<compile_context>
chip_gen: v7x
topology: tpu7x:2x2x1
jax: 0.10.0
libtpu: 0.0.40
codegen_flags: <defaults>
</compile_context>

<pallas_src>
import jax
import jax.numpy as jnp
from jax import lax
from jax.experimental import pallas as pl
from jax.experimental.pallas import tpu as pltpu

# ----- shapes fixed by the module (fc in_features = 5*47 forces L = 8192) -----
L_IN = 8192
C1, K1, S1 = 10, 120, 5          # conv1
PK1, PS1 = 46, 3                 # pool1
C2, K2, S2 = 5, 36, 3            # conv2
PK2, PS2 = 24, 3                 # pool2
T1 = (L_IN - K1) // S1 + 1       # 1615
P1 = (T1 - PK1) // PS1 + 1       # 524
T2 = (P1 - K2) // S2 + 1         # 163
P2 = (T2 - PK2) // PS2 + 1       # 47
NH = 25                          # fc1 out features

XSEG = 192                       # per-sample lane width of the conv1 input / output
ZSEG = 256                       # per-sample lane width of z1 / y2 / m24 / feat chunks
U1 = 176                         # pool1 working width (valid p < 524 -> u <= 174)

HIGH = lax.Precision.HIGHEST     # reference only


# ------------------------------ fused kernel --------------------------------

def _disc_fused_kernel(x_ref, w1_ref, b1_ref, w2_ref, b2_ref,
                       fw1_ref, fb1_ref, fw2_ref, fb2_ref,
                       o_ref, z1_ref, y2_ref, m24_ref, feat_ref):
    f32 = jnp.float32
    NB = o_ref.shape[0]
    NW2 = m24_ref.shape[1]                       # NB * ZSEG

    # Unwritten pad columns feed zero-weight / don't-care outputs only, but must
    # stay finite -> clear them.
    z1_ref[...] = jnp.zeros_like(z1_ref)
    y2_ref[:, NW2:] = jnp.zeros((8, y2_ref.shape[1] - NW2), f32)

    # ---- conv1 + ReLU + pool1, fused per sample ---------------------------------
    # Y1 row 16*psi + c holds y1[c, 9m + psi]; the conv1 output only lives in vregs.
    b1b = jnp.broadcast_to(b1_ref[...], (144, XSEG))
    for i in range(NB):
        xseg = x_ref[0, :, i * XSEG:(i + 1) * XSEG]                  # (192,192) bf16
        y1 = jnp.maximum(
            jnp.dot(w1_ref[...], xseg, preferred_element_type=f32) + b1b, 0.0)

        blk = [y1[16 * p:16 * (p + 1), :] for p in range(9)]         # per-phase blocks
        a68 = jnp.maximum(jnp.maximum(blk[6], blk[7]), blk[8])       # psi 6..8
        a38 = jnp.maximum(jnp.maximum(jnp.maximum(a68, blk[3]), blk[4]), blk[5])
        m012 = jnp.maximum(jnp.maximum(blk[0], blk[1]), blk[2])
        a9 = jnp.maximum(a38, m012)                                   # all 9 phases
        a03 = jnp.maximum(m012, blk[3])                               # psi 0..3
        a06 = jnp.maximum(jnp.maximum(jnp.maximum(a03, blk[4]), blk[5]), blk[6])

        # shared middle of every 46-wide pool1 window: complete 9-blocks at e=1..4
        b4 = jnp.maximum(jnp.maximum(a9[:, 1:1 + U1], a9[:, 2:2 + U1]),
                         jnp.maximum(a9[:, 3:3 + U1], a9[:, 4:4 + U1]))

        # z1p[c, 3u+rho] = max over window [3rho, 3rho+46) of y1[c, 9u + v]
        r0 = jnp.maximum(jnp.maximum(a9[:, 0:U1], b4), blk[0][:, 5:5 + U1])
        r1 = jnp.maximum(jnp.maximum(a38[:, 0:U1], b4), a03[:, 5:5 + U1])
        r2 = jnp.maximum(jnp.maximum(a68[:, 0:U1], b4), a06[:, 5:5 + U1])
        base = i * ZSEG
        z1_ref[0:10, base:base + U1] = r0[0:10, :]
        z1_ref[16:26, base:base + U1] = r1[0:10, :]
        z1_ref[32:42, base:base + U1] = r2[0:10, :]

    # ---- conv2 + ReLU over the batch-stacked z1 (12 matmuls, wide N) -------------
    nch = 512 if NW2 % 512 == 0 else ZSEG
    b2b = jnp.broadcast_to(b2_ref[...], (8, nch))
    for h in range(NW2 // nch):
        q0 = h * nch
        acc = b2b
        for kap in range(K2 // 3):
            acc = acc + jnp.dot(w2_ref[kap], z1_ref[:, q0 + kap:q0 + kap + nch],
                                preferred_element_type=f32)
        y2_ref[:, q0:q0 + nch] = jnp.maximum(acc, 0.0)

    # ---- pool2 (k=24): sequential sliding max over the stacked width -------------
    m = y2_ref[:, 0:NW2]
    for k3 in range(1, PK2):
        m = jnp.maximum(m, y2_ref[:, k3:k3 + NW2])
    m24_ref[...] = m

    # ---- gather per-sample features (stride-3 decimation is folded into FW1CAT) --
    for i in range(NB):
        for o in range(C2):
            feat_ref[i:i + 1, o * ZSEG:(o + 1) * ZSEG] = \
                m24_ref[o:o + 1, i * ZSEG:(i + 1) * ZSEG]

    # ---- fc1 -> softmax(dim=-1) -> fc2; lane-dense (NB,128) output row -----------
    h = jnp.dot(feat_ref[...], fw1_ref[...], preferred_element_type=f32) + fb1_ref[...]
    lane = lax.broadcasted_iota(jnp.int32, (NB, 32), 1)
    h = jnp.where(lane < NH, h, -1e30)                               # mask pad lanes
    h = h - jnp.max(h, axis=-1, keepdims=True)
    e = jnp.exp(h)
    p = e * pl.reciprocal(jnp.sum(e, axis=-1, keepdims=True), approx=True)
    out = jnp.sum(p * fw2_ref[...], axis=-1, keepdims=True) + fb2_ref[...]
    o_ref[...] = jnp.broadcast_to(out, (NB, 128))


# ----------------------------- wrapper / packing -----------------------------

def _pack_params(params):
    """Repack torch-layout weights for the phase-decomposed kernel (tiny, wrapper-side)."""
    w1, b1, w2, b2, fw1, fb1, fw2, fb2 = [p.astype(jnp.float32) for p in params]
    f32 = jnp.float32

    # conv1, phase-decomposed + K-merged:
    #   W1BIG[16*psi + c, 48*d + s] = w1[c, 0, 45*d + s - 5*psi]  (0 outside [0,120))
    w1sq = w1.reshape(C1, K1)
    d_ = jnp.arange(4)[:, None, None]
    psi_ = jnp.arange(9)[None, :, None]
    s_ = jnp.arange(45)[None, None, :]
    kk = 45 * d_ + s_ - 5 * psi_                                   # (4, 9, 45)
    valid = (kk >= 0) & (kk < K1)
    gath = jnp.where(valid[None], w1sq[:, jnp.clip(kk, 0, K1 - 1)], 0.0)  # (10,4,9,45)
    w1p = jnp.transpose(gath, (1, 2, 0, 3))                        # (4, 9, 10, 45)
    w1p = jnp.pad(w1p, ((0, 0), (0, 0), (0, 6), (0, 3))).reshape(4, 144, 48)
    w1big = jnp.transpose(w1p, (1, 0, 2)).reshape(144, 192).astype(jnp.bfloat16)

    b1col = jnp.tile(jnp.pad(b1, (0, 6)), 9).reshape(144, 1)

    # conv2: W2P[kap, o, 16*rho + c] = w2[o, c, 3*kap + rho]
    w2r = w2.reshape(C2, C1, K2 // 3, 3)                           # (o, c, kap, rho)
    w2p = jnp.transpose(w2r, (2, 0, 3, 1))                         # (kap, o, rho, c)
    w2p = jnp.pad(w2p, ((0, 0), (0, 3), (0, 0), (0, 6))).reshape(K2 // 3, 8, 48)

    b2col = jnp.pad(b2, (0, 3)).reshape(8, 1)

    # fc1 with pool2's stride-3 decimation and the 256-wide per-sample feature
    # segments folded in: FW1CAT[o*256 + 3*p, j] = fw1[j, 47*o + p], zero elsewhere.
    fw1t = jnp.transpose(fw1.reshape(NH, C2, P2), (1, 2, 0))       # (5, 47, 25)
    buf = jnp.zeros((C2, ZSEG, 32), f32)
    buf = buf.at[:, 0:3 * P2:3, :NH].set(fw1t)
    fw1cat = buf.reshape(C2 * ZSEG, 32)                            # (1280, 32)

    fb1row = jnp.pad(fb1, (0, 32 - NH)).reshape(1, 32)
    fw2row = jnp.pad(fw2.reshape(NH), (0, 32 - NH)).reshape(1, 32)
    fb2s = fb2.reshape(1, 1)
    return w1big, b1col, w2p, b2col, fw1cat, fb1row, fw2row, fb2s


def discriminator_cnn_forward(x_ncw, params, nb_max=8):
    B = x_ncw.shape[0]
    assert x_ncw.shape[1:] == (1, L_IN), x_ncw.shape
    f32 = jnp.float32

    NB = min(nb_max, B)                      # samples per grid step
    G = -(-B // NB)                          # grid length (keep it >= 2 for v7x when B allows)
    BP = G * NB
    NW1 = NB * XSEG
    NW2 = NB * ZSEG

    x = x_ncw[:, 0, :].astype(f32)           # (B, 8192)
    if BP > B:
        x = jnp.pad(x, ((0, BP - B), (0, 0)))

    # 45-phase + 4-shift relayout (folds conv1's stride-5 and the K-merge), then
    # stack NB samples on the lane axis:  X192[g, 48d+s, i*192+m] = x[gNB+i, 45(m+d)+s]
    xpad = jnp.pad(x, ((0, 0), (0, 45 * 196 - L_IN)))              # (BP, 8820)
    ph = xpad.reshape(BP, 196, 45).transpose(0, 2, 1)              # ph[b,s,n] = x[b,45n+s]
    xk = jnp.stack([ph[:, :, d:d + XSEG] for d in range(4)], axis=1)   # (BP,4,45,192)
    xk = jnp.pad(xk, ((0, 0), (0, 0), (0, 3), (0, 0)))                 # (BP,4,48,192)
    xk = xk.reshape(BP, 192, XSEG)
    x192 = xk.reshape(G, NB, 192, XSEG).transpose(0, 2, 1, 3).reshape(G, 192, NW1)
    x192 = x192.astype(jnp.bfloat16)

    w1big, b1col, w2p, b2col, fw1cat, fb1row, fw2row, fb2s = _pack_params(params)

    out = pl.pallas_call(
        _disc_fused_kernel,
        out_shape=jax.ShapeDtypeStruct((BP, 128), f32),
        grid=(G,),
        in_specs=[
            pl.BlockSpec((1, 192, NW1), lambda g: (g, 0, 0)),      # stacked conv1 input
            pl.BlockSpec((144, 192), lambda g: (0, 0)),            # W1BIG (bf16)
            pl.BlockSpec((144, 1), lambda g: (0, 0)),              # conv1 bias
            pl.BlockSpec((K2 // 3, 8, 48), lambda g: (0, 0, 0)),   # W2P
            pl.BlockSpec((8, 1), lambda g: (0, 0)),                # conv2 bias
            pl.BlockSpec((C2 * ZSEG, 32), lambda g: (0, 0)),       # fc1 (+decimation)
            pl.BlockSpec((1, 32), lambda g: (0, 0)),               # fc1 bias
            pl.BlockSpec((1, 32), lambda g: (0, 0)),               # fc2 weight
            pl.BlockSpec((1, 1), lambda g: (0, 0)),                # fc2 bias
        ],
        out_specs=pl.BlockSpec((NB, 128), lambda g: (g, 0)),
        scratch_shapes=[
            pltpu.VMEM((48, NW2 + 128), f32),                      # pool1 output (3-phase, stacked)
            pltpu.VMEM((8, NW2 + 128), f32),                       # conv2 output (stacked)
            pltpu.VMEM((8, NW2), f32),                             # pool2 sliding max (stacked)
            pltpu.VMEM((NB, C2 * ZSEG), f32),                      # per-sample features
        ],
        compiler_params=pltpu.CompilerParams(
            dimension_semantics=("parallel",)),
    )(x192, w1big, b1col, w2p, b2col, fw1cat, fb1row, fw2row, fb2s)

    return out[:B, 0:1]                                            # (B, 1)


# ------------------------------ pure-JAX reference ---------------------------

def ref_forward(x_ncw, params):
    w1, b1, w2, b2, fw1, fb1, fw2, fb2 = params
    dn = ('NCH', 'OIH', 'NCH')
    y = lax.conv_general_dilated(x_ncw, w1, (S1,), 'VALID',
                                 dimension_numbers=dn, precision=HIGH)
    y = jax.nn.relu(y + b1[None, :, None])
    y = lax.reduce_window(y, -jnp.inf, lax.max, (1, 1, PK1), (1, 1, PS1), 'VALID')
    y = lax.conv_general_dilated(y, w2, (S2,), 'VALID',
                                 dimension_numbers=dn, precision=HIGH)
    y = jax.nn.relu(y + b2[None, :, None])
    y = lax.reduce_window(y, -jnp.inf, lax.max, (1, 1, PK2), (1, 1, PS2), 'VALID')
    feat = y.reshape(y.shape[0], -1)
    h = jnp.dot(feat, fw1.T, precision=HIGH) + fb1
    p = jax.nn.softmax(h, axis=-1)
    return jnp.dot(p, fw2.T, precision=HIGH) + fb2


if __name__ == "__main__":
    key = jax.random.PRNGKey(0)
    ks = jax.random.split(key, 9)
    # Smallest shapes consistent with the module: fc hard-codes 5*47 features,
    # which forces an input length of 8192 (1615 -> 524 -> 163 -> 47).
    B = 2
    x = jax.random.normal(ks[0], (B, 1, L_IN), dtype=jnp.float32)
    params = (
        0.05 * jax.random.normal(ks[1], (C1, 1, K1), jnp.float32),   # conv1 weight
        0.05 * jax.random.normal(ks[2], (C1,), jnp.float32),         # conv1 bias
        0.05 * jax.random.normal(ks[3], (C2, C1, K2), jnp.float32),  # conv2 weight
        0.05 * jax.random.normal(ks[4], (C2,), jnp.float32),         # conv2 bias
        0.05 * jax.random.normal(ks[5], (NH, C2 * P2), jnp.float32), # fc1 weight
        0.05 * jax.random.normal(ks[6], (NH,), jnp.float32),         # fc1 bias
        0.10 * jax.random.normal(ks[7], (1, NH), jnp.float32),       # fc2 weight
        0.10 * jax.random.normal(ks[8], (1,), jnp.float32),          # fc2 bias
    )

    out = jax.jit(discriminator_cnn_forward)(x, params)
    out = jax.block_until_ready(out)
    ref = ref_forward(x, params)
    assert out.shape == (B, 1), out.shape
    # Matmuls are single-pass (bf16 operands / DEFAULT precision) vs. the HIGHEST-
    # precision reference, so use a slightly looser tolerance than the f32 version.
    assert jnp.allclose(out, ref, atol=5e-3, rtol=5e-3), (out, ref)
    print("KERNEL_OK")
</pallas_src>

<mosaic_0001>
module attributes {stable_mosaic.version = 11 : i64} {
  func.func @_disc_fused_kernel(%arg0: i32, %arg1: memref<1x192x384xbf16, #tpu.memory_space<vmem>>, %arg2: memref<144x192xbf16, #tpu.memory_space<vmem>>, %arg3: memref<144x1xf32, #tpu.memory_space<vmem>>, %arg4: memref<12x8x48xf32, #tpu.memory_space<vmem>>, %arg5: memref<8x1xf32, #tpu.memory_space<vmem>>, %arg6: memref<1280x32xf32, #tpu.memory_space<vmem>>, %arg7: memref<1x32xf32, #tpu.memory_space<vmem>>, %arg8: memref<1x32xf32, #tpu.memory_space<vmem>>, %arg9: memref<1x1xf32, #tpu.memory_space<vmem>>, %arg10: memref<2x128xf32, #tpu.memory_space<vmem>>, %arg11: memref<48x640xf32, #tpu.memory_space<vmem>>, %arg12: memref<8x640xf32, #tpu.memory_space<vmem>>, %arg13: memref<8x512xf32, #tpu.memory_space<vmem>>, %arg14: memref<2x1280xf32, #tpu.memory_space<vmem>>) attributes {dimension_semantics = [#tpu.dimension_semantics<parallel>], iteration_bounds = array<i64: 1>, scalar_prefetch = 0 : i64, scratch_operands = 4 : i64, tpu.core_type = #tpu.core_type<tc>, window_params = [{transform_indices = @transform_0, window_bounds = array<i64: 1, 192, 384>}, {pipeline_mode = #tpu.pipeline_mode<synchronous>, transform_indices = @transform_1, window_bounds = array<i64: 144, 192>}, {pipeline_mode = #tpu.pipeline_mode<synchronous>, transform_indices = @transform_2, window_bounds = array<i64: 144, 1>}, {pipeline_mode = #tpu.pipeline_mode<synchronous>, transform_indices = @transform_3, window_bounds = array<i64: 12, 8, 48>}, {pipeline_mode = #tpu.pipeline_mode<synchronous>, transform_indices = @transform_4, window_bounds = array<i64: 8, 1>}, {pipeline_mode = #tpu.pipeline_mode<synchronous>, transform_indices = @transform_5, window_bounds = array<i64: 1280, 32>}, {pipeline_mode = #tpu.pipeline_mode<synchronous>, transform_indices = @transform_6, window_bounds = array<i64: 1, 32>}, {pipeline_mode = #tpu.pipeline_mode<synchronous>, transform_indices = @transform_7, window_bounds = array<i64: 1, 32>}, {pipeline_mode = #tpu.pipeline_mode<synchronous>, transform_indices = @transform_8, window_bounds = array<i64: 1, 1>}, {transform_indices = @transform_9, window_bounds = array<i64: 2, 128>}]} {
    %cst = arith.constant 0.000000e+00 : f32
    %0 = vector.broadcast %cst : f32 to vector<48x640xf32>
    %c0 = arith.constant 0 : index
    %c0_0 = arith.constant 0 : index
    %1 = vector.load %arg11[%c0, %c0_0] : memref<48x640xf32, #tpu.memory_space<vmem>>, vector<48x640xf32>
    tpu.vector_store %arg11[%c0, %c0_0], %0 {strides = array<i32>} : memref<48x640xf32, #tpu.memory_space<vmem>>, vector<48x640xf32>,
    %cst_1 = arith.constant 0.000000e+00 : f32
    %2 = vector.broadcast %cst_1 : f32 to vector<8x128xf32>
    %c0_2 = arith.constant 0 : index
    %c512 = arith.constant 512 : index
    %3 = vector.load %arg12[%c0_2, %c512] : memref<8x640xf32, #tpu.memory_space<vmem>>, vector<8x128xf32>
    tpu.vector_store %arg12[%c0_2, %c512], %2 {strides = array<i32>} : memref<8x640xf32, #tpu.memory_space<vmem>>, vector<8x128xf32>,
    %c0_3 = arith.constant 0 : index
    %c0_4 = arith.constant 0 : index
    %4 = vector.load %arg3[%c0_3, %c0_4] : memref<144x1xf32, #tpu.memory_space<vmem>>, vector<144x1xf32>
    %5 = vector.shape_cast %4 : vector<144x1xf32> to vector<144x1xf32>
    %6 = vector.broadcast %5 : vector<144x1xf32> to vector<144x192xf32>
    %c0_5 = arith.constant 0 : index
    %c0_6 = arith.constant 0 : index
    %c0_7 = arith.constant 0 : index
    %7 = vector.load %arg1[%c0_5, %c0_6, %c0_7] : memref<1x192x384xbf16, #tpu.memory_space<vmem>>, vector<1x192x192xbf16>
    %8 = vector.shape_cast %7 : vector<1x192x192xbf16> to vector<192x192xbf16>
    %c0_8 = arith.constant 0 : index
    %c0_9 = arith.constant 0 : index
    %9 = vector.load %arg2[%c0_8, %c0_9] : memref<144x192xbf16, #tpu.memory_space<vmem>>, vector<144x192xbf16>
    %cst_10 = arith.constant dense<0.000000e+00> : vector<144x192xf32>
    %10 = tpu.matmul %9, %8, %cst_10 {dimension_numbers = #tpu.dot_dimension_numbers<[1], [0], [0], [1], [0, 0, 1, 1], [], []>} : vector<144x192xbf16>, vector<192x192xbf16>, vector<144x192xf32> -> vector<144x192xf32>
    %11 = arith.addf %10, %6 : vector<144x192xf32>
    %cst_11 = arith.constant 0.000000e+00 : f32
    %12 = vector.broadcast %cst_11 : f32 to vector<144x192xf32>
    %13 = arith.maximumf %11, %12 : vector<144x192xf32>
    %14 = vector.extract_strided_slice %13 {offsets = [0, 0], sizes = [16, 192], strides = [1, 1]} : vector<144x192xf32> to vector<16x192xf32>
    %15 = vector.extract_strided_slice %13 {offsets = [16, 0], sizes = [16, 192], strides = [1, 1]} : vector<144x192xf32> to vector<16x192xf32>
    %16 = vector.extract_strided_slice %13 {offsets = [32, 0], sizes = [16, 192], strides = [1, 1]} : vector<144x192xf32> to vector<16x192xf32>
    %17 = vector.extract_strided_slice %13 {offsets = [48, 0], sizes = [16, 192], strides = [1, 1]} : vector<144x192xf32> to vector<16x192xf32>
    %18 = vector.extract_strided_slice %13 {offsets = [64, 0], sizes = [16, 192], strides = [1, 1]} : vector<144x192xf32> to vector<16x192xf32>
    %19 = vector.extract_strided_slice %13 {offsets = [80, 0], sizes = [16, 192], strides = [1, 1]} : vector<144x192xf32> to vector<16x192xf32>
    %20 = vector.extract_strided_slice %13 {offsets = [96, 0], sizes = [16, 192], strides = [1, 1]} : vector<144x192xf32> to vector<16x192xf32>
    %21 = vector.extract_strided_slice %13 {offsets = [112, 0], sizes = [16, 192], strides = [1, 1]} : vector<144x192xf32> to vector<16x192xf32>
    %22 = vector.extract_strided_slice %13 {offsets = [128, 0], sizes = [16, 192], strides = [1, 1]} : vector<144x192xf32> to vector<16x192xf32>
    %23 = arith.maximumf %20, %21 : vector<16x192xf32>
    %24 = arith.maximumf %23, %22 : vector<16x192xf32>
    %25 = arith.maximumf %24, %17 : vector<16x192xf32>
    %26 = arith.maximumf %25, %18 : vector<16x192xf32>
    %27 = arith.maximumf %26, %19 : vector<16x192xf32>
    %28 = arith.maximumf %14, %15 : vector<16x192xf32>
    %29 = arith.maximumf %28, %16 : vector<16x192xf32>
    %30 = arith.maximumf %27, %29 : vector<16x192xf32>
    %31 = arith.maximumf %29, %17 : vector<16x192xf32>
    %32 = arith.maximumf %31, %18 : vector<16x192xf32>
    %33 = arith.maximumf %32, %19 : vector<16x192xf32>
    %34 = arith.maximumf %33, %20 : vector<16x192xf32>
    %35 = vector.extract_strided_slice %30 {offsets = [0, 1], sizes = [16, 176], strides = [1, 1]} : vector<16x192xf32> to vector<16x176xf32>
    %36 = vector.extract_strided_slice %30 {offsets = [0, 2], sizes = [16, 176], strides = [1, 1]} : vector<16x192xf32> to vector<16x176xf32>
    %37 = arith.maximumf %35, %36 : vector<16x176xf32>
    %38 = vector.extract_strided_slice %30 {offsets = [0, 3], sizes = [16, 176], strides = [1, 1]} : vector<16x192xf32> to vector<16x176xf32>
    %39 = vector.extract_strided_slice %30 {offsets = [0, 4], sizes = [16, 176], strides = [1, 1]} : vector<16x192xf32> to vector<16x176xf32>
    %40 = arith.maximumf %38, %39 : vector<16x176xf32>
    %41 = arith.maximumf %37, %40 : vector<16x176xf32>
    %42 = vector.extract_strided_slice %30 {offsets = [0, 0], sizes = [16, 176], strides = [1, 1]} : vector<16x192xf32> to vector<16x176xf32>
    %43 = arith.maximumf %42, %41 : vector<16x176xf32>
    %44 = vector.extract_strided_slice %14 {offsets = [0, 5], sizes = [16, 176], strides = [1, 1]} : vector<16x192xf32> to vector<16x176xf32>
    %45 = arith.maximumf %43, %44 : vector<16x176xf32>
    %46 = vector.extract_strided_slice %27 {offsets = [0, 0], sizes = [16, 176], strides = [1, 1]} : vector<16x192xf32> to vector<16x176xf32>
    %47 = arith.maximumf %46, %41 : vector<16x176xf32>
    %48 = vector.extract_strided_slice %31 {offsets = [0, 5], sizes = [16, 176], strides = [1, 1]} : vector<16x192xf32> to vector<16x176xf32>
    %49 = arith.maximumf %47, %48 : vector<16x176xf32>
    %50 = vector.extract_strided_slice %24 {offsets = [0, 0], sizes = [16, 176], strides = [1, 1]} : vector<16x192xf32> to vector<16x176xf32>
    %51 = arith.maximumf %50, %41 : vector<16x176xf32>
    %52 = vector.extract_strided_slice %34 {offsets = [0, 5], sizes = [16, 176], strides = [1, 1]} : vector<16x192xf32> to vector<16x176xf32>
    %53 = arith.maximumf %51, %52 : vector<16x176xf32>
    %54 = vector.extract_strided_slice %45 {offsets = [0, 0], sizes = [10, 176], strides = [1, 1]} : vector<16x176xf32> to vector<10x176xf32>
    %c0_12 = arith.constant 0 : index
    %c0_13 = arith.constant 0 : index
    %55 = vector.load %arg11[%c0_12, %c0_13] : memref<48x640xf32, #tpu.memory_space<vmem>>, vector<10x176xf32>
    tpu.vector_store %arg11[%c0_12, %c0_13], %54 {strides = array<i32>} : memref<48x640xf32, #tpu.memory_space<vmem>>, vector<10x176xf32>,
    %56 = vector.extract_strided_slice %49 {offsets = [0, 0], sizes = [10, 176], strides = [1, 1]} : vector<16x176xf32> to vector<10x176xf32>
    %c16 = arith.constant 16 : index
    %c0_14 = arith.constant 0 : index
    %57 = vector.load %arg11[%c16, %c0_14] : memref<48x640xf32, #tpu.memory_space<vmem>>, vector<10x176xf32>
    tpu.vector_store %arg11[%c16, %c0_14], %56 {strides = array<i32>} : memref<48x640xf32, #tpu.memory_space<vmem>>, vector<10x176xf32>,
    %58 = vector.extract_strided_slice %53 {offsets = [0, 0], sizes = [10, 176], strides = [1, 1]} : vector<16x176xf32> to vector<10x176xf32>
    %c32 = arith.constant 32 : index
    %c0_15 = arith.constant 0 : index
    %59 = vector.load %arg11[%c32, %c0_15] : memref<48x640xf32, #tpu.memory_space<vmem>>, vector<10x176xf32>
    tpu.vector_store %arg11[%c32, %c0_15], %58 {strides = array<i32>} : memref<48x640xf32, #tpu.memory_space<vmem>>, vector<10x176xf32>,
    %c0_16 = arith.constant 0 : index
    %c0_17 = arith.constant 0 : index
    %c192 = arith.constant 192 : index
    %60 = vector.load %arg1[%c0_16, %c0_17, %c192] : memref<1x192x384xbf16, #tpu.memory_space<vmem>>, vector<1x192x192xbf16>
    %61 = vector.shape_cast %60 : vector<1x192x192xbf16> to vector<192x192xbf16>
    %c0_18 = arith.constant 0 : index
    %c0_19 = arith.constant 0 : index
    %62 = vector.load %arg2[%c0_18, %c0_19] : memref<144x192xbf16, #tpu.memory_space<vmem>>, vector<144x192xbf16>
    %cst_20 = arith.constant dense<0.000000e+00> : vector<144x192xf32>
    %63 = tpu.matmul %62, %61, %cst_20 {dimension_numbers = #tpu.dot_dimension_numbers<[1], [0], [0], [1], [0, 0, 1, 1], [], []>} : vector<144x192xbf16>, vector<192x192xbf16>, vector<144x192xf32> -> vector<144x192xf32>
    %64 = arith.addf %63, %6 : vector<144x192xf32>
    %cst_21 = arith.constant 0.000000e+00 : f32
    %65 = vector.broadcast %cst_21 : f32 to vector<144x192xf32>
    %66 = arith.maximumf %64, %65 : vector<144x192xf32>
    %67 = vector.extract_strided_slice %66 {offsets = [0, 0], sizes = [16, 192], strides = [1, 1]} : vector<144x192xf32> to vector<16x192xf32>
    %68 = vector.extract_strided_slice %66 {offsets = [16, 0], sizes = [16, 192], strides = [1, 1]} : vector<144x192xf32> to vector<16x192xf32>
    %69 = vector.extract_strided_slice %66 {offsets = [32, 0], sizes = [16, 192], strides = [1, 1]} : vector<144x192xf32> to vector<16x192xf32>
    %70 = vector.extract_strided_slice %66 {offsets = [48, 0], sizes = [16, 192], strides = [1, 1]} : vector<144x192xf32> to vector<16x192xf32>
    %71 = vector.extract_strided_slice %66 {offsets = [64, 0], sizes = [16, 192], strides = [1, 1]} : vector<144x192xf32> to vector<16x192xf32>
    %72 = vector.extract_strided_slice %66 {offsets = [80, 0], sizes = [16, 192], strides = [1, 1]} : vector<144x192xf32> to vector<16x192xf32>
    %73 = vector.extract_strided_slice %66 {offsets = [96, 0], sizes = [16, 192], strides = [1, 1]} : vector<144x192xf32> to vector<16x192xf32>
    %74 = vector.extract_strided_slice %66 {offsets = [112, 0], sizes = [16, 192], strides = [1, 1]} : vector<144x192xf32> to vector<16x192xf32>
    %75 = vector.extract_strided_slice %66 {offsets = [128, 0], sizes = [16, 192], strides = [1, 1]} : vector<144x192xf32> to vector<16x192xf32>
    %76 = arith.maximumf %73, %74 : vector<16x192xf32>
    %77 = arith.maximumf %76, %75 : vector<16x192xf32>
    %78 = arith.maximumf %77, %70 : vector<16x192xf32>
    %79 = arith.maximumf %78, %71 : vector<16x192xf32>
    %80 = arith.maximumf %79, %72 : vector<16x192xf32>
    %81 = arith.maximumf %67, %68 : vector<16x192xf32>
    %82 = arith.maximumf %81, %69 : vector<16x192xf32>
    %83 = arith.maximumf %80, %82 : vector<16x192xf32>
    %84 = arith.maximumf %82, %70 : vector<16x192xf32>
    %85 = arith.maximumf %84, %71 : vector<16x192xf32>
    %86 = arith.maximumf %85, %72 : vector<16x192xf32>
    %87 = arith.maximumf %86, %73 : vector<16x192xf32>
    %88 = vector.extract_strided_slice %83 {offsets = [0, 1], sizes = [16, 176], strides = [1, 1]} : vector<16x192xf32> to vector<16x176xf32>
    %89 = vector.extract_strided_slice %83 {offsets = [0, 2], sizes = [16, 176], strides = [1, 1]} : vector<16x192xf32> to vector<16x176xf32>
    %90 = arith.maximumf %88, %89 : vector<16x176xf32>
    %91 = vector.extract_strided_slice %83 {offsets = [0, 3], sizes = [16, 176], strides = [1, 1]} : vector<16x192xf32> to vector<16x176xf32>
    %92 = vector.extract_strided_slice %83 {offsets = [0, 4], sizes = [16, 176], strides = [1, 1]} : vector<16x192xf32> to vector<16x176xf32>
    %93 = arith.maximumf %91, %92 : vector<16x176xf32>
    %94 = arith.maximumf %90, %93 : vector<16x176xf32>
    %95 = vector.extract_strided_slice %83 {offsets = [0, 0], sizes = [16, 176], strides = [1, 1]} : vector<16x192xf32> to vector<16x176xf32>
    %96 = arith.maximumf %95, %94 : vector<16x176xf32>
    %97 = vector.extract_strided_slice %67 {offsets = [0, 5], sizes = [16, 176], strides = [1, 1]} : vector<16x192xf32> to vector<16x176xf32>
    %98 = arith.maximumf %96, %97 : vector<16x176xf32>
    %99 = vector.extract_strided_slice %80 {offsets = [0, 0], sizes = [16, 176], strides = [1, 1]} : vector<16x192xf32> to vector<16x176xf32>
    %100 = arith.maximumf %99, %94 : vector<16x176xf32>
    %101 = vector.extract_strided_slice %84 {offsets = [0, 5], sizes = [16, 176], strides = [1, 1]} : vector<16x192xf32> to vector<16x176xf32>
    %102 = arith.maximumf %100, %101 : vector<16x176xf32>
    %103 = vector.extract_strided_slice %77 {offsets = [0, 0], sizes = [16, 176], strides = [1, 1]} : vector<16x192xf32> to vector<16x176xf32>
    %104 = arith.maximumf %103, %94 : vector<16x176xf32>
    %105 = vector.extract_strided_slice %87 {offsets = [0, 5], sizes = [16, 176], strides = [1, 1]} : vector<16x192xf32> to vector<16x176xf32>
    %106 = arith.maximumf %104, %105 : vector<16x176xf32>
    %107 = vector.extract_strided_slice %98 {offsets = [0, 0], sizes = [10, 176], strides = [1, 1]} : vector<16x176xf32> to vector<10x176xf32>
    %c0_22 = arith.constant 0 : index
    %c256 = arith.constant 256 : index
    %108 = vector.load %arg11[%c0_22, %c256] : memref<48x640xf32, #tpu.memory_space<vmem>>, vector<10x176xf32>
    tpu.vector_store %arg11[%c0_22, %c256], %107 {strides = array<i32>} : memref<48x640xf32, #tpu.memory_space<vmem>>, vector<10x176xf32>,
    %109 = vector.extract_strided_slice %102 {offsets = [0, 0], sizes = [10, 176], strides = [1, 1]} : vector<16x176xf32> to vector<10x176xf32>
    %c16_23 = arith.constant 16 : index
    %c256_24 = arith.constant 256 : index
    %110 = vector.load %arg11[%c16_23, %c256_24] : memref<48x640xf32, #tpu.memory_space<vmem>>, vector<10x176xf32>
    tpu.vector_store %arg11[%c16_23, %c256_24], %109 {strides = array<i32>} : memref<48x640xf32, #tpu.memory_space<vmem>>, vector<10x176xf32>,
    %111 = vector.extract_strided_slice %106 {offsets = [0, 0], sizes = [10, 176], strides = [1, 1]} : vector<16x176xf32> to vector<10x176xf32>
    %c32_25 = arith.constant 32 : index
    %c256_26 = arith.constant 256 : index
    %112 = vector.load %arg11[%c32_25, %c256_26] : memref<48x640xf32, #tpu.memory_space<vmem>>, vector<10x176xf32>
    tpu.vector_store %arg11[%c32_25, %c256_26], %111 {strides = array<i32>} : memref<48x640xf32, #tpu.memory_space<vmem>>, vector<10x176xf32>,
    %c0_27 = arith.constant 0 : index
    %c0_28 = arith.constant 0 : index
    %113 = vector.load %arg5[%c0_27, %c0_28] : memref<8x1xf32, #tpu.memory_space<vmem>>, vector<8x1xf32>
    %114 = vector.shape_cast %113 : vector<8x1xf32> to vector<8x1xf32>
    %115 = vector.broadcast %114 : vector<8x1xf32> to vector<8x512xf32>
    %c0_29 = arith.constant 0 : index
    %c0_30 = arith.constant 0 : index
    %c0_31 = arith.constant 0 : index
    %116 = vector.load %arg4[%c0_29, %c0_30, %c0_31] : memref<12x8x48xf32, #tpu.memory_space<vmem>>, vector<1x8x48xf32>
    %117 = vector.shape_cast %116 : vector<1x8x48xf32> to vector<8x48xf32>
    %c0_32 = arith.constant 0 : index
    %c0_33 = arith.constant 0 : index
    %118 = vector.load %arg11[%c0_32, %c0_33] : memref<48x640xf32, #tpu.memory_space<vmem>>, vector<48x512xf32>
    %cst_34 = arith.constant dense<0.000000e+00> : vector<8x512xf32>
    %119 = tpu.matmul %117, %118, %cst_34 {dimension_numbers = #tpu.dot_dimension_numbers<[1], [0], [0], [1], [0, 0, 1, 1], [], []>} : vector<8x48xf32>, vector<48x512xf32>, vector<8x512xf32> -> vector<8x512xf32>
    %120 = arith.addf %115, %119 : vector<8x512xf32>
    %c1 = arith.constant 1 : index
    %c0_35 = arith.constant 0 : index
    %c0_36 = arith.constant 0 : index
    %121 = vector.load %arg4[%c1, %c0_35, %c0_36] : memref<12x8x48xf32, #tpu.memory_space<vmem>>, vector<1x8x48xf32>
    %122 = vector.shape_cast %121 : vector<1x8x48xf32> to vector<8x48xf32>
    %c0_37 = arith.constant 0 : index
    %c1_38 = arith.constant 1 : index
    %123 = vector.load %arg11[%c0_37, %c1_38] : memref<48x640xf32, #tpu.memory_space<vmem>>, vector<48x512xf32>
    %cst_39 = arith.constant dense<0.000000e+00> : vector<8x512xf32>
    %124 = tpu.matmul %122, %123, %cst_39 {dimension_numbers = #tpu.dot_dimension_numbers<[1], [0], [0], [1], [0, 0, 1, 1], [], []>} : vector<8x48xf32>, vector<48x512xf32>, vector<8x512xf32> -> vector<8x512xf32>
    %125 = arith.addf %120, %124 : vector<8x512xf32>
    %c2 = arith.constant 2 : index
    %c0_40 = arith.constant 0 : index
    %c0_41 = arith.constant 0 : index
    %126 = vector.load %arg4[%c2, %c0_40, %c0_41] : memref<12x8x48xf32, #tpu.memory_space<vmem>>, vector<1x8x48xf32>
    %127 = vector.shape_cast %126 : vector<1x8x48xf32> to vector<8x48xf32>
    %c0_42 = arith.constant 0 : index
    %c2_43 = arith.constant 2 : index
    %128 = vector.load %arg11[%c0_42, %c2_43] : memref<48x640xf32, #tpu.memory_space<vmem>>, vector<48x512xf32>
    %cst_44 = arith.constant dense<0.000000e+00> : vector<8x512xf32>
    %129 = tpu.matmul %127, %128, %cst_44 {dimension_numbers = #tpu.dot_dimension_numbers<[1], [0], [0], [1], [0, 0, 1, 1], [], []>} : vector<8x48xf32>, vector<48x512xf32>, vector<8x512xf32> -> vector<8x512xf32>
    %130 = arith.addf %125, %129 : vector<8x512xf32>
    %c3 = arith.constant 3 : index
    %c0_45 = arith.constant 0 : index
    %c0_46 = arith.constant 0 : index
    %131 = vector.load %arg4[%c3, %c0_45, %c0_46] : memref<12x8x48xf32, #tpu.memory_space<vmem>>, vector<1x8x48xf32>
    %132 = vector.shape_cast %131 : vector<1x8x48xf32> to vector<8x48xf32>
    %c0_47 = arith.constant 0 : index
    %c3_48 = arith.constant 3 : index
    %133 = vector.load %arg11[%c0_47, %c3_48] : memref<48x640xf32, #tpu.memory_space<vmem>>, vector<48x512xf32>
    %cst_49 = arith.constant dense<0.000000e+00> : vector<8x512xf32>
    %134 = tpu.matmul %132, %133, %cst_49 {dimension_numbers = #tpu.dot_dimension_numbers<[1], [0], [0], [1], [0, 0, 1, 1], [], []>} : vector<8x48xf32>, vector<48x512xf32>, vector<8x512xf32> -> vector<8x512xf32>
    %135 = arith.addf %130, %134 : vector<8x512xf32>
    %c4 = arith.constant 4 : index
    %c0_50 = arith.constant 0 : index
    %c0_51 = arith.constant 0 : index
    %136 = vector.load %arg4[%c4, %c0_50, %c0_51] : memref<12x8x48xf32, #tpu.memory_space<vmem>>, vector<1x8x48xf32>
    %137 = vector.shape_cast %136 : vector<1x8x48xf32> to vector<8x48xf32>
    %c0_52 = arith.constant 0 : index
    %c4_53 = arith.constant 4 : index
    %138 = vector.load %arg11[%c0_52, %c4_53] : memref<48x640xf32, #tpu.memory_space<vmem>>, vector<48x512xf32>
    %cst_54 = arith.constant dense<0.000000e+00> : vector<8x512xf32>
    %139 = tpu.matmul %137, %138, %cst_54 {dimension_numbers = #tpu.dot_dimension_numbers<[1], [0], [0], [1], [0, 0, 1, 1], [], []>} : vector<8x48xf32>, vector<48x512xf32>, vector<8x512xf32> -> vector<8x512xf32>
    %140 = arith.addf %135, %139 : vector<8x512xf32>
    %c5 = arith.constant 5 : index
    %c0_55 = arith.constant 0 : index
    %c0_56 = arith.constant 0 : index
    %141 = vector.load %arg4[%c5, %c0_55, %c0_56] : memref<12x8x48xf32, #tpu.memory_space<vmem>>, vector<1x8x48xf32>
    %142 = vector.shape_cast %141 : vector<1x8x48xf32> to vector<8x48xf32>
    %c0_57 = arith.constant 0 : index
    %c5_58 = arith.constant 5 : index
    %143 = vector.load %arg11[%c0_57, %c5_58] : memref<48x640xf32, #tpu.memory_space<vmem>>, vector<48x512xf32>
    %cst_59 = arith.constant dense<0.000000e+00> : vector<8x512xf32>
    %144 = tpu.matmul %142, %143, %cst_59 {dimension_numbers = #tpu.dot_dimension_numbers<[1], [0], [0], [1], [0, 0, 1, 1], [], []>} : vector<8x48xf32>, vector<48x512xf32>, vector<8x512xf32> -> vector<8x512xf32>
    %145 = arith.addf %140, %144 : vector<8x512xf32>
    %c6 = arith.constant 6 : index
    %c0_60 = arith.constant 0 : index
    %c0_61 = arith.constant 0 : index
    %146 = vector.load %arg4[%c6, %c0_60, %c0_61] : memref<12x8x48xf32, #tpu.memory_space<vmem>>, vector<1x8x48xf32>
    %147 = vector.shape_cast %146 : vector<1x8x48xf32> to vector<8x48xf32>
    %c0_62 = arith.constant 0 : index
    %c6_63 = arith.constant 6 : index
    %148 = vector.load %arg11[%c0_62, %c6_63] : memref<48x640xf32, #tpu.memory_space<vmem>>, vector<48x512xf32>
    %cst_64 = arith.constant dense<0.000000e+00> : vector<8x512xf32>
    %149 = tpu.matmul %147, %148, %cst_64 {dimension_numbers = #tpu.dot_dimension_numbers<[1], [0], [0], [1], [0, 0, 1, 1], [], []>} : vector<8x48xf32>, vector<48x512xf32>, vector<8x512xf32> -> vector<8x512xf32>
    %150 = arith.addf %145, %149 : vector<8x512xf32>
    %c7 = arith.constant 7 : index
    %c0_65 = arith.constant 0 : index
    %c0_66 = arith.constant 0 : index
    %151 = vector.load %arg4[%c7, %c0_65, %c0_66] : memref<12x8x48xf32, #tpu.memory_space<vmem>>, vector<1x8x48xf32>
    %152 = vector.shape_cast %151 : vector<1x8x48xf32> to vector<8x48xf32>
    %c0_67 = arith.constant 0 : index
    %c7_68 = arith.constant 7 : index
    %153 = vector.load %arg11[%c0_67, %c7_68] : memref<48x640xf32, #tpu.memory_space<vmem>>, vector<48x512xf32>
    %cst_69 = arith.constant dense<0.000000e+00> : vector<8x512xf32>
    %154 = tpu.matmul %152, %153, %cst_69 {dimension_numbers = #tpu.dot_dimension_numbers<[1], [0], [0], [1], [0, 0, 1, 1], [], []>} : vector<8x48xf32>, vector<48x512xf32>, vector<8x512xf32> -> vector<8x512xf32>
    %155 = arith.addf %150, %154 : vector<8x512xf32>
    %c8 = arith.constant 8 : index
    %c0_70 = arith.constant 0 : index
    %c0_71 = arith.constant 0 : index
    %156 = vector.load %arg4[%c8, %c0_70, %c0_71] : memref<12x8x48xf32, #tpu.memory_space<vmem>>, vector<1x8x48xf32>
    %157 = vector.shape_cast %156 : vector<1x8x48xf32> to vector<8x48xf32>
    %c0_72 = arith.constant 0 : index
    %c8_73 = arith.constant 8 : index
    %158 = vector.load %arg11[%c0_72, %c8_73] : memref<48x640xf32, #tpu.memory_space<vmem>>, vector<48x512xf32>
    %cst_74 = arith.constant dense<0.000000e+00> : vector<8x512xf32>
    %159 = tpu.matmul %157, %158, %cst_74 {dimension_numbers = #tpu.dot_dimension_numbers<[1], [0], [0], [1], [0, 0, 1, 1], [], []>} : vector<8x48xf32>, vector<48x512xf32>, vector<8x512xf32> -> vector<8x512xf32>
    %160 = arith.addf %155, %159 : vector<8x512xf32>
    %c9 = arith.constant 9 : index
    %c0_75 = arith.constant 0 : index
    %c0_76 = arith.constant 0 : index
    %161 = vector.load %arg4[%c9, %c0_75, %c0_76] : memref<12x8x48xf32, #tpu.memory_space<vmem>>, vector<1x8x48xf32>
    %162 = vector.shape_cast %161 : vector<1x8x48xf32> to vector<8x48xf32>
    %c0_77 = arith.constant 0 : index
    %c9_78 = arith.constant 9 : index
    %163 = vector.load %arg11[%c0_77, %c9_78] : memref<48x640xf32, #tpu.memory_space<vmem>>, vector<48x512xf32>
    %cst_79 = arith.constant dense<0.000000e+00> : vector<8x512xf32>
    %164 = tpu.matmul %162, %163, %cst_79 {dimension_numbers = #tpu.dot_dimension_numbers<[1], [0], [0], [1], [0, 0, 1, 1], [], []>} : vector<8x48xf32>, vector<48x512xf32>, vector<8x512xf32> -> vector<8x512xf32>
    %165 = arith.addf %160, %164 : vector<8x512xf32>
    %c10 = arith.constant 10 : index
    %c0_80 = arith.constant 0 : index
    %c0_81 = arith.constant 0 : index
    %166 = vector.load %arg4[%c10, %c0_80, %c0_81] : memref<12x8x48xf32, #tpu.memory_space<vmem>>, vector<1x8x48xf32>
    %167 = vector.shape_cast %166 : vector<1x8x48xf32> to vector<8x48xf32>
    %c0_82 = arith.constant 0 : index
    %c10_83 = arith.constant 10 : index
    %168 = vector.load %arg11[%c0_82, %c10_83] : memref<48x640xf32, #tpu.memory_space<vmem>>, vector<48x512xf32>
    %cst_84 = arith.constant dense<0.000000e+00> : vector<8x512xf32>
    %169 = tpu.matmul %167, %168, %cst_84 {dimension_numbers = #tpu.dot_dimension_numbers<[1], [0], [0], [1], [0, 0, 1, 1], [], []>} : vector<8x48xf32>, vector<48x512xf32>, vector<8x512xf32> -> vector<8x512xf32>
    %170 = arith.addf %165, %169 : vector<8x512xf32>
    %c11 = arith.constant 11 : index
    %c0_85 = arith.constant 0 : index
    %c0_86 = arith.constant 0 : index
    %171 = vector.load %arg4[%c11, %c0_85, %c0_86] : memref<12x8x48xf32, #tpu.memory_space<vmem>>, vector<1x8x48xf32>
    %172 = vector.shape_cast %171 : vector<1x8x48xf32> to vector<8x48xf32>
    %c0_87 = arith.constant 0 : index
    %c11_88 = arith.constant 11 : index
    %173 = vector.load %arg11[%c0_87, %c11_88] : memref<48x640xf32, #tpu.memory_space<vmem>>, vector<48x512xf32>
    %cst_89 = arith.constant dense<0.000000e+00> : vector<8x512xf32>
    %174 = tpu.matmul %172, %173, %cst_89 {dimension_numbers = #tpu.dot_dimension_numbers<[1], [0], [0], [1], [0, 0, 1, 1], [], []>} : vector<8x48xf32>, vector<48x512xf32>, vector<8x512xf32> -> vector<8x512xf32>
    %175 = arith.addf %170, %174 : vector<8x512xf32>
    %cst_90 = arith.constant 0.000000e+00 : f32
    %176 = vector.broadcast %cst_90 : f32 to vector<8x512xf32>
    %177 = arith.maximumf %175, %176 : vector<8x512xf32>
    %c0_91 = arith.constant 0 : index
    %c0_92 = arith.constant 0 : index
    %178 = vector.load %arg12[%c0_91, %c0_92] : memref<8x640xf32, #tpu.memory_space<vmem>>, vector<8x512xf32>
    tpu.vector_store %arg12[%c0_91, %c0_92], %177 {strides = array<i32>} : memref<8x640xf32, #tpu.memory_space<vmem>>, vector<8x512xf32>,
    %c0_93 = arith.constant 0 : index
    %c0_94 = arith.constant 0 : index
    %179 = vector.load %arg12[%c0_93, %c0_94] : memref<8x640xf32, #tpu.memory_space<vmem>>, vector<8x512xf32>
    %c0_95 = arith.constant 0 : index
    %c1_96 = arith.constant 1 : index
    %180 = vector.load %arg12[%c0_95, %c1_96] : memref<8x640xf32, #tpu.memory_space<vmem>>, vector<8x512xf32>
    %181 = arith.maximumf %179, %180 : vector<8x512xf32>
    %c0_97 = arith.constant 0 : index
    %c2_98 = arith.constant 2 : index
    %182 = vector.load %arg12[%c0_97, %c2_98] : memref<8x640xf32, #tpu.memory_space<vmem>>, vector<8x512xf32>
    %183 = arith.maximumf %181, %182 : vector<8x512xf32>
    %c0_99 = arith.constant 0 : index
    %c3_100 = arith.constant 3 : index
    %184 = vector.load %arg12[%c0_99, %c3_100] : memref<8x640xf32, #tpu.memory_space<vmem>>, vector<8x512xf32>
    %185 = arith.maximumf %183, %184 : vector<8x512xf32>
    %c0_101 = arith.constant 0 : index
    %c4_102 = arith.constant 4 : index
    %186 = vector.load %arg12[%c0_101, %c4_102] : memref<8x640xf32, #tpu.memory_space<vmem>>, vector<8x512xf32>
    %187 = arith.maximumf %185, %186 : vector<8x512xf32>
    %c0_103 = arith.constant 0 : index
    %c5_104 = arith.constant 5 : index
    %188 = vector.load %arg12[%c0_103, %c5_104] : memref<8x640xf32, #tpu.memory_space<vmem>>, vector<8x512xf32>
    %189 = arith.maximumf %187, %188 : vector<8x512xf32>
    %c0_105 = arith.constant 0 : index
    %c6_106 = arith.constant 6 : index
    %190 = vector.load %arg12[%c0_105, %c6_106] : memref<8x640xf32, #tpu.memory_space<vmem>>, vector<8x512xf32>
    %191 = arith.maximumf %189, %190 : vector<8x512xf32>
    %c0_107 = arith.constant 0 : index
    %c7_108 = arith.constant 7 : index
    %192 = vector.load %arg12[%c0_107, %c7_108] : memref<8x640xf32, #tpu.memory_space<vmem>>, vector<8x512xf32>
    %193 = arith.maximumf %191, %192 : vector<8x512xf32>
    %c0_109 = arith.constant 0 : index
    %c8_110 = arith.constant 8 : index
    %194 = vector.load %arg12[%c0_109, %c8_110] : memref<8x640xf32, #tpu.memory_space<vmem>>, vector<8x512xf32>
    %195 = arith.maximumf %193, %194 : vector<8x512xf32>
    %c0_111 = arith.constant 0 : index
    %c9_112 = arith.constant 9 : index
    %196 = vector.load %arg12[%c0_111, %c9_112] : memref<8x640xf32, #tpu.memory_space<vmem>>, vector<8x512xf32>
    %197 = arith.maximumf %195, %196 : vector<8x512xf32>
    %c0_113 = arith.constant 0 : index
    %c10_114 = arith.constant 10 : index
    %198 = vector.load %arg12[%c0_113, %c10_114] : memref<8x640xf32, #tpu.memory_space<vmem>>, vector<8x512xf32>
    %199 = arith.maximumf %197, %198 : vector<8x512xf32>
    %c0_115 = arith.constant 0 : index
    %c11_116 = arith.constant 11 : index
    %200 = vector.load %arg12[%c0_115, %c11_116] : memref<8x640xf32, #tpu.memory_space<vmem>>, vector<8x512xf32>
    %201 = arith.maximumf %199, %200 : vector<8x512xf32>
    %c0_117 = arith.constant 0 : index
    %c12 = arith.constant 12 : index
    %202 = vector.load %arg12[%c0_117, %c12] : memref<8x640xf32, #tpu.memory_space<vmem>>, vector<8x512xf32>
    %203 = arith.maximumf %201, %202 : vector<8x512xf32>
    %c0_118 = arith.constant 0 : index
    %c13 = arith.constant 13 : index
    %204 = vector.load %arg12[%c0_118, %c13] : memref<8x640xf32, #tpu.memory_space<vmem>>, vector<8x512xf32>
    %205 = arith.maximumf %203, %204 : vector<8x512xf32>
    %c0_119 = arith.constant 0 : index
    %c14 = arith.constant 14 : index
    %206 = vector.load %arg12[%c0_119, %c14] : memref<8x640xf32, #tpu.memory_space<vmem>>, vector<8x512xf32>
    %207 = arith.maximumf %205, %206 : vector<8x512xf32>
    %c0_120 = arith.constant 0 : index
    %c15 = arith.constant 15 : index
    %208 = vector.load %arg12[%c0_120, %c15] : memref<8x640xf32, #tpu.memory_space<vmem>>, vector<8x512xf32>
    %209 = arith.maximumf %207, %208 : vector<8x512xf32>
    %c0_121 = arith.constant 0 : index
    %c16_122 = arith.constant 16 : index
    %210 = vector.load %arg12[%c0_121, %c16_122] : memref<8x640xf32, #tpu.memory_space<vmem>>, vector<8x512xf32>
    %211 = arith.maximumf %209, %210 : vector<8x512xf32>
    %c0_123 = arith.constant 0 : index
    %c17 = arith.constant 17 : index
    %212 = vector.load %arg12[%c0_123, %c17] : memref<8x640xf32, #tpu.memory_space<vmem>>, vector<8x512xf32>
    %213 = arith.maximumf %211, %212 : vector<8x512xf32>
    %c0_124 = arith.constant 0 : index
    %c18 = arith.constant 18 : index
    %214 = vector.load %arg12[%c0_124, %c18] : memref<8x640xf32, #tpu.memory_space<vmem>>, vector<8x512xf32>
    %215 = arith.maximumf %213, %214 : vector<8x512xf32>
    %c0_125 = arith.constant 0 : index
    %c19 = arith.constant 19 : index
    %216 = vector.load %arg12[%c0_125, %c19] : memref<8x640xf32, #tpu.memory_space<vmem>>, vector<8x512xf32>
    %217 = arith.maximumf %215, %216 : vector<8x512xf32>
    %c0_126 = arith.constant 0 : index
    %c20 = arith.constant 20 : index
    %218 = vector.load %arg12[%c0_126, %c20] : memref<8x640xf32, #tpu.memory_space<vmem>>, vector<8x512xf32>
    %219 = arith.maximumf %217, %218 : vector<8x512xf32>
    %c0_127 = arith.constant 0 : index
    %c21 = arith.constant 21 : index
    %220 = vector.load %arg12[%c0_127, %c21] : memref<8x640xf32, #tpu.memory_space<vmem>>, vector<8x512xf32>
    %221 = arith.maximumf %219, %220 : vector<8x512xf32>
    %c0_128 = arith.constant 0 : index
    %c22 = arith.constant 22 : index
    %222 = vector.load %arg12[%c0_128, %c22] : memref<8x640xf32, #tpu.memory_space<vmem>>, vector<8x512xf32>
    %223 = arith.maximumf %221, %222 : vector<8x512xf32>
    %c0_129 = arith.constant 0 : index
    %c23 = arith.constant 23 : index
    %224 = vector.load %arg12[%c0_129, %c23] : memref<8x640xf32, #tpu.memory_space<vmem>>, vector<8x512xf32>
    %225 = arith.maximumf %223, %224 : vector<8x512xf32>
    %c0_130 = arith.constant 0 : index
    %c0_131 = arith.constant 0 : index
    %226 = vector.load %arg13[%c0_130, %c0_131] : memref<8x512xf32, #tpu.memory_space<vmem>>, vector<8x512xf32>
    tpu.vector_store %arg13[%c0_130, %c0_131], %225 {strides = array<i32>} : memref<8x512xf32, #tpu.memory_space<vmem>>, vector<8x512xf32>,
    %c0_132 = arith.constant 0 : index
    %c0_133 = arith.constant 0 : index
    %227 = vector.load %arg13[%c0_132, %c0_133] : memref<8x512xf32, #tpu.memory_space<vmem>>, vector<1x256xf32>
    %c0_134 = arith.constant 0 : index
    %c0_135 = arith.constant 0 : index
    %228 = vector.load %arg14[%c0_134, %c0_135] : memref<2x1280xf32, #tpu.memory_space<vmem>>, vector<1x256xf32>
    tpu.vector_store %arg14[%c0_134, %c0_135], %227 {strides = array<i32>} : memref<2x1280xf32, #tpu.memory_space<vmem>>, vector<1x256xf32>,
    %c1_136 = arith.constant 1 : index
    %c0_137 = arith.constant 0 : index
    %229 = vector.load %arg13[%c1_136, %c0_137] : memref<8x512xf32, #tpu.memory_space<vmem>>, vector<1x256xf32>
    %c0_138 = arith.constant 0 : index
    %c256_139 = arith.constant 256 : index
    %230 = vector.load %arg14[%c0_138, %c256_139] : memref<2x1280xf32, #tpu.memory_space<vmem>>, vector<1x256xf32>
    tpu.vector_store %arg14[%c0_138, %c256_139], %229 {strides = array<i32>} : memref<2x1280xf32, #tpu.memory_space<vmem>>, vector<1x256xf32>,
    %c2_140 = arith.constant 2 : index
    %c0_141 = arith.constant 0 : index
    %231 = vector.load %arg13[%c2_140, %c0_141] : memref<8x512xf32, #tpu.memory_space<vmem>>, vector<1x256xf32>
    %c0_142 = arith.constant 0 : index
    %c512_143 = arith.constant 512 : index
    %232 = vector.load %arg14[%c0_142, %c512_143] : memref<2x1280xf32, #tpu.memory_space<vmem>>, vector<1x256xf32>
    tpu.vector_store %arg14[%c0_142, %c512_143], %231 {strides = array<i32>} : memref<2x1280xf32, #tpu.memory_space<vmem>>, vector<1x256xf32>,
    %c3_144 = arith.constant 3 : index
    %c0_145 = arith.constant 0 : index
    %233 = vector.load %arg13[%c3_144, %c0_145] : memref<8x512xf32, #tpu.memory_space<vmem>>, vector<1x256xf32>
    %c0_146 = arith.constant 0 : index
    %c768 = arith.constant 768 : index
    %234 = vector.load %arg14[%c0_146, %c768] : memref<2x1280xf32, #tpu.memory_space<vmem>>, vector<1x256xf32>
    tpu.vector_store %arg14[%c0_146, %c768], %233 {strides = array<i32>} : memref<2x1280xf32, #tpu.memory_space<vmem>>, vector<1x256xf32>,
    %c4_147 = arith.constant 4 : index
    %c0_148 = arith.constant 0 : index
    %235 = vector.load %arg13[%c4_147, %c0_148] : memref<8x512xf32, #tpu.memory_space<vmem>>, vector<1x256xf32>
    %c0_149 = arith.constant 0 : index
    %c1024 = arith.constant 1024 : index
    %236 = vector.load %arg14[%c0_149, %c1024] : memref<2x1280xf32, #tpu.memory_space<vmem>>, vector<1x256xf32>
    tpu.vector_store %arg14[%c0_149, %c1024], %235 {strides = array<i32>} : memref<2x1280xf32, #tpu.memory_space<vmem>>, vector<1x256xf32>,
    %c0_150 = arith.constant 0 : index
    %c256_151 = arith.constant 256 : index
    %237 = vector.load %arg13[%c0_150, %c256_151] : memref<8x512xf32, #tpu.memory_space<vmem>>, vector<1x256xf32>
    %c1_152 = arith.constant 1 : index
    %c0_153 = arith.constant 0 : index
    %238 = vector.load %arg14[%c1_152, %c0_153] : memref<2x1280xf32, #tpu.memory_space<vmem>>, vector<1x256xf32>
    tpu.vector_store %arg14[%c1_152, %c0_153], %237 {strides = array<i32>} : memref<2x1280xf32, #tpu.memory_space<vmem>>, vector<1x256xf32>,
    %c1_154 = arith.constant 1 : index
    %c256_155 = arith.constant 256 : index
    %239 = vector.load %arg13[%c1_154, %c256_155] : memref<8x512xf32, #tpu.memory_space<vmem>>, vector<1x256xf32>
    %c1_156 = arith.constant 1 : index
    %c256_157 = arith.constant 256 : index
    %240 = vector.load %arg14[%c1_156, %c256_157] : memref<2x1280xf32, #tpu.memory_space<vmem>>, vector<1x256xf32>
    tpu.vector_store %arg14[%c1_156, %c256_157], %239 {strides = array<i32>} : memref<2x1280xf32, #tpu.memory_space<vmem>>, vector<1x256xf32>,
    %c2_158 = arith.constant 2 : index
    %c256_159 = arith.constant 256 : index
    %241 = vector.load %arg13[%c2_158, %c256_159] : memref<8x512xf32, #tpu.memory_space<vmem>>, vector<1x256xf32>
    %c1_160 = arith.constant 1 : index
    %c512_161 = arith.constant 512 : index
    %242 = vector.load %arg14[%c1_160, %c512_161] : memref<2x1280xf32, #tpu.memory_space<vmem>>, vector<1x256xf32>
    tpu.vector_store %arg14[%c1_160, %c512_161], %241 {strides = array<i32>} : memref<2x1280xf32, #tpu.memory_space<vmem>>, vector<1x256xf32>,
    %c3_162 = arith.constant 3 : index
    %c256_163 = arith.constant 256 : index
    %243 = vector.load %arg13[%c3_162, %c256_163] : memref<8x512xf32, #tpu.memory_space<vmem>>, vector<1x256xf32>
    %c1_164 = arith.constant 1 : index
    %c768_165 = arith.constant 768 : index
    %244 = vector.load %arg14[%c1_164, %c768_165] : memref<2x1280xf32, #tpu.memory_space<vmem>>, vector<1x256xf32>
    tpu.vector_store %arg14[%c1_164, %c768_165], %243 {strides = array<i32>} : memref<2x1280xf32, #tpu.memory_space<vmem>>, vector<1x256xf32>,
    %c4_166 = arith.constant 4 : index
    %c256_167 = arith.constant 256 : index
    %245 = vector.load %arg13[%c4_166, %c256_167] : memref<8x512xf32, #tpu.memory_space<vmem>>, vector<1x256xf32>
    %c1_168 = arith.constant 1 : index
    %c1024_169 = arith.constant 1024 : index
    %246 = vector.load %arg14[%c1_168, %c1024_169] : memref<2x1280xf32, #tpu.memory_space<vmem>>, vector<1x256xf32>
    tpu.vector_store %arg14[%c1_168, %c1024_169], %245 {strides = array<i32>} : memref<2x1280xf32, #tpu.memory_space<vmem>>, vector<1x256xf32>,
    %c0_170 = arith.constant 0 : index
    %c0_171 = arith.constant 0 : index
    %247 = vector.load %arg14[%c0_170, %c0_171] : memref<2x1280xf32, #tpu.memory_space<vmem>>, vector<2x1280xf32>
    %c0_172 = arith.constant 0 : index
    %c0_173 = arith.constant 0 : index
    %248 = vector.load %arg6[%c0_172, %c0_173] : memref<1280x32xf32, #tpu.memory_space<vmem>>, vector<1280x32xf32>
    %cst_174 = arith.constant dense<0.000000e+00> : vector<2x32xf32>
    %249 = tpu.matmul %247, %248, %cst_174 {dimension_numbers = #tpu.dot_dimension_numbers<[1], [0], [0], [1], [0, 0, 1, 1], [], []>} : vector<2x1280xf32>, vector<1280x32xf32>, vector<2x32xf32> -> vector<2x32xf32>
    %c0_175 = arith.constant 0 : index
    %c0_176 = arith.constant 0 : index
    %250 = vector.load %arg7[%c0_175, %c0_176] : memref<1x32xf32, #tpu.memory_space<vmem>>, vector<1x32xf32>
    %251 = vector.broadcast %250 : vector<1x32xf32> to vector<2x32xf32>
    %252 = arith.addf %249, %251 : vector<2x32xf32>
    %253 = tpu.iota {dimensions = array<i32: 1>} : vector<2x32xi32>
    %c25_i32 = arith.constant 25 : i32
    %254 = vector.broadcast %c25_i32 : i32 to vector<2x32xi32>
    %255 = arith.cmpi slt, %253, %254 : vector<2x32xi32>
    %cst_177 = arith.constant -1.000000e+30 : f32
    %256 = vector.broadcast %cst_177 : f32 to vector<2x32xf32>
    %257 = arith.select %255, %252, %256 : vector<2x32xi1>, vector<2x32xf32>
    %cst_178 = arith.constant dense<0xFF800000> : vector<2xf32>
    %258 = vector.multi_reduction <maximumf>, %257, %cst_178 [1] : vector<2x32xf32> to vector<2xf32>
    %259 = vector.shape_cast %258 : vector<2xf32> to vector<2x1xf32>
    %260 = vector.broadcast %259 : vector<2x1xf32> to vector<2x32xf32>
    %261 = arith.subf %257, %260 : vector<2x32xf32>
    %262 = math.exp %261 : vector<2x32xf32>
    %cst_179 = arith.constant dense<0.000000e+00> : vector<2xf32>
    %263 = vector.multi_reduction <add>, %262, %cst_179 [1] : vector<2x32xf32> to vector<2xf32>
    %264 = vector.shape_cast %263 : vector<2xf32> to vector<2x1xf32>
    %265 = tpu.reciprocal %264 {approx = true} : vector<2x1xf32> -> vector<2x1xf32>
    %266 = vector.broadcast %265 : vector<2x1xf32> to vector<2x32xf32>
    %267 = arith.mulf %262, %266 : vector<2x32xf32>
    %c0_180 = arith.constant 0 : index
    %c0_181 = arith.constant 0 : index
    %268 = vector.load %arg8[%c0_180, %c0_181] : memref<1x32xf32, #tpu.memory_space<vmem>>, vector<1x32xf32>
    %269 = vector.broadcast %268 : vector<1x32xf32> to vector<2x32xf32>
    %270 = arith.mulf %267, %269 : vector<2x32xf32>
    %cst_182 = arith.constant dense<0.000000e+00> : vector<2xf32>
    %271 = vector.multi_reduction <add>, %270, %cst_182 [1] : vector<2x32xf32> to vector<2xf32>
    %272 = vector.shape_cast %271 : vector<2xf32> to vector<2x1xf32>
    %c0_183 = arith.constant 0 : index
    %c0_184 = arith.constant 0 : index
    %273 = vector.load %arg9[%c0_183, %c0_184] : memref<1x1xf32, #tpu.memory_space<vmem>>, vector<1x1xf32>
    %274 = vector.broadcast %273 : vector<1x1xf32> to vector<2x1xf32>
    %275 = arith.addf %272, %274 : vector<2x1xf32>
    %276 = vector.shape_cast %275 : vector<2x1xf32> to vector<2x1xf32>
    %277 = vector.broadcast %276 : vector<2x1xf32> to vector<2x128xf32>
    %c0_185 = arith.constant 0 : index
    %c0_186 = arith.constant 0 : index
    %278 = vector.load %arg10[%c0_185, %c0_186] : memref<2x128xf32, #tpu.memory_space<vmem>>, vector<2x128xf32>
    tpu.vector_store %arg10[%c0_185, %c0_186], %277 {strides = array<i32>} : memref<2x128xf32, #tpu.memory_space<vmem>>, vector<2x128xf32>,
    return
  }
  func.func @transform_0(%arg0: i32) -> (i32, i32, i32) {
    %c0_i32 = arith.constant 0 : i32
    %c0_i32_0 = arith.constant 0 : i32
    %c0_i32_1 = arith.constant 0 : i32
    return %arg0, %c0_i32, %c0_i32_0 : i32, i32, i32
  }
  func.func @transform_1(%arg0: i32) -> (i32, i32) {
    %c0_i32 = arith.constant 0 : i32
    %c0_i32_0 = arith.constant 0 : i32
    %c0_i32_1 = arith.constant 0 : i32
    return %c0_i32, %c0_i32_0 : i32, i32
  }
  func.func @transform_2(%arg0: i32) -> (i32, i32) {
    %c0_i32 = arith.constant 0 : i32
    %c0_i32_0 = arith.constant 0 : i32
    %c0_i32_1 = arith.constant 0 : i32
    return %c0_i32, %c0_i32_0 : i32, i32
  }
  func.func @transform_3(%arg0: i32) -> (i32, i32, i32) {
    %c0_i32 = arith.constant 0 : i32
    %c0_i32_0 = arith.constant 0 : i32
    %c0_i32_1 = arith.constant 0 : i32
    %c0_i32_2 = arith.constant 0 : i32
    return %c0_i32, %c0_i32_0, %c0_i32_1 : i32, i32, i32
  }
  func.func @transform_4(%arg0: i32) -> (i32, i32) {
    %c0_i32 = arith.constant 0 : i32
    %c0_i32_0 = arith.constant 0 : i32
    %c0_i32_1 = arith.constant 0 : i32
    return %c0_i32, %c0_i32_0 : i32, i32
  }
  func.func @transform_5(%arg0: i32) -> (i32, i32) {
    %c0_i32 = arith.constant 0 : i32
    %c0_i32_0 = arith.constant 0 : i32
    %c0_i32_1 = arith.constant 0 : i32
    return %c0_i32, %c0_i32_0 : i32, i32
  }
  func.func @transform_6(%arg0: i32) -> (i32, i32) {
    %c0_i32 = arith.constant 0 : i32
    %c0_i32_0 = arith.constant 0 : i32
    %c0_i32_1 = arith.constant 0 : i32
    return %c0_i32, %c0_i32_0 : i32, i32
  }
  func.func @transform_7(%arg0: i32) -> (i32, i32) {
    %c0_i32 = arith.constant 0 : i32
    %c0_i32_0 = arith.constant 0 : i32
    %c0_i32_1 = arith.constant 0 : i32
    return %c0_i32, %c0_i32_0 : i32, i32
  }
  func.func @transform_8(%arg0: i32) -> (i32, i32) {
    %c0_i32 = arith.constant 0 : i32
    %c0_i32_0 = arith.constant 0 : i32
    %c0_i32_1 = arith.constant 0 : i32
    return %c0_i32, %c0_i32_0 : i32, i32
  }
  func.func @transform_9(%arg0: i32) -> (i32, i32) {
    %c0_i32 = arith.constant 0 : i32
    %c0_i32_0 = arith.constant 0 : i32
    return %arg0, %c0_i32 : i32, i32
  }
}

</mosaic_0001>

<llo_original>
// kernel: tile.8
$region0: #{tile.8}
  #allocation0 [shape = 's32[1]{0}', space=sflag, size = 0x4, scoped, tag = 'scoped memory for tile.8']
  %s0 = inlined_call_operand.vmem [shape: f32[16], index: 0, kind: input, shape index: {}]
  %s1 = inlined_call_operand.vmem [shape: f32[9,16], index: 1, kind: output, shape index: {}]
  // Predicated region
  $region2: #{tile.8} parent=0 // pred_check
    _
  $region3: #{tile.8} parent=0 // pred_check_branch
    %3 = sbr.rel (0) target = $region5
  $region4: #{tile.8} parent=0 // pred_region
    _
  $region5: #{tile.8} parent=0 // pred_fallthru
    _
  %v4 = vld [vmem:[%s0] ss:$0 sm:$0xff]
  %5 = vst [vmem:[%s1] sm:$0xff] %v4
  %s6 = scalar_lea.vmem %s1, 8
  %7 = vst [vmem:[%s6] sm:$0xff] %v4

// kernel: tile.0
$region0: #{tile.0}
  %s0 = inlined_call_operand.vmem [shape: f32[9,16], index: 0, kind: input, shape index: {}]
  %s1 = inlined_call_operand.vmem [shape: f32[144,1], index: 1, kind: output, shape index: {}]
  %v2 = vld [vmem:[%s0] sm:$0xff]
  %vm3 = vcmask 7168
  %4 = vst.msk [vmem:[%s1] ss:$16 sm:$0x3] %vm3, %v2
  %5 = vst.msk [vmem:[%s1] ss:$16 sm:$0xc] %vm3, %v2
  %6 = vst.msk [vmem:[%s1] ss:$16 sm:$0x30] %vm3, %v2
  %7 = vst.msk [vmem:[%s1] ss:$16 sm:$0xc0] %vm3, %v2
  %s8 = scalar_lea.vmem %s0, 8
  %v9 = vld [vmem:[%s8] sm:$0x1]
  %vm10 = vcmask 7168
  %s11 = scalar_lea.vmem %s1, 128
  %12 = vst.msk [vmem:[%s11] sm:$0x1] %vm10, %v9
  %v13 = vld [vmem:[%s0] sm:$0xff]
  %14 = vrot.lane.b32.xlu0 %v13, 127
  %v15 = vpop.permute.xlu0 %14
  %vm16 = vcmask 7168
  %s17 = scalar_lea.vmem %s1, 1
  %18 = vst.msk [vmem:[%s17] ss:$16 sm:$0x3] %vm16, %v15
  %s19 = scalar_lea.vmem %s1, 1
  %20 = vst.msk [vmem:[%s19] ss:$16 sm:$0xc] %vm16, %v15
  %s21 = scalar_lea.vmem %s1, 1
  %22 = vst.msk [vmem:[%s21] ss:$16 sm:$0x30] %vm16, %v15
  %s23 = scalar_lea.vmem %s1, 1
  %24 = vst.msk [vmem:[%s23] ss:$16 sm:$0xc0] %vm16, %v15
  %s25 = scalar_lea.vmem %s0, 8
  %v26 = vld [vmem:[%s25] sm:$0x1]
  %27 = vrot.lane.b32.xlu0 %v26, 127
  %v28 = vpop.permute.xlu0 %27
  %vm29 = vcmask 7168
  %s30 = scalar_lea.vmem %s1, 129
  %31 = vst.msk [vmem:[%s30] sm:$0x1] %vm29, %v28
  %v32 = vld [vmem:[%s0] sm:$0xff]
  %33 = vrot.lane.b32.xlu0 %v32, 126
  %v34 = vpop.permute.xlu0 %33
  %vm35 = vcmask 7168
  %s36 = scalar_lea.vmem %s1, 2
  %37 = vst.msk [vmem:[%s36] ss:$16 sm:$0x3] %vm35, %v34
  %s38 = scalar_lea.vmem %s1, 2
  %39 = vst.msk [vmem:[%s38] ss:$16 sm:$0xc] %vm35, %v34
  %s40 = scalar_lea.vmem %s1, 2
  %41 = vst.msk [vmem:[%s40] ss:$16 sm:$0x30] %vm35, %v34
  %s42 = scalar_lea.vmem %s1, 2
  %43 = vst.msk [vmem:[%s42] ss:$16 sm:$0xc0] %vm35, %v34
  %s44 = scalar_lea.vmem %s0, 8
  %v45 = vld [vmem:[%s44] sm:$0x1]
  %46 = vrot.lane.b32.xlu0 %v45, 126
  %v47 = vpop.permute.xlu0 %46
  %vm48 = vcmask 7168
  %s49 = scalar_lea.vmem %s1, 130
  %50 = vst.msk [vmem:[%s49] sm:$0x1] %vm48, %v47
  %v51 = vld [vmem:[%s0] sm:$0xff]
  %52 = vrot.lane.b32.xlu0 %v51, 125
  %v53 = vpop.permute.xlu0 %52
  %vm54 = vcmask 7168
  %s55 = scalar_lea.vmem %s1, 3
  %56 = vst.msk [vmem:[%s55] ss:$16 sm:$0x3] %vm54, %v53
  %s57 = scalar_lea.vmem %s1, 3
  %58 = vst.msk [vmem:[%s57] ss:$16 sm:$0xc] %vm54, %v53
  %s59 = scalar_lea.vmem %s1, 3
  %60 = vst.msk [vmem:[%s59] ss:$16 sm:$0x30] %vm54, %v53
  %s61 = scalar_lea.vmem %s1, 3
  %62 = vst.msk [vmem:[%s61] ss:$16 sm:$0xc0] %vm54, %v53
  %s63 = scalar_lea.vmem %s0, 8
  %v64 = vld [vmem:[%s63] sm:$0x1]
  %65 = vrot.lane.b32.xlu0 %v64, 125
  %v66 = vpop.permute.xlu0 %65
  %vm67 = vcmask 7168
  %s68 = scalar_lea.vmem %s1, 131
  %69 = vst.msk [vmem:[%s68] sm:$0x1] %vm67, %v66
  %v70 = vld [vmem:[%s0] sm:$0xff]
  %71 = vrot.lane.b32.xlu0 %v70, 124
  %v72 = vpop.permute.xlu0 %71
  %vm73 = vcmask 7168
  %s74 = scalar_lea.vmem %s1, 4
  %75 = vst.msk [vmem:[%s74] ss:$16 sm:$0x3] %vm73, %v72
  %s76 = scalar_lea.vmem %s1, 4
  %77 = vst.msk [vmem:[%s76] ss:$16 sm:$0xc] %vm73, %v72
  %s78 = scalar_lea.vmem %s1, 4
  %79 = vst.msk [vmem:[%s78] ss:$16 sm:$0x30] %vm73, %v72
  %s80 = scalar_lea.vmem %s1, 4
  %81 = vst.msk [vmem:[%s80] ss:$16 sm:$0xc0] %vm73, %v72
  %s82 = scalar_lea.vmem %s0, 8
  %v83 = vld [vmem:[%s82] sm:$0x1]
  %84 = vrot.lane.b32.xlu0 %v83, 124
  %v85 = vpop.permute.xlu0 %84
  %vm86 = vcmask 7168
  %s87 = scalar_lea.vmem %s1, 132
  %88 = vst.msk [vmem:[%s87] sm:$0x1] %vm86, %v85
  %v89 = vld [vmem:[%s0] sm:$0xff]
  %90 = vrot.lane.b32.xlu0 %v89, 123
  %v91 = vpop.permute.xlu0 %90
  %vm92 = vcmask 7168
  %s93 = scalar_lea.vmem %s1, 5
  %94 = vst.msk [vmem:[%s93] ss:$16 sm:$0x3] %vm92, %v91
  %s95 = scalar_lea.vmem %s1, 5
  %96 = vst.msk [vmem:[%s95] ss:$16 sm:$0xc] %vm92, %v91
  %s97 = scalar_lea.vmem %s1, 5
  %98 = vst.msk [vmem:[%s97] ss:$16 sm:$0x30] %vm92, %v91
  %s99 = scalar_lea.vmem %s1, 5
  %100 = vst.msk [vmem:[%s99] ss:$16 sm:$0xc0] %vm92, %v91
  %s101 = scalar_lea.vmem %s0, 8
  %v102 = vld [vmem:[%s101] sm:$0x1]
  %103 = vrot.lane.b32.xlu0 %v102, 123
  %v104 = vpop.permute.xlu0 %103
  %vm105 = vcmask 7168
  %s106 = scalar_lea.vmem %s1, 133
  %107 = vst.msk [vmem:[%s106] sm:$0x1] %vm105, %v104
  %v108 = vld [vmem:[%s0] sm:$0xff]
  %109 = vrot.lane.b32.xlu0 %v108, 122
  %v110 = vpop.permute.xlu0 %109
  %vm111 = vcmask 7168
  %s112 = scalar_lea.vmem %s1, 6
  %113 = vst.msk [vmem:[%s112] ss:$16 sm:$0x3] %vm111, %v110
  %s114 = scalar_lea.vmem %s1, 6
  %115 = vst.msk [vmem:[%s114] ss:$16 sm:$0xc] %vm111, %v110
  %s116 = scalar_lea.vmem %s1, 6
  %117 = vst.msk [vmem:[%s116] ss:$16 sm:$0x30] %vm111, %v110
  %s118 = scalar_lea.vmem %s1, 6
  %119 = vst.msk [vmem:[%s118] ss:$16 sm:$0xc0] %vm111, %v110
  %s120 = scalar_lea.vmem %s0, 8
  %v121 = vld [vmem:[%s120] sm:$0x1]
  %122 = vrot.lane.b32.xlu0 %v121, 122
  %v123 = vpop.permute.xlu0 %122
  %vm124 = vcmask 7168
  %s125 = scalar_lea.vmem %s1, 134
  %126 = vst.msk [vmem:[%s125] sm:$0x1] %vm124, %v123
  %v127 = vld [vmem:[%s0] sm:$0xff]
  %128 = vrot.lane.b32.xlu0 %v127, 121
  %v129 = vpop.permute.xlu0 %128
  %vm130 = vcmask 7168
  %s131 = scalar_lea.vmem %s1, 7
  %132 = vst.msk [vmem:[%s131] ss:$16 sm:$0x3] %vm130, %v129
  %s133 = scalar_lea.vmem %s1, 7
  %134 = vst.msk [vmem:[%s133] ss:$16 sm:$0xc] %vm130, %v129
  %s135 = scalar_lea.vmem %s1, 7
  %136 = vst.msk [vmem:[%s135] ss:$16 sm:$0x30] %vm130, %v129
  %s137 = scalar_lea.vmem %s1, 7
  %138 = vst.msk [vmem:[%s137] ss:$16 sm:$0xc0] %vm130, %v129
  %s139 = scalar_lea.vmem %s0, 8
  %v140 = vld [vmem:[%s139] sm:$0x1]
  %141 = vrot.lane.b32.xlu0 %v140, 121
  %v142 = vpop.permute.xlu0 %141
  %vm143 = vcmask 7168
  %s144 = scalar_lea.vmem %s1, 135
  %145 = vst.msk [vmem:[%s144] sm:$0x1] %vm143, %v142
  %v146 = vld [vmem:[%s0] sm:$0xff]
  %147 = vrot.lane.b32.xlu0 %v146, 120
  %v148 = vpop.permute.xlu0 %147
  %vm149 = vcmask 7168
  %s150 = scalar_lea.vmem %s1, 8
  %151 = vst.msk [vmem:[%s150] ss:$16 sm:$0x3] %vm149, %v148
  %s152 = scalar_lea.vmem %s1, 8
  %153 = vst.msk [vmem:[%s152] ss:$16 sm:$0xc] %vm149, %v148
  %s154 = scalar_lea.vmem %s1, 8
  %155 = vst.msk [vmem:[%s154] ss:$16 sm:$0x30] %vm149, %v148
  %s156 = scalar_lea.vmem %s1, 8
  %157 = vst.msk [vmem:[%s156] ss:$16 sm:$0xc0] %vm149, %v148
  %s158 = scalar_lea.vmem %s0, 8
  %v159 = vld [vmem:[%s158] sm:$0x1]
  %160 = vrot.lane.b32.xlu0 %v159, 120
  %v161 = vpop.permute.xlu0 %160
  %vm162 = vcmask 7168
  %s163 = scalar_lea.vmem %s1, 136
  %164 = vst.msk [vmem:[%s163] sm:$0x1] %vm162, %v161
  %v165 = vld [vmem:[%s0] sm:$0xff]
  %166 = vrot.lane.b32.xlu0 %v165, 119
  %v167 = vpop.permute.xlu0 %166
  %vm168 = vcmask 7168
  %s169 = scalar_lea.vmem %s1, 9
  %170 = vst.msk [vmem:[%s169] ss:$16 sm:$0x3] %vm168, %v167
  %s171 = scalar_lea.vmem %s1, 9
  %172 = vst.msk [vmem:[%s171] ss:$16 sm:$0xc] %vm168, %v167
  %s173 = scalar_lea.vmem %s1, 9
  %174 = vst.msk [vmem:[%s173] ss:$16 sm:$0x30] %vm168, %v167
  %s175 = scalar_lea.vmem %s1, 9
  %176 = vst.msk [vmem:[%s175] ss:$16 sm:$0xc0] %vm168, %v167
  %s177 = scalar_lea.vmem %s0, 8
  %v178 = vld [vmem:[%s177] sm:$0x1]
  %179 = vrot.lane.b32.xlu0 %v178, 119
  %v180 = vpop.permute.xlu0 %179
  %vm181 = vcmask 7168
  %s182 = scalar_lea.vmem %s1, 137
  %183 = vst.msk [vmem:[%s182] sm:$0x1] %vm181, %v180
  %v184 = vld [vmem:[%s0] sm:$0xff]
  %185 = vrot.lane.b32.xlu0 %v184, 118
  %v186 = vpop.permute.xlu0 %185
  %vm187 = vcmask 7168
  %s188 = scalar_lea.vmem %s1, 10
  %189 = vst.msk [vmem:[%s188] ss:$16 sm:$0x3] %vm187, %v186
  %s190 = scalar_lea.vmem %s1, 10
  %191 = vst.msk [vmem:[%s190] ss:$16 sm:$0xc] %vm187, %v186
  %s192 = scalar_lea.vmem %s1, 10
  %193 = vst.msk [vmem:[%s192] ss:$16 sm:$0x30] %vm187, %v186
  %s194 = scalar_lea.vmem %s1, 10
  %195 = vst.msk [vmem:[%s194] ss:$16 sm:$0xc0] %vm187, %v186
  %s196 = scalar_lea.vmem %s0, 8
  %v197 = vld [vmem:[%s196] sm:$0x1]
  %198 = vrot.lane.b32.xlu0 %v197, 118
  %v199 = vpop.permute.xlu0 %198
  %vm200 = vcmask 7168
  %s201 = scalar_lea.vmem %s1, 138
  %202 = vst.msk [vmem:[%s201] sm:$0x1] %vm200, %v199
  %v203 = vld [vmem:[%s0] sm:$0xff]
  %204 = vrot.lane.b32.xlu0 %v203, 117
  %v205 = vpop.permute.xlu0 %204
  %vm206 = vcmask 7168
  %s207 = scalar_lea.vmem %s1, 11
  %208 = vst.msk [vmem:[%s207] ss:$16 sm:$0x3] %vm206, %v205
  %s209 = scalar_lea.vmem %s1, 11
  %210 = vst.msk [vmem:[%s209] ss:$16 sm:$0xc] %vm206, %v205
  %s211 = scalar_lea.vmem %s1, 11
  %212 = vst.msk [vmem:[%s211] ss:$16 sm:$0x30] %vm206, %v205
  %s213 = scalar_lea.vmem %s1, 11
  %214 = vst.msk [vmem:[%s213] ss:$16 sm:$0xc0] %vm206, %v205
  %s215 = scalar_lea.vmem %s0, 8
  %v216 = vld [vmem:[%s215] sm:$0x1]
  %217 = vrot.lane.b32.xlu0 %v216, 117
  %v218 = vpop.permute.xlu0 %217
  %vm219 = vcmask 7168
  %s220 = scalar_lea.vmem %s1, 139
  %221 = vst.msk [vmem:[%s220] sm:$0x1] %vm219, %v218
  %v222 = vld [vmem:[%s0] sm:$0xff]
  %223 = vrot.lane.b32.xlu0 %v222, 116
  %v224 = vpop.permute.xlu0 %223
  %vm225 = vcmask 7168
  %s226 = scalar_lea.vmem %s1, 12
  %227 = vst.msk [vmem:[%s226] ss:$16 sm:$0x3] %vm225, %v224
  %s228 = scalar_lea.vmem %s1, 12
  %229 = vst.msk [vmem:[%s228] ss:$16 sm:$0xc] %vm225, %v224
  %s230 = scalar_lea.vmem %s1, 12
  %231 = vst.msk [vmem:[%s230] ss:$16 sm:$0x30] %vm225, %v224
  %s232 = scalar_lea.vmem %s1, 12
  %233 = vst.msk [vmem:[%s232] ss:$16 sm:$0xc0] %vm225, %v224
  %s234 = scalar_lea.vmem %s0, 8
  %v235 = vld [vmem:[%s234] sm:$0x1]
  %236 = vrot.lane.b32.xlu0 %v235, 116
  %v237 = vpop.permute.xlu0 %236
  %vm238 = vcmask 7168
  %s239 = scalar_lea.vmem %s1, 140
  %240 = vst.msk [vmem:[%s239] sm:$0x1] %vm238, %v237
  %v241 = vld [vmem:[%s0] sm:$0xff]
  %242 = vrot.lane.b32.xlu0 %v241, 115
  %v243 = vpop.permute.xlu0 %242
  %vm244 = vcmask 7168
  %s245 = scalar_lea.vmem %s1, 13
  %246 = vst.msk [vmem:[%s245] ss:$16 sm:$0x3] %vm244, %v243
  %s247 = scalar_lea.vmem %s1, 13
  %248 = vst.msk [vmem:[%s247] ss:$16 sm:$0xc] %vm244, %v243
  %s249 = scalar_lea.vmem %s1, 13
  %250 = vst.msk [vmem:[%s249] ss:$16 sm:$0x30] %vm244, %v243
  %s251 = scalar_lea.vmem %s1, 13
  %252 = vst.msk [vmem:[%s251] ss:$16 sm:$0xc0] %vm244, %v243
  %s253 = scalar_lea.vmem %s0, 8
  %v254 = vld [vmem:[%s253] sm:$0x1]
  %255 = vrot.lane.b32.xlu0 %v254, 115
  %v256 = vpop.permute.xlu0 %255
  %vm257 = vcmask 7168
  %s258 = scalar_lea.vmem %s1, 141
  %259 = vst.msk [vmem:[%s258] sm:$0x1] %vm257, %v256
  %v260 = vld [vmem:[%s0] sm:$0xff]
  %261 = vrot.lane.b32.xlu0 %v260, 114
  %v262 = vpop.permute.xlu0 %261
  %vm263 = vcmask 7168
  %s264 = scalar_lea.vmem %s1, 14
  %265 = vst.msk [vmem:[%s264] ss:$16 sm:$0x3] %vm263, %v262
  %s266 = scalar_lea.vmem %s1, 14
  %267 = vst.msk [vmem:[%s266] ss:$16 sm:$0xc] %vm263, %v262
  %s268 = scalar_lea.vmem %s1, 14
  %269 = vst.msk [vmem:[%s268] ss:$16 sm:$0x30] %vm263, %v262
  %s270 = scalar_lea.vmem %s1, 14
  %271 = vst.msk [vmem:[%s270] ss:$16 sm:$0xc0] %vm263, %v262
  %s272 = scalar_lea.vmem %s0, 8
  %v273 = vld [vmem:[%s272] sm:$0x1]
  %274 = vrot.lane.b32.xlu0 %v273, 114
  %v275 = vpop.permute.xlu0 %274
  %vm276 = vcmask 7168
  %s277 = scalar_lea.vmem %s1, 142
  %278 = vst.msk [vmem:[%s277] sm:$0x1] %vm276, %v275
  %v279 = vld [vmem:[%s0] sm:$0xff]
  %280 = vrot.lane.b32.xlu0 %v279, 113
  %v281 = vpop.permute.xlu0 %280
  %vm282 = vcmask 7168
  %s283 = scalar_lea.vmem %s1, 15
  %284 = vst.msk [vmem:[%s283] ss:$16 sm:$0x3] %vm282, %v281
  %s285 = scalar_lea.vmem %s1, 15
  %286 = vst.msk [vmem:[%s285] ss:$16 sm:$0xc] %vm282, %v281
  %s287 = scalar_lea.vmem %s1, 15
  %288 = vst.msk [vmem:[%s287] ss:$16 sm:$0x30] %vm282, %v281
  %s289 = scalar_lea.vmem %s1, 15
  %290 = vst.msk [vmem:[%s289] ss:$16 sm:$0xc0] %vm282, %v281
  %s291 = scalar_lea.vmem %s0, 8
  %v292 = vld [vmem:[%s291] sm:$0x1]
  %293 = vrot.lane.b32.xlu0 %v292, 113
  %v294 = vpop.permute.xlu0 %293
  %vm295 = vcmask 7168
  %s296 = scalar_lea.vmem %s1, 143
  %297 = vst.msk [vmem:[%s296] sm:$0x1] %vm295, %v294

// kernel: discriminator_cnn_forward.1
$region0: #{discriminator_cnn_forward.1}
  #allocation0 [shape = 'u32[]', space=smem, size = 0x4, offset = 0x4, fixed_abs, tag = 'smem constant byte address 0x4 - core index']
  #allocation1 [shape = 'u32[144,128]{1,0:T(1,128)}', space=vmem, size = 0x12000, scoped, tag = 'internal scratch']
  #allocation2 [shape = 'f32[48,640]{1,0:T(8,128)}', space=vmem, size = 0x1e000, scoped, tag = 'scratch operand']
  #allocation3 [shape = 'f32[8,640]{1,0:T(8,128)}', space=vmem, size = 0x5000, scoped, tag = 'scratch operand']
  #allocation4 [shape = 'f32[8,512]{1,0:T(8,128)}', space=vmem, size = 0x4000, scoped, tag = 'scratch operand']
  #allocation5 [shape = 'f32[2,1280]{1,0:T(2,128)}', space=vmem, size = 0x2800, scoped, tag = 'scratch operand']
  #allocation6 [shape = 'f32[1,1]{1,0:T(1,128)S(1)}', space=vmem, size = 0x200, scoped, tag = 'scoped memory for discriminator_cnn_forward.1']
  %s0 = inlined_call_operand.vmem [shape: bf16[1,192,384], index: 0, kind: input, shape index: {}]
  %s1 = inlined_call_operand.vmem [shape: bf16[144,192], index: 1, kind: input, shape index: {}]
  %s2 = inlined_call_operand.vmem [shape: f32[144,1], index: 2, kind: input, shape index: {}]
  %s3 = inlined_call_operand.vmem [shape: f32[12,8,48], index: 3, kind: input, shape index: {}]
  %s4 = inlined_call_operand.vmem [shape: f32[8,1], index: 4, kind: input, shape index: {}]
  %s5 = inlined_call_operand.vmem [shape: f32[1280,32], index: 5, kind: input, shape index: {}]
  %s6 = inlined_call_operand.vmem [shape: f32[1,32], index: 6, kind: input, shape index: {}]
  %s7 = inlined_call_operand.vmem [shape: f32[1,32], index: 7, kind: input, shape index: {}]
  %s8 = inlined_call_operand.<no memory space> [shape: f32[1,1], index: 8, kind: input, shape index: {}]
  %s9 = inlined_call_operand.vmem [shape: f32[2,128], index: 9, kind: output, shape index: {}]
  %s10 = sld [smem:[#allocation0]]
  $region46: #{discriminator_cnn_forward.1} parent=0
    _
  %s12 = ssub.s32 1, %s10
  %s13 = scalar_select 0, %s12, %s10
  %v14 = vstv %s8
  %15 = vst [vmem:[#allocation6] sm:$0x1] %v14
  // Predicated region
  $region2: #{discriminator_cnn_forward.1} parent=0 // pred_check
    _
  $region3: #{discriminator_cnn_forward.1} parent=0 // pred_check_branch
    %17 = sbr.rel (0) target = $region5
  $region4: #{discriminator_cnn_forward.1} parent=0 // pred_region
    _
  $region5: #{discriminator_cnn_forward.1} parent=0 // pred_fallthru
    _
  // Predicated region
  $region6: #{discriminator_cnn_forward.1} parent=0 // pred_check
    _
  $region7: #{discriminator_cnn_forward.1} parent=0 // pred_check_branch
    %19 = sbr.rel (0) target = $region9
  $region8: #{discriminator_cnn_forward.1} parent=0 // pred_region
    _
  $region9: #{discriminator_cnn_forward.1} parent=0 // pred_fallthru
    _
  // Predicated region
  $region10: #{discriminator_cnn_forward.1} parent=0 // pred_check
    _
  $region11: #{discriminator_cnn_forward.1} parent=0 // pred_check_branch
    %21 = sbr.rel (0) target = $region13
  $region12: #{discriminator_cnn_forward.1} parent=0 // pred_region
    _
  $region13: #{discriminator_cnn_forward.1} parent=0 // pred_fallthru
    _
  // Predicated region
  $region14: #{discriminator_cnn_forward.1} parent=0 // pred_check
    _
  $region15: #{discriminator_cnn_forward.1} parent=0 // pred_check_branch
    %23 = sbr.rel (0) target = $region17
  $region16: #{discriminator_cnn_forward.1} parent=0 // pred_region
    _
  $region17: #{discriminator_cnn_forward.1} parent=0 // pred_fallthru
    _
  // Predicated region
  $region18: #{discriminator_cnn_forward.1} parent=0 // pred_check
    _
  $region19: #{discriminator_cnn_forward.1} parent=0 // pred_check_branch
    %25 = sbr.rel (0) target = $region21
  $region20: #{discriminator_cnn_forward.1} parent=0 // pred_region
    _
  $region21: #{discriminator_cnn_forward.1} parent=0 // pred_fallthru
    _
  // Predicated region
  $region22: #{discriminator_cnn_forward.1} parent=0 // pred_check
    _
  $region23: #{discriminator_cnn_forward.1} parent=0 // pred_check_branch
    %27 = sbr.rel (0) target = $region25
  $region24: #{discriminator_cnn_forward.1} parent=0 // pred_region
    _
  $region25: #{discriminator_cnn_forward.1} parent=0 // pred_fallthru
    _
  // Predicated region
  $region26: #{discriminator_cnn_forward.1} parent=0 // pred_check
    _
  $region27: #{discriminator_cnn_forward.1} parent=0 // pred_check_branch
    %29 = sbr.rel (0) target = $region29
  $region28: #{discriminator_cnn_forward.1} parent=0 // pred_region
    _
  $region29: #{discriminator_cnn_forward.1} parent=0 // pred_fallthru
    _
  // Predicated region
  $region30: #{discriminator_cnn_forward.1} parent=0 // pred_check
    _
  $region31: #{discriminator_cnn_forward.1} parent=0 // pred_check_branch
    %31 = sbr.rel (0) target = $region33
  $region32: #{discriminator_cnn_forward.1} parent=0 // pred_region
    _
  $region33: #{discriminator_cnn_forward.1} parent=0 // pred_fallthru
    _
  // Predicated region
  $region34: #{discriminator_cnn_forward.1} parent=0 // pred_check
    _
  $region35: #{discriminator_cnn_forward.1} parent=0 // pred_check_branch
    %33 = sbr.rel (0) target = $region37
  $region36: #{discriminator_cnn_forward.1} parent=0 // pred_region
    _
  $region37: #{discriminator_cnn_forward.1} parent=0 // pred_fallthru
    _
  %35 = vst [vmem:[#allocation2] sm:$0xff] 0.0
  %36 = vst [vmem:[#allocation2 + $0x8] sm:$0xff] 0.0
  %37 = vst [vmem:[#allocation2 + $0x10] sm:$0xff] 0.0
  %38 = vst [vmem:[#allocation2 + $0x18] sm:$0xff] 0.0
  %39 = vst [vmem:[#allocation2 + $0x20] sm:$0xff] 0.0
  %40 = vst [vmem:[#allocation2 + $0x28] sm:$0xff] 0.0
  %41 = vst [vmem:[#allocation2 + $0x30] sm:$0xff] 0.0
  %42 = vst [vmem:[#allocation2 + $0x38] sm:$0xff] 0.0
  %43 = vst [vmem:[#allocation2 + $0x40] sm:$0xff] 0.0
  %44 = vst [vmem:[#allocation2 + $0x48] sm:$0xff] 0.0
  %45 = vst [vmem:[#allocation2 + $0x50] sm:$0xff] 0.0
  %46 = vst [vmem:[#allocation2 + $0x58] sm:$0xff] 0.0
  %47 = vst [vmem:[#allocation2 + $0x60] sm:$0xff] 0.0
  %48 = vst [vmem:[#allocation2 + $0x68] sm:$0xff] 0.0
  %49 = vst [vmem:[#allocation2 + $0x70] sm:$0xff] 0.0
  %50 = vst [vmem:[#allocation2 + $0x78] sm:$0xff] 0.0
  %51 = vst [vmem:[#allocation2 + $0x80] sm:$0xff] 0.0
  %52 = vst [vmem:[#allocation2 + $0x88] sm:$0xff] 0.0
  %53 = vst [vmem:[#allocation2 + $0x90] sm:$0xff] 0.0
  %54 = vst [vmem:[#allocation2 + $0x98] sm:$0xff] 0.0
  %55 = vst [vmem:[#allocation2 + $0xa0] sm:$0xff] 0.0
  %56 = vst [vmem:[#allocation2 + $0xa8] sm:$0xff] 0.0
  %57 = vst [vmem:[#allocation2 + $0xb0] sm:$0xff] 0.0
  %58 = vst [vmem:[#allocation2 + $0xb8] sm:$0xff] 0.0
  %59 = vst [vmem:[#allocation2 + $0xc0] sm:$0xff] 0.0
  %60 = vst [vmem:[#allocation2 + $0xc8] sm:$0xff] 0.0
  %61 = vst [vmem:[#allocation2 + $0xd0] sm:$0xff] 0.0
  %62 = vst [vmem:[#allocation2 + $0xd8] sm:$0xff] 0.0
  %63 = vst [vmem:[#allocation2 + $0xe0] sm:$0xff] 0.0
  %64 = vst [vmem:[#allocation2 + $0xe8] sm:$0xff] 0.0
  %65 = vst [vmem:[#allocation3 + $0x20] sm:$0xff] 0.0
  %v66 = vld [vmem:[%s2] sm:$0xff]
  %v67 = vld [vmem:[%s2 + $0x8] sm:$0xff]
  %v68 = vld [vmem:[%s2 + $0x10] sm:$0xff]
  %v69 = vld [vmem:[%s2 + $0x18] sm:$0xff]
  %v70 = vld [vmem:[%s2 + $0x20] sm:$0xff]
  %v71 = vld [vmem:[%s2 + $0x28] sm:$0xff]
  %v72 = vld [vmem:[%s2 + $0x30] sm:$0xff]
  %v73 = vld [vmem:[%s2 + $0x38] sm:$0xff]
  %v74 = vld [vmem:[%s2 + $0x40] sm:$0xff]
  %v75 = vld [vmem:[%s2 + $0x48] sm:$0xff]
  %v76 = vld [vmem:[%s2 + $0x50] sm:$0xff]
  %v77 = vld [vmem:[%s2 + $0x58] sm:$0xff]
  %v78 = vld [vmem:[%s2 + $0x60] sm:$0xff]
  %v79 = vld [vmem:[%s2 + $0x68] sm:$0xff]
  %v80 = vld [vmem:[%s2 + $0x70] sm:$0xff]
  %v81 = vld [vmem:[%s2 + $0x78] sm:$0xff]
  %v82 = vld [vmem:[%s2 + $0x80] sm:$0xff]
  %v83 = vld [vmem:[%s2 + $0x88] sm:$0xff]
  %85 = vset.pattern.permute.xlu0 0
  %86 = vperm.xlu0 %85, %v66
  %v87 = vpop.permute.xlu0 %86
  %90 = vset.pattern.permute.xlu0 0
  %91 = vperm.xlu0 %90, %v67
  %v92 = vpop.permute.xlu0 %91
  %95 = vset.pattern.permute.xlu0 0
  %96 = vperm.xlu0 %95, %v68
  %v97 = vpop.permute.xlu0 %96
  %100 = vset.pattern.permute.xlu0 0
  %101 = vperm.xlu0 %100, %v69
  %v102 = vpop.permute.xlu0 %101
  %105 = vset.pattern.permute.xlu0 0
  %106 = vperm.xlu0 %105, %v70
  %v107 = vpop.permute.xlu0 %106
  %110 = vset.pattern.permute.xlu0 0
  %111 = vperm.xlu0 %110, %v71
  %v112 = vpop.permute.xlu0 %111
  %115 = vset.pattern.permute.xlu0 0
  %116 = vperm.xlu0 %115, %v72
  %v117 = vpop.permute.xlu0 %116
  %120 = vset.pattern.permute.xlu0 0
  %121 = vperm.xlu0 %120, %v73
  %v122 = vpop.permute.xlu0 %121
  %125 = vset.pattern.permute.xlu0 0
  %126 = vperm.xlu0 %125, %v74
  %v127 = vpop.permute.xlu0 %126
  %130 = vset.pattern.permute.xlu0 0
  %131 = vperm.xlu0 %130, %v75
  %v132 = vpop.permute.xlu0 %131
  %135 = vset.pattern.permute.xlu0 0
  %136 = vperm.xlu0 %135, %v76
  %v137 = vpop.permute.xlu0 %136
  %140 = vset.pattern.permute.xlu0 0
  %141 = vperm.xlu0 %140, %v77
  %v142 = vpop.permute.xlu0 %141
  %145 = vset.pattern.permute.xlu0 0
  %146 = vperm.xlu0 %145, %v78
  %v147 = vpop.permute.xlu0 %146
  %150 = vset.pattern.permute.xlu0 0
  %151 = vperm.xlu0 %150, %v79
  %v152 = vpop.permute.xlu0 %151
  %155 = vset.pattern.permute.xlu0 0
  %156 = vperm.xlu0 %155, %v80
  %v157 = vpop.permute.xlu0 %156
  %160 = vset.pattern.permute.xlu0 0
  %161 = vperm.xlu0 %160, %v81
  %v162 = vpop.permute.xlu0 %161
  %165 = vset.pattern.permute.xlu0 0
  %166 = vperm.xlu0 %165, %v82
  %v167 = vpop.permute.xlu0 %166
  %170 = vset.pattern.permute.xlu0 0
  %171 = vperm.xlu0 %170, %v83
  %v172 = vpop.permute.xlu0 %171
  %v174 = vld [vmem:[%s0] sm:$0xff]
  %v175 = vld [vmem:[%s0 + $0xc] sm:$0xff]
  %v176 = vld [vmem:[%s0 + $0x18] sm:$0xff]
  %v177 = vld [vmem:[%s0 + $0x24] sm:$0xff]
  %v178 = vld [vmem:[%s0 + $0x30] sm:$0xff]
  %v179 = vld [vmem:[%s0 + $0x3c] sm:$0xff]
  %v180 = vld [vmem:[%s0 + $0x48] sm:$0xff]
  %v181 = vld [vmem:[%s0 + $0x54] sm:$0xff]
  %v182 = vld [vmem:[%s0 + $0x60] sm:$0xff]
  %v183 = vld [vmem:[%s0 + $0x6c] sm:$0xff]
  %v184 = vld [vmem:[%s0 + $0x78] sm:$0xff]
  %v185 = vld [vmem:[%s0 + $0x84] sm:$0xff]
  %v186 = vld [vmem:[%s0 + $0x90] sm:$0xff]
  %v187 = vld [vmem:[%s0 + $0x9c] sm:$0xff]
  %v188 = vld [vmem:[%s0 + $0xa8] sm:$0xff]
  %v189 = vld [vmem:[%s0 + $0xb4] sm:$0xff]
  %v190 = vld [vmem:[%s0 + $0xc0] sm:$0xff]
  %v191 = vld [vmem:[%s0 + $0xcc] sm:$0xff]
  %v192 = vld [vmem:[%s0 + $0xd8] sm:$0xff]
  %v193 = vld [vmem:[%s0 + $0xe4] sm:$0xff]
  %v194 = vld [vmem:[%s0 + $0xf0] sm:$0xff]
  %v195 = vld [vmem:[%s0 + $0xfc] sm:$0xff]
  %v196 = vld [vmem:[%s0 + $0x108] sm:$0xff]
  %v197 = vld [vmem:[%s0 + $0x114] sm:$0xff]
  %v198 = vld [vmem:[%s1] sm:$0xff]
  %v199 = vld [vmem:[%s1 + $0x8] sm:$0xff]
  %v200 = vld [vmem:[%s1 + $0x10] sm:$0xff]
  %v201 = vld [vmem:[%s1 + $0x18] sm:$0xff]
  %v202 = vld [vmem:[%s1 + $0x20] sm:$0xff]
  %v203 = vld [vmem:[%s1 + $0x28] sm:$0xff]
  %v204 = vld [vmem:[%s1 + $0x30] sm:$0xff]
  %v205 = vld [vmem:[%s1 + $0x38] sm:$0xff]
  %v206 = vld [vmem:[%s1 + $0x40] sm:$0xff]
  %v207 = vld [vmem:[%s1 + $0x48] sm:$0xff]
  %v208 = vld [vmem:[%s1 + $0x50] sm:$0xff]
  %v209 = vld [vmem:[%s1 + $0x58] sm:$0xff]
  %v210 = vld [vmem:[%s1 + $0x60] sm:$0xff]
  %v211 = vld [vmem:[%s1 + $0x68] sm:$0xff]
  %v212 = vld [vmem:[%s1 + $0x70] sm:$0xff]
  %v213 = vld [vmem:[%s1 + $0x78] sm:$0xff]
  %v214 = vld [vmem:[%s1 + $0x80] sm:$0xff]
  %v215 = vld [vmem:[%s1 + $0x88] sm:$0xff]
  %v234 = vunpack.c.l.b16 %v198
  %v235 = vunpack.c.h.b16 %v198
  %v236 = vunpack.c.l.b16 %v199
  %v237 = vunpack.c.h.b16 %v199
  %v238 = vunpack.c.l.b16 %v200
  %v239 = vunpack.c.h.b16 %v200
  %v240 = vunpack.c.l.b16 %v201
  %v241 = vunpack.c.h.b16 %v201
  %v242 = vunpack.c.l.b16 %v202
  %v243 = vunpack.c.h.b16 %v202
  %v244 = vunpack.c.l.b16 %v203
  %v245 = vunpack.c.h.b16 %v203
  %v246 = vunpack.c.l.b16 %v204
  %v247 = vunpack.c.h.b16 %v204
  %v248 = vunpack.c.l.b16 %v205
  %v249 = vunpack.c.h.b16 %v205
  %v250 = vunpack.c.l.b16 %v206
  %v251 = vunpack.c.h.b16 %v206
  %v252 = vunpack.c.l.b16 %v207
  %v253 = vunpack.c.h.b16 %v207
  %v254 = vunpack.c.l.b16 %v208
  %v255 = vunpack.c.h.b16 %v208
  %v256 = vunpack.c.l.b16 %v209
  %v257 = vunpack.c.h.b16 %v209
  %v258 = vunpack.c.l.b16 %v210
  %v259 = vunpack.c.h.b16 %v210
  %v260 = vunpack.c.l.b16 %v211
  %v261 = vunpack.c.h.b16 %v211
  %v262 = vunpack.c.l.b16 %v212
  %v263 = vunpack.c.h.b16 %v212
  %v264 = vunpack.c.l.b16 %v213
  %v265 = vunpack.c.h.b16 %v213
  %v266 = vunpack.c.l.b16 %v214
  %v267 = vunpack.c.h.b16 %v214
  %v268 = vunpack.c.l.b16 %v215
  %v269 = vunpack.c.h.b16 %v215
  %v270 = vpack.c.b16 %v236, %v234
  %v271 = vpack.c.b16 %v237, %v235
  %v272 = vpack.c.b16 %v240, %v238
  %v273 = vpack.c.b16 %v241, %v239
  %v274 = vpack.c.b16 %v244, %v242
  %v275 = vpack.c.b16 %v245, %v243
  %v276 = vpack.c.b16 %v248, %v246
  %v277 = vpack.c.b16 %v249, %v247
  %v278 = vpack.c.b16 %v252, %v250
  %v279 = vpack.c.b16 %v253, %v251
  %v280 = vpack.c.b16 %v256, %v254
  %v281 = vpack.c.b16 %v257, %v255
  %v282 = vpack.c.b16 %v260, %v258
  %v283 = vpack.c.b16 %v261, %v259
  %v284 = vpack.c.b16 %v264, %v262
  %v285 = vpack.c.b16 %v265, %v263
  %v286 = vpack.c.b16 %v268, %v266
  %v287 = vpack.c.b16 %v269, %v267
  %v321 = vunpack.c.l.b16 %v174
  %v322 = vunpack.c.h.b16 %v174
  %v323 = vunpack.c.l.b16 %v175
  %v324 = vunpack.c.h.b16 %v175
  %v325 = vunpack.c.l.b16 %v176
  %v326 = vunpack.c.h.b16 %v176
  %v327 = vunpack.c.l.b16 %v177
  %v328 = vunpack.c.h.b16 %v177
  %v329 = vunpack.c.l.b16 %v178
  %v330 = vunpack.c.h.b16 %v178
  %v331 = vunpack.c.l.b16 %v179
  %v332 = vunpack.c.h.b16 %v179
  %v333 = vunpack.c.l.b16 %v180
  %v334 = vunpack.c.h.b16 %v180
  %v335 = vunpack.c.l.b16 %v181
  %v336 = vunpack.c.h.b16 %v181
  %v337 = vunpack.c.l.b16 %v182
  %v338 = vunpack.c.h.b16 %v182
  %v339 = vunpack.c.l.b16 %v183
  %v340 = vunpack.c.h.b16 %v183
  %v341 = vunpack.c.l.b16 %v184
  %v342 = vunpack.c.h.b16 %v184
  %v343 = vunpack.c.l.b16 %v185
  %v344 = vunpack.c.h.b16 %v185
  %v345 = vunpack.c.l.b16 %v186
  %v346 = vunpack.c.h.b16 %v186
  %v347 = vunpack.c.l.b16 %v187
  %v348 = vunpack.c.h.b16 %v187
  %v349 = vunpack.c.l.b16 %v188
  %v350 = vunpack.c.h.b16 %v188
  %v351 = vunpack.c.l.b16 %v189
  %v352 = vunpack.c.h.b16 %v189
  %v353 = vunpack.c.l.b16 %v190
  %v354 = vunpack.c.h.b16 %v190
  %v355 = vunpack.c.l.b16 %v191
  %v356 = vunpack.c.h.b16 %v191
  %v357 = vunpack.c.l.b16 %v192
  %v358 = vunpack.c.h.b16 %v192
  %v359 = vunpack.c.l.b16 %v193
  %v360 = vunpack.c.h.b16 %v193
  %v361 = vunpack.c.l.b16 %v194
  %v362 = vunpack.c.h.b16 %v194
  %v363 = vunpack.c.l.b16 %v195
  %v364 = vunpack.c.h.b16 %v195
  %v365 = vunpack.c.l.b16 %v196
  %v366 = vunpack.c.h.b16 %v196
  %v367 = vunpack.c.l.b16 %v197
  %v368 = vunpack.c.h.b16 %v197
  %v369 = vpack.c.b16 %v323, %v321
  %v370 = vpack.c.b16 %v324, %v322
  %v371 = vpack.c.b16 %v327, %v325
  %v372 = vpack.c.b16 %v328, %v326
  %v373 = vpack.c.b16 %v331, %v329
  %v374 = vpack.c.b16 %v332, %v330
  %v375 = vpack.c.b16 %v335, %v333
  %v376 = vpack.c.b16 %v336, %v334
  %v377 = vpack.c.b16 %v339, %v337
  %v378 = vpack.c.b16 %v340, %v338
  %v379 = vpack.c.b16 %v343, %v341
  %v380 = vpack.c.b16 %v344, %v342
  %v381 = vpack.c.b16 %v347, %v345
  %v382 = vpack.c.b16 %v348, %v346
  %v383 = vpack.c.b16 %v351, %v349
  %v384 = vpack.c.b16 %v352, %v350
  %v385 = vpack.c.b16 %v355, %v353
  %v386 = vpack.c.b16 %v356, %v354
  %v387 = vpack.c.b16 %v359, %v357
  %v388 = vpack.c.b16 %v360, %v358
  %v389 = vpack.c.b16 %v363, %v361
  %v390 = vpack.c.b16 %v364, %v362
  %v391 = vpack.c.b16 %v367, %v365
  %v392 = vpack.c.b16 %v368, %v366
  %vm417 = vcmask 523264
  %v419 = vsel %vm417, %v271, 0
  %v422 = vsel %vm417, %v273, 0
  %v425 = vsel %vm417, %v275, 0
  %v428 = vsel %vm417, %v277, 0
  %v431 = vsel %vm417, %v279, 0
  %v434 = vsel %vm417, %v281, 0
  %v437 = vsel %vm417, %v283, 0
  %v440 = vsel %vm417, %v285, 0
  %v443 = vsel %vm417, %v287, 0
  %445 = vmatprep.subr.bf16.mxu0 %v370
  %446 = vmatpush1.bf16.msra.mxu0 %v369
  %447 = vmatprep.subr.bf16.mxu0 %v372
  %448 = vmatpush1.bf16.msra.mxu0 %v371
  %449 = vmatprep.subr.bf16.mxu0 %v374
  %450 = vmatpush1.bf16.msra.mxu0 %v373
  %451 = vmatprep.subr.bf16.mxu0 %v376
  %452 = vmatpush1.bf16.msra.mxu0 %v375
  %453 = vmatprep.subr.bf16.mxu0 %v378
  %454 = vmatpush1.bf16.msra.mxu0 %v377
  %455 = vmatprep.subr.bf16.mxu0 %v380
  %456 = vmatpush1.bf16.msra.mxu0 %v379
  %457 = vmatprep.subr.bf16.mxu0 %v382
  %458 = vmatpush1.bf16.msra.mxu0 %v381
  %459 = vmatprep.subr.bf16.mxu0 %v384
  %460 = vmatpush1.bf16.msra.mxu0 %v383
  %461 = vmatprep.subr.bf16.mxu0 %v386
  %462 = vmatpush1.bf16.msra.mxu0 %v385
  %463 = vmatprep.subr.bf16.mxu0 %v388
  %464 = vmatpush1.bf16.msra.mxu0 %v387
  %465 = vmatprep.subr.bf16.mxu0 %v390
  %466 = vmatpush1.bf16.msra.mxu0 %v389
  %467 = vmatprep.subr.bf16.mxu0 %v392
  %468 = vmatpush1.bf16.msra.mxu0 %v391
  %469 = vmatprep.subr.bf16.mxu0 0
  %470 = vmatpush1.bf16.msra.mxu0 0
  %471 = vmatprep.subr.bf16.mxu0 0
  %472 = vmatpush1.bf16.msra.mxu0 0
  %473 = vmatprep.subr.bf16.mxu0 0
  %474 = vmatpush1.bf16.msra.mxu0 0
  %475 = vmatprep.subr.bf16.mxu0 0
  %476 = vmatpush1.bf16.msra.mxu0 0
  %477 = vmatprep.mubr.bf16.mxu0 %v419
  %478 = vmatmul.mubr.bf16.gmra.mrb[0].mxu0 %v270
  %v479 = vpop.f32.mrb[0].mxu0
  %v480 = vadd.f32 %v87, %v479
  %v481 = vpop.f32.mrb[0].mxu0
  %v482 = vadd.f32 %v87, %v481
  %v483 = vpop.f32.mrb[0].mxu0
  %v484 = vadd.f32 %v92, %v483
  %v485 = vpop.f32.mrb[0].mxu0
  %v486 = vadd.f32 %v92, %v485
  %487 = vmatprep.mubr.bf16.mxu0 %v422
  %488 = vmatmul.mubr.bf16.gmra.mrb[0].mxu0 %v272
  %v489 = vpop.f32.mrb[0].mxu0
  %v490 = vadd.f32 %v97, %v489
  %v491 = vpop.f32.mrb[0].mxu0
  %v492 = vadd.f32 %v97, %v491
  %v493 = vpop.f32.mrb[0].mxu0
  %v494 = vadd.f32 %v102, %v493
  %v495 = vpop.f32.mrb[0].mxu0
  %v496 = vadd.f32 %v102, %v495
  %497 = vmatprep.mubr.bf16.mxu0 %v425
  %498 = vmatmul.mubr.bf16.gmra.mrb[0].mxu0 %v274
  %v499 = vpop.f32.mrb[0].mxu0
  %v500 = vadd.f32 %v107, %v499
  %v501 = vpop.f32.mrb[0].mxu0
  %v502 = vadd.f32 %v107, %v501
  %v503 = vpop.f32.mrb[0].mxu0
  %v504 = vadd.f32 %v112, %v503
  %v505 = vpop.f32.mrb[0].mxu0
  %v506 = vadd.f32 %v112, %v505
  %507 = vmatprep.mubr.bf16.mxu0 %v428
  %508 = vmatmul.mubr.bf16.gmra.mrb[0].mxu0 %v276
  %v509 = vpop.f32.mrb[0].mxu0
  %v510 = vadd.f32 %v117, %v509
  %v511 = vpop.f32.mrb[0].mxu0
  %v512 = vadd.f32 %v117, %v511
  %v513 = vpop.f32.mrb[0].mxu0
  %v514 = vadd.f32 %v122, %v513
  %v515 = vpop.f32.mrb[0].mxu0
  %v516 = vadd.f32 %v122, %v515
  %517 = vmatprep.mubr.bf16.mxu0 %v431
  %518 = vmatmul.mubr.bf16.gmra.mrb[0].mxu0 %v278
  %v519 = vpop.f32.mrb[0].mxu0
  %v520 = vadd.f32 %v127, %v519
  %v521 = vpop.f32.mrb[0].mxu0
  %v522 = vadd.f32 %v127, %v521
  %v523 = vpop.f32.mrb[0].mxu0
  %v524 = vadd.f32 %v132, %v523
  %v525 = vpop.f32.mrb[0].mxu0
  %v526 = vadd.f32 %v132, %v525
  %527 = vmatprep.mubr.bf16.mxu0 %v434
  %528 = vmatmul.mubr.bf16.gmra.mrb[0].mxu0 %v280
  %v529 = vpop.f32.mrb[0].mxu0
  %v530 = vadd.f32 %v137, %v529
  %v531 = vpop.f32.mrb[0].mxu0
  %v532 = vadd.f32 %v137, %v531
  %v533 = vpop.f32.mrb[0].mxu0
  %v534 = vadd.f32 %v142, %v533
  %v535 = vpop.f32.mrb[0].mxu0
  %v536 = vadd.f32 %v142, %v535
  %537 = vmatprep.mubr.bf16.mxu0 %v437
  %538 = vmatmul.mubr.bf16.gmra.mrb[0].mxu0 %v282
  %v539 = vpop.f32.mrb[0].mxu0
  %v540 = vadd.f32 %v147, %v539
  %v541 = vpop.f32.mrb[0].mxu0
  %v542 = vadd.f32 %v147, %v541
  %v543 = vpop.f32.mrb[0].mxu0
  %v544 = vadd.f32 %v152, %v543
  %v545 = vpop.f32.mrb[0].mxu0
  %v546 = vadd.f32 %v152, %v545
  %547 = vmatprep.mubr.bf16.mxu0 %v440
  %548 = vmatmul.mubr.bf16.gmra.mrb[0].mxu0 %v284
  %v549 = vpop.f32.mrb[0].mxu0
  %v550 = vadd.f32 %v157, %v549
  %v551 = vpop.f32.mrb[0].mxu0
  %v552 = vadd.f32 %v157, %v551
  %v553 = vpop.f32.mrb[0].mxu0
  %v554 = vadd.f32 %v162, %v553
  %v555 = vpop.f32.mrb[0].mxu0
  %v556 = vadd.f32 %v162, %v555
  %557 = vmatprep.mubr.bf16.mxu0 %v443
  %558 = vmatmul.mubr.bf16.gmra.mrb[0].mxu0 %v286
  %v559 = vpop.f32.mrb[0].mxu0
  %v560 = vadd.f32 %v167, %v559
  %v561 = vpop.f32.mrb[0].mxu0
  %v562 = vadd.f32 %v167, %v561
  %v563 = vpop.f32.mrb[0].mxu0
  %v564 = vadd.f32 %v172, %v563
  %v565 = vpop.f32.mrb[0].mxu0
  %v566 = vadd.f32 %v172, %v565
  %567 = vdwg.mxu0
  %v568 = vmax.f32 %v480, 0.0
  %v569 = vmax.f32 %v482, 0.0
  %v570 = vmax.f32 %v484, 0.0
  %v571 = vmax.f32 %v486, 0.0
  %v572 = vmax.f32 %v490, 0.0
  %v573 = vmax.f32 %v492, 0.0
  %v574 = vmax.f32 %v494, 0.0
  %v575 = vmax.f32 %v496, 0.0
  %v576 = vmax.f32 %v500, 0.0
  %v577 = vmax.f32 %v502, 0.0
  %v578 = vmax.f32 %v504, 0.0
  %v579 = vmax.f32 %v506, 0.0
  %v580 = vmax.f32 %v510, 0.0
  %v581 = vmax.f32 %v512, 0.0
  %v582 = vmax.f32 %v514, 0.0
  %v583 = vmax.f32 %v516, 0.0
  %v584 = vmax.f32 %v520, 0.0
  %v585 = vmax.f32 %v522, 0.0
  %v586 = vmax.f32 %v524, 0.0
  %v587 = vmax.f32 %v526, 0.0
  %v588 = vmax.f32 %v530, 0.0
  %v589 = vmax.f32 %v532, 0.0
  %v590 = vmax.f32 %v534, 0.0
  %v591 = vmax.f32 %v536, 0.0
  %v592 = vmax.f32 %v540, 0.0
  %v593 = vmax.f32 %v542, 0.0
  %v594 = vmax.f32 %v544, 0.0
  %v595 = vmax.f32 %v546, 0.0
  %v596 = vmax.f32 %v550, 0.0
  %v597 = vmax.f32 %v552, 0.0
  %v598 = vmax.f32 %v554, 0.0
  %v599 = vmax.f32 %v556, 0.0
  %v600 = vmax.f32 %v560, 0.0
  %v601 = vmax.f32 %v562, 0.0
  %v602 = vmax.f32 %v564, 0.0
  %v603 = vmax.f32 %v566, 0.0
  %v604 = vmax.f32 %v592, %v596
  %v605 = vmax.f32 %v593, %v597
  %v606 = vmax.f32 %v594, %v598
  %v607 = vmax.f32 %v595, %v599
  %v608 = vmax.f32 %v604, %v600
  %v609 = vmax.f32 %v605, %v601
  %v610 = vmax.f32 %v606, %v602
  %v611 = vmax.f32 %v607, %v603
  %v612 = vmax.f32 %v608, %v580
  %v613 = vmax.f32 %v609, %v581
  %v614 = vmax.f32 %v610, %v582
  %v615 = vmax.f32 %v611, %v583
  %v616 = vmax.f32 %v612, %v584
  %v617 = vmax.f32 %v613, %v585
  %v618 = vmax.f32 %v614, %v586
  %v619 = vmax.f32 %v615, %v587
  %v620 = vmax.f32 %v616, %v588
  %v621 = vmax.f32 %v617, %v589
  %v622 = vmax.f32 %v618, %v590
  %v623 = vmax.f32 %v619, %v591
  %v624 = vmax.f32 %v568, %v572
  %v625 = vmax.f32 %v569, %v573
  %v626 = vmax.f32 %v570, %v574
  %v627 = vmax.f32 %v571, %v575
  %v628 = vmax.f32 %v624, %v576
  %v629 = vmax.f32 %v625, %v577
  %v630 = vmax.f32 %v626, %v578
  %v631 = vmax.f32 %v627, %v579
  %v632 = vmax.f32 %v620, %v628
  %v633 = vmax.f32 %v621, %v629
  %v634 = vmax.f32 %v622, %v630
  %v635 = vmax.f32 %v623, %v631
  %v636 = vmax.f32 %v628, %v580
  %v637 = vmax.f32 %v629, %v581
  %v638 = vmax.f32 %v630, %v582
  %v639 = vmax.f32 %v631, %v583
  %v640 = vmax.f32 %v636, %v584
  %v641 = vmax.f32 %v637, %v585
  %v642 = vmax.f32 %v638, %v586
  %v643 = vmax.f32 %v639, %v587
  %v644 = vmax.f32 %v640, %v588
  %v645 = vmax.f32 %v641, %v589
  %v646 = vmax.f32 %v642, %v590
  %v647 = vmax.f32 %v643, %v591
  %v648 = vmax.f32 %v644, %v592
  %v649 = vmax.f32 %v645, %v593
  %v650 = vmax.f32 %v646, %v594
  %v651 = vmax.f32 %v647, %v595
  %656 = vrot.lane.b32.xlu0 %v632, 127
  %v657 = vpop.permute.xlu0 %656
  %658 = vrot.lane.b32.xlu0 %v633, 127
  %v659 = vpop.permute.xlu0 %658
  %660 = vrot.lane.b32.xlu0 %v634, 127
  %v661 = vpop.permute.xlu0 %660
  %662 = vrot.lane.b32.xlu0 %v635, 127
  %v663 = vpop.permute.xlu0 %662
  %vm664 = vcmask 1039360
  %v665 = vsel %vm664, %v657, %v659
  %v666 = vsel %vm664, %v661, %v663
  %v671 = vmax.f32 %v632, %v665
  %v672 = vmax.f32 %v633, %v659
  %v673 = vmax.f32 %v634, %v666
  %v674 = vmax.f32 %v635, %v663
  %679 = vrot.lane.b32.xlu0 %v671, 126
  %v680 = vpop.permute.xlu0 %679
  %681 = vrot.lane.b32.xlu0 %v672, 126
  %v682 = vpop.permute.xlu0 %681
  %683 = vrot.lane.b32.xlu0 %v673, 126
  %v684 = vpop.permute.xlu0 %683
  %685 = vrot.lane.b32.xlu0 %v674, 126
  %v686 = vpop.permute.xlu0 %685
  %vm687 = vcmask 1031168
  %v688 = vsel %vm687, %v680, %v682
  %v689 = vsel %vm687, %v684, %v686
  %v694 = vmax.f32 %v671, %v688
  %v695 = vmax.f32 %v672, %v682
  %v696 = vmax.f32 %v673, %v689
  %v697 = vmax.f32 %v674, %v686
  %702 = vrot.lane.b32.xlu0 %v694, 127
  %v703 = vpop.permute.xlu0 %702
  %704 = vrot.lane.b32.xlu0 %v695, 127
  %v705 = vpop.permute.xlu0 %704
  %706 = vrot.lane.b32.xlu0 %v696, 127
  %v707 = vpop.permute.xlu0 %706
  %708 = vrot.lane.b32.xlu0 %v697, 127
  %v709 = vpop.permute.xlu0 %708
  %v710 = vsel %vm664, %v703, %v705
  %v711 = vsel %vm664, %v707, %v709
  %v716 = vmax.f32 %v632, %v710
  %v717 = vmax.f32 %v633, %v705
  %v718 = vmax.f32 %v634, %v711
  %v719 = vmax.f32 %v635, %v709
  %724 = vrot.lane.b32.xlu0 %v568, 123
  %v725 = vpop.permute.xlu0 %724
  %726 = vrot.lane.b32.xlu0 %v569, 123
  %v727 = vpop.permute.xlu0 %726
  %728 = vrot.lane.b32.xlu0 %v570, 123
  %v729 = vpop.permute.xlu0 %728
  %730 = vrot.lane.b32.xlu0 %v571, 123
  %v731 = vpop.permute.xlu0 %730
  %vm732 = vcmask 1006592
  %v733 = vsel %vm732, %v725, %v727
  %v734 = vsel %vm732, %v729, %v731
  %v739 = vmax.f32 %v716, %v733
  %v740 = vmax.f32 %v717, %v727
  %v741 = vmax.f32 %v718, %v734
  %v742 = vmax.f32 %v719, %v731
  %v743 = vmax.f32 %v620, %v710
  %v744 = vmax.f32 %v621, %v705
  %v745 = vmax.f32 %v622, %v711
  %v746 = vmax.f32 %v623, %v709
  %751 = vrot.lane.b32.xlu0 %v636, 123
  %v752 = vpop.permute.xlu0 %751
  %753 = vrot.lane.b32.xlu0 %v637, 123
  %v754 = vpop.permute.xlu0 %753
  %755 = vrot.lane.b32.xlu0 %v638, 123
  %v756 = vpop.permute.xlu0 %755
  %757 = vrot.lane.b32.xlu0 %v639, 123
  %v758 = vpop.permute.xlu0 %757
  %v759 = vsel %vm732, %v752, %v754
  %v760 = vsel %vm732, %v756, %v758
  %v765 = vmax.f32 %v743, %v759
  %v766 = vmax.f32 %v744, %v754
  %v767 = vmax.f32 %v745, %v760
  %v768 = vmax.f32 %v746, %v758
  %v769 = vmax.f32 %v608, %v710
  %v770 = vmax.f32 %v609, %v705
  %v771 = vmax.f32 %v610, %v711
  %v772 = vmax.f32 %v611, %v709
  %777 = vrot.lane.b32.xlu0 %v648, 123
  %v778 = vpop.permute.xlu0 %777
  %779 = vrot.lane.b32.xlu0 %v649, 123
  %v780 = vpop.permute.xlu0 %779
  %781 = vrot.lane.b32.xlu0 %v650, 123
  %v782 = vpop.permute.xlu0 %781
  %783 = vrot.lane.b32.xlu0 %v651, 123
  %v784 = vpop.permute.xlu0 %783
  %v785 = vsel %vm732, %v778, %v780
  %v786 = vsel %vm732, %v782, %v784
  %v791 = vmax.f32 %v769, %v785
  %v792 = vmax.f32 %v770, %v780
  %v793 = vmax.f32 %v771, %v786
  %v794 = vmax.f32 %v772, %v784
  %795 = vst [vmem:[#allocation2] sm:$0xff] %v739
  %vm796 = vcmask 392192
  %797 = vst.msk [vmem:[#allocation2 + $0x8] sm:$0xff] %vm796, %v740
  %798 = vst [vmem:[#allocation2 + $0x28] sm:$0x3] %v741
  %vm799 = vcmask 386048
  %800 = vst.msk [vmem:[#allocation2 + $0x30] sm:$0x3] %vm799, %v742
  %801 = vst [vmem:[#allocation2 + $0x50] sm:$0xff] %v765
  %802 = vst.msk [vmem:[#allocation2 + $0x58] sm:$0xff] %vm796, %v766
  %803 = vst [vmem:[#allocation2 + $0x78] sm:$0x3] %v767
  %804 = vst.msk [vmem:[#allocation2 + $0x80] sm:$0x3] %vm799, %v768
  %805 = vst [vmem:[#allocation2 + $0xa0] sm:$0xff] %v791
  %806 = vst.msk [vmem:[#allocation2 + $0xa8] sm:$0xff] %vm796, %v792
  %807 = vst [vmem:[#allocation2 + $0xc8] sm:$0x3] %v793
  %808 = vst.msk [vmem:[#allocation2 + $0xd0] sm:$0x3] %vm799, %v794
  %v809 = vld [vmem:[%s0 + $0x4] sm:$0xff]
  %v810 = vld [vmem:[%s0 + $0x10] sm:$0xff]
  %v811 = vld [vmem:[%s0 + $0x1c] sm:$0xff]
  %v812 = vld [vmem:[%s0 + $0x28] sm:$0xff]
  %v813 = vld [vmem:[%s0 + $0x34] sm:$0xff]
  %v814 = vld [vmem:[%s0 + $0x40] sm:$0xff]
  %v815 = vld [vmem:[%s0 + $0x4c] sm:$0xff]
  %v816 = vld [vmem:[%s0 + $0x58] sm:$0xff]
  %v817 = vld [vmem:[%s0 + $0x64] sm:$0xff]
  %v818 = vld [vmem:[%s0 + $0x70] sm:$0xff]
  %v819 = vld [vmem:[%s0 + $0x7c] sm:$0xff]
  %v820 = vld [vmem:[%s0 + $0x88] sm:$0xff]
  %v821 = vld [vmem:[%s0 + $0x94] sm:$0xff]
  %v822 = vld [vmem:[%s0 + $0xa0] sm:$0xff]
  %v823 = vld [vmem:[%s0 + $0xac] sm:$0xff]
  %v824 = vld [vmem:[%s0 + $0xb8] sm:$0xff]
  %v825 = vld [vmem:[%s0 + $0xc4] sm:$0xff]
  %v826 = vld [vmem:[%s0 + $0xd0] sm:$0xff]
  %v827 = vld [vmem:[%s0 + $0xdc] sm:$0xff]
  %v828 = vld [vmem:[%s0 + $0xe8] sm:$0xff]
  %v829 = vld [vmem:[%s0 + $0xf4] sm:$0xff]
  %v830 = vld [vmem:[%s0 + $0x100] sm:$0xff]
  %v831 = vld [vmem:[%s0 + $0x10c] sm:$0xff]
  %v832 = vld [vmem:[%s0 + $0x118] sm:$0xff]
  %v833 = vld [vmem:[%s1] sm:$0xff]
  %v834 = vld [vmem:[%s1 + $0x8] sm:$0xff]
  %v835 = vld [vmem:[%s1 + $0x10] sm:$0xff]
  %v836 = vld [vmem:[%s1 + $0x18] sm:$0xff]
  %v837 = vld [vmem:[%s1 + $0x20] sm:$0xff]
  %v838 = vld [vmem:[%s1 + $0x28] sm:$0xff]
  %v839 = vld [vmem:[%s1 + $0x30] sm:$0xff]
  %v840 = vld [vmem:[%s1 + $0x38] sm:$0xff]
  %v841 = vld [vmem:[%s1 + $0x40] sm:$0xff]
  %v842 = vld [vmem:[%s1 + $0x48] sm:$0xff]
  %v843 = vld [vmem:[%s1 + $0x50] sm:$0xff]
  %v844 = vld [vmem:[%s1 + $0x58] sm:$0xff]
  %v845 = vld [vmem:[%s1 + $0x60] sm:$0xff]
  %v846 = vld [vmem:[%s1 + $0x68] sm:$0xff]
  %v847 = vld [vmem:[%s1 + $0x70] sm:$0xff]
  %v848 = vld [vmem:[%s1 + $0x78] sm:$0xff]
  %v849 = vld [vmem:[%s1 + $0x80] sm:$0xff]
  %v850 = vld [vmem:[%s1 + $0x88] sm:$0xff]
  %v869 = vunpack.c.l.b16 %v833
  %v870 = vunpack.c.h.b16 %v833
  %v871 = vunpack.c.l.b16 %v834
  %v872 = vunpack.c.h.b16 %v834
  %v873 = vunpack.c.l.b16 %v835
  %v874 = vunpack.c.h.b16 %v835
  %v875 = vunpack.c.l.b16 %v836
  %v876 = vunpack.c.h.b16 %v836
  %v877 = vunpack.c.l.b16 %v837
  %v878 = vunpack.c.h.b16 %v837
  %v879 = vunpack.c.l.b16 %v838
  %v880 = vunpack.c.h.b16 %v838
  %v881 = vunpack.c.l.b16 %v839
  %v882 = vunpack.c.h.b16 %v839
  %v883 = vunpack.c.l.b16 %v840
  %v884 = vunpack.c.h.b16 %v840
  %v885 = vunpack.c.l.b16 %v841
  %v886 = vunpack.c.h.b16 %v841
  %v887 = vunpack.c.l.b16 %v842
  %v888 = vunpack.c.h.b16 %v842
  %v889 = vunpack.c.l.b16 %v843
  %v890 = vunpack.c.h.b16 %v843
  %v891 = vunpack.c.l.b16 %v844
  %v892 = vunpack.c.h.b16 %v844
  %v893 = vunpack.c.l.b16 %v845
  %v894 = vunpack.c.h.b16 %v845
  %v895 = vunpack.c.l.b16 %v846
  %v896 = vunpack.c.h.b16 %v846
  %v897 = vunpack.c.l.b16 %v847
  %v898 = vunpack.c.h.b16 %v847
  %v899 = vunpack.c.l.b16 %v848
  %v900 = vunpack.c.h.b16 %v848
  %v901 = vunpack.c.l.b16 %v849
  %v902 = vunpack.c.h.b16 %v849
  %v903 = vunpack.c.l.b16 %v850
  %v904 = vunpack.c.h.b16 %v850
  %v905 = vpack.c.b16 %v871, %v869
  %v906 = vpack.c.b16 %v872, %v870
  %v907 = vpack.c.b16 %v875, %v873
  %v908 = vpack.c.b16 %v876, %v874
  %v909 = vpack.c.b16 %v879, %v877
  %v910 = vpack.c.b16 %v880, %v878
  %v911 = vpack.c.b16 %v883, %v881
  %v912 = vpack.c.b16 %v884, %v882
  %v913 = vpack.c.b16 %v887, %v885
  %v914 = vpack.c.b16 %v888, %v886
  %v915 = vpack.c.b16 %v891, %v889
  %v916 = vpack.c.b16 %v892, %v890
  %v917 = vpack.c.b16 %v895, %v893
  %v918 = vpack.c.b16 %v896, %v894
  %v919 = vpack.c.b16 %v899, %v897
  %v920 = vpack.c.b16 %v900, %v898
  %v921 = vpack.c.b16 %v903, %v901
  %v922 = vpack.c.b16 %v904, %v902
  %v956 = vunpack.c.l.b16 %v809
  %v957 = vunpack.c.h.b16 %v809
  %v958 = vunpack.c.l.b16 %v810
  %v959 = vunpack.c.h.b16 %v810
  %v960 = vunpack.c.l.b16 %v811
  %v961 = vunpack.c.h.b16 %v811
  %v962 = vunpack.c.l.b16 %v812
  %v963 = vunpack.c.h.b16 %v812
  %v964 = vunpack.c.l.b16 %v813
  %v965 = vunpack.c.h.b16 %v813
  %v966 = vunpack.c.l.b16 %v814
  %v967 = vunpack.c.h.b16 %v814
  %v968 = vunpack.c.l.b16 %v815
  %v969 = vunpack.c.h.b16 %v815
  %v970 = vunpack.c.l.b16 %v816
  %v971 = vunpack.c.h.b16 %v816
  %v972 = vunpack.c.l.b16 %v817
  %v973 = vunpack.c.h.b16 %v817
  %v974 = vunpack.c.l.b16 %v818
  %v975 = vunpack.c.h.b16 %v818
  %v976 = vunpack.c.l.b16 %v819
  %v977 = vunpack.c.h.b16 %v819
  %v978 = vunpack.c.l.b16 %v820
  %v979 = vunpack.c.h.b16 %v820
  %v980 = vunpack.c.l.b16 %v821
  %v981 = vunpack.c.h.b16 %v821
  %v982 = vunpack.c.l.b16 %v822
  %v983 = vunpack.c.h.b16 %v822
  %v984 = vunpack.c.l.b16 %v823
  %v985 = vunpack.c.h.b16 %v823
  %v986 = vunpack.c.l.b16 %v824
  %v987 = vunpack.c.h.b16 %v824
  %v988 = vunpack.c.l.b16 %v825
  %v989 = vunpack.c.h.b16 %v825
  %v990 = vunpack.c.l.b16 %v826
  %v991 = vunpack.c.h.b16 %v826
  %v992 = vunpack.c.l.b16 %v827
  %v993 = vunpack.c.h.b16 %v827
  %v994 = vunpack.c.l.b16 %v828
  %v995 = vunpack.c.h.b16 %v828
  %v996 = vunpack.c.l.b16 %v829
  %v997 = vunpack.c.h.b16 %v829
  %v998 = vunpack.c.l.b16 %v830
  %v999 = vunpack.c.h.b16 %v830
  %v1000 = vunpack.c.l.b16 %v831
  %v1001 = vunpack.c.h.b16 %v831
  %v1002 = vunpack.c.l.b16 %v832
  %v1003 = vunpack.c.h.b16 %v832
  %v1004 = vpack.c.b16 %v958, %v956
  %v1005 = vpack.c.b16 %v959, %v957
  %v1006 = vpack.c.b16 %v962, %v960
  %v1007 = vpack.c.b16 %v963, %v961
  %v1008 = vpack.c.b16 %v966, %v964
  %v1009 = vpack.c.b16 %v967, %v965
  %v1010 = vpack.c.b16 %v970, %v968
  %v1011 = vpack.c.b16 %v971, %v969
  %v1012 = vpack.c.b16 %v974, %v972
  %v1013 = vpack.c.b16 %v975, %v973
  %v1014 = vpack.c.b16 %v978, %v976
  %v1015 = vpack.c.b16 %v979, %v977
  %v1016 = vpack.c.b16 %v982, %v980
  %v1017 = vpack.c.b16 %v983, %v981
  %v1018 = vpack.c.b16 %v986, %v984
  %v1019 = vpack.c.b16 %v987, %v985
  %v1020 = vpack.c.b16 %v990, %v988
  %v1021 = vpack.c.b16 %v991, %v989
  %v1022 = vpack.c.b16 %v994, %v992
  %v1023 = vpack.c.b16 %v995, %v993
  %v1024 = vpack.c.b16 %v998, %v996
  %v1025 = vpack.c.b16 %v999, %v997
  %v1026 = vpack.c.b16 %v1002, %v1000
  %v1027 = vpack.c.b16 %v1003, %v1001
  %1028 = vrot.lane.b32.xlu0 %v1004, 64
  %v1029 = vpop.permute.xlu0 %1028
  %1030 = vrot.lane.b32.xlu0 %v1005, 64
  %v1031 = vpop.permute.xlu0 %1030
  %1032 = vrot.lane.b32.xlu0 %v1006, 64
  %v1033 = vpop.permute.xlu0 %1032
  %1034 = vrot.lane.b32.xlu0 %v1007, 64
  %v1035 = vpop.permute.xlu0 %1034
  %1036 = vrot.lane.b32.xlu0 %v1008, 64
  %v1037 = vpop.permute.xlu0 %1036
  %1038 = vrot.lane.b32.xlu0 %v1009, 64
  %v1039 = vpop.permute.xlu0 %1038
  %1040 = vrot.lane.b32.xlu0 %v1010, 64
  %v1041 = vpop.permute.xlu0 %1040
  %1042 = vrot.lane.b32.xlu0 %v1011, 64
  %v1043 = vpop.permute.xlu0 %1042
  %1044 = vrot.lane.b32.xlu0 %v1012, 64
  %v1045 = vpop.permute.xlu0 %1044
  %1046 = vrot.lane.b32.xlu0 %v1013, 64
  %v1047 = vpop.permute.xlu0 %1046
  %1048 = vrot.lane.b32.xlu0 %v1014, 64
  %v1049 = vpop.permute.xlu0 %1048
  %1050 = vrot.lane.b32.xlu0 %v1015, 64
  %v1051 = vpop.permute.xlu0 %1050
  %1052 = vrot.lane.b32.xlu0 %v1016, 64
  %v1053 = vpop.permute.xlu0 %1052
  %1054 = vrot.lane.b32.xlu0 %v1017, 64
  %v1055 = vpop.permute.xlu0 %1054
  %1056 = vrot.lane.b32.xlu0 %v1018, 64
  %v1057 = vpop.permute.xlu0 %1056
  %1058 = vrot.lane.b32.xlu0 %v1019, 64
  %v1059 = vpop.permute.xlu0 %1058
  %1060 = vrot.lane.b32.xlu0 %v1020, 64
  %v1061 = vpop.permute.xlu0 %1060
  %1062 = vrot.lane.b32.xlu0 %v1021, 64
  %v1063 = vpop.permute.xlu0 %1062
  %1064 = vrot.lane.b32.xlu0 %v1022, 64
  %v1065 = vpop.permute.xlu0 %1064
  %1066 = vrot.lane.b32.xlu0 %v1023, 64
  %v1067 = vpop.permute.xlu0 %1066
  %1068 = vrot.lane.b32.xlu0 %v1024, 64
  %v1069 = vpop.permute.xlu0 %1068
  %1070 = vrot.lane.b32.xlu0 %v1025, 64
  %v1071 = vpop.permute.xlu0 %1070
  %1072 = vrot.lane.b32.xlu0 %v1026, 64
  %v1073 = vpop.permute.xlu0 %1072
  %1074 = vrot.lane.b32.xlu0 %v1027, 64
  %v1075 = vpop.permute.xlu0 %1074
  %vm1076 = vcmask 523264
  %v1077 = vsel %vm1076, %v1029, %v1031
  %v1078 = vsel %vm1076, %v1033, %v1035
  %v1079 = vsel %vm1076, %v1037, %v1039
  %v1080 = vsel %vm1076, %v1041, %v1043
  %v1081 = vsel %vm1076, %v1045, %v1047
  %v1082 = vsel %vm1076, %v1049, %v1051
  %v1083 = vsel %vm1076, %v1053, %v1055
  %v1084 = vsel %vm1076, %v1057, %v1059
  %v1085 = vsel %vm1076, %v1061, %v1063
  %v1086 = vsel %vm1076, %v1065, %v1067
  %v1087 = vsel %vm1076, %v1069, %v1071
  %v1088 = vsel %vm1076, %v1073, %v1075
  %v1114 = vsel %vm417, %v906, 0
  %v1117 = vsel %vm417, %v908, 0
  %v1120 = vsel %vm417, %v910, 0
  %v1123 = vsel %vm417, %v912, 0
  %v1126 = vsel %vm417, %v914, 0
  %v1129 = vsel %vm417, %v916, 0
  %v1132 = vsel %vm417, %v918, 0
  %v1135 = vsel %vm417, %v920, 0
  %v1138 = vsel %vm417, %v922, 0
  %1140 = vmatprep.subr.bf16.mxu0 %v1031
  %1141 = vmatpush1.bf16.msra.mxu0 %v1077
  %1142 = vmatprep.subr.bf16.mxu0 %v1035
  %1143 = vmatpush1.bf16.msra.mxu0 %v1078
  %1144 = vmatprep.subr.bf16.mxu0 %v1039
  %1145 = vmatpush1.bf16.msra.mxu0 %v1079
  %1146 = vmatprep.subr.bf16.mxu0 %v1043
  %1147 = vmatpush1.bf16.msra.mxu0 %v1080
  %1148 = vmatprep.subr.bf16.mxu0 %v1047
  %1149 = vmatpush1.bf16.msra.mxu0 %v1081
  %1150 = vmatprep.subr.bf16.mxu0 %v1051
  %1151 = vmatpush1.bf16.msra.mxu0 %v1082
  %1152 = vmatprep.subr.bf16.mxu0 %v1055
  %1153 = vmatpush1.bf16.msra.mxu0 %v1083
  %1154 = vmatprep.subr.bf16.mxu0 %v1059
  %1155 = vmatpush1.bf16.msra.mxu0 %v1084
  %1156 = vmatprep.subr.bf16.mxu0 %v1063
  %1157 = vmatpush1.bf16.msra.mxu0 %v1085
  %1158 = vmatprep.subr.bf16.mxu0 %v1067
  %1159 = vmatpush1.bf16.msra.mxu0 %v1086
  %1160 = vmatprep.subr.bf16.mxu0 %v1071
  %1161 = vmatpush1.bf16.msra.mxu0 %v1087
  %1162 = vmatprep.subr.bf16.mxu0 %v1075
  %1163 = vmatpush1.bf16.msra.mxu0 %v1088
  %1164 = vmatprep.subr.bf16.mxu0 0
  %1165 = vmatpush1.bf16.msra.mxu0 0
  %1166 = vmatprep.subr.bf16.mxu0 0
  %1167 = vmatpush1.bf16.msra.mxu0 0
  %1168 = vmatprep.subr.bf16.mxu0 0
  %1169 = vmatpush1.bf16.msra.mxu0 0
  %1170 = vmatprep.subr.bf16.mxu0 0
  %1171 = vmatpush1.bf16.msra.mxu0 0
  %1172 = vmatprep.mubr.bf16.mxu0 %v1114
  %1173 = vmatmul.mubr.bf16.gmra.mrb[0].mxu0 %v905
  %v1174 = vpop.f32.mrb[0].mxu0
  %v1175 = vadd.f32 %v87, %v1174
  %v1176 = vpop.f32.mrb[0].mxu0
  %v1177 = vadd.f32 %v87, %v1176
  %v1178 = vpop.f32.mrb[0].mxu0
  %v1179 = vadd.f32 %v92, %v1178
  %v1180 = vpop.f32.mrb[0].mxu0
  %v1181 = vadd.f32 %v92, %v1180
  %1182 = vmatprep.mubr.bf16.mxu0 %v1117
  %1183 = vmatmul.mubr.bf16.gmra.mrb[0].mxu0 %v907
  %v1184 = vpop.f32.mrb[0].mxu0
  %v1185 = vadd.f32 %v97, %v1184
  %v1186 = vpop.f32.mrb[0].mxu0
  %v1187 = vadd.f32 %v97, %v1186
  %v1188 = vpop.f32.mrb[0].mxu0
  %v1189 = vadd.f32 %v102, %v1188
  %v1190 = vpop.f32.mrb[0].mxu0
  %v1191 = vadd.f32 %v102, %v1190
  %1192 = vmatprep.mubr.bf16.mxu0 %v1120
  %1193 = vmatmul.mubr.bf16.gmra.mrb[0].mxu0 %v909
  %v1194 = vpop.f32.mrb[0].mxu0
  %v1195 = vadd.f32 %v107, %v1194
  %v1196 = vpop.f32.mrb[0].mxu0
  %v1197 = vadd.f32 %v107, %v1196
  %v1198 = vpop.f32.mrb[0].mxu0
  %v1199 = vadd.f32 %v112, %v1198
  %v1200 = vpop.f32.mrb[0].mxu0
  %v1201 = vadd.f32 %v112, %v1200
  %1202 = vmatprep.mubr.bf16.mxu0 %v1123
  %1203 = vmatmul.mubr.bf16.gmra.mrb[0].mxu0 %v911
  %v1204 = vpop.f32.mrb[0].mxu0
  %v1205 = vadd.f32 %v117, %v1204
  %v1206 = vpop.f32.mrb[0].mxu0
  %v1207 = vadd.f32 %v117, %v1206
  %v1208 = vpop.f32.mrb[0].mxu0
  %v1209 = vadd.f32 %v122, %v1208
  %v1210 = vpop.f32.mrb[0].mxu0
  %v1211 = vadd.f32 %v122, %v1210
  %1212 = vmatprep.mubr.bf16.mxu0 %v1126
  %1213 = vmatmul.mubr.bf16.gmra.mrb[0].mxu0 %v913
  %v1214 = vpop.f32.mrb[0].mxu0
  %v1215 = vadd.f32 %v127, %v1214
  %v1216 = vpop.f32.mrb[0].mxu0
  %v1217 = vadd.f32 %v127, %v1216
  %v1218 = vpop.f32.mrb[0].mxu0
  %v1219 = vadd.f32 %v132, %v1218
  %v1220 = vpop.f32.mrb[0].mxu0
  %v1221 = vadd.f32 %v132, %v1220
  %1222 = vmatprep.mubr.bf16.mxu0 %v1129
  %1223 = vmatmul.mubr.bf16.gmra.mrb[0].mxu0 %v915
  %v1224 = vpop.f32.mrb[0].mxu0
  %v1225 = vadd.f32 %v137, %v1224
  %v1226 = vpop.f32.mrb[0].mxu0
  %v1227 = vadd.f32 %v137, %v1226
  %v1228 = vpop.f32.mrb[0].mxu0
  %v1229 = vadd.f32 %v142, %v1228
  %v1230 = vpop.f32.mrb[0].mxu0
  %v1231 = vadd.f32 %v142, %v1230
  %1232 = vmatprep.mubr.bf16.mxu0 %v1132
  %1233 = vmatmul.mubr.bf16.gmra.mrb[0].mxu0 %v917
  %v1234 = vpop.f32.mrb[0].mxu0
  %v1235 = vadd.f32 %v147, %v1234
  %v1236 = vpop.f32.mrb[0].mxu0
  %v1237 = vadd.f32 %v147, %v1236
  %v1238 = vpop.f32.mrb[0].mxu0
  %v1239 = vadd.f32 %v152, %v1238
  %v1240 = vpop.f32.mrb[0].mxu0
  %v1241 = vadd.f32 %v152, %v1240
  %1242 = vmatprep.mubr.bf16.mxu0 %v1135
  %1243 = vmatmul.mubr.bf16.gmra.mrb[0].mxu0 %v919
  %v1244 = vpop.f32.mrb[0].mxu0
  %v1245 = vadd.f32 %v157, %v1244
  %v1246 = vpop.f32.mrb[0].mxu0
  %v1247 = vadd.f32 %v157, %v1246
  %v1248 = vpop.f32.mrb[0].mxu0
  %v1249 = vadd.f32 %v162, %v1248
  %v1250 = vpop.f32.mrb[0].mxu0
  %v1251 = vadd.f32 %v162, %v1250
  %1252 = vmatprep.mubr.bf16.mxu0 %v1138
  %1253 = vmatmul.mubr.bf16.gmra.mrb[0].mxu0 %v921
  %v1254 = vpop.f32.mrb[0].mxu0
  %v1255 = vadd.f32 %v167, %v1254
  %v1256 = vpop.f32.mrb[0].mxu0
  %v1257 = vadd.f32 %v167, %v1256
  %v1258 = vpop.f32.mrb[0].mxu0
  %v1259 = vadd.f32 %v172, %v1258
  %v1260 = vpop.f32.mrb[0].mxu0
  %v1261 = vadd.f32 %v172, %v1260
  %1262 = vdwg.mxu0
  %v1263 = vmax.f32 %v1175, 0.0
  %v1264 = vmax.f32 %v1177, 0.0
  %v1265 = vmax.f32 %v1179, 0.0
  %v1266 = vmax.f32 %v1181, 0.0
  %v1267 = vmax.f32 %v1185, 0.0
  %v1268 = vmax.f32 %v1187, 0.0
  %v1269 = vmax.f32 %v1189, 0.0
  %v1270 = vmax.f32 %v1191, 0.0
  %v1271 = vmax.f32 %v1195, 0.0
  %v1272 = vmax.f32 %v1197, 0.0
  %v1273 = vmax.f32 %v1199, 0.0
  %v1274 = vmax.f32 %v1201, 0.0
  %v1275 = vmax.f32 %v1205, 0.0
  %v1276 = vmax.f32 %v1207, 0.0
  %v1277 = vmax.f32 %v1209, 0.0
  %v1278 = vmax.f32 %v1211, 0.0
  %v1279 = vmax.f32 %v1215, 0.0
  %v1280 = vmax.f32 %v1217, 0.0
  %v1281 = vmax.f32 %v1219, 0.0
  %v1282 = vmax.f32 %v1221, 0.0
  %v1283 = vmax.f32 %v1225, 0.0
  %v1284 = vmax.f32 %v1227, 0.0
  %v1285 = vmax.f32 %v1229, 0.0
  %v1286 = vmax.f32 %v1231, 0.0
  %v1287 = vmax.f32 %v1235, 0.0
  %v1288 = vmax.f32 %v1237, 0.0
  %v1289 = vmax.f32 %v1239, 0.0
  %v1290 = vmax.f32 %v1241, 0.0
  %v1291 = vmax.f32 %v1245, 0.0
  %v1292 = vmax.f32 %v1247, 0.0
  %v1293 = vmax.f32 %v1249, 0.0
  %v1294 = vmax.f32 %v1251, 0.0
  %v1295 = vmax.f32 %v1255, 0.0
  %v1296 = vmax.f32 %v1257, 0.0
  %v1297 = vmax.f32 %v1259, 0.0
  %v1298 = vmax.f32 %v1261, 0.0
  %v1299 = vmax.f32 %v1287, %v1291
  %v1300 = vmax.f32 %v1288, %v1292
  %v1301 = vmax.f32 %v1289, %v1293
  %v1302 = vmax.f32 %v1290, %v1294
  %v1303 = vmax.f32 %v1299, %v1295
  %v1304 = vmax.f32 %v1300, %v1296
  %v1305 = vmax.f32 %v1301, %v1297
  %v1306 = vmax.f32 %v1302, %v1298
  %v1307 = vmax.f32 %v1303, %v1275
  %v1308 = vmax.f32 %v1304, %v1276
  %v1309 = vmax.f32 %v1305, %v1277
  %v1310 = vmax.f32 %v1306, %v1278
  %v1311 = vmax.f32 %v1307, %v1279
  %v1312 = vmax.f32 %v1308, %v1280
  %v1313 = vmax.f32 %v1309, %v1281
  %v1314 = vmax.f32 %v1310, %v1282
  %v1315 = vmax.f32 %v1311, %v1283
  %v1316 = vmax.f32 %v1312, %v1284
  %v1317 = vmax.f32 %v1313, %v1285
  %v1318 = vmax.f32 %v1314, %v1286
  %v1319 = vmax.f32 %v1263, %v1267
  %v1320 = vmax.f32 %v1264, %v1268
  %v1321 = vmax.f32 %v1265, %v1269
  %v1322 = vmax.f32 %v1266, %v1270
  %v1323 = vmax.f32 %v1319, %v1271
  %v1324 = vmax.f32 %v1320, %v1272
  %v1325 = vmax.f32 %v1321, %v1273
  %v1326 = vmax.f32 %v1322, %v1274
  %v1327 = vmax.f32 %v1315, %v1323
  %v1328 = vmax.f32 %v1316, %v1324
  %v1329 = vmax.f32 %v1317, %v1325
  %v1330 = vmax.f32 %v1318, %v1326
  %v1331 = vmax.f32 %v1323, %v1275
  %v1332 = vmax.f32 %v1324, %v1276
  %v1333 = vmax.f32 %v1325, %v1277
  %v1334 = vmax.f32 %v1326, %v1278
  %v1335 = vmax.f32 %v1331, %v1279
  %v1336 = vmax.f32 %v1332, %v1280
  %v1337 = vmax.f32 %v1333, %v1281
  %v1338 = vmax.f32 %v1334, %v1282
  %v1339 = vmax.f32 %v1335, %v1283
  %v1340 = vmax.f32 %v1336, %v1284
  %v1341 = vmax.f32 %v1337, %v1285
  %v1342 = vmax.f32 %v1338, %v1286
  %v1343 = vmax.f32 %v1339, %v1287
  %v1344 = vmax.f32 %v1340, %v1288
  %v1345 = vmax.f32 %v1341, %v1289
  %v1346 = vmax.f32 %v1342, %v1290
  %1351 = vrot.lane.b32.xlu0 %v1327, 127
  %v1352 = vpop.permute.xlu0 %1351
  %1353 = vrot.lane.b32.xlu0 %v1328, 127
  %v1354 = vpop.permute.xlu0 %1353
  %1355 = vrot.lane.b32.xlu0 %v1329, 127
  %v1356 = vpop.permute.xlu0 %1355
  %1357 = vrot.lane.b32.xlu0 %v1330, 127
  %v1358 = vpop.permute.xlu0 %1357
  %v1359 = vsel %vm664, %v1352, %v1354
  %v1360 = vsel %vm664, %v1356, %v1358
  %v1365 = vmax.f32 %v1327, %v1359
  %v1366 = vmax.f32 %v1328, %v1354
  %v1367 = vmax.f32 %v1329, %v1360
  %v1368 = vmax.f32 %v1330, %v1358
  %1373 = vrot.lane.b32.xlu0 %v1365, 126
  %v1374 = vpop.permute.xlu0 %1373
  %1375 = vrot.lane.b32.xlu0 %v1366, 126
  %v1376 = vpop.permute.xlu0 %1375
  %1377 = vrot.lane.b32.xlu0 %v1367, 126
  %v1378 = vpop.permute.xlu0 %1377
  %1379 = vrot.lane.b32.xlu0 %v1368, 126
  %v1380 = vpop.permute.xlu0 %1379
  %v1381 = vsel %vm687, %v1374, %v1376
  %v1382 = vsel %vm687, %v1378, %v1380
  %v1387 = vmax.f32 %v1365, %v1381
  %v1388 = vmax.f32 %v1366, %v1376
  %v1389 = vmax.f32 %v1367, %v1382
  %v1390 = vmax.f32 %v1368, %v1380
  %1395 = vrot.lane.b32.xlu0 %v1387, 127
  %v1396 = vpop.permute.xlu0 %1395
  %1397 = vrot.lane.b32.xlu0 %v1388, 127
  %v1398 = vpop.permute.xlu0 %1397
  %1399 = vrot.lane.b32.xlu0 %v1389, 127
  %v1400 = vpop.permute.xlu0 %1399
  %1401 = vrot.lane.b32.xlu0 %v1390, 127
  %v1402 = vpop.permute.xlu0 %1401
  %v1403 = vsel %vm664, %v1396, %v1398
  %v1404 = vsel %vm664, %v1400, %v1402
  %v1409 = vmax.f32 %v1327, %v1403
  %v1410 = vmax.f32 %v1328, %v1398
  %v1411 = vmax.f32 %v1329, %v1404
  %v1412 = vmax.f32 %v1330, %v1402
  %1417 = vrot.lane.b32.xlu0 %v1263, 123
  %v1418 = vpop.permute.xlu0 %1417
  %1419 = vrot.lane.b32.xlu0 %v1264, 123
  %v1420 = vpop.permute.xlu0 %1419
  %1421 = vrot.lane.b32.xlu0 %v1265, 123
  %v1422 = vpop.permute.xlu0 %1421
  %1423 = vrot.lane.b32.xlu0 %v1266, 123
  %v1424 = vpop.permute.xlu0 %1423
  %v1425 = vsel %vm732, %v1418, %v1420
  %v1426 = vsel %vm732, %v1422, %v1424
  %v1431 = vmax.f32 %v1409, %v1425
  %v1432 = vmax.f32 %v1410, %v1420
  %v1433 = vmax.f32 %v1411, %v1426
  %v1434 = vmax.f32 %v1412, %v1424
  %v1435 = vmax.f32 %v1315, %v1403
  %v1436 = vmax.f32 %v1316, %v1398
  %v1437 = vmax.f32 %v1317, %v1404
  %v1438 = vmax.f32 %v1318, %v1402
  %1443 = vrot.lane.b32.xlu0 %v1331, 123
  %v1444 = vpop.permute.xlu0 %1443
  %1445 = vrot.lane.b32.xlu0 %v1332, 123
  %v1446 = vpop.permute.xlu0 %1445
  %1447 = vrot.lane.b32.xlu0 %v1333, 123
  %v1448 = vpop.permute.xlu0 %1447
  %1449 = vrot.lane.b32.xlu0 %v1334, 123
  %v1450 = vpop.permute.xlu0 %1449
  %v1451 = vsel %vm732, %v1444, %v1446
  %v1452 = vsel %vm732, %v1448, %v1450
  %v1457 = vmax.f32 %v1435, %v1451
  %v1458 = vmax.f32 %v1436, %v1446
  %v1459 = vmax.f32 %v1437, %v1452
  %v1460 = vmax.f32 %v1438, %v1450
  %v1461 = vmax.f32 %v1303, %v1403
  %v1462 = vmax.f32 %v1304, %v1398
  %v1463 = vmax.f32 %v1305, %v1404
  %v1464 = vmax.f32 %v1306, %v1402
  %1469 = vrot.lane.b32.xlu0 %v1343, 123
  %v1470 = vpop.permute.xlu0 %1469
  %1471 = vrot.lane.b32.xlu0 %v1344, 123
  %v1472 = vpop.permute.xlu0 %1471
  %1473 = vrot.lane.b32.xlu0 %v1345, 123
  %v1474 = vpop.permute.xlu0 %1473
  %1475 = vrot.lane.b32.xlu0 %v1346, 123
  %v1476 = vpop.permute.xlu0 %1475
  %v1477 = vsel %vm732, %v1470, %v1472
  %v1478 = vsel %vm732, %v1474, %v1476
  %v1483 = vmax.f32 %v1461, %v1477
  %v1484 = vmax.f32 %v1462, %v1472
  %v1485 = vmax.f32 %v1463, %v1478
  %v1486 = vmax.f32 %v1464, %v1476
  %1487 = vst [vmem:[#allocation2 + $0x10] sm:$0xff] %v1431
  %1488 = vst.msk [vmem:[#allocation2 + $0x18] sm:$0xff] %vm796, %v1432
  %1489 = vst [vmem:[#allocation2 + $0x38] sm:$0x3] %v1433
  %1490 = vst.msk [vmem:[#allocation2 + $0x40] sm:$0x3] %vm799, %v1434
  %1491 = vst [vmem:[#allocation2 + $0x60] sm:$0xff] %v1457
  %1492 = vst.msk [vmem:[#allocation2 + $0x68] sm:$0xff] %vm796, %v1458
  %1493 = vst [vmem:[#allocation2 + $0x88] sm:$0x3] %v1459
  %1494 = vst.msk [vmem:[#allocation2 + $0x90] sm:$0x3] %vm799, %v1460
  %1495 = vst [vmem:[#allocation2 + $0xb0] sm:$0xff] %v1483
  %1496 = vst.msk [vmem:[#allocation2 + $0xb8] sm:$0xff] %vm796, %v1484
  %1497 = vst [vmem:[#allocation2 + $0xd8] sm:$0x3] %v1485
  %1498 = vst.msk [vmem:[#allocation2 + $0xe0] sm:$0x3] %vm799, %v1486
  %v1499 = vld [vmem:[%s4] sm:$0xff]
  %1501 = vset.pattern.permute.xlu0 0
  %1502 = vperm.xlu0 %1501, %v1499
  %v1503 = vpop.permute.xlu0 %1502
  %v1505 = vld [vmem:[%s3] sm:$0xff]
  %v1506 = vld [vmem:[#allocation2] sm:$0xff]
  %v1507 = vld [vmem:[#allocation2 + $0x8] sm:$0xff]
  %v1508 = vld [vmem:[#allocation2 + $0x10] sm:$0xff]
  %v1509 = vld [vmem:[#allocation2 + $0x18] sm:$0xff]
  %v1510 = vld [vmem:[#allocation2 + $0x28] sm:$0xff]
  %v1511 = vld [vmem:[#allocation2 + $0x30] sm:$0xff]
  %v1512 = vld [vmem:[#allocation2 + $0x38] sm:$0xff]
  %v1513 = vld [vmem:[#allocation2 + $0x40] sm:$0xff]
  %v1514 = vld [vmem:[#allocation2 + $0x50] sm:$0xff]
  %v1515 = vld [vmem:[#allocation2 + $0x58] sm:$0xff]
  %v1516 = vld [vmem:[#allocation2 + $0x60] sm:$0xff]
  %v1517 = vld [vmem:[#allocation2 + $0x68] sm:$0xff]
  %v1518 = vld [vmem:[#allocation2 + $0x78] sm:$0xff]
  %v1519 = vld [vmem:[#allocation2 + $0x80] sm:$0xff]
  %v1520 = vld [vmem:[#allocation2 + $0x88] sm:$0xff]
  %v1521 = vld [vmem:[#allocation2 + $0x90] sm:$0xff]
  %v1522 = vld [vmem:[#allocation2 + $0xa0] sm:$0xff]
  %v1523 = vld [vmem:[#allocation2 + $0xa8] sm:$0xff]
  %v1524 = vld [vmem:[#allocation2 + $0xb0] sm:$0xff]
  %v1525 = vld [vmem:[#allocation2 + $0xb8] sm:$0xff]
  %v1526 = vld [vmem:[#allocation2 + $0xc8] sm:$0xff]
  %v1527 = vld [vmem:[#allocation2 + $0xd0] sm:$0xff]
  %v1528 = vld [vmem:[#allocation2 + $0xd8] sm:$0xff]
  %v1529 = vld [vmem:[#allocation2 + $0xe0] sm:$0xff]
  %v1531 = vsel %vm796, %v1505, 0
  %1533 = vmatprep.subr.mxu0 %v1507
  %1534 = vmatpush1.msra.mxu0 %v1506
  %1535 = vmatprep.subr.mxu0 %v1511
  %1536 = vmatpush1.msra.mxu0 %v1510
  %1537 = vmatprep.subr.mxu0 %v1515
  %1538 = vmatpush1.msra.mxu0 %v1514
  %1539 = vmatprep.subr.mxu0 %v1519
  %1540 = vmatpush1.msra.mxu0 %v1518
  %1541 = vmatprep.subr.mxu0 %v1523
  %1542 = vmatpush1.msra.mxu0 %v1522
  %1543 = vmatprep.subr.mxu0 %v1527
  %1544 = vmatpush1.msra.mxu0 %v1526
  %1545 = vmatprep.subr.mxu0 0.0
  %1546 = vmatpush1.msra.mxu0 0.0
  %1547 = vmatprep.subr.mxu0 0.0
  %1548 = vmatpush1.msra.mxu0 0.0
  %1549 = vmatprep.subr.mxu0 0.0
  %1550 = vmatpush1.msra.mxu0 0.0
  %1551 = vmatprep.subr.mxu0 0.0
  %1552 = vmatpush1.msra.mxu0 0.0
  %1553 = vmatprep.subr.mxu0 0.0
  %1554 = vmatpush1.msra.mxu0 0.0
  %1555 = vmatprep.subr.mxu0 0.0
  %1556 = vmatpush1.msra.mxu0 0.0
  %1557 = vmatprep.subr.mxu0 0.0
  %1558 = vmatpush1.msra.mxu0 0.0
  %1559 = vmatprep.subr.mxu0 0.0
  %1560 = vmatpush1.msra.mxu0 0.0
  %1561 = vmatprep.subr.mxu0 0.0
  %1562 = vmatpush1.msra.mxu0 0.0
  %1563 = vmatprep.subr.mxu0 0.0
  %1564 = vmatpush1.msra.mxu0 0.0
  %1565 = vmatprep.subr.mxu0 0.0
  %1566 = vmatpush1.msra.mxu0 0.0
  %1567 = vmatprep.subr.mxu0 0.0
  %1568 = vmatpush1.msra.mxu0 0.0
  %1569 = vmatprep.subr.mxu0 0.0
  %1570 = vmatpush1.msra.mxu0 0.0
  %1571 = vmatprep.subr.mxu0 0.0
  %1572 = vmatpush1.msra.mxu0 0.0
  %1573 = vmatprep.subr.mxu0 0.0
  %1574 = vmatpush1.msra.mxu0 0.0
  %1575 = vmatprep.subr.mxu0 0.0
  %1576 = vmatpush1.msra.mxu0 0.0
  %1577 = vmatprep.subr.mxu0 0.0
  %1578 = vmatpush1.msra.mxu0 0.0
  %1579 = vmatprep.subr.mxu0 0.0
  %1580 = vmatpush1.msra.mxu0 0.0
  %1581 = vmatprep.subr.mxu0 0.0
  %1582 = vmatpush1.msra.mxu0 0.0
  %1583 = vmatprep.subr.mxu0 0.0
  %1584 = vmatpush1.msra.mxu0 0.0
  %1585 = vmatprep.subr.mxu0 0.0
  %1586 = vmatpush1.msra.mxu0 0.0
  %1587 = vmatprep.subr.mxu0 0.0
  %1588 = vmatpush1.msra.mxu0 0.0
  %1589 = vmatprep.subr.mxu0 0.0
  %1590 = vmatpush1.msra.mxu0 0.0
  %1591 = vmatprep.subr.mxu0 0.0
  %1592 = vmatpush1.msra.mxu0 0.0
  %1593 = vmatprep.subr.mxu0 0.0
  %1594 = vmatpush1.msra.mxu0 0.0
  %1595 = vmatprep.subr.mxu0 0.0
  %1596 = vmatpush1.msra.mxu0 0.0
  %1597 = vmatprep.mubr.f32.mxu0 0.0
  %1598 = vmatmul.mubr.f32.gmra.mrb[0].mxu0 %v1531
  %v1599 = vpop.f32.mrb[0].mxu0
  %v1600 = vadd.f32 0.0, %v1599
  %v1601 = vpop.f32.mrb[0].mxu0
  %v1602 = vadd.f32 0.0, %v1601
  %1603 = vdwg.mxu0
  %1604 = vmatprep.subr.mxu0 %v1509
  %1605 = vmatpush1.msra.mxu0 %v1508
  %1606 = vmatprep.subr.mxu0 %v1513
  %1607 = vmatpush1.msra.mxu0 %v1512
  %1608 = vmatprep.subr.mxu0 %v1517
  %1609 = vmatpush1.msra.mxu0 %v1516
  %1610 = vmatprep.subr.mxu0 %v1521
  %1611 = vmatpush1.msra.mxu0 %v1520
  %1612 = vmatprep.subr.mxu0 %v1525
  %1613 = vmatpush1.msra.mxu0 %v1524
  %1614 = vmatprep.subr.mxu0 %v1529
  %1615 = vmatpush1.msra.mxu0 %v1528
  %1616 = vmatprep.subr.mxu0 0.0
  %1617 = vmatpush1.msra.mxu0 0.0
  %1618 = vmatprep.subr.mxu0 0.0
  %1619 = vmatpush1.msra.mxu0 0.0
  %1620 = vmatprep.subr.mxu0 0.0
  %1621 = vmatpush1.msra.mxu0 0.0
  %1622 = vmatprep.subr.mxu0 0.0
  %1623 = vmatpush1.msra.mxu0 0.0
  %1624 = vmatprep.subr.mxu0 0.0
  %1625 = vmatpush1.msra.mxu0 0.0
  %1626 = vmatprep.subr.mxu0 0.0
  %1627 = vmatpush1.msra.mxu0 0.0
  %1628 = vmatprep.subr.mxu0 0.0
  %1629 = vmatpush1.msra.mxu0 0.0
  %1630 = vmatprep.subr.mxu0 0.0
  %1631 = vmatpush1.msra.mxu0 0.0
  %1632 = vmatprep.subr.mxu0 0.0
  %1633 = vmatpush1.msra.mxu0 0.0
  %1634 = vmatprep.subr.mxu0 0.0
  %1635 = vmatpush1.msra.mxu0 0.0
  %1636 = vmatprep.subr.mxu0 0.0
  %1637 = vmatpush1.msra.mxu0 0.0
  %1638 = vmatprep.subr.mxu0 0.0
  %1639 = vmatpush1.msra.mxu0 0.0
  %1640 = vmatprep.subr.mxu0 0.0
  %1641 = vmatpush1.msra.mxu0 0.0
  %1642 = vmatprep.subr.mxu0 0.0
  %1643 = vmatpush1.msra.mxu0 0.0
  %1644 = vmatprep.subr.mxu0 0.0
  %1645 = vmatpush1.msra.mxu0 0.0
  %1646 = vmatprep.subr.mxu0 0.0
  %1647 = vmatpush1.msra.mxu0 0.0
  %1648 = vmatprep.subr.mxu0 0.0
  %1649 = vmatpush1.msra.mxu0 0.0
  %1650 = vmatprep.subr.mxu0 0.0
  %1651 = vmatpush1.msra.mxu0 0.0
  %1652 = vmatprep.subr.mxu0 0.0
  %1653 = vmatpush1.msra.mxu0 0.0
  %1654 = vmatprep.subr.mxu0 0.0
  %1655 = vmatpush1.msra.mxu0 0.0
  %1656 = vmatprep.subr.mxu0 0.0
  %1657 = vmatpush1.msra.mxu0 0.0
  %1658 = vmatprep.subr.mxu0 0.0
  %1659 = vmatpush1.msra.mxu0 0.0
  %1660 = vmatprep.subr.mxu0 0.0
  %1661 = vmatpush1.msra.mxu0 0.0
  %1662 = vmatprep.subr.mxu0 0.0
  %1663 = vmatpush1.msra.mxu0 0.0
  %1664 = vmatprep.subr.mxu0 0.0
  %1665 = vmatpush1.msra.mxu0 0.0
  %1666 = vmatprep.subr.mxu0 0.0
  %1667 = vmatpush1.msra.mxu0 0.0
  %1668 = vmatprep.mubr.f32.mxu0 0.0
  %1669 = vmatmul.mubr.f32.gmra.mrb[0].mxu0 %v1531
  %v1670 = vpop.f32.mrb[0].mxu0
  %v1671 = vadd.f32 0.0, %v1670
  %v1672 = vpop.f32.mrb[0].mxu0
  %v1673 = vadd.f32 0.0, %v1672
  %1674 = vdwg.mxu0
  %v1675 = vadd.f32 %v1503, %v1600
  %v1676 = vadd.f32 %v1503, %v1602
  %v1677 = vadd.f32 %v1503, %v1671
  %v1678 = vadd.f32 %v1503, %v1673
  %s1679 = scalar_lea.vmem %s3, 8
  %v1680 = vld [vmem:[%s1679] sm:$0xff]
  %v1681 = vld [vmem:[#allocation2] sm:$0xff]
  %v1682 = vld [vmem:[#allocation2 + $0x8] sm:$0xff]
  %v1683 = vld [vmem:[#allocation2 + $0x10] sm:$0xff]
  %v1684 = vld [vmem:[#allocation2 + $0x18] sm:$0xff]
  %v1685 = vld [vmem:[#allocation2 + $0x20] sm:$0xff]
  %v1686 = vld [vmem:[#allocation2 + $0x28] sm:$0xff]
  %v1687 = vld [vmem:[#allocation2 + $0x30] sm:$0xff]
  %v1688 = vld [vmem:[#allocation2 + $0x38] sm:$0xff]
  %v1689 = vld [vmem:[#allocation2 + $0x40] sm:$0xff]
  %v1690 = vld [vmem:[#allocation2 + $0x48] sm:$0xff]
  %v1691 = vld [vmem:[#allocation2 + $0x50] sm:$0xff]
  %v1692 = vld [vmem:[#allocation2 + $0x58] sm:$0xff]
  %v1693 = vld [vmem:[#allocation2 + $0x60] sm:$0xff]
  %v1694 = vld [vmem:[#allocation2 + $0x68] sm:$0xff]
  %v1695 = vld [vmem:[#allocation2 + $0x70] sm:$0xff]
  %v1696 = vld [vmem:[#allocation2 + $0x78] sm:$0xff]
  %v1697 = vld [vmem:[#allocation2 + $0x80] sm:$0xff]
  %v1698 = vld [vmem:[#allocation2 + $0x88] sm:$0xff]
  %v1699 = vld [vmem:[#allocation2 + $0x90] sm:$0xff]
  %v1700 = vld [vmem:[#allocation2 + $0x98] sm:$0xff]
  %v1701 = vld [vmem:[#allocation2 + $0xa0] sm:$0xff]
  %v1702 = vld [vmem:[#allocation2 + $0xa8] sm:$0xff]
  %v1703 = vld [vmem:[#allocation2 + $0xb0] sm:$0xff]
  %v1704 = vld [vmem:[#allocation2 + $0xb8] sm:$0xff]
  %v1705 = vld [vmem:[#allocation2 + $0xc0] sm:$0xff]
  %v1706 = vld [vmem:[#allocation2 + $0xc8] sm:$0xff]
  %v1707 = vld [vmem:[#allocation2 + $0xd0] sm:$0xff]
  %v1708 = vld [vmem:[#allocation2 + $0xd8] sm:$0xff]
  %v1709 = vld [vmem:[#allocation2 + $0xe0] sm:$0xff]
  %v1710 = vld [vmem:[#allocation2 + $0xe8] sm:$0xff]
  %1741 = vrot.lane.b32.xlu0 %v1681, 127
  %v1742 = vpop.permute.xlu0 %1741
  %1743 = vrot.lane.b32.xlu0 %v1682, 127
  %v1744 = vpop.permute.xlu0 %1743
  %1745 = vrot.lane.b32.xlu0 %v1683, 127
  %v1746 = vpop.permute.xlu0 %1745
  %1747 = vrot.lane.b32.xlu0 %v1684, 127
  %v1748 = vpop.permute.xlu0 %1747
  %1749 = vrot.lane.b32.xlu0 %v1685, 127
  %v1750 = vpop.permute.xlu0 %1749
  %1751 = vrot.lane.b32.xlu0 %v1686, 127
  %v1752 = vpop.permute.xlu0 %1751
  %1753 = vrot.lane.b32.xlu0 %v1687, 127
  %v1754 = vpop.permute.xlu0 %1753
  %1755 = vrot.lane.b32.xlu0 %v1688, 127
  %v1756 = vpop.permute.xlu0 %1755
  %1757 = vrot.lane.b32.xlu0 %v1689, 127
  %v1758 = vpop.permute.xlu0 %1757
  %1759 = vrot.lane.b32.xlu0 %v1690, 127
  %v1760 = vpop.permute.xlu0 %1759
  %1761 = vrot.lane.b32.xlu0 %v1691, 127
  %v1762 = vpop.permute.xlu0 %1761
  %1763 = vrot.lane.b32.xlu0 %v1692, 127
  %v1764 = vpop.permute.xlu0 %1763
  %1765 = vrot.lane.b32.xlu0 %v1693, 127
  %v1766 = vpop.permute.xlu0 %1765
  %1767 = vrot.lane.b32.xlu0 %v1694, 127
  %v1768 = vpop.permute.xlu0 %1767
  %1769 = vrot.lane.b32.xlu0 %v1695, 127
  %v1770 = vpop.permute.xlu0 %1769
  %1771 = vrot.lane.b32.xlu0 %v1696, 127
  %v1772 = vpop.permute.xlu0 %1771
  %1773 = vrot.lane.b32.xlu0 %v1697, 127
  %v1774 = vpop.permute.xlu0 %1773
  %1775 = vrot.lane.b32.xlu0 %v1698, 127
  %v1776 = vpop.permute.xlu0 %1775
  %1777 = vrot.lane.b32.xlu0 %v1699, 127
  %v1778 = vpop.permute.xlu0 %1777
  %1779 = vrot.lane.b32.xlu0 %v1700, 127
  %v1780 = vpop.permute.xlu0 %1779
  %1781 = vrot.lane.b32.xlu0 %v1701, 127
  %v1782 = vpop.permute.xlu0 %1781
  %1783 = vrot.lane.b32.xlu0 %v1702, 127
  %v1784 = vpop.permute.xlu0 %1783
  %1785 = vrot.lane.b32.xlu0 %v1703, 127
  %v1786 = vpop.permute.xlu0 %1785
  %1787 = vrot.lane.b32.xlu0 %v1704, 127
  %v1788 = vpop.permute.xlu0 %1787
  %1789 = vrot.lane.b32.xlu0 %v1705, 127
  %v1790 = vpop.permute.xlu0 %1789
  %1791 = vrot.lane.b32.xlu0 %v1706, 127
  %v1792 = vpop.permute.xlu0 %1791
  %1793 = vrot.lane.b32.xlu0 %v1707, 127
  %v1794 = vpop.permute.xlu0 %1793
  %1795 = vrot.lane.b32.xlu0 %v1708, 127
  %v1796 = vpop.permute.xlu0 %1795
  %1797 = vrot.lane.b32.xlu0 %v1709, 127
  %v1798 = vpop.permute.xlu0 %1797
  %1799 = vrot.lane.b32.xlu0 %v1710, 127
  %v1800 = vpop.permute.xlu0 %1799
  %v1801 = vsel %vm664, %v1742, %v1744
  %v1802 = vsel %vm664, %v1744, %v1746
  %v1803 = vsel %vm664, %v1746, %v1748
  %v1804 = vsel %vm664, %v1748, %v1750
  %v1805 = vsel %vm664, %v1752, %v1754
  %v1806 = vsel %vm664, %v1754, %v1756
  %v1807 = vsel %vm664, %v1756, %v1758
  %v1808 = vsel %vm664, %v1758, %v1760
  %v1809 = vsel %vm664, %v1762, %v1764
  %v1810 = vsel %vm664, %v1764, %v1766
  %v1811 = vsel %vm664, %v1766, %v1768
  %v1812 = vsel %vm664, %v1768, %v1770
  %v1813 = vsel %vm664, %v1772, %v1774
  %v1814 = vsel %vm664, %v1774, %v1776
  %v1815 = vsel %vm664, %v1776, %v1778
  %v1816 = vsel %vm664, %v1778, %v1780
  %v1817 = vsel %vm664, %v1782, %v1784
  %v1818 = vsel %vm664, %v1784, %v1786
  %v1819 = vsel %vm664, %v1786, %v1788
  %v1820 = vsel %vm664, %v1788, %v1790
  %v1821 = vsel %vm664, %v1792, %v1794
  %v1822 = vsel %vm664, %v1794, %v1796
  %v1823 = vsel %vm664, %v1796, %v1798
  %v1824 = vsel %vm664, %v1798, %v1800
  %v1850 = vsel %vm796, %v1680, 0
  %1852 = vmatprep.subr.mxu0 %v1802
  %1853 = vmatpush1.msra.mxu0 %v1801
  %1854 = vmatprep.subr.mxu0 %v1806
  %1855 = vmatpush1.msra.mxu0 %v1805
  %1856 = vmatprep.subr.mxu0 %v1810
  %1857 = vmatpush1.msra.mxu0 %v1809
  %1858 = vmatprep.subr.mxu0 %v1814
  %1859 = vmatpush1.msra.mxu0 %v1813
  %1860 = vmatprep.subr.mxu0 %v1818
  %1861 = vmatpush1.msra.mxu0 %v1817
  %1862 = vmatprep.subr.mxu0 %v1822
  %1863 = vmatpush1.msra.mxu0 %v1821
  %1864 = vmatprep.subr.mxu0 0.0
  %1865 = vmatpush1.msra.mxu0 0.0
  %1866 = vmatprep.subr.mxu0 0.0
  %1867 = vmatpush1.msra.mxu0 0.0
  %1868 = vmatprep.subr.mxu0 0.0
  %1869 = vmatpush1.msra.mxu0 0.0
  %1870 = vmatprep.subr.mxu0 0.0
  %1871 = vmatpush1.msra.mxu0 0.0
  %1872 = vmatprep.subr.mxu0 0.0
  %1873 = vmatpush1.msra.mxu0 0.0
  %1874 = vmatprep.subr.mxu0 0.0
  %1875 = vmatpush1.msra.mxu0 0.0
  %1876 = vmatprep.subr.mxu0 0.0
  %1877 = vmatpush1.msra.mxu0 0.0
  %1878 = vmatprep.subr.mxu0 0.0
  %1879 = vmatpush1.msra.mxu0 0.0
  %1880 = vmatprep.subr.mxu0 0.0
  %1881 = vmatpush1.msra.mxu0 0.0
  %1882 = vmatprep.subr.mxu0 0.0
  %1883 = vmatpush1.msra.mxu0 0.0
  %1884 = vmatprep.subr.mxu0 0.0
  %1885 = vmatpush1.msra.mxu0 0.0
  %1886 = vmatprep.subr.mxu0 0.0
  %1887 = vmatpush1.msra.mxu0 0.0
  %1888 = vmatprep.subr.mxu0 0.0
  %1889 = vmatpush1.msra.mxu0 0.0
  %1890 = vmatprep.subr.mxu0 0.0
  %1891 = vmatpush1.msra.mxu0 0.0
  %1892 = vmatprep.subr.mxu0 0.0
  %1893 = vmatpush1.msra.mxu0 0.0
  %1894 = vmatprep.subr.mxu0 0.0
  %1895 = vmatpush1.msra.mxu0 0.0
  %1896 = vmatprep.subr.mxu0 0.0
  %1897 = vmatpush1.msra.mxu0 0.0
  %1898 = vmatprep.subr.mxu0 0.0
  %1899 = vmatpush1.msra.mxu0 0.0
  %1900 = vmatprep.subr.mxu0 0.0
  %1901 = vmatpush1.msra.mxu0 0.0
  %1902 = vmatprep.subr.mxu0 0.0
  %1903 = vmatpush1.msra.mxu0 0.0
  %1904 = vmatprep.subr.mxu0 0.0
  %1905 = vmatpush1.msra.mxu0 0.0
  %1906 = vmatprep.subr.mxu0 0.0
  %1907 = vmatpush1.msra.mxu0 0.0
  %1908 = vmatprep.subr.mxu0 0.0
  %1909 = vmatpush1.msra.mxu0 0.0
  %1910 = vmatprep.subr.mxu0 0.0
  %1911 = vmatpush1.msra.mxu0 0.0
  %1912 = vmatprep.subr.mxu0 0.0
  %1913 = vmatpush1.msra.mxu0 0.0
  %1914 = vmatprep.subr.mxu0 0.0
  %1915 = vmatpush1.msra.mxu0 0.0
  %1916 = vmatprep.mubr.f32.mxu0 0.0
  %1917 = vmatmul.mubr.f32.gmra.mrb[0].mxu0 %v1850
  %v1918 = vpop.f32.mrb[0].mxu0
  %v1919 = vadd.f32 0.0, %v1918
  %v1920 = vpop.f32.mrb[0].mxu0
  %v1921 = vadd.f32 0.0, %v1920
  %1922 = vdwg.mxu0
  %1923 = vmatprep.subr.mxu0 %v1804
  %1924 = vmatpush1.msra.mxu0 %v1803
  %1925 = vmatprep.subr.mxu0 %v1808
  %1926 = vmatpush1.msra.mxu0 %v1807
  %1927 = vmatprep.subr.mxu0 %v1812
  %1928 = vmatpush1.msra.mxu0 %v1811
  %1929 = vmatprep.subr.mxu0 %v1816
  %1930 = vmatpush1.msra.mxu0 %v1815
  %1931 = vmatprep.subr.mxu0 %v1820
  %1932 = vmatpush1.msra.mxu0 %v1819
  %1933 = vmatprep.subr.mxu0 %v1824
  %1934 = vmatpush1.msra.mxu0 %v1823
  %1935 = vmatprep.subr.mxu0 0.0
  %1936 = vmatpush1.msra.mxu0 0.0
  %1937 = vmatprep.subr.mxu0 0.0
  %1938 = vmatpush1.msra.mxu0 0.0
  %1939 = vmatprep.subr.mxu0 0.0
  %1940 = vmatpush1.msra.mxu0 0.0
  %1941 = vmatprep.subr.mxu0 0.0
  %1942 = vmatpush1.msra.mxu0 0.0
  %1943 = vmatprep.subr.mxu0 0.0
  %1944 = vmatpush1.msra.mxu0 0.0
  %1945 = vmatprep.subr.mxu0 0.0
  %1946 = vmatpush1.msra.mxu0 0.0
  %1947 = vmatprep.subr.mxu0 0.0
  %1948 = vmatpush1.msra.mxu0 0.0
  %1949 = vmatprep.subr.mxu0 0.0
  %1950 = vmatpush1.msra.mxu0 0.0
  %1951 = vmatprep.subr.mxu0 0.0
  %1952 = vmatpush1.msra.mxu0 0.0
  %1953 = vmatprep.subr.mxu0 0.0
  %1954 = vmatpush1.msra.mxu0 0.0
  %1955 = vmatprep.subr.mxu0 0.0
  %1956 = vmatpush1.msra.mxu0 0.0
  %1957 = vmatprep.subr.mxu0 0.0
  %1958 = vmatpush1.msra.mxu0 0.0
  %1959 = vmatprep.subr.mxu0 0.0
  %1960 = vmatpush1.msra.mxu0 0.0
  %1961 = vmatprep.subr.mxu0 0.0
  %1962 = vmatpush1.msra.mxu0 0.0
  %1963 = vmatprep.subr.mxu0 0.0
  %1964 = vmatpush1.msra.mxu0 0.0
  %1965 = vmatprep.subr.mxu0 0.0
  %1966 = vmatpush1.msra.mxu0 0.0
  %1967 = vmatprep.subr.mxu0 0.0
  %1968 = vmatpush1.msra.mxu0 0.0
  %1969 = vmatprep.subr.mxu0 0.0
  %1970 = vmatpush1.msra.mxu0 0.0
  %1971 = vmatprep.subr.mxu0 0.0
  %1972 = vmatpush1.msra.mxu0 0.0
  %1973 = vmatprep.subr.mxu0 0.0
  %1974 = vmatpush1.msra.mxu0 0.0
  %1975 = vmatprep.subr.mxu0 0.0
  %1976 = vmatpush1.msra.mxu0 0.0
  %1977 = vmatprep.subr.mxu0 0.0
  %1978 = vmatpush1.msra.mxu0 0.0
  %1979 = vmatprep.subr.mxu0 0.0
  %1980 = vmatpush1.msra.mxu0 0.0
  %1981 = vmatprep.subr.mxu0 0.0
  %1982 = vmatpush1.msra.mxu0 0.0
  %1983 = vmatprep.subr.mxu0 0.0
  %1984 = vmatpush1.msra.mxu0 0.0
  %1985 = vmatprep.subr.mxu0 0.0
  %1986 = vmatpush1.msra.mxu0 0.0
  %1987 = vmatprep.mubr.f32.mxu0 0.0
  %1988 = vmatmul.mubr.f32.gmra.mrb[0].mxu0 %v1850
  %v1989 = vpop.f32.mrb[0].mxu0
  %v1990 = vadd.f32 0.0, %v1989
  %v1991 = vpop.f32.mrb[0].mxu0
  %v1992 = vadd.f32 0.0, %v1991
  %1993 = vdwg.mxu0
  %v1994 = vadd.f32 %v1675, %v1919
  %v1995 = vadd.f32 %v1676, %v1921
  %v1996 = vadd.f32 %v1677, %v1990
  %v1997 = vadd.f32 %v1678, %v1992
  %s1998 = scalar_lea.vmem %s3, 16
  %v1999 = vld [vmem:[%s1998] sm:$0xff]
  %2000 = vrot.lane.b32.xlu0 %v1681, 126
  %v2001 = vpop.permute.xlu0 %2000
  %2002 = vrot.lane.b32.xlu0 %v1682, 126
  %v2003 = vpop.permute.xlu0 %2002
  %2004 = vrot.lane.b32.xlu0 %v1683, 126
  %v2005 = vpop.permute.xlu0 %2004
  %2006 = vrot.lane.b32.xlu0 %v1684, 126
  %v2007 = vpop.permute.xlu0 %2006
  %2008 = vrot.lane.b32.xlu0 %v1685, 126
  %v2009 = vpop.permute.xlu0 %2008
  %2010 = vrot.lane.b32.xlu0 %v1686, 126
  %v2011 = vpop.permute.xlu0 %2010
  %2012 = vrot.lane.b32.xlu0 %v1687, 126
  %v2013 = vpop.permute.xlu0 %2012
  %2014 = vrot.lane.b32.xlu0 %v1688, 126
  %v2015 = vpop.permute.xlu0 %2014
  %2016 = vrot.lane.b32.xlu0 %v1689, 126
  %v2017 = vpop.permute.xlu0 %2016
  %2018 = vrot.lane.b32.xlu0 %v1690, 126
  %v2019 = vpop.permute.xlu0 %2018
  %2020 = vrot.lane.b32.xlu0 %v1691, 126
  %v2021 = vpop.permute.xlu0 %2020
  %2022 = vrot.lane.b32.xlu0 %v1692, 126
  %v2023 = vpop.permute.xlu0 %2022
  %2024 = vrot.lane.b32.xlu0 %v1693, 126
  %v2025 = vpop.permute.xlu0 %2024
  %2026 = vrot.lane.b32.xlu0 %v1694, 126
  %v2027 = vpop.permute.xlu0 %2026
  %2028 = vrot.lane.b32.xlu0 %v1695, 126
  %v2029 = vpop.permute.xlu0 %2028
  %2030 = vrot.lane.b32.xlu0 %v1696, 126
  %v2031 = vpop.permute.xlu0 %2030
  %2032 = vrot.lane.b32.xlu0 %v1697, 126
  %v2033 = vpop.permute.xlu0 %2032
  %2034 = vrot.lane.b32.xlu0 %v1698, 126
  %v2035 = vpop.permute.xlu0 %2034
  %2036 = vrot.lane.b32.xlu0 %v1699, 126
  %v2037 = vpop.permute.xlu0 %2036
  %2038 = vrot.lane.b32.xlu0 %v1700, 126
  %v2039 = vpop.permute.xlu0 %2038
  %2040 = vrot.lane.b32.xlu0 %v1701, 126
  %v2041 = vpop.permute.xlu0 %2040
  %2042 = vrot.lane.b32.xlu0 %v1702, 126
  %v2043 = vpop.permute.xlu0 %2042
  %2044 = vrot.lane.b32.xlu0 %v1703, 126
  %v2045 = vpop.permute.xlu0 %2044
  %2046 = vrot.lane.b32.xlu0 %v1704, 126
  %v2047 = vpop.permute.xlu0 %2046
  %2048 = vrot.lane.b32.xlu0 %v1705, 126
  %v2049 = vpop.permute.xlu0 %2048
  %2050 = vrot.lane.b32.xlu0 %v1706, 126
  %v2051 = vpop.permute.xlu0 %2050
  %2052 = vrot.lane.b32.xlu0 %v1707, 126
  %v2053 = vpop.permute.xlu0 %2052
  %2054 = vrot.lane.b32.xlu0 %v1708, 126
  %v2055 = vpop.permute.xlu0 %2054
  %2056 = vrot.lane.b32.xlu0 %v1709, 126
  %v2057 = vpop.permute.xlu0 %2056
  %2058 = vrot.lane.b32.xlu0 %v1710, 126
  %v2059 = vpop.permute.xlu0 %2058
  %v2060 = vsel %vm687, %v2001, %v2003
  %v2061 = vsel %vm687, %v2003, %v2005
  %v2062 = vsel %vm687, %v2005, %v2007
  %v2063 = vsel %vm687, %v2007, %v2009
  %v2064 = vsel %vm687, %v2011, %v2013
  %v2065 = vsel %vm687, %v2013, %v2015
  %v2066 = vsel %vm687, %v2015, %v2017
  %v2067 = vsel %vm687, %v2017, %v2019
  %v2068 = vsel %vm687, %v2021, %v2023
  %v2069 = vsel %vm687, %v2023, %v2025
  %v2070 = vsel %vm687, %v2025, %v2027
  %v2071 = vsel %vm687, %v2027, %v2029
  %v2072 = vsel %vm687, %v2031, %v2033
  %v2073 = vsel %vm687, %v2033, %v2035
  %v2074 = vsel %vm687, %v2035, %v2037
  %v2075 = vsel %vm687, %v2037, %v2039
  %v2076 = vsel %vm687, %v2041, %v2043
  %v2077 = vsel %vm687, %v2043, %v2045
  %v2078 = vsel %vm687, %v2045, %v2047
  %v2079 = vsel %vm687, %v2047, %v2049
  %v2080 = vsel %vm687, %v2051, %v2053
  %v2081 = vsel %vm687, %v2053, %v2055
  %v2082 = vsel %vm687, %v2055, %v2057
  %v2083 = vsel %vm687, %v2057, %v2059
  %v2109 = vsel %vm796, %v1999, 0
  %2111 = vmatprep.subr.mxu0 %v2061
  %2112 = vmatpush1.msra.mxu0 %v2060
  %2113 = vmatprep.subr.mxu0 %v2065
  %2114 = vmatpush1.msra.mxu0 %v2064
  %2115 = vmatprep.subr.mxu0 %v2069
  %2116 = vmatpush1.msra.mxu0 %v2068
  %2117 = vmatprep.subr.mxu0 %v2073
  %2118 = vmatpush1.msra.mxu0 %v2072
  %2119 = vmatprep.subr.mxu0 %v2077
  %2120 = vmatpush1.msra.mxu0 %v2076
  %2121 = vmatprep.subr.mxu0 %v2081
  %2122 = vmatpush1.msra.mxu0 %v2080
  %2123 = vmatprep.subr.mxu0 0.0
  %2124 = vmatpush1.msra.mxu0 0.0
  %2125 = vmatprep.subr.mxu0 0.0
  %2126 = vmatpush1.msra.mxu0 0.0
  %2127 = vmatprep.subr.mxu0 0.0
  %2128 = vmatpush1.msra.mxu0 0.0
  %2129 = vmatprep.subr.mxu0 0.0
  %2130 = vmatpush1.msra.mxu0 0.0
  %2131 = vmatprep.subr.mxu0 0.0
  %2132 = vmatpush1.msra.mxu0 0.0
  %2133 = vmatprep.subr.mxu0 0.0
  %2134 = vmatpush1.msra.mxu0 0.0
  %2135 = vmatprep.subr.mxu0 0.0
  %2136 = vmatpush1.msra.mxu0 0.0
  %2137 = vmatprep.subr.mxu0 0.0
  %2138 = vmatpush1.msra.mxu0 0.0
  %2139 = vmatprep.subr.mxu0 0.0
  %2140 = vmatpush1.msra.mxu0 0.0
  %2141 = vmatprep.subr.mxu0 0.0
  %2142 = vmatpush1.msra.mxu0 0.0
  %2143 = vmatprep.subr.mxu0 0.0
  %2144 = vmatpush1.msra.mxu0 0.0
  %2145 = vmatprep.subr.mxu0 0.0
  %2146 = vmatpush1.msra.mxu0 0.0
  %2147 = vmatprep.subr.mxu0 0.0
  %2148 = vmatpush1.msra.mxu0 0.0
  %2149 = vmatprep.subr.mxu0 0.0
  %2150 = vmatpush1.msra.mxu0 0.0
  %2151 = vmatprep.subr.mxu0 0.0
  %2152 = vmatpush1.msra.mxu0 0.0
  %2153 = vmatprep.subr.mxu0 0.0
  %2154 = vmatpush1.msra.mxu0 0.0
  %2155 = vmatprep.subr.mxu0 0.0
  %2156 = vmatpush1.msra.mxu0 0.0
  %2157 = vmatprep.subr.mxu0 0.0
  %2158 = vmatpush1.msra.mxu0 0.0
  %2159 = vmatprep.subr.mxu0 0.0
  %2160 = vmatpush1.msra.mxu0 0.0
  %2161 = vmatprep.subr.mxu0 0.0
  %2162 = vmatpush1.msra.mxu0 0.0
  %2163 = vmatprep.subr.mxu0 0.0
  %2164 = vmatpush1.msra.mxu0 0.0
  %2165 = vmatprep.subr.mxu0 0.0
  %2166 = vmatpush1.msra.mxu0 0.0
  %2167 = vmatprep.subr.mxu0 0.0
  %2168 = vmatpush1.msra.mxu0 0.0
  %2169 = vmatprep.subr.mxu0 0.0
  %2170 = vmatpush1.msra.mxu0 0.0
  %2171 = vmatprep.subr.mxu0 0.0
  %2172 = vmatpush1.msra.mxu0 0.0
  %2173 = vmatprep.subr.mxu0 0.0
  %2174 = vmatpush1.msra.mxu0 0.0
  %2175 = vmatprep.mubr.f32.mxu0 0.0
  %2176 = vmatmul.mubr.f32.gmra.mrb[0].mxu0 %v2109
  %v2177 = vpop.f32.mrb[0].mxu0
  %v2178 = vadd.f32 0.0, %v2177
  %v2179 = vpop.f32.mrb[0].mxu0
  %v2180 = vadd.f32 0.0, %v2179
  %2181 = vdwg.mxu0
  %2182 = vmatprep.subr.mxu0 %v2063
  %2183 = vmatpush1.msra.mxu0 %v2062
  %2184 = vmatprep.subr.mxu0 %v2067
  %2185 = vmatpush1.msra.mxu0 %v2066
  %2186 = vmatprep.subr.mxu0 %v2071
  %2187 = vmatpush1.msra.mxu0 %v2070
  %2188 = vmatprep.subr.mxu0 %v2075
  %2189 = vmatpush1.msra.mxu0 %v2074
  %2190 = vmatprep.subr.mxu0 %v2079
  %2191 = vmatpush1.msra.mxu0 %v2078
  %2192 = vmatprep.subr.mxu0 %v2083
  %2193 = vmatpush1.msra.mxu0 %v2082
  %2194 = vmatprep.subr.mxu0 0.0
  %2195 = vmatpush1.msra.mxu0 0.0
  %2196 = vmatprep.subr.mxu0 0.0
  %2197 = vmatpush1.msra.mxu0 0.0
  %2198 = vmatprep.subr.mxu0 0.0
  %2199 = vmatpush1.msra.mxu0 0.0
  %2200 = vmatprep.subr.mxu0 0.0
  %2201 = vmatpush1.msra.mxu0 0.0
  %2202 = vmatprep.subr.mxu0 0.0
  %2203 = vmatpush1.msra.mxu0 0.0
  %2204 = vmatprep.subr.mxu0 0.0
  %2205 = vmatpush1.msra.mxu0 0.0
  %2206 = vmatprep.subr.mxu0 0.0
  %2207 = vmatpush1.msra.mxu0 0.0
  %2208 = vmatprep.subr.mxu0 0.0
  %2209 = vmatpush1.msra.mxu0 0.0
  %2210 = vmatprep.subr.mxu0 0.0
  %2211 = vmatpush1.msra.mxu0 0.0
  %2212 = vmatprep.subr.mxu0 0.0
  %2213 = vmatpush1.msra.mxu0 0.0
  %2214 = vmatprep.subr.mxu0 0.0
  %2215 = vmatpush1.msra.mxu0 0.0
  %2216 = vmatprep.subr.mxu0 0.0
  %2217 = vmatpush1.msra.mxu0 0.0
  %2218 = vmatprep.subr.mxu0 0.0
  %2219 = vmatpush1.msra.mxu0 0.0
  %2220 = vmatprep.subr.mxu0 0.0
  %2221 = vmatpush1.msra.mxu0 0.0
  %2222 = vmatprep.subr.mxu0 0.0
  %2223 = vmatpush1.msra.mxu0 0.0
  %2224 = vmatprep.subr.mxu0 0.0
  %2225 = vmatpush1.msra.mxu0 0.0
  %2226 = vmatprep.subr.mxu0 0.0
  %2227 = vmatpush1.msra.mxu0 0.0
  %2228 = vmatprep.subr.mxu0 0.0
  %2229 = vmatpush1.msra.mxu0 0.0
  %2230 = vmatprep.subr.mxu0 0.0
  %2231 = vmatpush1.msra.mxu0 0.0
  %2232 = vmatprep.subr.mxu0 0.0
  %2233 = vmatpush1.msra.mxu0 0.0
  %2234 = vmatprep.subr.mxu0 0.0
  %2235 = vmatpush1.msra.mxu0 0.0
  %2236 = vmatprep.subr.mxu0 0.0
  %2237 = vmatpush1.msra.mxu0 0.0
  %2238 = vmatprep.subr.mxu0 0.0
  %2239 = vmatpush1.msra.mxu0 0.0
  %2240 = vmatprep.subr.mxu0 0.0
  %2241 = vmatpush1.msra.mxu0 0.0
  %2242 = vmatprep.subr.mxu0 0.0
  %2243 = vmatpush1.msra.mxu0 0.0
  %2244 = vmatprep.subr.mxu0 0.0
  %2245 = vmatpush1.msra.mxu0 0.0
  %2246 = vmatprep.mubr.f32.mxu0 0.0
  %2247 = vmatmul.mubr.f32.gmra.mrb[0].mxu0 %v2109
  %v2248 = vpop.f32.mrb[0].mxu0
  %v2249 = vadd.f32 0.0, %v2248
  %v2250 = vpop.f32.mrb[0].mxu0
  %v2251 = vadd.f32 0.0, %v2250
  %2252 = vdwg.mxu0
  %v2253 = vadd.f32 %v1994, %v2178
  %v2254 = vadd.f32 %v1995, %v2180
  %v2255 = vadd.f32 %v1996, %v2249
  %v2256 = vadd.f32 %v1997, %v2251
  %s2257 = scalar_lea.vmem %s3, 24
  %v2258 = vld [vmem:[%s2257] sm:$0xff]
  %2259 = vrot.lane.b32.xlu0 %v1681, 125
  %v2260 = vpop.permute.xlu0 %2259
  %2261 = vrot.lane.b32.xlu0 %v1682, 125
  %v2262 = vpop.permute.xlu0 %2261
  %2263 = vrot.lane.b32.xlu0 %v1683, 125
  %v2264 = vpop.permute.xlu0 %2263
  %2265 = vrot.lane.b32.xlu0 %v1684, 125
  %v2266 = vpop.permute.xlu0 %2265
  %2267 = vrot.lane.b32.xlu0 %v1685, 125
  %v2268 = vpop.permute.xlu0 %2267
  %2269 = vrot.lane.b32.xlu0 %v1686, 125
  %v2270 = vpop.permute.xlu0 %2269
  %2271 = vrot.lane.b32.xlu0 %v1687, 125
  %v2272 = vpop.permute.xlu0 %2271
  %2273 = vrot.lane.b32.xlu0 %v1688, 125
  %v2274 = vpop.permute.xlu0 %2273
  %2275 = vrot.lane.b32.xlu0 %v1689, 125
  %v2276 = vpop.permute.xlu0 %2275
  %2277 = vrot.lane.b32.xlu0 %v1690, 125
  %v2278 = vpop.permute.xlu0 %2277
  %2279 = vrot.lane.b32.xlu0 %v1691, 125
  %v2280 = vpop.permute.xlu0 %2279
  %2281 = vrot.lane.b32.xlu0 %v1692, 125
  %v2282 = vpop.permute.xlu0 %2281
  %2283 = vrot.lane.b32.xlu0 %v1693, 125
  %v2284 = vpop.permute.xlu0 %2283
  %2285 = vrot.lane.b32.xlu0 %v1694, 125
  %v2286 = vpop.permute.xlu0 %2285
  %2287 = vrot.lane.b32.xlu0 %v1695, 125
  %v2288 = vpop.permute.xlu0 %2287
  %2289 = vrot.lane.b32.xlu0 %v1696, 125
  %v2290 = vpop.permute.xlu0 %2289
  %2291 = vrot.lane.b32.xlu0 %v1697, 125
  %v2292 = vpop.permute.xlu0 %2291
  %2293 = vrot.lane.b32.xlu0 %v1698, 125
  %v2294 = vpop.permute.xlu0 %2293
  %2295 = vrot.lane.b32.xlu0 %v1699, 125
  %v2296 = vpop.permute.xlu0 %2295
  %2297 = vrot.lane.b32.xlu0 %v1700, 125
  %v2298 = vpop.permute.xlu0 %2297
  %2299 = vrot.lane.b32.xlu0 %v1701, 125
  %v2300 = vpop.permute.xlu0 %2299
  %2301 = vrot.lane.b32.xlu0 %v1702, 125
  %v2302 = vpop.permute.xlu0 %2301
  %2303 = vrot.lane.b32.xlu0 %v1703, 125
  %v2304 = vpop.permute.xlu0 %2303
  %2305 = vrot.lane.b32.xlu0 %v1704, 125
  %v2306 = vpop.permute.xlu0 %2305
  %2307 = vrot.lane.b32.xlu0 %v1705, 125
  %v2308 = vpop.permute.xlu0 %2307
  %2309 = vrot.lane.b32.xlu0 %v1706, 125
  %v2310 = vpop.permute.xlu0 %2309
  %2311 = vrot.lane.b32.xlu0 %v1707, 125
  %v2312 = vpop.permute.xlu0 %2311
  %2313 = vrot.lane.b32.xlu0 %v1708, 125
  %v2314 = vpop.permute.xlu0 %2313
  %2315 = vrot.lane.b32.xlu0 %v1709, 125
  %v2316 = vpop.permute.xlu0 %2315
  %2317 = vrot.lane.b32.xlu0 %v1710, 125
  %v2318 = vpop.permute.xlu0 %2317
  %vm2319 = vcmask 1022976
  %v2320 = vsel %vm2319, %v2260, %v2262
  %v2321 = vsel %vm2319, %v2262, %v2264
  %v2322 = vsel %vm2319, %v2264, %v2266
  %v2323 = vsel %vm2319, %v2266, %v2268
  %v2324 = vsel %vm2319, %v2270, %v2272
  %v2325 = vsel %vm2319, %v2272, %v2274
  %v2326 = vsel %vm2319, %v2274, %v2276
  %v2327 = vsel %vm2319, %v2276, %v2278
  %v2328 = vsel %vm2319, %v2280, %v2282
  %v2329 = vsel %vm2319, %v2282, %v2284
  %v2330 = vsel %vm2319, %v2284, %v2286
  %v2331 = vsel %vm2319, %v2286, %v2288
  %v2332 = vsel %vm2319, %v2290, %v2292
  %v2333 = vsel %vm2319, %v2292, %v2294
  %v2334 = vsel %vm2319, %v2294, %v2296
  %v2335 = vsel %vm2319, %v2296, %v2298
  %v2336 = vsel %vm2319, %v2300, %v2302
  %v2337 = vsel %vm2319, %v2302, %v2304
  %v2338 = vsel %vm2319, %v2304, %v2306
  %v2339 = vsel %vm2319, %v2306, %v2308
  %v2340 = vsel %vm2319, %v2310, %v2312
  %v2341 = vsel %vm2319, %v2312, %v2314
  %v2342 = vsel %vm2319, %v2314, %v2316
  %v2343 = vsel %vm2319, %v2316, %v2318
  %v2369 = vsel %vm796, %v2258, 0
  %2371 = vmatprep.subr.mxu0 %v2321
  %2372 = vmatpush1.msra.mxu0 %v2320
  %2373 = vmatprep.subr.mxu0 %v2325
  %2374 = vmatpush1.msra.mxu0 %v2324
  %2375 = vmatprep.subr.mxu0 %v2329
  %2376 = vmatpush1.msra.mxu0 %v2328
  %2377 = vmatprep.subr.mxu0 %v2333
  %2378 = vmatpush1.msra.mxu0 %v2332
  %2379 = vmatprep.subr.mxu0 %v2337
  %2380 = vmatpush1.msra.mxu0 %v2336
  %2381 = vmatprep.subr.mxu0 %v2341
  %2382 = vmatpush1.msra.mxu0 %v2340
  %2383 = vmatprep.subr.mxu0 0.0
  %2384 = vmatpush1.msra.mxu0 0.0
  %2385 = vmatprep.subr.mxu0 0.0
  %2386 = vmatpush1.msra.mxu0 0.0
  %2387 = vmatprep.subr.mxu0 0.0
  %2388 = vmatpush1.msra.mxu0 0.0
  %2389 = vmatprep.subr.mxu0 0.0
  %2390 = vmatpush1.msra.mxu0 0.0
  %2391 = vmatprep.subr.mxu0 0.0
  %2392 = vmatpush1.msra.mxu0 0.0
  %2393 = vmatprep.subr.mxu0 0.0
  %2394 = vmatpush1.msra.mxu0 0.0
  %2395 = vmatprep.subr.mxu0 0.0
  %2396 = vmatpush1.msra.mxu0 0.0
  %2397 = vmatprep.subr.mxu0 0.0
  %2398 = vmatpush1.msra.mxu0 0.0
  %2399 = vmatprep.subr.mxu0 0.0
  %2400 = vmatpush1.msra.mxu0 0.0
  %2401 = vmatprep.subr.mxu0 0.0
  %2402 = vmatpush1.msra.mxu0 0.0
  %2403 = vmatprep.subr.mxu0 0.0
  %2404 = vmatpush1.msra.mxu0 0.0
  %2405 = vmatprep.subr.mxu0 0.0
  %2406 = vmatpush1.msra.mxu0 0.0
  %2407 = vmatprep.subr.mxu0 0.0
  %2408 = vmatpush1.msra.mxu0 0.0
  %2409 = vmatprep.subr.mxu0 0.0
  %2410 = vmatpush1.msra.mxu0 0.0
  %2411 = vmatprep.subr.mxu0 0.0
  %2412 = vmatpush1.msra.mxu0 0.0
  %2413 = vmatprep.subr.mxu0 0.0
  %2414 = vmatpush1.msra.mxu0 0.0
  %2415 = vmatprep.subr.mxu0 0.0
  %2416 = vmatpush1.msra.mxu0 0.0
  %2417 = vmatprep.subr.mxu0 0.0
  %2418 = vmatpush1.msra.mxu0 0.0
  %2419 = vmatprep.subr.mxu0 0.0
  %2420 = vmatpush1.msra.mxu0 0.0
  %2421 = vmatprep.subr.mxu0 0.0
  %2422 = vmatpush1.msra.mxu0 0.0
  %2423 = vmatprep.subr.mxu0 0.0
  %2424 = vmatpush1.msra.mxu0 0.0
  %2425 = vmatprep.subr.mxu0 0.0
  %2426 = vmatpush1.msra.mxu0 0.0
  %2427 = vmatprep.subr.mxu0 0.0
  %2428 = vmatpush1.msra.mxu0 0.0
  %2429 = vmatprep.subr.mxu0 0.0
  %2430 = vmatpush1.msra.mxu0 0.0
  %2431 = vmatprep.subr.mxu0 0.0
  %2432 = vmatpush1.msra.mxu0 0.0
  %2433 = vmatprep.subr.mxu0 0.0
  %2434 = vmatpush1.msra.mxu0 0.0
  %2435 = vmatprep.mubr.f32.mxu0 0.0
  %2436 = vmatmul.mubr.f32.gmra.mrb[0].mxu0 %v2369
  %v2437 = vpop.f32.mrb[0].mxu0
  %v2438 = vadd.f32 0.0, %v2437
  %v2439 = vpop.f32.mrb[0].mxu0
  %v2440 = vadd.f32 0.0, %v2439
  %2441 = vdwg.mxu0
  %2442 = vmatprep.subr.mxu0 %v2323
  %2443 = vmatpush1.msra.mxu0 %v2322
  %2444 = vmatprep.subr.mxu0 %v2327
  %2445 = vmatpush1.msra.mxu0 %v2326
  %2446 = vmatprep.subr.mxu0 %v2331
  %2447 = vmatpush1.msra.mxu0 %v2330
  %2448 = vmatprep.subr.mxu0 %v2335
  %2449 = vmatpush1.msra.mxu0 %v2334
  %2450 = vmatprep.subr.mxu0 %v2339
  %2451 = vmatpush1.msra.mxu0 %v2338
  %2452 = vmatprep.subr.mxu0 %v2343
  %2453 = vmatpush1.msra.mxu0 %v2342
  %2454 = vmatprep.subr.mxu0 0.0
  %2455 = vmatpush1.msra.mxu0 0.0
  %2456 = vmatprep.subr.mxu0 0.0
  %2457 = vmatpush1.msra.mxu0 0.0
  %2458 = vmatprep.subr.mxu0 0.0
  %2459 = vmatpush1.msra.mxu0 0.0
  %2460 = vmatprep.subr.mxu0 0.0
  %2461 = vmatpush1.msra.mxu0 0.0
  %2462 = vmatprep.subr.mxu0 0.0
  %2463 = vmatpush1.msra.mxu0 0.0
  %2464 = vmatprep.subr.mxu0 0.0
  %2465 = vmatpush1.msra.mxu0 0.0
  %2466 = vmatprep.subr.mxu0 0.0
  %2467 = vmatpush1.msra.mxu0 0.0
  %2468 = vmatprep.subr.mxu0 0.0
  %2469 = vmatpush1.msra.mxu0 0.0
  %2470 = vmatprep.subr.mxu0 0.0
  %2471 = vmatpush1.msra.mxu0 0.0
  %2472 = vmatprep.subr.mxu0 0.0
  %2473 = vmatpush1.msra.mxu0 0.0
  %2474 = vmatprep.subr.mxu0 0.0
  %2475 = vmatpush1.msra.mxu0 0.0
  %2476 = vmatprep.subr.mxu0 0.0
  %2477 = vmatpush1.msra.mxu0 0.0
  %2478 = vmatprep.subr.mxu0 0.0
  %2479 = vmatpush1.msra.mxu0 0.0
  %2480 = vmatprep.subr.mxu0 0.0
  %2481 = vmatpush1.msra.mxu0 0.0
  %2482 = vmatprep.subr.mxu0 0.0
  %2483 = vmatpush1.msra.mxu0 0.0
  %2484 = vmatprep.subr.mxu0 0.0
  %2485 = vmatpush1.msra.mxu0 0.0
  %2486 = vmatprep.subr.mxu0 0.0
  %2487 = vmatpush1.msra.mxu0 0.0
  %2488 = vmatprep.subr.mxu0 0.0
  %2489 = vmatpush1.msra.mxu0 0.0
  %2490 = vmatprep.subr.mxu0 0.0
  %2491 = vmatpush1.msra.mxu0 0.0
  %2492 = vmatprep.subr.mxu0 0.0
  %2493 = vmatpush1.msra.mxu0 0.0
  %2494 = vmatprep.subr.mxu0 0.0
  %2495 = vmatpush1.msra.mxu0 0.0
  %2496 = vmatprep.subr.mxu0 0.0
  %2497 = vmatpush1.msra.mxu0 0.0
  %2498 = vmatprep.subr.mxu0 0.0
  %2499 = vmatpush1.msra.mxu0 0.0
  %2500 = vmatprep.subr.mxu0 0.0
  %2501 = vmatpush1.msra.mxu0 0.0
  %2502 = vmatprep.subr.mxu0 0.0
  %2503 = vmatpush1.msra.mxu0 0.0
  %2504 = vmatprep.subr.mxu0 0.0
  %2505 = vmatpush1.msra.mxu0 0.0
  %2506 = vmatprep.mubr.f32.mxu0 0.0
  %2507 = vmatmul.mubr.f32.gmra.mrb[0].mxu0 %v2369
  %v2508 = vpop.f32.mrb[0].mxu0
  %v2509 = vadd.f32 0.0, %v2508
  %v2510 = vpop.f32.mrb[0].mxu0
  %v2511 = vadd.f32 0.0, %v2510
  %2512 = vdwg.mxu0
  %v2513 = vadd.f32 %v2253, %v2438
  %v2514 = vadd.f32 %v2254, %v2440
  %v2515 = vadd.f32 %v2255, %v2509
  %v2516 = vadd.f32 %v2256, %v2511
  %s2517 = scalar_lea.vmem %s3, 32
  %v2518 = vld [vmem:[%s2517] sm:$0xff]
  %2519 = vrot.lane.b32.xlu0 %v1681, 124
  %v2520 = vpop.permute.xlu0 %2519
  %2521 = vrot.lane.b32.xlu0 %v1682, 124
  %v2522 = vpop.permute.xlu0 %2521
  %2523 = vrot.lane.b32.xlu0 %v1683, 124
  %v2524 = vpop.permute.xlu0 %2523
  %2525 = vrot.lane.b32.xlu0 %v1684, 124
  %v2526 = vpop.permute.xlu0 %2525
  %2527 = vrot.lane.b32.xlu0 %v1685, 124
  %v2528 = vpop.permute.xlu0 %2527
  %2529 = vrot.lane.b32.xlu0 %v1686, 124
  %v2530 = vpop.permute.xlu0 %2529
  %2531 = vrot.lane.b32.xlu0 %v1687, 124
  %v2532 = vpop.permute.xlu0 %2531
  %2533 = vrot.lane.b32.xlu0 %v1688, 124
  %v2534 = vpop.permute.xlu0 %2533
  %2535 = vrot.lane.b32.xlu0 %v1689, 124
  %v2536 = vpop.permute.xlu0 %2535
  %2537 = vrot.lane.b32.xlu0 %v1690, 124
  %v2538 = vpop.permute.xlu0 %2537
  %2539 = vrot.lane.b32.xlu0 %v1691, 124
  %v2540 = vpop.permute.xlu0 %2539
  %2541 = vrot.lane.b32.xlu0 %v1692, 124
  %v2542 = vpop.permute.xlu0 %2541
  %2543 = vrot.lane.b32.xlu0 %v1693, 124
  %v2544 = vpop.permute.xlu0 %2543
  %2545 = vrot.lane.b32.xlu0 %v1694, 124
  %v2546 = vpop.permute.xlu0 %2545
  %2547 = vrot.lane.b32.xlu0 %v1695, 124
  %v2548 = vpop.permute.xlu0 %2547
  %2549 = vrot.lane.b32.xlu0 %v1696, 124
  %v2550 = vpop.permute.xlu0 %2549
  %2551 = vrot.lane.b32.xlu0 %v1697, 124
  %v2552 = vpop.permute.xlu0 %2551
  %2553 = vrot.lane.b32.xlu0 %v1698, 124
  %v2554 = vpop.permute.xlu0 %2553
  %2555 = vrot.lane.b32.xlu0 %v1699, 124
  %v2556 = vpop.permute.xlu0 %2555
  %2557 = vrot.lane.b32.xlu0 %v1700, 124
  %v2558 = vpop.permute.xlu0 %2557
  %2559 = vrot.lane.b32.xlu0 %v1701, 124
  %v2560 = vpop.permute.xlu0 %2559
  %2561 = vrot.lane.b32.xlu0 %v1702, 124
  %v2562 = vpop.permute.xlu0 %2561
  %2563 = vrot.lane.b32.xlu0 %v1703, 124
  %v2564 = vpop.permute.xlu0 %2563
  %2565 = vrot.lane.b32.xlu0 %v1704, 124
  %v2566 = vpop.permute.xlu0 %2565
  %2567 = vrot.lane.b32.xlu0 %v1705, 124
  %v2568 = vpop.permute.xlu0 %2567
  %2569 = vrot.lane.b32.xlu0 %v1706, 124
  %v2570 = vpop.permute.xlu0 %2569
  %2571 = vrot.lane.b32.xlu0 %v1707, 124
  %v2572 = vpop.permute.xlu0 %2571
  %2573 = vrot.lane.b32.xlu0 %v1708, 124
  %v2574 = vpop.permute.xlu0 %2573
  %2575 = vrot.lane.b32.xlu0 %v1709, 124
  %v2576 = vpop.permute.xlu0 %2575
  %2577 = vrot.lane.b32.xlu0 %v1710, 124
  %v2578 = vpop.permute.xlu0 %2577
  %vm2579 = vcmask 1014784
  %v2580 = vsel %vm2579, %v2520, %v2522
  %v2581 = vsel %vm2579, %v2522, %v2524
  %v2582 = vsel %vm2579, %v2524, %v2526
  %v2583 = vsel %vm2579, %v2526, %v2528
  %v2584 = vsel %vm2579, %v2530, %v2532
  %v2585 = vsel %vm2579, %v2532, %v2534
  %v2586 = vsel %vm2579, %v2534, %v2536
  %v2587 = vsel %vm2579, %v2536, %v2538
  %v2588 = vsel %vm2579, %v2540, %v2542
  %v2589 = vsel %vm2579, %v2542, %v2544
  %v2590 = vsel %vm2579, %v2544, %v2546
  %v2591 = vsel %vm2579, %v2546, %v2548
  %v2592 = vsel %vm2579, %v2550, %v2552
  %v2593 = vsel %vm2579, %v2552, %v2554
  %v2594 = vsel %vm2579, %v2554, %v2556
  %v2595 = vsel %vm2579, %v2556, %v2558
  %v2596 = vsel %vm2579, %v2560, %v2562
  %v2597 = vsel %vm2579, %v2562, %v2564
  %v2598 = vsel %vm2579, %v2564, %v2566
  %v2599 = vsel %vm2579, %v2566, %v2568
  %v2600 = vsel %vm2579, %v2570, %v2572
  %v2601 = vsel %vm2579, %v2572, %v2574
  %v2602 = vsel %vm2579, %v2574, %v2576
  %v2603 = vsel %vm2579, %v2576, %v2578
  %v2629 = vsel %vm796, %v2518, 0
  %2631 = vmatprep.subr.mxu0 %v2581
  %2632 = vmatpush1.msra.mxu0 %v2580
  %2633 = vmatprep.subr.mxu0 %v2585
  %2634 = vmatpush1.msra.mxu0 %v2584
  %2635 = vmatprep.subr.mxu0 %v2589
  %2636 = vmatpush1.msra.mxu0 %v2588
  %2637 = vmatprep.subr.mxu0 %v2593
  %2638 = vmatpush1.msra.mxu0 %v2592
  %2639 = vmatprep.subr.mxu0 %v2597
  %2640 = vmatpush1.msra.mxu0 %v2596
  %2641 = vmatprep.subr.mxu0 %v2601
  %2642 = vmatpush1.msra.mxu0 %v2600
  %2643 = vmatprep.subr.mxu0 0.0
  %2644 = vmatpush1.msra.mxu0 0.0
  %2645 = vmatprep.subr.mxu0 0.0
  %2646 = vmatpush1.msra.mxu0 0.0
  %2647 = vmatprep.subr.mxu0 0.0
  %2648 = vmatpush1.msra.mxu0 0.0
  %2649 = vmatprep.subr.mxu0 0.0
  %2650 = vmatpush1.msra.mxu0 0.0
  %2651 = vmatprep.subr.mxu0 0.0
  %2652 = vmatpush1.msra.mxu0 0.0
  %2653 = vmatprep.subr.mxu0 0.0
  %2654 = vmatpush1.msra.mxu0 0.0
  %2655 = vmatprep.subr.mxu0 0.0
  %2656 = vmatpush1.msra.mxu0 0.0
  %2657 = vmatprep.subr.mxu0 0.0
  %2658 = vmatpush1.msra.mxu0 0.0
  %2659 = vmatprep.subr.mxu0 0.0
  %2660 = vmatpush1.msra.mxu0 0.0
  %2661 = vmatprep.subr.mxu0 0.0
  %2662 = vmatpush1.msra.mxu0 0.0
  %2663 = vmatprep.subr.mxu0 0.0
  %2664 = vmatpush1.msra.mxu0 0.0
  %2665 = vmatprep.subr.mxu0 0.0
  %2666 = vmatpush1.msra.mxu0 0.0
  %2667 = vmatprep.subr.mxu0 0.0
  %2668 = vmatpush1.msra.mxu0 0.0
  %2669 = vmatprep.subr.mxu0 0.0
  %2670 = vmatpush1.msra.mxu0 0.0
  %2671 = vmatprep.subr.mxu0 0.0
  %2672 = vmatpush1.msra.mxu0 0.0
  %2673 = vmatprep.subr.mxu0 0.0
  %2674 = vmatpush1.msra.mxu0 0.0
  %2675 = vmatprep.subr.mxu0 0.0
  %2676 = vmatpush1.msra.mxu0 0.0
  %2677 = vmatprep.subr.mxu0 0.0
  %2678 = vmatpush1.msra.mxu0 0.0
  %2679 = vmatprep.subr.mxu0 0.0
  %2680 = vmatpush1.msra.mxu0 0.0
  %2681 = vmatprep.subr.mxu0 0.0
  %2682 = vmatpush1.msra.mxu0 0.0
  %2683 = vmatprep.subr.mxu0 0.0
  %2684 = vmatpush1.msra.mxu0 0.0
  %2685 = vmatprep.subr.mxu0 0.0
  %2686 = vmatpush1.msra.mxu0 0.0
  %2687 = vmatprep.subr.mxu0 0.0
  %2688 = vmatpush1.msra.mxu0 0.0
  %2689 = vmatprep.subr.mxu0 0.0
  %2690 = vmatpush1.msra.mxu0 0.0
  %2691 = vmatprep.subr.mxu0 0.0
  %2692 = vmatpush1.msra.mxu0 0.0
  %2693 = vmatprep.subr.mxu0 0.0
  %2694 = vmatpush1.msra.mxu0 0.0
  %2695 = vmatprep.mubr.f32.mxu0 0.0
  %2696 = vmatmul.mubr.f32.gmra.mrb[0].mxu0 %v2629
  %v2697 = vpop.f32.mrb[0].mxu0
  %v2698 = vadd.f32 0.0, %v2697
  %v2699 = vpop.f32.mrb[0].mxu0
  %v2700 = vadd.f32 0.0, %v2699
  %2701 = vdwg.mxu0
  %2702 = vmatprep.subr.mxu0 %v2583
  %2703 = vmatpush1.msra.mxu0 %v2582
  %2704 = vmatprep.subr.mxu0 %v2587
  %2705 = vmatpush1.msra.mxu0 %v2586
  %2706 = vmatprep.subr.mxu0 %v2591
  %2707 = vmatpush1.msra.mxu0 %v2590
  %2708 = vmatprep.subr.mxu0 %v2595
  %2709 = vmatpush1.msra.mxu0 %v2594
  %2710 = vmatprep.subr.mxu0 %v2599
  %2711 = vmatpush1.msra.mxu0 %v2598
  %2712 = vmatprep.subr.mxu0 %v2603
  %2713 = vmatpush1.msra.mxu0 %v2602
  %2714 = vmatprep.subr.mxu0 0.0
  %2715 = vmatpush1.msra.mxu0 0.0
  %2716 = vmatprep.subr.mxu0 0.0
  %2717 = vmatpush1.msra.mxu0 0.0
  %2718 = vmatprep.subr.mxu0 0.0
  %2719 = vmatpush1.msra.mxu0 0.0
  %2720 = vmatprep.subr.mxu0 0.0
  %2721 = vmatpush1.msra.mxu0 0.0
  %2722 = vmatprep.subr.mxu0 0.0
  %2723 = vmatpush1.msra.mxu0 0.0
  %2724 = vmatprep.subr.mxu0 0.0
  %2725 = vmatpush1.msra.mxu0 0.0
  %2726 = vmatprep.subr.mxu0 0.0
  %2727 = vmatpush1.msra.mxu0 0.0
  %2728 = vmatprep.subr.mxu0 0.0
  %2729 = vmatpush1.msra.mxu0 0.0
  %2730 = vmatprep.subr.mxu0 0.0
  %2731 = vmatpush1.msra.mxu0 0.0
  %2732 = vmatprep.subr.mxu0 0.0
  %2733 = vmatpush1.msra.mxu0 0.0
  %2734 = vmatprep.subr.mxu0 0.0
  %2735 = vmatpush1.msra.mxu0 0.0
  %2736 = vmatprep.subr.mxu0 0.0
  %2737 = vmatpush1.msra.mxu0 0.0
  %2738 = vmatprep.subr.mxu0 0.0
  %2739 = vmatpush1.msra.mxu0 0.0
  %2740 = vmatprep.subr.mxu0 0.0
  %2741 = vmatpush1.msra.mxu0 0.0
  %2742 = vmatprep.subr.mxu0 0.0
  %2743 = vmatpush1.msra.mxu0 0.0
  %2744 = vmatprep.subr.mxu0 0.0
  %2745 = vmatpush1.msra.mxu0 0.0
  %2746 = vmatprep.subr.mxu0 0.0
  %2747 = vmatpush1.msra.mxu0 0.0
  %2748 = vmatprep.subr.mxu0 0.0
  %2749 = vmatpush1.msra.mxu0 0.0
  %2750 = vmatprep.subr.mxu0 0.0
  %2751 = vmatpush1.msra.mxu0 0.0
  %2752 = vmatprep.subr.mxu0 0.0
  %2753 = vmatpush1.msra.mxu0 0.0
  %2754 = vmatprep.subr.mxu0 0.0
  %2755 = vmatpush1.msra.mxu0 0.0
  %2756 = vmatprep.subr.mxu0 0.0
  %2757 = vmatpush1.msra.mxu0 0.0
  %2758 = vmatprep.subr.mxu0 0.0
  %2759 = vmatpush1.msra.mxu0 0.0
  %2760 = vmatprep.subr.mxu0 0.0
  %2761 = vmatpush1.msra.mxu0 0.0
  %2762 = vmatprep.subr.mxu0 0.0
  %2763 = vmatpush1.msra.mxu0 0.0
  %2764 = vmatprep.subr.mxu0 0.0
  %2765 = vmatpush1.msra.mxu0 0.0
  %2766 = vmatprep.mubr.f32.mxu0 0.0
  %2767 = vmatmul.mubr.f32.gmra.mrb[0].mxu0 %v2629
  %v2768 = vpop.f32.mrb[0].mxu0
  %v2769 = vadd.f32 0.0, %v2768
  %v2770 = vpop.f32.mrb[0].mxu0
  %v2771 = vadd.f32 0.0, %v2770
  %2772 = vdwg.mxu0
  %v2773 = vadd.f32 %v2513, %v2698
  %v2774 = vadd.f32 %v2514, %v2700
  %v2775 = vadd.f32 %v2515, %v2769
  %v2776 = vadd.f32 %v2516, %v2771
  %s2777 = scalar_lea.vmem %s3, 40
  %v2778 = vld [vmem:[%s2777] sm:$0xff]
  %2779 = vrot.lane.b32.xlu0 %v1681, 123
  %v2780 = vpop.permute.xlu0 %2779
  %2781 = vrot.lane.b32.xlu0 %v1682, 123
  %v2782 = vpop.permute.xlu0 %2781
  %2783 = vrot.lane.b32.xlu0 %v1683, 123
  %v2784 = vpop.permute.xlu0 %2783
  %2785 = vrot.lane.b32.xlu0 %v1684, 123
  %v2786 = vpop.permute.xlu0 %2785
  %2787 = vrot.lane.b32.xlu0 %v1685, 123
  %v2788 = vpop.permute.xlu0 %2787
  %2789 = vrot.lane.b32.xlu0 %v1686, 123
  %v2790 = vpop.permute.xlu0 %2789
  %2791 = vrot.lane.b32.xlu0 %v1687, 123
  %v2792 = vpop.permute.xlu0 %2791
  %2793 = vrot.lane.b32.xlu0 %v1688, 123
  %v2794 = vpop.permute.xlu0 %2793
  %2795 = vrot.lane.b32.xlu0 %v1689, 123
  %v2796 = vpop.permute.xlu0 %2795
  %2797 = vrot.lane.b32.xlu0 %v1690, 123
  %v2798 = vpop.permute.xlu0 %2797
  %2799 = vrot.lane.b32.xlu0 %v1691, 123
  %v2800 = vpop.permute.xlu0 %2799
  %2801 = vrot.lane.b32.xlu0 %v1692, 123
  %v2802 = vpop.permute.xlu0 %2801
  %2803 = vrot.lane.b32.xlu0 %v1693, 123
  %v2804 = vpop.permute.xlu0 %2803
  %2805 = vrot.lane.b32.xlu0 %v1694, 123
  %v2806 = vpop.permute.xlu0 %2805
  %2807 = vrot.lane.b32.xlu0 %v1695, 123
  %v2808 = vpop.permute.xlu0 %2807
  %2809 = vrot.lane.b32.xlu0 %v1696, 123
  %v2810 = vpop.permute.xlu0 %2809
  %2811 = vrot.lane.b32.xlu0 %v1697, 123
  %v2812 = vpop.permute.xlu0 %2811
  %2813 = vrot.lane.b32.xlu0 %v1698, 123
  %v2814 = vpop.permute.xlu0 %2813
  %2815 = vrot.lane.b32.xlu0 %v1699, 123
  %v2816 = vpop.permute.xlu0 %2815
  %2817 = vrot.lane.b32.xlu0 %v1700, 123
  %v2818 = vpop.permute.xlu0 %2817
  %2819 = vrot.lane.b32.xlu0 %v1701, 123
  %v2820 = vpop.permute.xlu0 %2819
  %2821 = vrot.lane.b32.xlu0 %v1702, 123
  %v2822 = vpop.permute.xlu0 %2821
  %2823 = vrot.lane.b32.xlu0 %v1703, 123
  %v2824 = vpop.permute.xlu0 %2823
  %2825 = vrot.lane.b32.xlu0 %v1704, 123
  %v2826 = vpop.permute.xlu0 %2825
  %2827 = vrot.lane.b32.xlu0 %v1705, 123
  %v2828 = vpop.permute.xlu0 %2827
  %2829 = vrot.lane.b32.xlu0 %v1706, 123
  %v2830 = vpop.permute.xlu0 %2829
  %2831 = vrot.lane.b32.xlu0 %v1707, 123
  %v2832 = vpop.permute.xlu0 %2831
  %2833 = vrot.lane.b32.xlu0 %v1708, 123
  %v2834 = vpop.permute.xlu0 %2833
  %2835 = vrot.lane.b32.xlu0 %v1709, 123
  %v2836 = vpop.permute.xlu0 %2835
  %2837 = vrot.lane.b32.xlu0 %v1710, 123
  %v2838 = vpop.permute.xlu0 %2837
  %v2839 = vsel %vm732, %v2780, %v2782
  %v2840 = vsel %vm732, %v2782, %v2784
  %v2841 = vsel %vm732, %v2784, %v2786
  %v2842 = vsel %vm732, %v2786, %v2788
  %v2843 = vsel %vm732, %v2790, %v2792
  %v2844 = vsel %vm732, %v2792, %v2794
  %v2845 = vsel %vm732, %v2794, %v2796
  %v2846 = vsel %vm732, %v2796, %v2798
  %v2847 = vsel %vm732, %v2800, %v2802
  %v2848 = vsel %vm732, %v2802, %v2804
  %v2849 = vsel %vm732, %v2804, %v2806
  %v2850 = vsel %vm732, %v2806, %v2808
  %v2851 = vsel %vm732, %v2810, %v2812
  %v2852 = vsel %vm732, %v2812, %v2814
  %v2853 = vsel %vm732, %v2814, %v2816
  %v2854 = vsel %vm732, %v2816, %v2818
  %v2855 = vsel %vm732, %v2820, %v2822
  %v2856 = vsel %vm732, %v2822, %v2824
  %v2857 = vsel %vm732, %v2824, %v2826
  %v2858 = vsel %vm732, %v2826, %v2828
  %v2859 = vsel %vm732, %v2830, %v2832
  %v2860 = vsel %vm732, %v2832, %v2834
  %v2861 = vsel %vm732, %v2834, %v2836
  %v2862 = vsel %vm732, %v2836, %v2838
  %v2888 = vsel %vm796, %v2778, 0
  %2890 = vmatprep.subr.mxu0 %v2840
  %2891 = vmatpush1.msra.mxu0 %v2839
  %2892 = vmatprep.subr.mxu0 %v2844
  %2893 = vmatpush1.msra.mxu0 %v2843
  %2894 = vmatprep.subr.mxu0 %v2848
  %2895 = vmatpush1.msra.mxu0 %v2847
  %2896 = vmatprep.subr.mxu0 %v2852
  %2897 = vmatpush1.msra.mxu0 %v2851
  %2898 = vmatprep.subr.mxu0 %v2856
  %2899 = vmatpush1.msra.mxu0 %v2855
  %2900 = vmatprep.subr.mxu0 %v2860
  %2901 = vmatpush1.msra.mxu0 %v2859
  %2902 = vmatprep.subr.mxu0 0.0
  %2903 = vmatpush1.msra.mxu0 0.0
  %2904 = vmatprep.subr.mxu0 0.0
  %2905 = vmatpush1.msra.mxu0 0.0
  %2906 = vmatprep.subr.mxu0 0.0
  %2907 = vmatpush1.msra.mxu0 0.0
  %2908 = vmatprep.subr.mxu0 0.0
  %2909 = vmatpush1.msra.mxu0 0.0
  %2910 = vmatprep.subr.mxu0 0.0
  %2911 = vmatpush1.msra.mxu0 0.0
  %2912 = vmatprep.subr.mxu0 0.0
  %2913 = vmatpush1.msra.mxu0 0.0
  %2914 = vmatprep.subr.mxu0 0.0
  %2915 = vmatpush1.msra.mxu0 0.0
  %2916 = vmatprep.subr.mxu0 0.0
  %2917 = vmatpush1.msra.mxu0 0.0
  %2918 = vmatprep.subr.mxu0 0.0
  %2919 = vmatpush1.msra.mxu0 0.0
  %2920 = vmatprep.subr.mxu0 0.0
  %2921 = vmatpush1.msra.mxu0 0.0
  %2922 = vmatprep.subr.mxu0 0.0
  %2923 = vmatpush1.msra.mxu0 0.0
  %2924 = vmatprep.subr.mxu0 0.0
  %2925 = vmatpush1.msra.mxu0 0.0
  %2926 = vmatprep.subr.mxu0 0.0
  %2927 = vmatpush1.msra.mxu0 0.0
  %2928 = vmatprep.subr.mxu0 0.0
  %2929 = vmatpush1.msra.mxu0 0.0
  %2930 = vmatprep.subr.mxu0 0.0
  %2931 = vmatpush1.msra.mxu0 0.0
  %2932 = vmatprep.subr.mxu0 0.0
  %2933 = vmatpush1.msra.mxu0 0.0
  %2934 = vmatprep.subr.mxu0 0.0
  %2935 = vmatpush1.msra.mxu0 0.0
  %2936 = vmatprep.subr.mxu0 0.0
  %2937 = vmatpush1.msra.mxu0 0.0
  %2938 = vmatprep.subr.mxu0 0.0
  %2939 = vmatpush1.msra.mxu0 0.0
  %2940 = vmatprep.subr.mxu0 0.0
  %2941 = vmatpush1.msra.mxu0 0.0
  %2942 = vmatprep.subr.mxu0 0.0
  %2943 = vmatpush1.msra.mxu0 0.0
  %2944 = vmatprep.subr.mxu0 0.0
  %2945 = vmatpush1.msra.mxu0 0.0
  %2946 = vmatprep.subr.mxu0 0.0
  %2947 = vmatpush1.msra.mxu0 0.0
  %2948 = vmatprep.subr.mxu0 0.0
  %2949 = vmatpush1.msra.mxu0 0.0
  %2950 = vmatprep.subr.mxu0 0.0
  %2951 = vmatpush1.msra.mxu0 0.0
  %2952 = vmatprep.subr.mxu0 0.0
  %2953 = vmatpush1.msra.mxu0 0.0
  %2954 = vmatprep.mubr.f32.mxu0 0.0
  %2955 = vmatmul.mubr.f32.gmra.mrb[0].mxu0 %v2888
  %v2956 = vpop.f32.mrb[0].mxu0
  %v2957 = vadd.f32 0.0, %v2956
  %v2958 = vpop.f32.mrb[0].mxu0
  %v2959 = vadd.f32 0.0, %v2958
  %2960 = vdwg.mxu0
  %2961 = vmatprep.subr.mxu0 %v2842
  %2962 = vmatpush1.msra.mxu0 %v2841
  %2963 = vmatprep.subr.mxu0 %v2846
  %2964 = vmatpush1.msra.mxu0 %v2845
  %2965 = vmatprep.subr.mxu0 %v2850
  %2966 = vmatpush1.msra.mxu0 %v2849
  %2967 = vmatprep.subr.mxu0 %v2854
  %2968 = vmatpush1.msra.mxu0 %v2853
  %2969 = vmatprep.subr.mxu0 %v2858
  %2970 = vmatpush1.msra.mxu0 %v2857
  %2971 = vmatprep.subr.mxu0 %v2862
  %2972 = vmatpush1.msra.mxu0 %v2861
  %2973 = vmatprep.subr.mxu0 0.0
  %2974 = vmatpush1.msra.mxu0 0.0
  %2975 = vmatprep.subr.mxu0 0.0
  %2976 = vmatpush1.msra.mxu0 0.0
  %2977 = vmatprep.subr.mxu0 0.0
  %2978 = vmatpush1.msra.mxu0 0.0
  %2979 = vmatprep.subr.mxu0 0.0
  %2980 = vmatpush1.msra.mxu0 0.0
  %2981 = vmatprep.subr.mxu0 0.0
  %2982 = vmatpush1.msra.mxu0 0.0
  %2983 = vmatprep.subr.mxu0 0.0
  %2984 = vmatpush1.msra.mxu0 0.0
  %2985 = vmatprep.subr.mxu0 0.0
  %2986 = vmatpush1.msra.mxu0 0.0
  %2987 = vmatprep.subr.mxu0 0.0
  %2988 = vmatpush1.msra.mxu0 0.0
  %2989 = vmatprep.subr.mxu0 0.0
  %2990 = vmatpush1.msra.mxu0 0.0
  %2991 = vmatprep.subr.mxu0 0.0
  %2992 = vmatpush1.msra.mxu0 0.0
  %2993 = vmatprep.subr.mxu0 0.0
  %2994 = vmatpush1.msra.mxu0 0.0
  %2995 = vmatprep.subr.mxu0 0.0
  %2996 = vmatpush1.msra.mxu0 0.0
  %2997 = vmatprep.subr.mxu0 0.0
  %2998 = vmatpush1.msra.mxu0 0.0
  %2999 = vmatprep.subr.mxu0 0.0
  %3000 = vmatpush1.msra.mxu0 0.0
  %3001 = vmatprep.subr.mxu0 0.0
  %3002 = vmatpush1.msra.mxu0 0.0
  %3003 = vmatprep.subr.mxu0 0.0
  %3004 = vmatpush1.msra.mxu0 0.0
  %3005 = vmatprep.subr.mxu0 0.0
  %3006 = vmatpush1.msra.mxu0 0.0
  %3007 = vmatprep.subr.mxu0 0.0
  %3008 = vmatpush1.msra.mxu0 0.0
  %3009 = vmatprep.subr.mxu0 0.0
  %3010 = vmatpush1.msra.mxu0 0.0
  %3011 = vmatprep.subr.mxu0 0.0
  %3012 = vmatpush1.msra.mxu0 0.0
  %3013 = vmatprep.subr.mxu0 0.0
  %3014 = vmatpush1.msra.mxu0 0.0
  %3015 = vmatprep.subr.mxu0 0.0
  %3016 = vmatpush1.msra.mxu0 0.0
  %3017 = vmatprep.subr.mxu0 0.0
  %3018 = vmatpush1.msra.mxu0 0.0
  %3019 = vmatprep.subr.mxu0 0.0
  %3020 = vmatpush1.msra.mxu0 0.0
  %3021 = vmatprep.subr.mxu0 0.0
  %3022 = vmatpush1.msra.mxu0 0.0
  %3023 = vmatprep.subr.mxu0 0.0
  %3024 = vmatpush1.msra.mxu0 0.0
  %3025 = vmatprep.mubr.f32.mxu0 0.0
  %3026 = vmatmul.mubr.f32.gmra.mrb[0].mxu0 %v2888
  %v3027 = vpop.f32.mrb[0].mxu0
  %v3028 = vadd.f32 0.0, %v3027
  %v3029 = vpop.f32.mrb[0].mxu0
  %v3030 = vadd.f32 0.0, %v3029
  %3031 = vdwg.mxu0
  %v3032 = vadd.f32 %v2773, %v2957
  %v3033 = vadd.f32 %v2774, %v2959
  %v3034 = vadd.f32 %v2775, %v3028
  %v3035 = vadd.f32 %v2776, %v3030
  %s3036 = scalar_lea.vmem %s3, 48
  %v3037 = vld [vmem:[%s3036] sm:$0xff]
  %3038 = vrot.lane.b32.xlu0 %v1681, 122
  %v3039 = vpop.permute.xlu0 %3038
  %3040 = vrot.lane.b32.xlu0 %v1682, 122
  %v3041 = vpop.permute.xlu0 %3040
  %3042 = vrot.lane.b32.xlu0 %v1683, 122
  %v3043 = vpop.permute.xlu0 %3042
  %3044 = vrot.lane.b32.xlu0 %v1684, 122
  %v3045 = vpop.permute.xlu0 %3044
  %3046 = vrot.lane.b32.xlu0 %v1685, 122
  %v3047 = vpop.permute.xlu0 %3046
  %3048 = vrot.lane.b32.xlu0 %v1686, 122
  %v3049 = vpop.permute.xlu0 %3048
  %3050 = vrot.lane.b32.xlu0 %v1687, 122
  %v3051 = vpop.permute.xlu0 %3050
  %3052 = vrot.lane.b32.xlu0 %v1688, 122
  %v3053 = vpop.permute.xlu0 %3052
  %3054 = vrot.lane.b32.xlu0 %v1689, 122
  %v3055 = vpop.permute.xlu0 %3054
  %3056 = vrot.lane.b32.xlu0 %v1690, 122
  %v3057 = vpop.permute.xlu0 %3056
  %3058 = vrot.lane.b32.xlu0 %v1691, 122
  %v3059 = vpop.permute.xlu0 %3058
  %3060 = vrot.lane.b32.xlu0 %v1692, 122
  %v3061 = vpop.permute.xlu0 %3060
  %3062 = vrot.lane.b32.xlu0 %v1693, 122
  %v3063 = vpop.permute.xlu0 %3062
  %3064 = vrot.lane.b32.xlu0 %v1694, 122
  %v3065 = vpop.permute.xlu0 %3064
  %3066 = vrot.lane.b32.xlu0 %v1695, 122
  %v3067 = vpop.permute.xlu0 %3066
  %3068 = vrot.lane.b32.xlu0 %v1696, 122
  %v3069 = vpop.permute.xlu0 %3068
  %3070 = vrot.lane.b32.xlu0 %v1697, 122
  %v3071 = vpop.permute.xlu0 %3070
  %3072 = vrot.lane.b32.xlu0 %v1698, 122
  %v3073 = vpop.permute.xlu0 %3072
  %3074 = vrot.lane.b32.xlu0 %v1699, 122
  %v3075 = vpop.permute.xlu0 %3074
  %3076 = vrot.lane.b32.xlu0 %v1700, 122
  %v3077 = vpop.permute.xlu0 %3076
  %3078 = vrot.lane.b32.xlu0 %v1701, 122
  %v3079 = vpop.permute.xlu0 %3078
  %3080 = vrot.lane.b32.xlu0 %v1702, 122
  %v3081 = vpop.permute.xlu0 %3080
  %3082 = vrot.lane.b32.xlu0 %v1703, 122
  %v3083 = vpop.permute.xlu0 %3082
  %3084 = vrot.lane.b32.xlu0 %v1704, 122
  %v3085 = vpop.permute.xlu0 %3084
  %3086 = vrot.lane.b32.xlu0 %v1705, 122
  %v3087 = vpop.permute.xlu0 %3086
  %3088 = vrot.lane.b32.xlu0 %v1706, 122
  %v3089 = vpop.permute.xlu0 %3088
  %3090 = vrot.lane.b32.xlu0 %v1707, 122
  %v3091 = vpop.permute.xlu0 %3090
  %3092 = vrot.lane.b32.xlu0 %v1708, 122
  %v3093 = vpop.permute.xlu0 %3092
  %3094 = vrot.lane.b32.xlu0 %v1709, 122
  %v3095 = vpop.permute.xlu0 %3094
  %3096 = vrot.lane.b32.xlu0 %v1710, 122
  %v3097 = vpop.permute.xlu0 %3096
  %vm3098 = vcmask 998400
  %v3099 = vsel %vm3098, %v3039, %v3041
  %v3100 = vsel %vm3098, %v3041, %v3043
  %v3101 = vsel %vm3098, %v3043, %v3045
  %v3102 = vsel %vm3098, %v3045, %v3047
  %v3103 = vsel %vm3098, %v3049, %v3051
  %v3104 = vsel %vm3098, %v3051, %v3053
  %v3105 = vsel %vm3098, %v3053, %v3055
  %v3106 = vsel %vm3098, %v3055, %v3057
  %v3107 = vsel %vm3098, %v3059, %v3061
  %v3108 = vsel %vm3098, %v3061, %v3063
  %v3109 = vsel %vm3098, %v3063, %v3065
  %v3110 = vsel %vm3098, %v3065, %v3067
  %v3111 = vsel %vm3098, %v3069, %v3071
  %v3112 = vsel %vm3098, %v3071, %v3073
  %v3113 = vsel %vm3098, %v3073, %v3075
  %v3114 = vsel %vm3098, %v3075, %v3077
  %v3115 = vsel %vm3098, %v3079, %v3081
  %v3116 = vsel %vm3098, %v3081, %v3083
  %v3117 = vsel %vm3098, %v3083, %v3085
  %v3118 = vsel %vm3098, %v3085, %v3087
  %v3119 = vsel %vm3098, %v3089, %v3091
  %v3120 = vsel %vm3098, %v3091, %v3093
  %v3121 = vsel %vm3098, %v3093, %v3095
  %v3122 = vsel %vm3098, %v3095, %v3097
  %v3148 = vsel %vm796, %v3037, 0
  %3150 = vmatprep.subr.mxu0 %v3100
  %3151 = vmatpush1.msra.mxu0 %v3099
  %3152 = vmatprep.subr.mxu0 %v3104
  %3153 = vmatpush1.msra.mxu0 %v3103
  %3154 = vmatprep.subr.mxu0 %v3108
  %3155 = vmatpush1.msra.mxu0 %v3107
  %3156 = vmatprep.subr.mxu0 %v3112
  %3157 = vmatpush1.msra.mxu0 %v3111
  %3158 = vmatprep.subr.mxu0 %v3116
  %3159 = vmatpush1.msra.mxu0 %v3115
  %3160 = vmatprep.subr.mxu0 %v3120
  %3161 = vmatpush1.msra.mxu0 %v3119
  %3162 = vmatprep.subr.mxu0 0.0
  %3163 = vmatpush1.msra.mxu0 0.0
  %3164 = vmatprep.subr.mxu0 0.0
  %3165 = vmatpush1.msra.mxu0 0.0
  %3166 = vmatprep.subr.mxu0 0.0
  %3167 = vmatpush1.msra.mxu0 0.0
  %3168 = vmatprep.subr.mxu0 0.0
  %3169 = vmatpush1.msra.mxu0 0.0
  %3170 = vmatprep.subr.mxu0 0.0
  %3171 = vmatpush1.msra.mxu0 0.0
  %3172 = vmatprep.subr.mxu0 0.0
  %3173 = vmatpush1.msra.mxu0 0.0
  %3174 = vmatprep.subr.mxu0 0.0
  %3175 = vmatpush1.msra.mxu0 0.0
  %3176 = vmatprep.subr.mxu0 0.0
  %3177 = vmatpush1.msra.mxu0 0.0
  %3178 = vmatprep.subr.mxu0 0.0
  %3179 = vmatpush1.msra.mxu0 0.0
  %3180 = vmatprep.subr.mxu0 0.0
  %3181 = vmatpush1.msra.mxu0 0.0
  %3182 = vmatprep.subr.mxu0 0.0
  %3183 = vmatpush1.msra.mxu0 0.0
  %3184 = vmatprep.subr.mxu0 0.0
  %3185 = vmatpush1.msra.mxu0 0.0
  %3186 = vmatprep.subr.mxu0 0.0
  %3187 = vmatpush1.msra.mxu0 0.0
  %3188 = vmatprep.subr.mxu0 0.0
  %3189 = vmatpush1.msra.mxu0 0.0
  %3190 = vmatprep.subr.mxu0 0.0
  %3191 = vmatpush1.msra.mxu0 0.0
  %3192 = vmatprep.subr.mxu0 0.0
  %3193 = vmatpush1.msra.mxu0 0.0
  %3194 = vmatprep.subr.mxu0 0.0
  %3195 = vmatpush1.msra.mxu0 0.0
  %3196 = vmatprep.subr.mxu0 0.0
  %3197 = vmatpush1.msra.mxu0 0.0
  %3198 = vmatprep.subr.mxu0 0.0
  %3199 = vmatpush1.msra.mxu0 0.0
  %3200 = vmatprep.subr.mxu0 0.0
  %3201 = vmatpush1.msra.mxu0 0.0
  %3202 = vmatprep.subr.mxu0 0.0
  %3203 = vmatpush1.msra.mxu0 0.0
  %3204 = vmatprep.subr.mxu0 0.0
  %3205 = vmatpush1.msra.mxu0 0.0
  %3206 = vmatprep.subr.mxu0 0.0
  %3207 = vmatpush1.msra.mxu0 0.0
  %3208 = vmatprep.subr.mxu0 0.0
  %3209 = vmatpush1.msra.mxu0 0.0
  %3210 = vmatprep.subr.mxu0 0.0
  %3211 = vmatpush1.msra.mxu0 0.0
  %3212 = vmatprep.subr.mxu0 0.0
  %3213 = vmatpush1.msra.mxu0 0.0
  %3214 = vmatprep.mubr.f32.mxu0 0.0
  %3215 = vmatmul.mubr.f32.gmra.mrb[0].mxu0 %v3148
  %v3216 = vpop.f32.mrb[0].mxu0
  %v3217 = vadd.f32 0.0, %v3216
  %v3218 = vpop.f32.mrb[0].mxu0
  %v3219 = vadd.f32 0.0, %v3218
  %3220 = vdwg.mxu0
  %3221 = vmatprep.subr.mxu0 %v3102
  %3222 = vmatpush1.msra.mxu0 %v3101
  %3223 = vmatprep.subr.mxu0 %v3106
  %3224 = vmatpush1.msra.mxu0 %v3105
  %3225 = vmatprep.subr.mxu0 %v3110
  %3226 = vmatpush1.msra.mxu0 %v3109
  %3227 = vmatprep.subr.mxu0 %v3114
  %3228 = vmatpush1.msra.mxu0 %v3113
  %3229 = vmatprep.subr.mxu0 %v3118
  %3230 = vmatpush1.msra.mxu0 %v3117
  %3231 = vmatprep.subr.mxu0 %v3122
  %3232 = vmatpush1.msra.mxu0 %v3121
  %3233 = vmatprep.subr.mxu0 0.0
  %3234 = vmatpush1.msra.mxu0 0.0
  %3235 = vmatprep.subr.mxu0 0.0
  %3236 = vmatpush1.msra.mxu0 0.0
  %3237 = vmatprep.subr.mxu0 0.0
  %3238 = vmatpush1.msra.mxu0 0.0
  %3239 = vmatprep.subr.mxu0 0.0
  %3240 = vmatpush1.msra.mxu0 0.0
  %3241 = vmatprep.subr.mxu0 0.0
  %3242 = vmatpush1.msra.mxu0 0.0
  %3243 = vmatprep.subr.mxu0 0.0
  %3244 = vmatpush1.msra.mxu0 0.0
  %3245 = vmatprep.subr.mxu0 0.0
  %3246 = vmatpush1.msra.mxu0 0.0
  %3247 = vmatprep.subr.mxu0 0.0
  %3248 = vmatpush1.msra.mxu0 0.0
  %3249 = vmatprep.subr.mxu0 0.0
  %3250 = vmatpush1.msra.mxu0 0.0
  %3251 = vmatprep.subr.mxu0 0.0
  %3252 = vmatpush1.msra.mxu0 0.0
  %3253 = vmatprep.subr.mxu0 0.0
  %3254 = vmatpush1.msra.mxu0 0.0
  %3255 = vmatprep.subr.mxu0 0.0
  %3256 = vmatpush1.msra.mxu0 0.0
  %3257 = vmatprep.subr.mxu0 0.0
  %3258 = vmatpush1.msra.mxu0 0.0
  %3259 = vmatprep.subr.mxu0 0.0
  %3260 = vmatpush1.msra.mxu0 0.0
  %3261 = vmatprep.subr.mxu0 0.0
  %3262 = vmatpush1.msra.mxu0 0.0
  %3263 = vmatprep.subr.mxu0 0.0
  %3264 = vmatpush1.msra.mxu0 0.0
  %3265 = vmatprep.subr.mxu0 0.0
  %3266 = vmatpush1.msra.mxu0 0.0
  %3267 = vmatprep.subr.mxu0 0.0
  %3268 = vmatpush1.msra.mxu0 0.0
  %3269 = vmatprep.subr.mxu0 0.0
  %3270 = vmatpush1.msra.mxu0 0.0
  %3271 = vmatprep.subr.mxu0 0.0
  %3272 = vmatpush1.msra.mxu0 0.0
  %3273 = vmatprep.subr.mxu0 0.0
  %3274 = vmatpush1.msra.mxu0 0.0
  %3275 = vmatprep.subr.mxu0 0.0
  %3276 = vmatpush1.msra.mxu0 0.0
  %3277 = vmatprep.subr.mxu0 0.0
  %3278 = vmatpush1.msra.mxu0 0.0
  %3279 = vmatprep.subr.mxu0 0.0
  %3280 = vmatpush1.msra.mxu0 0.0
  %3281 = vmatprep.subr.mxu0 0.0
  %3282 = vmatpush1.msra.mxu0 0.0
  %3283 = vmatprep.subr.mxu0 0.0
  %3284 = vmatpush1.msra.mxu0 0.0
  %3285 = vmatprep.mubr.f32.mxu0 0.0
  %3286 = vmatmul.mubr.f32.gmra.mrb[0].mxu0 %v3148
  %v3287 = vpop.f32.mrb[0].mxu0
  %v3288 = vadd.f32 0.0, %v3287
  %v3289 = vpop.f32.mrb[0].mxu0
  %v3290 = vadd.f32 0.0, %v3289
  %3291 = vdwg.mxu0
  %v3292 = vadd.f32 %v3032, %v3217
  %v3293 = vadd.f32 %v3033, %v3219
  %v3294 = vadd.f32 %v3034, %v3288
  %v3295 = vadd.f32 %v3035, %v3290
  %s3296 = scalar_lea.vmem %s3, 56
  %v3297 = vld [vmem:[%s3296] sm:$0xff]
  %3298 = vrot.lane.b32.xlu0 %v1681, 121
  %v3299 = vpop.permute.xlu0 %3298
  %3300 = vrot.lane.b32.xlu0 %v1682, 121
  %v3301 = vpop.permute.xlu0 %3300
  %3302 = vrot.lane.b32.xlu0 %v1683, 121
  %v3303 = vpop.permute.xlu0 %3302
  %3304 = vrot.lane.b32.xlu0 %v1684, 121
  %v3305 = vpop.permute.xlu0 %3304
  %3306 = vrot.lane.b32.xlu0 %v1685, 121
  %v3307 = vpop.permute.xlu0 %3306
  %3308 = vrot.lane.b32.xlu0 %v1686, 121
  %v3309 = vpop.permute.xlu0 %3308
  %3310 = vrot.lane.b32.xlu0 %v1687, 121
  %v3311 = vpop.permute.xlu0 %3310
  %3312 = vrot.lane.b32.xlu0 %v1688, 121
  %v3313 = vpop.permute.xlu0 %3312
  %3314 = vrot.lane.b32.xlu0 %v1689, 121
  %v3315 = vpop.permute.xlu0 %3314
  %3316 = vrot.lane.b32.xlu0 %v1690, 121
  %v3317 = vpop.permute.xlu0 %3316
  %3318 = vrot.lane.b32.xlu0 %v1691, 121
  %v3319 = vpop.permute.xlu0 %3318
  %3320 = vrot.lane.b32.xlu0 %v1692, 121
  %v3321 = vpop.permute.xlu0 %3320
  %3322 = vrot.lane.b32.xlu0 %v1693, 121
  %v3323 = vpop.permute.xlu0 %3322
  %3324 = vrot.lane.b32.xlu0 %v1694, 121
  %v3325 = vpop.permute.xlu0 %3324
  %3326 = vrot.lane.b32.xlu0 %v1695, 121
  %v3327 = vpop.permute.xlu0 %3326
  %3328 = vrot.lane.b32.xlu0 %v1696, 121
  %v3329 = vpop.permute.xlu0 %3328
  %3330 = vrot.lane.b32.xlu0 %v1697, 121
  %v3331 = vpop.permute.xlu0 %3330
  %3332 = vrot.lane.b32.xlu0 %v1698, 121
  %v3333 = vpop.permute.xlu0 %3332
  %3334 = vrot.lane.b32.xlu0 %v1699, 121
  %v3335 = vpop.permute.xlu0 %3334
  %3336 = vrot.lane.b32.xlu0 %v1700, 121
  %v3337 = vpop.permute.xlu0 %3336
  %3338 = vrot.lane.b32.xlu0 %v1701, 121
  %v3339 = vpop.permute.xlu0 %3338
  %3340 = vrot.lane.b32.xlu0 %v1702, 121
  %v3341 = vpop.permute.xlu0 %3340
  %3342 = vrot.lane.b32.xlu0 %v1703, 121
  %v3343 = vpop.permute.xlu0 %3342
  %3344 = vrot.lane.b32.xlu0 %v1704, 121
  %v3345 = vpop.permute.xlu0 %3344
  %3346 = vrot.lane.b32.xlu0 %v1705, 121
  %v3347 = vpop.permute.xlu0 %3346
  %3348 = vrot.lane.b32.xlu0 %v1706, 121
  %v3349 = vpop.permute.xlu0 %3348
  %3350 = vrot.lane.b32.xlu0 %v1707, 121
  %v3351 = vpop.permute.xlu0 %3350
  %3352 = vrot.lane.b32.xlu0 %v1708, 121
  %v3353 = vpop.permute.xlu0 %3352
  %3354 = vrot.lane.b32.xlu0 %v1709, 121
  %v3355 = vpop.permute.xlu0 %3354
  %3356 = vrot.lane.b32.xlu0 %v1710, 121
  %v3357 = vpop.permute.xlu0 %3356
  %vm3358 = vcmask 990208
  %v3359 = vsel %vm3358, %v3299, %v3301
  %v3360 = vsel %vm3358, %v3301, %v3303
  %v3361 = vsel %vm3358, %v3303, %v3305
  %v3362 = vsel %vm3358, %v3305, %v3307
  %v3363 = vsel %vm3358, %v3309, %v3311
  %v3364 = vsel %vm3358, %v3311, %v3313
  %v3365 = vsel %vm3358, %v3313, %v3315
  %v3366 = vsel %vm3358, %v3315, %v3317
  %v3367 = vsel %vm3358, %v3319, %v3321
  %v3368 = vsel %vm3358, %v3321, %v3323
  %v3369 = vsel %vm3358, %v3323, %v3325
  %v3370 = vsel %vm3358, %v3325, %v3327
  %v3371 = vsel %vm3358, %v3329, %v3331
  %v3372 = vsel %vm3358, %v3331, %v3333
  %v3373 = vsel %vm3358, %v3333, %v3335
  %v3374 = vsel %vm3358, %v3335, %v3337
  %v3375 = vsel %vm3358, %v3339, %v3341
  %v3376 = vsel %vm3358, %v3341, %v3343
  %v3377 = vsel %vm3358, %v3343, %v3345
  %v3378 = vsel %vm3358, %v3345, %v3347
  %v3379 = vsel %vm3358, %v3349, %v3351
  %v3380 = vsel %vm3358, %v3351, %v3353
  %v3381 = vsel %vm3358, %v3353, %v3355
  %v3382 = vsel %vm3358, %v3355, %v3357
  %v3408 = vsel %vm796, %v3297, 0
  %3410 = vmatprep.subr.mxu0 %v3360
  %3411 = vmatpush1.msra.mxu0 %v3359
  %3412 = vmatprep.subr.mxu0 %v3364
  %3413 = vmatpush1.msra.mxu0 %v3363
  %3414 = vmatprep.subr.mxu0 %v3368
  %3415 = vmatpush1.msra.mxu0 %v3367
  %3416 = vmatprep.subr.mxu0 %v3372
  %3417 = vmatpush1.msra.mxu0 %v3371
  %3418 = vmatprep.subr.mxu0 %v3376
  %3419 = vmatpush1.msra.mxu0 %v3375
  %3420 = vmatprep.subr.mxu0 %v3380
  %3421 = vmatpush1.msra.mxu0 %v3379
  %3422 = vmatprep.subr.mxu0 0.0
  %3423 = vmatpush1.msra.mxu0 0.0
  %3424 = vmatprep.subr.mxu0 0.0
  %3425 = vmatpush1.msra.mxu0 0.0
  %3426 = vmatprep.subr.mxu0 0.0
  %3427 = vmatpush1.msra.mxu0 0.0
  %3428 = vmatprep.subr.mxu0 0.0
  %3429 = vmatpush1.msra.mxu0 0.0
  %3430 = vmatprep.subr.mxu0 0.0
  %3431 = vmatpush1.msra.mxu0 0.0
  %3432 = vmatprep.subr.mxu0 0.0
  %3433 = vmatpush1.msra.mxu0 0.0
  %3434 = vmatprep.subr.mxu0 0.0
  %3435 = vmatpush1.msra.mxu0 0.0
  %3436 = vmatprep.subr.mxu0 0.0
  %3437 = vmatpush1.msra.mxu0 0.0
  %3438 = vmatprep.subr.mxu0 0.0
  %3439 = vmatpush1.msra.mxu0 0.0
  %3440 = vmatprep.subr.mxu0 0.0
  %3441 = vmatpush1.msra.mxu0 0.0
  %3442 = vmatprep.subr.mxu0 0.0
  %3443 = vmatpush1.msra.mxu0 0.0
  %3444 = vmatprep.subr.mxu0 0.0
  %3445 = vmatpush1.msra.mxu0 0.0
  %3446 = vmatprep.subr.mxu0 0.0
  %3447 = vmatpush1.msra.mxu0 0.0
  %3448 = vmatprep.subr.mxu0 0.0
  %3449 = vmatpush1.msra.mxu0 0.0
  %3450 = vmatprep.subr.mxu0 0.0
  %3451 = vmatpush1.msra.mxu0 0.0
  %3452 = vmatprep.subr.mxu0 0.0
  %3453 = vmatpush1.msra.mxu0 0.0
  %3454 = vmatprep.subr.mxu0 0.0
  %3455 = vmatpush1.msra.mxu0 0.0
  %3456 = vmatprep.subr.mxu0 0.0
  %3457 = vmatpush1.msra.mxu0 0.0
  %3458 = vmatprep.subr.mxu0 0.0
  %3459 = vmatpush1.msra.mxu0 0.0
  %3460 = vmatprep.subr.mxu0 0.0
  %3461 = vmatpush1.msra.mxu0 0.0
  %3462 = vmatprep.subr.mxu0 0.0
  %3463 = vmatpush1.msra.mxu0 0.0
  %3464 = vmatprep.subr.mxu0 0.0
  %3465 = vmatpush1.msra.mxu0 0.0
  %3466 = vmatprep.subr.mxu0 0.0
  %3467 = vmatpush1.msra.mxu0 0.0
  %3468 = vmatprep.subr.mxu0 0.0
  %3469 = vmatpush1.msra.mxu0 0.0
  %3470 = vmatprep.subr.mxu0 0.0
  %3471 = vmatpush1.msra.mxu0 0.0
  %3472 = vmatprep.subr.mxu0 0.0
  %3473 = vmatpush1.msra.mxu0 0.0
  %3474 = vmatprep.mubr.f32.mxu0 0.0
  %3475 = vmatmul.mubr.f32.gmra.mrb[0].mxu0 %v3408
  %v3476 = vpop.f32.mrb[0].mxu0
  %v3477 = vadd.f32 0.0, %v3476
  %v3478 = vpop.f32.mrb[0].mxu0
  %v3479 = vadd.f32 0.0, %v3478
  %3480 = vdwg.mxu0
  %3481 = vmatprep.subr.mxu0 %v3362
  %3482 = vmatpush1.msra.mxu0 %v3361
  %3483 = vmatprep.subr.mxu0 %v3366
  %3484 = vmatpush1.msra.mxu0 %v3365
  %3485 = vmatprep.subr.mxu0 %v3370
  %3486 = vmatpush1.msra.mxu0 %v3369
  %3487 = vmatprep.subr.mxu0 %v3374
  %3488 = vmatpush1.msra.mxu0 %v3373
  %3489 = vmatprep.subr.mxu0 %v3378
  %3490 = vmatpush1.msra.mxu0 %v3377
  %3491 = vmatprep.subr.mxu0 %v3382
  %3492 = vmatpush1.msra.mxu0 %v3381
  %3493 = vmatprep.subr.mxu0 0.0
  %3494 = vmatpush1.msra.mxu0 0.0
  %3495 = vmatprep.subr.mxu0 0.0
  %3496 = vmatpush1.msra.mxu0 0.0
  %3497 = vmatprep.subr.mxu0 0.0
  %3498 = vmatpush1.msra.mxu0 0.0
  %3499 = vmatprep.subr.mxu0 0.0
  %3500 = vmatpush1.msra.mxu0 0.0
  %3501 = vmatprep.subr.mxu0 0.0
  %3502 = vmatpush1.msra.mxu0 0.0
  %3503 = vmatprep.subr.mxu0 0.0
  %3504 = vmatpush1.msra.mxu0 0.0
  %3505 = vmatprep.subr.mxu0 0.0
  %3506 = vmatpush1.msra.mxu0 0.0
  %3507 = vmatprep.subr.mxu0 0.0
  %3508 = vmatpush1.msra.mxu0 0.0
  %3509 = vmatprep.subr.mxu0 0.0
  %3510 = vmatpush1.msra.mxu0 0.0
  %3511 = vmatprep.subr.mxu0 0.0
  %3512 = vmatpush1.msra.mxu0 0.0
  %3513 = vmatprep.subr.mxu0 0.0
  %3514 = vmatpush1.msra.mxu0 0.0
  %3515 = vmatprep.subr.mxu0 0.0
  %3516 = vmatpush1.msra.mxu0 0.0
  %3517 = vmatprep.subr.mxu0 0.0
  %3518 = vmatpush1.msra.mxu0 0.0
  %3519 = vmatprep.subr.mxu0 0.0
  %3520 = vmatpush1.msra.mxu0 0.0
  %3521 = vmatprep.subr.mxu0 0.0
  %3522 = vmatpush1.msra.mxu0 0.0
  %3523 = vmatprep.subr.mxu0 0.0
  %3524 = vmatpush1.msra.mxu0 0.0
  %3525 = vmatprep.subr.mxu0 0.0
  %3526 = vmatpush1.msra.mxu0 0.0
  %3527 = vmatprep.subr.mxu0 0.0
  %3528 = vmatpush1.msra.mxu0 0.0
  %3529 = vmatprep.subr.mxu0 0.0
  %3530 = vmatpush1.msra.mxu0 0.0
  %3531 = vmatprep.subr.mxu0 0.0
  %3532 = vmatpush1.msra.mxu0 0.0
  %3533 = vmatprep.subr.mxu0 0.0
  %3534 = vmatpush1.msra.mxu0 0.0
  %3535 = vmatprep.subr.mxu0 0.0
  %3536 = vmatpush1.msra.mxu0 0.0
  %3537 = vmatprep.subr.mxu0 0.0
  %3538 = vmatpush1.msra.mxu0 0.0
  %3539 = vmatprep.subr.mxu0 0.0
  %3540 = vmatpush1.msra.mxu0 0.0
  %3541 = vmatprep.subr.mxu0 0.0
  %3542 = vmatpush1.msra.mxu0 0.0
  %3543 = vmatprep.subr.mxu0 0.0
  %3544 = vmatpush1.msra.mxu0 0.0
  %3545 = vmatprep.mubr.f32.mxu0 0.0
  %3546 = vmatmul.mubr.f32.gmra.mrb[0].mxu0 %v3408
  %v3547 = vpop.f32.mrb[0].mxu0
  %v3548 = vadd.f32 0.0, %v3547
  %v3549 = vpop.f32.mrb[0].mxu0
  %v3550 = vadd.f32 0.0, %v3549
  %3551 = vdwg.mxu0
  %v3552 = vadd.f32 %v3292, %v3477
  %v3553 = vadd.f32 %v3293, %v3479
  %v3554 = vadd.f32 %v3294, %v3548
  %v3555 = vadd.f32 %v3295, %v3550
  %s3556 = scalar_lea.vmem %s3, 64
  %v3557 = vld [vmem:[%s3556] sm:$0xff]
  %3558 = vrot.lane.b32.xlu0 %v1681, 120
  %v3559 = vpop.permute.xlu0 %3558
  %3560 = vrot.lane.b32.xlu0 %v1682, 120
  %v3561 = vpop.permute.xlu0 %3560
  %3562 = vrot.lane.b32.xlu0 %v1683, 120
  %v3563 = vpop.permute.xlu0 %3562
  %3564 = vrot.lane.b32.xlu0 %v1684, 120
  %v3565 = vpop.permute.xlu0 %3564
  %3566 = vrot.lane.b32.xlu0 %v1685, 120
  %v3567 = vpop.permute.xlu0 %3566
  %3568 = vrot.lane.b32.xlu0 %v1686, 120
  %v3569 = vpop.permute.xlu0 %3568
  %3570 = vrot.lane.b32.xlu0 %v1687, 120
  %v3571 = vpop.permute.xlu0 %3570
  %3572 = vrot.lane.b32.xlu0 %v1688, 120
  %v3573 = vpop.permute.xlu0 %3572
  %3574 = vrot.lane.b32.xlu0 %v1689, 120
  %v3575 = vpop.permute.xlu0 %3574
  %3576 = vrot.lane.b32.xlu0 %v1690, 120
  %v3577 = vpop.permute.xlu0 %3576
  %3578 = vrot.lane.b32.xlu0 %v1691, 120
  %v3579 = vpop.permute.xlu0 %3578
  %3580 = vrot.lane.b32.xlu0 %v1692, 120
  %v3581 = vpop.permute.xlu0 %3580
  %3582 = vrot.lane.b32.xlu0 %v1693, 120
  %v3583 = vpop.permute.xlu0 %3582
  %3584 = vrot.lane.b32.xlu0 %v1694, 120
  %v3585 = vpop.permute.xlu0 %3584
  %3586 = vrot.lane.b32.xlu0 %v1695, 120
  %v3587 = vpop.permute.xlu0 %3586
  %3588 = vrot.lane.b32.xlu0 %v1696, 120
  %v3589 = vpop.permute.xlu0 %3588
  %3590 = vrot.lane.b32.xlu0 %v1697, 120
  %v3591 = vpop.permute.xlu0 %3590
  %3592 = vrot.lane.b32.xlu0 %v1698, 120
  %v3593 = vpop.permute.xlu0 %3592
  %3594 = vrot.lane.b32.xlu0 %v1699, 120
  %v3595 = vpop.permute.xlu0 %3594
  %3596 = vrot.lane.b32.xlu0 %v1700, 120
  %v3597 = vpop.permute.xlu0 %3596
  %3598 = vrot.lane.b32.xlu0 %v1701, 120
  %v3599 = vpop.permute.xlu0 %3598
  %3600 = vrot.lane.b32.xlu0 %v1702, 120
  %v3601 = vpop.permute.xlu0 %3600
  %3602 = vrot.lane.b32.xlu0 %v1703, 120
  %v3603 = vpop.permute.xlu0 %3602
  %3604 = vrot.lane.b32.xlu0 %v1704, 120
  %v3605 = vpop.permute.xlu0 %3604
  %3606 = vrot.lane.b32.xlu0 %v1705, 120
  %v3607 = vpop.permute.xlu0 %3606
  %3608 = vrot.lane.b32.xlu0 %v1706, 120
  %v3609 = vpop.permute.xlu0 %3608
  %3610 = vrot.lane.b32.xlu0 %v1707, 120
  %v3611 = vpop.permute.xlu0 %3610
  %3612 = vrot.lane.b32.xlu0 %v1708, 120
  %v3613 = vpop.permute.xlu0 %3612
  %3614 = vrot.lane.b32.xlu0 %v1709, 120
  %v3615 = vpop.permute.xlu0 %3614
  %3616 = vrot.lane.b32.xlu0 %v1710, 120
  %v3617 = vpop.permute.xlu0 %3616
  %vm3618 = vcmask 982016
  %v3619 = vsel %vm3618, %v3559, %v3561
  %v3620 = vsel %vm3618, %v3561, %v3563
  %v3621 = vsel %vm3618, %v3563, %v3565
  %v3622 = vsel %vm3618, %v3565, %v3567
  %v3623 = vsel %vm3618, %v3569, %v3571
  %v3624 = vsel %vm3618, %v3571, %v3573
  %v3625 = vsel %vm3618, %v3573, %v3575
  %v3626 = vsel %vm3618, %v3575, %v3577
  %v3627 = vsel %vm3618, %v3579, %v3581
  %v3628 = vsel %vm3618, %v3581, %v3583
  %v3629 = vsel %vm3618, %v3583, %v3585
  %v3630 = vsel %vm3618, %v3585, %v3587
  %v3631 = vsel %vm3618, %v3589, %v3591
  %v3632 = vsel %vm3618, %v3591, %v3593
  %v3633 = vsel %vm3618, %v3593, %v3595
  %v3634 = vsel %vm3618, %v3595, %v3597
  %v3635 = vsel %vm3618, %v3599, %v3601
  %v3636 = vsel %vm3618, %v3601, %v3603
  %v3637 = vsel %vm3618, %v3603, %v3605
  %v3638 = vsel %vm3618, %v3605, %v3607
  %v3639 = vsel %vm3618, %v3609, %v3611
  %v3640 = vsel %vm3618, %v3611, %v3613
  %v3641 = vsel %vm3618, %v3613, %v3615
  %v3642 = vsel %vm3618, %v3615, %v3617
  %v3668 = vsel %vm796, %v3557, 0
  %3670 = vmatprep.subr.mxu0 %v3620
  %3671 = vmatpush1.msra.mxu0 %v3619
  %3672 = vmatprep.subr.mxu0 %v3624
  %3673 = vmatpush1.msra.mxu0 %v3623
  %3674 = vmatprep.subr.mxu0 %v3628
  %3675 = vmatpush1.msra.mxu0 %v3627
  %3676 = vmatprep.subr.mxu0 %v3632
  %3677 = vmatpush1.msra.mxu0 %v3631
  %3678 = vmatprep.subr.mxu0 %v3636
  %3679 = vmatpush1.msra.mxu0 %v3635
  %3680 = vmatprep.subr.mxu0 %v3640
  %3681 = vmatpush1.msra.mxu0 %v3639
  %3682 = vmatprep.subr.mxu0 0.0
  %3683 = vmatpush1.msra.mxu0 0.0
  %3684 = vmatprep.subr.mxu0 0.0
  %3685 = vmatpush1.msra.mxu0 0.0
  %3686 = vmatprep.subr.mxu0 0.0
  %3687 = vmatpush1.msra.mxu0 0.0
  %3688 = vmatprep.subr.mxu0 0.0
  %3689 = vmatpush1.msra.mxu0 0.0
  %3690 = vmatprep.subr.mxu0 0.0
  %3691 = vmatpush1.msra.mxu0 0.0
  %3692 = vmatprep.subr.mxu0 0.0
  %3693 = vmatpush1.msra.mxu0 0.0
  %3694 = vmatprep.subr.mxu0 0.0
  %3695 = vmatpush1.msra.mxu0 0.0
  %3696 = vmatprep.subr.mxu0 0.0
  %3697 = vmatpush1.msra.mxu0 0.0
  %3698 = vmatprep.subr.mxu0 0.0
  %3699 = vmatpush1.msra.mxu0 0.0
  %3700 = vmatprep.subr.mxu0 0.0
  %3701 = vmatpush1.msra.mxu0 0.0
  %3702 = vmatprep.subr.mxu0 0.0
  %3703 = vmatpush1.msra.mxu0 0.0
  %3704 = vmatprep.subr.mxu0 0.0
  %3705 = vmatpush1.msra.mxu0 0.0
  %3706 = vmatprep.subr.mxu0 0.0
  %3707 = vmatpush1.msra.mxu0 0.0
  %3708 = vmatprep.subr.mxu0 0.0
  %3709 = vmatpush1.msra.mxu0 0.0
  %3710 = vmatprep.subr.mxu0 0.0
  %3711 = vmatpush1.msra.mxu0 0.0
  %3712 = vmatprep.subr.mxu0 0.0
  %3713 = vmatpush1.msra.mxu0 0.0
  %3714 = vmatprep.subr.mxu0 0.0
  %3715 = vmatpush1.msra.mxu0 0.0
  %3716 = vmatprep.subr.mxu0 0.0
  %3717 = vmatpush1.msra.mxu0 0.0
  %3718 = vmatprep.subr.mxu0 0.0
  %3719 = vmatpush1.msra.mxu0 0.0
  %3720 = vmatprep.subr.mxu0 0.0
  %3721 = vmatpush1.msra.mxu0 0.0
  %3722 = vmatprep.subr.mxu0 0.0
  %3723 = vmatpush1.msra.mxu0 0.0
  %3724 = vmatprep.subr.mxu0 0.0
  %3725 = vmatpush1.msra.mxu0 0.0
  %3726 = vmatprep.subr.mxu0 0.0
  %3727 = vmatpush1.msra.mxu0 0.0
  %3728 = vmatprep.subr.mxu0 0.0
  %3729 = vmatpush1.msra.mxu0 0.0
  %3730 = vmatprep.subr.mxu0 0.0
  %3731 = vmatpush1.msra.mxu0 0.0
  %3732 = vmatprep.subr.mxu0 0.0
  %3733 = vmatpush1.msra.mxu0 0.0
  %3734 = vmatprep.mubr.f32.mxu0 0.0
  %3735 = vmatmul.mubr.f32.gmra.mrb[0].mxu0 %v3668
  %v3736 = vpop.f32.mrb[0].mxu0
  %v3737 = vadd.f32 0.0, %v3736
  %v3738 = vpop.f32.mrb[0].mxu0
  %v3739 = vadd.f32 0.0, %v3738
  %3740 = vdwg.mxu0
  %3741 = vmatprep.subr.mxu0 %v3622
  %3742 = vmatpush1.msra.mxu0 %v3621
  %3743 = vmatprep.subr.mxu0 %v3626
  %3744 = vmatpush1.msra.mxu0 %v3625
  %3745 = vmatprep.subr.mxu0 %v3630
  %3746 = vmatpush1.msra.mxu0 %v3629
  %3747 = vmatprep.subr.mxu0 %v3634
  %3748 = vmatpush1.msra.mxu0 %v3633
  %3749 = vmatprep.subr.mxu0 %v3638
  %3750 = vmatpush1.msra.mxu0 %v3637
  %3751 = vmatprep.subr.mxu0 %v3642
  %3752 = vmatpush1.msra.mxu0 %v3641
  %3753 = vmatprep.subr.mxu0 0.0
  %3754 = vmatpush1.msra.mxu0 0.0
  %3755 = vmatprep.subr.mxu0 0.0
  %3756 = vmatpush1.msra.mxu0 0.0
  %3757 = vmatprep.subr.mxu0 0.0
  %3758 = vmatpush1.msra.mxu0 0.0
  %3759 = vmatprep.subr.mxu0 0.0
  %3760 = vmatpush1.msra.mxu0 0.0
  %3761 = vmatprep.subr.mxu0 0.0
  %3762 = vmatpush1.msra.mxu0 0.0
  %3763 = vmatprep.subr.mxu0 0.0
  %3764 = vmatpush1.msra.mxu0 0.0
  %3765 = vmatprep.subr.mxu0 0.0
  %3766 = vmatpush1.msra.mxu0 0.0
  %3767 = vmatprep.subr.mxu0 0.0
  %3768 = vmatpush1.msra.mxu0 0.0
  %3769 = vmatprep.subr.mxu0 0.0
  %3770 = vmatpush1.msra.mxu0 0.0
  %3771 = vmatprep.subr.mxu0 0.0
  %3772 = vmatpush1.msra.mxu0 0.0
  %3773 = vmatprep.subr.mxu0 0.0
  %3774 = vmatpush1.msra.mxu0 0.0
  %3775 = vmatprep.subr.mxu0 0.0
  %3776 = vmatpush1.msra.mxu0 0.0
  %3777 = vmatprep.subr.mxu0 0.0
  %3778 = vmatpush1.msra.mxu0 0.0
  %3779 = vmatprep.subr.mxu0 0.0
  %3780 = vmatpush1.msra.mxu0 0.0
  %3781 = vmatprep.subr.mxu0 0.0
  %3782 = vmatpush1.msra.mxu0 0.0
  %3783 = vmatprep.subr.mxu0 0.0
  %3784 = vmatpush1.msra.mxu0 0.0
  %3785 = vmatprep.subr.mxu0 0.0
  %3786 = vmatpush1.msra.mxu0 0.0
  %3787 = vmatprep.subr.mxu0 0.0
  %3788 = vmatpush1.msra.mxu0 0.0
  %3789 = vmatprep.subr.mxu0 0.0
  %3790 = vmatpush1.msra.mxu0 0.0
  %3791 = vmatprep.subr.mxu0 0.0
  %3792 = vmatpush1.msra.mxu0 0.0
  %3793 = vmatprep.subr.mxu0 0.0
  %3794 = vmatpush1.msra.mxu0 0.0
  %3795 = vmatprep.subr.mxu0 0.0
  %3796 = vmatpush1.msra.mxu0 0.0
  %3797 = vmatprep.subr.mxu0 0.0
  %3798 = vmatpush1.msra.mxu0 0.0
  %3799 = vmatprep.subr.mxu0 0.0
  %3800 = vmatpush1.msra.mxu0 0.0
  %3801 = vmatprep.subr.mxu0 0.0
  %3802 = vmatpush1.msra.mxu0 0.0
  %3803 = vmatprep.subr.mxu0 0.0
  %3804 = vmatpush1.msra.mxu0 0.0
  %3805 = vmatprep.mubr.f32.mxu0 0.0
  %3806 = vmatmul.mubr.f32.gmra.mrb[0].mxu0 %v3668
  %v3807 = vpop.f32.mrb[0].mxu0
  %v3808 = vadd.f32 0.0, %v3807
  %v3809 = vpop.f32.mrb[0].mxu0
  %v3810 = vadd.f32 0.0, %v3809
  %3811 = vdwg.mxu0
  %v3812 = vadd.f32 %v3552, %v3737
  %v3813 = vadd.f32 %v3553, %v3739
  %v3814 = vadd.f32 %v3554, %v3808
  %v3815 = vadd.f32 %v3555, %v3810
  %s3816 = scalar_lea.vmem %s3, 72
  %v3817 = vld [vmem:[%s3816] sm:$0xff]
  %3818 = vrot.lane.b32.xlu0 %v1681, 119
  %v3819 = vpop.permute.xlu0 %3818
  %3820 = vrot.lane.b32.xlu0 %v1682, 119
  %v3821 = vpop.permute.xlu0 %3820
  %3822 = vrot.lane.b32.xlu0 %v1683, 119
  %v3823 = vpop.permute.xlu0 %3822
  %3824 = vrot.lane.b32.xlu0 %v1684, 119
  %v3825 = vpop.permute.xlu0 %3824
  %3826 = vrot.lane.b32.xlu0 %v1685, 119
  %v3827 = vpop.permute.xlu0 %3826
  %3828 = vrot.lane.b32.xlu0 %v1686, 119
  %v3829 = vpop.permute.xlu0 %3828
  %3830 = vrot.lane.b32.xlu0 %v1687, 119
  %v3831 = vpop.permute.xlu0 %3830
  %3832 = vrot.lane.b32.xlu0 %v1688, 119
  %v3833 = vpop.permute.xlu0 %3832
  %3834 = vrot.lane.b32.xlu0 %v1689, 119
  %v3835 = vpop.permute.xlu0 %3834
  %3836 = vrot.lane.b32.xlu0 %v1690, 119
  %v3837 = vpop.permute.xlu0 %3836
  %3838 = vrot.lane.b32.xlu0 %v1691, 119
  %v3839 = vpop.permute.xlu0 %3838
  %3840 = vrot.lane.b32.xlu0 %v1692, 119
  %v3841 = vpop.permute.xlu0 %3840
  %3842 = vrot.lane.b32.xlu0 %v1693, 119
  %v3843 = vpop.permute.xlu0 %3842
  %3844 = vrot.lane.b32.xlu0 %v1694, 119
  %v3845 = vpop.permute.xlu0 %3844
  %3846 = vrot.lane.b32.xlu0 %v1695, 119
  %v3847 = vpop.permute.xlu0 %3846
  %3848 = vrot.lane.b32.xlu0 %v1696, 119
  %v3849 = vpop.permute.xlu0 %3848
  %3850 = vrot.lane.b32.xlu0 %v1697, 119
  %v3851 = vpop.permute.xlu0 %3850
  %3852 = vrot.lane.b32.xlu0 %v1698, 119
  %v3853 = vpop.permute.xlu0 %3852
  %3854 = vrot.lane.b32.xlu0 %v1699, 119
  %v3855 = vpop.permute.xlu0 %3854
  %3856 = vrot.lane.b32.xlu0 %v1700, 119
  %v3857 = vpop.permute.xlu0 %3856
  %3858 = vrot.lane.b32.xlu0 %v1701, 119
  %v3859 = vpop.permute.xlu0 %3858
  %3860 = vrot.lane.b32.xlu0 %v1702, 119
  %v3861 = vpop.permute.xlu0 %3860
  %3862 = vrot.lane.b32.xlu0 %v1703, 119
  %v3863 = vpop.permute.xlu0 %3862
  %3864 = vrot.lane.b32.xlu0 %v1704, 119
  %v3865 = vpop.permute.xlu0 %3864
  %3866 = vrot.lane.b32.xlu0 %v1705, 119
  %v3867 = vpop.permute.xlu0 %3866
  %3868 = vrot.lane.b32.xlu0 %v1706, 119
  %v3869 = vpop.permute.xlu0 %3868
  %3870 = vrot.lane.b32.xlu0 %v1707, 119
  %v3871 = vpop.permute.xlu0 %3870
  %3872 = vrot.lane.b32.xlu0 %v1708, 119
  %v3873 = vpop.permute.xlu0 %3872
  %3874 = vrot.lane.b32.xlu0 %v1709, 119
  %v3875 = vpop.permute.xlu0 %3874
  %3876 = vrot.lane.b32.xlu0 %v1710, 119
  %v3877 = vpop.permute.xlu0 %3876
  %vm3878 = vcmask 973824
  %v3879 = vsel %vm3878, %v3819, %v3821
  %v3880 = vsel %vm3878, %v3821, %v3823
  %v3881 = vsel %vm3878, %v3823, %v3825
  %v3882 = vsel %vm3878, %v3825, %v3827
  %v3883 = vsel %vm3878, %v3829, %v3831
  %v3884 = vsel %vm3878, %v3831, %v3833
  %v3885 = vsel %vm3878, %v3833, %v3835
  %v3886 = vsel %vm3878, %v3835, %v3837
  %v3887 = vsel %vm3878, %v3839, %v3841
  %v3888 = vsel %vm3878, %v3841, %v3843
  %v3889 = vsel %vm3878, %v3843, %v3845
  %v3890 = vsel %vm3878, %v3845, %v3847
  %v3891 = vsel %vm3878, %v3849, %v3851
  %v3892 = vsel %vm3878, %v3851, %v3853
  %v3893 = vsel %vm3878, %v3853, %v3855
  %v3894 = vsel %vm3878, %v3855, %v3857
  %v3895 = vsel %vm3878, %v3859, %v3861
  %v3896 = vsel %vm3878, %v3861, %v3863
  %v3897 = vsel %vm3878, %v3863, %v3865
  %v3898 = vsel %vm3878, %v3865, %v3867
  %v3899 = vsel %vm3878, %v3869, %v3871
  %v3900 = vsel %vm3878, %v3871, %v3873
  %v3901 = vsel %vm3878, %v3873, %v3875
  %v3902 = vsel %vm3878, %v3875, %v3877
  %v3928 = vsel %vm796, %v3817, 0
  %3930 = vmatprep.subr.mxu0 %v3880
  %3931 = vmatpush1.msra.mxu0 %v3879
  %3932 = vmatprep.subr.mxu0 %v3884
  %3933 = vmatpush1.msra.mxu0 %v3883
  %3934 = vmatprep.subr.mxu0 %v3888
  %3935 = vmatpush1.msra.mxu0 %v3887
  %3936 = vmatprep.subr.mxu0 %v3892
  %3937 = vmatpush1.msra.mxu0 %v3891
  %3938 = vmatprep.subr.mxu0 %v3896
  %3939 = vmatpush1.msra.mxu0 %v3895
  %3940 = vmatprep.subr.mxu0 %v3900
  %3941 = vmatpush1.msra.mxu0 %v3899
  %3942 = vmatprep.subr.mxu0 0.0
  %3943 = vmatpush1.msra.mxu0 0.0
  %3944 = vmatprep.subr.mxu0 0.0
  %3945 = vmatpush1.msra.mxu0 0.0
  %3946 = vmatprep.subr.mxu0 0.0
  %3947 = vmatpush1.msra.mxu0 0.0
  %3948 = vmatprep.subr.mxu0 0.0
  %3949 = vmatpush1.msra.mxu0 0.0
  %3950 = vmatprep.subr.mxu0 0.0
  %3951 = vmatpush1.msra.mxu0 0.0
  %3952 = vmatprep.subr.mxu0 0.0
  %3953 = vmatpush1.msra.mxu0 0.0
  %3954 = vmatprep.subr.mxu0 0.0
  %3955 = vmatpush1.msra.mxu0 0.0
  %3956 = vmatprep.subr.mxu0 0.0
  %3957 = vmatpush1.msra.mxu0 0.0
  %3958 = vmatprep.subr.mxu0 0.0
  %3959 = vmatpush1.msra.mxu0 0.0
  %3960 = vmatprep.subr.mxu0 0.0
  %3961 = vmatpush1.msra.mxu0 0.0
  %3962 = vmatprep.subr.mxu0 0.0
  %3963 = vmatpush1.msra.mxu0 0.0
  %3964 = vmatprep.subr.mxu0 0.0
  %3965 = vmatpush1.msra.mxu0 0.0
  %3966 = vmatprep.subr.mxu0 0.0
  %3967 = vmatpush1.msra.mxu0 0.0
  %3968 = vmatprep.subr.mxu0 0.0
  %3969 = vmatpush1.msra.mxu0 0.0
  %3970 = vmatprep.subr.mxu0 0.0
  %3971 = vmatpush1.msra.mxu0 0.0
  %3972 = vmatprep.subr.mxu0 0.0
  %3973 = vmatpush1.msra.mxu0 0.0
  %3974 = vmatprep.subr.mxu0 0.0
  %3975 = vmatpush1.msra.mxu0 0.0
  %3976 = vmatprep.subr.mxu0 0.0
  %3977 = vmatpush1.msra.mxu0 0.0
  %3978 = vmatprep.subr.mxu0 0.0
  %3979 = vmatpush1.msra.mxu0 0.0
  %3980 = vmatprep.subr.mxu0 0.0
  %3981 = vmatpush1.msra.mxu0 0.0
  %3982 = vmatprep.subr.mxu0 0.0
  %3983 = vmatpush1.msra.mxu0 0.0
  %3984 = vmatprep.subr.mxu0 0.0
  %3985 = vmatpush1.msra.mxu0 0.0
  %3986 = vmatprep.subr.mxu0 0.0
  %3987 = vmatpush1.msra.mxu0 0.0
  %3988 = vmatprep.subr.mxu0 0.0
  %3989 = vmatpush1.msra.mxu0 0.0
  %3990 = vmatprep.subr.mxu0 0.0
  %3991 = vmatpush1.msra.mxu0 0.0
  %3992 = vmatprep.subr.mxu0 0.0
  %3993 = vmatpush1.msra.mxu0 0.0
  %3994 = vmatprep.mubr.f32.mxu0 0.0
  %3995 = vmatmul.mubr.f32.gmra.mrb[0].mxu0 %v3928
  %v3996 = vpop.f32.mrb[0].mxu0
  %v3997 = vadd.f32 0.0, %v3996
  %v3998 = vpop.f32.mrb[0].mxu0
  %v3999 = vadd.f32 0.0, %v3998
  %4000 = vdwg.mxu0
  %4001 = vmatprep.subr.mxu0 %v3882
  %4002 = vmatpush1.msra.mxu0 %v3881
  %4003 = vmatprep.subr.mxu0 %v3886
  %4004 = vmatpush1.msra.mxu0 %v3885
  %4005 = vmatprep.subr.mxu0 %v3890
  %4006 = vmatpush1.msra.mxu0 %v3889
  %4007 = vmatprep.subr.mxu0 %v3894
  %4008 = vmatpush1.msra.mxu0 %v3893
  %4009 = vmatprep.subr.mxu0 %v3898
  %4010 = vmatpush1.msra.mxu0 %v3897
  %4011 = vmatprep.subr.mxu0 %v3902
  %4012 = vmatpush1.msra.mxu0 %v3901
  %4013 = vmatprep.subr.mxu0 0.0
  %4014 = vmatpush1.msra.mxu0 0.0
  %4015 = vmatprep.subr.mxu0 0.0
  %4016 = vmatpush1.msra.mxu0 0.0
  %4017 = vmatprep.subr.mxu0 0.0
  %4018 = vmatpush1.msra.mxu0 0.0
  %4019 = vmatprep.subr.mxu0 0.0
  %4020 = vmatpush1.msra.mxu0 0.0
  %4021 = vmatprep.subr.mxu0 0.0
  %4022 = vmatpush1.msra.mxu0 0.0
  %4023 = vmatprep.subr.mxu0 0.0
  %4024 = vmatpush1.msra.mxu0 0.0
  %4025 = vmatprep.subr.mxu0 0.0
  %4026 = vmatpush1.msra.mxu0 0.0
  %4027 = vmatprep.subr.mxu0 0.0
  %4028 = vmatpush1.msra.mxu0 0.0
  %4029 = vmatprep.subr.mxu0 0.0
  %4030 = vmatpush1.msra.mxu0 0.0
  %4031 = vmatprep.subr.mxu0 0.0
  %4032 = vmatpush1.msra.mxu0 0.0
  %4033 = vmatprep.subr.mxu0 0.0
  %4034 = vmatpush1.msra.mxu0 0.0
  %4035 = vmatprep.subr.mxu0 0.0
  %4036 = vmatpush1.msra.mxu0 0.0
  %4037 = vmatprep.subr.mxu0 0.0
  %4038 = vmatpush1.msra.mxu0 0.0
  %4039 = vmatprep.subr.mxu0 0.0
  %4040 = vmatpush1.msra.mxu0 0.0
  %4041 = vmatprep.subr.mxu0 0.0
  %4042 = vmatpush1.msra.mxu0 0.0
  %4043 = vmatprep.subr.mxu0 0.0
  %4044 = vmatpush1.msra.mxu0 0.0
  %4045 = vmatprep.subr.mxu0 0.0
  %4046 = vmatpush1.msra.mxu0 0.0
  %4047 = vmatprep.subr.mxu0 0.0
  %4048 = vmatpush1.msra.mxu0 0.0
  %4049 = vmatprep.subr.mxu0 0.0
  %4050 = vmatpush1.msra.mxu0 0.0
  %4051 = vmatprep.subr.mxu0 0.0
  %4052 = vmatpush1.msra.mxu0 0.0
  %4053 = vmatprep.subr.mxu0 0.0
  %4054 = vmatpush1.msra.mxu0 0.0
  %4055 = vmatprep.subr.mxu0 0.0
  %4056 = vmatpush1.msra.mxu0 0.0
  %4057 = vmatprep.subr.mxu0 0.0
  %4058 = vmatpush1.msra.mxu0 0.0
  %4059 = vmatprep.subr.mxu0 0.0
  %4060 = vmatpush1.msra.mxu0 0.0
  %4061 = vmatprep.subr.mxu0 0.0
  %4062 = vmatpush1.msra.mxu0 0.0
  %4063 = vmatprep.subr.mxu0 0.0
  %4064 = vmatpush1.msra.mxu0 0.0
  %4065 = vmatprep.mubr.f32.mxu0 0.0
  %4066 = vmatmul.mubr.f32.gmra.mrb[0].mxu0 %v3928
  %v4067 = vpop.f32.mrb[0].mxu0
  %v4068 = vadd.f32 0.0, %v4067
  %v4069 = vpop.f32.mrb[0].mxu0
  %v4070 = vadd.f32 0.0, %v4069
  %4071 = vdwg.mxu0
  %v4072 = vadd.f32 %v3812, %v3997
  %v4073 = vadd.f32 %v3813, %v3999
  %v4074 = vadd.f32 %v3814, %v4068
  %v4075 = vadd.f32 %v3815, %v4070
  %s4076 = scalar_lea.vmem %s3, 80
  %v4077 = vld [vmem:[%s4076] sm:$0xff]
  %4078 = vrot.lane.b32.xlu0 %v1681, 118
  %v4079 = vpop.permute.xlu0 %4078
  %4080 = vrot.lane.b32.xlu0 %v1682, 118
  %v4081 = vpop.permute.xlu0 %4080
  %4082 = vrot.lane.b32.xlu0 %v1683, 118
  %v4083 = vpop.permute.xlu0 %4082
  %4084 = vrot.lane.b32.xlu0 %v1684, 118
  %v4085 = vpop.permute.xlu0 %4084
  %4086 = vrot.lane.b32.xlu0 %v1685, 118
  %v4087 = vpop.permute.xlu0 %4086
  %4088 = vrot.lane.b32.xlu0 %v1686, 118
  %v4089 = vpop.permute.xlu0 %4088
  %4090 = vrot.lane.b32.xlu0 %v1687, 118
  %v4091 = vpop.permute.xlu0 %4090
  %4092 = vrot.lane.b32.xlu0 %v1688, 118
  %v4093 = vpop.permute.xlu0 %4092
  %4094 = vrot.lane.b32.xlu0 %v1689, 118
  %v4095 = vpop.permute.xlu0 %4094
  %4096 = vrot.lane.b32.xlu0 %v1690, 118
  %v4097 = vpop.permute.xlu0 %4096
  %4098 = vrot.lane.b32.xlu0 %v1691, 118
  %v4099 = vpop.permute.xlu0 %4098
  %4100 = vrot.lane.b32.xlu0 %v1692, 118
  %v4101 = vpop.permute.xlu0 %4100
  %4102 = vrot.lane.b32.xlu0 %v1693, 118
  %v4103 = vpop.permute.xlu0 %4102
  %4104 = vrot.lane.b32.xlu0 %v1694, 118
  %v4105 = vpop.permute.xlu0 %4104
  %4106 = vrot.lane.b32.xlu0 %v1695, 118
  %v4107 = vpop.permute.xlu0 %4106
  %4108 = vrot.lane.b32.xlu0 %v1696, 118
  %v4109 = vpop.permute.xlu0 %4108
  %4110 = vrot.lane.b32.xlu0 %v1697, 118
  %v4111 = vpop.permute.xlu0 %4110
  %4112 = vrot.lane.b32.xlu0 %v1698, 118
  %v4113 = vpop.permute.xlu0 %4112
  %4114 = vrot.lane.b32.xlu0 %v1699, 118
  %v4115 = vpop.permute.xlu0 %4114
  %4116 = vrot.lane.b32.xlu0 %v1700, 118
  %v4117 = vpop.permute.xlu0 %4116
  %4118 = vrot.lane.b32.xlu0 %v1701, 118
  %v4119 = vpop.permute.xlu0 %4118
  %4120 = vrot.lane.b32.xlu0 %v1702, 118
  %v4121 = vpop.permute.xlu0 %4120
  %4122 = vrot.lane.b32.xlu0 %v1703, 118
  %v4123 = vpop.permute.xlu0 %4122
  %4124 = vrot.lane.b32.xlu0 %v1704, 118
  %v4125 = vpop.permute.xlu0 %4124
  %4126 = vrot.lane.b32.xlu0 %v1705, 118
  %v4127 = vpop.permute.xlu0 %4126
  %4128 = vrot.lane.b32.xlu0 %v1706, 118
  %v4129 = vpop.permute.xlu0 %4128
  %4130 = vrot.lane.b32.xlu0 %v1707, 118
  %v4131 = vpop.permute.xlu0 %4130
  %4132 = vrot.lane.b32.xlu0 %v1708, 118
  %v4133 = vpop.permute.xlu0 %4132
  %4134 = vrot.lane.b32.xlu0 %v1709, 118
  %v4135 = vpop.permute.xlu0 %4134
  %4136 = vrot.lane.b32.xlu0 %v1710, 118
  %v4137 = vpop.permute.xlu0 %4136
  %vm4138 = vcmask 965632
  %v4139 = vsel %vm4138, %v4079, %v4081
  %v4140 = vsel %vm4138, %v4081, %v4083
  %v4141 = vsel %vm4138, %v4083, %v4085
  %v4142 = vsel %vm4138, %v4085, %v4087
  %v4143 = vsel %vm4138, %v4089, %v4091
  %v4144 = vsel %vm4138, %v4091, %v4093
  %v4145 = vsel %vm4138, %v4093, %v4095
  %v4146 = vsel %vm4138, %v4095, %v4097
  %v4147 = vsel %vm4138, %v4099, %v4101
  %v4148 = vsel %vm4138, %v4101, %v4103
  %v4149 = vsel %vm4138, %v4103, %v4105
  %v4150 = vsel %vm4138, %v4105, %v4107
  %v4151 = vsel %vm4138, %v4109, %v4111
  %v4152 = vsel %vm4138, %v4111, %v4113
  %v4153 = vsel %vm4138, %v4113, %v4115
  %v4154 = vsel %vm4138, %v4115, %v4117
  %v4155 = vsel %vm4138, %v4119, %v4121
  %v4156 = vsel %vm4138, %v4121, %v4123
  %v4157 = vsel %vm4138, %v4123, %v4125
  %v4158 = vsel %vm4138, %v4125, %v4127
  %v4159 = vsel %vm4138, %v4129, %v4131
  %v4160 = vsel %vm4138, %v4131, %v4133
  %v4161 = vsel %vm4138, %v4133, %v4135
  %v4162 = vsel %vm4138, %v4135, %v4137
  %v4188 = vsel %vm796, %v4077, 0
  %4190 = vmatprep.subr.mxu0 %v4140
  %4191 = vmatpush1.msra.mxu0 %v4139
  %4192 = vmatprep.subr.mxu0 %v4144
  %4193 = vmatpush1.msra.mxu0 %v4143
  %4194 = vmatprep.subr.mxu0 %v4148
  %4195 = vmatpush1.msra.mxu0 %v4147
  %4196 = vmatprep.subr.mxu0 %v4152
  %4197 = vmatpush1.msra.mxu0 %v4151
  %4198 = vmatprep.subr.mxu0 %v4156
  %4199 = vmatpush1.msra.mxu0 %v4155
  %4200 = vmatprep.subr.mxu0 %v4160
  %4201 = vmatpush1.msra.mxu0 %v4159
  %4202 = vmatprep.subr.mxu0 0.0
  %4203 = vmatpush1.msra.mxu0 0.0
  %4204 = vmatprep.subr.mxu0 0.0
  %4205 = vmatpush1.msra.mxu0 0.0
  %4206 = vmatprep.subr.mxu0 0.0
  %4207 = vmatpush1.msra.mxu0 0.0
  %4208 = vmatprep.subr.mxu0 0.0
  %4209 = vmatpush1.msra.mxu0 0.0
  %4210 = vmatprep.subr.mxu0 0.0
  %4211 = vmatpush1.msra.mxu0 0.0
  %4212 = vmatprep.subr.mxu0 0.0
  %4213 = vmatpush1.msra.mxu0 0.0
  %4214 = vmatprep.subr.mxu0 0.0
  %4215 = vmatpush1.msra.mxu0 0.0
  %4216 = vmatprep.subr.mxu0 0.0
  %4217 = vmatpush1.msra.mxu0 0.0
  %4218 = vmatprep.subr.mxu0 0.0
  %4219 = vmatpush1.msra.mxu0 0.0
  %4220 = vmatprep.subr.mxu0 0.0
  %4221 = vmatpush1.msra.mxu0 0.0
  %4222 = vmatprep.subr.mxu0 0.0
  %4223 = vmatpush1.msra.mxu0 0.0
  %4224 = vmatprep.subr.mxu0 0.0
  %4225 = vmatpush1.msra.mxu0 0.0
  %4226 = vmatprep.subr.mxu0 0.0
  %4227 = vmatpush1.msra.mxu0 0.0
  %4228 = vmatprep.subr.mxu0 0.0
  %4229 = vmatpush1.msra.mxu0 0.0
  %4230 = vmatprep.subr.mxu0 0.0
  %4231 = vmatpush1.msra.mxu0 0.0
  %4232 = vmatprep.subr.mxu0 0.0
  %4233 = vmatpush1.msra.mxu0 0.0
  %4234 = vmatprep.subr.mxu0 0.0
  %4235 = vmatpush1.msra.mxu0 0.0
  %4236 = vmatprep.subr.mxu0 0.0
  %4237 = vmatpush1.msra.mxu0 0.0
  %4238 = vmatprep.subr.mxu0 0.0
  %4239 = vmatpush1.msra.mxu0 0.0
  %4240 = vmatprep.subr.mxu0 0.0
  %4241 = vmatpush1.msra.mxu0 0.0
  %4242 = vmatprep.subr.mxu0 0.0
  %4243 = vmatpush1.msra.mxu0 0.0
  %4244 = vmatprep.subr.mxu0 0.0
  %4245 = vmatpush1.msra.mxu0 0.0
  %4246 = vmatprep.subr.mxu0 0.0
  %4247 = vmatpush1.msra.mxu0 0.0
  %4248 = vmatprep.subr.mxu0 0.0
  %4249 = vmatpush1.msra.mxu0 0.0
  %4250 = vmatprep.subr.mxu0 0.0
  %4251 = vmatpush1.msra.mxu0 0.0
  %4252 = vmatprep.subr.mxu0 0.0
  %4253 = vmatpush1.msra.mxu0 0.0
  %4254 = vmatprep.mubr.f32.mxu0 0.0
  %4255 = vmatmul.mubr.f32.gmra.mrb[0].mxu0 %v4188
  %v4256 = vpop.f32.mrb[0].mxu0
  %v4257 = vadd.f32 0.0, %v4256
  %v4258 = vpop.f32.mrb[0].mxu0
  %v4259 = vadd.f32 0.0, %v4258
  %4260 = vdwg.mxu0
  %4261 = vmatprep.subr.mxu0 %v4142
  %4262 = vmatpush1.msra.mxu0 %v4141
  %4263 = vmatprep.subr.mxu0 %v4146
  %4264 = vmatpush1.msra.mxu0 %v4145
  %4265 = vmatprep.subr.mxu0 %v4150
  %4266 = vmatpush1.msra.mxu0 %v4149
  %4267 = vmatprep.subr.mxu0 %v4154
  %4268 = vmatpush1.msra.mxu0 %v4153
  %4269 = vmatprep.subr.mxu0 %v4158
  %4270 = vmatpush1.msra.mxu0 %v4157
  %4271 = vmatprep.subr.mxu0 %v4162
  %4272 = vmatpush1.msra.mxu0 %v4161
  %4273 = vmatprep.subr.mxu0 0.0
  %4274 = vmatpush1.msra.mxu0 0.0
  %4275 = vmatprep.subr.mxu0 0.0
  %4276 = vmatpush1.msra.mxu0 0.0
  %4277 = vmatprep.subr.mxu0 0.0
  %4278 = vmatpush1.msra.mxu0 0.0
  %4279 = vmatprep.subr.mxu0 0.0
  %4280 = vmatpush1.msra.mxu0 0.0
  %4281 = vmatprep.subr.mxu0 0.0
  %4282 = vmatpush1.msra.mxu0 0.0
  %4283 = vmatprep.subr.mxu0 0.0
  %4284 = vmatpush1.msra.mxu0 0.0
  %4285 = vmatprep.subr.mxu0 0.0
  %4286 = vmatpush1.msra.mxu0 0.0
  %4287 = vmatprep.subr.mxu0 0.0
  %4288 = vmatpush1.msra.mxu0 0.0
  %4289 = vmatprep.subr.mxu0 0.0
  %4290 = vmatpush1.msra.mxu0 0.0
  %4291 = vmatprep.subr.mxu0 0.0
  %4292 = vmatpush1.msra.mxu0 0.0
  %4293 = vmatprep.subr.mxu0 0.0
  %4294 = vmatpush1.msra.mxu0 0.0
  %4295 = vmatprep.subr.mxu0 0.0
  %4296 = vmatpush1.msra.mxu0 0.0
  %4297 = vmatprep.subr.mxu0 0.0
  %4298 = vmatpush1.msra.mxu0 0.0
  %4299 = vmatprep.subr.mxu0 0.0
  %4300 = vmatpush1.msra.mxu0 0.0
  %4301 = vmatprep.subr.mxu0 0.0
  %4302 = vmatpush1.msra.mxu0 0.0
  %4303 = vmatprep.subr.mxu0 0.0
  %4304 = vmatpush1.msra.mxu0 0.0
  %4305 = vmatprep.subr.mxu0 0.0
  %4306 = vmatpush1.msra.mxu0 0.0
  %4307 = vmatprep.subr.mxu0 0.0
  %4308 = vmatpush1.msra.mxu0 0.0
  %4309 = vmatprep.subr.mxu0 0.0
  %4310 = vmatpush1.msra.mxu0 0.0
  %4311 = vmatprep.subr.mxu0 0.0
  %4312 = vmatpush1.msra.mxu0 0.0
  %4313 = vmatprep.subr.mxu0 0.0
  %4314 = vmatpush1.msra.mxu0 0.0
  %4315 = vmatprep.subr.mxu0 0.0
  %4316 = vmatpush1.msra.mxu0 0.0
  %4317 = vmatprep.subr.mxu0 0.0
  %4318 = vmatpush1.msra.mxu0 0.0
  %4319 = vmatprep.subr.mxu0 0.0
  %4320 = vmatpush1.msra.mxu0 0.0
  %4321 = vmatprep.subr.mxu0 0.0
  %4322 = vmatpush1.msra.mxu0 0.0
  %4323 = vmatprep.subr.mxu0 0.0
  %4324 = vmatpush1.msra.mxu0 0.0
  %4325 = vmatprep.mubr.f32.mxu0 0.0
  %4326 = vmatmul.mubr.f32.gmra.mrb[0].mxu0 %v4188
  %v4327 = vpop.f32.mrb[0].mxu0
  %v4328 = vadd.f32 0.0, %v4327
  %v4329 = vpop.f32.mrb[0].mxu0
  %v4330 = vadd.f32 0.0, %v4329
  %4331 = vdwg.mxu0
  %v4332 = vadd.f32 %v4072, %v4257
  %v4333 = vadd.f32 %v4073, %v4259
  %v4334 = vadd.f32 %v4074, %v4328
  %v4335 = vadd.f32 %v4075, %v4330
  %s4336 = scalar_lea.vmem %s3, 88
  %v4337 = vld [vmem:[%s4336] sm:$0xff]
  %4338 = vrot.lane.b32.xlu0 %v1681, 117
  %v4339 = vpop.permute.xlu0 %4338
  %4340 = vrot.lane.b32.xlu0 %v1682, 117
  %v4341 = vpop.permute.xlu0 %4340
  %4342 = vrot.lane.b32.xlu0 %v1683, 117
  %v4343 = vpop.permute.xlu0 %4342
  %4344 = vrot.lane.b32.xlu0 %v1684, 117
  %v4345 = vpop.permute.xlu0 %4344
  %4346 = vrot.lane.b32.xlu0 %v1685, 117
  %v4347 = vpop.permute.xlu0 %4346
  %4348 = vrot.lane.b32.xlu0 %v1686, 117
  %v4349 = vpop.permute.xlu0 %4348
  %4350 = vrot.lane.b32.xlu0 %v1687, 117
  %v4351 = vpop.permute.xlu0 %4350
  %4352 = vrot.lane.b32.xlu0 %v1688, 117
  %v4353 = vpop.permute.xlu0 %4352
  %4354 = vrot.lane.b32.xlu0 %v1689, 117
  %v4355 = vpop.permute.xlu0 %4354
  %4356 = vrot.lane.b32.xlu0 %v1690, 117
  %v4357 = vpop.permute.xlu0 %4356
  %4358 = vrot.lane.b32.xlu0 %v1691, 117
  %v4359 = vpop.permute.xlu0 %4358
  %4360 = vrot.lane.b32.xlu0 %v1692, 117
  %v4361 = vpop.permute.xlu0 %4360
  %4362 = vrot.lane.b32.xlu0 %v1693, 117
  %v4363 = vpop.permute.xlu0 %4362
  %4364 = vrot.lane.b32.xlu0 %v1694, 117
  %v4365 = vpop.permute.xlu0 %4364
  %4366 = vrot.lane.b32.xlu0 %v1695, 117
  %v4367 = vpop.permute.xlu0 %4366
  %4368 = vrot.lane.b32.xlu0 %v1696, 117
  %v4369 = vpop.permute.xlu0 %4368
  %4370 = vrot.lane.b32.xlu0 %v1697, 117
  %v4371 = vpop.permute.xlu0 %4370
  %4372 = vrot.lane.b32.xlu0 %v1698, 117
  %v4373 = vpop.permute.xlu0 %4372
  %4374 = vrot.lane.b32.xlu0 %v1699, 117
  %v4375 = vpop.permute.xlu0 %4374
  %4376 = vrot.lane.b32.xlu0 %v1700, 117
  %v4377 = vpop.permute.xlu0 %4376
  %4378 = vrot.lane.b32.xlu0 %v1701, 117
  %v4379 = vpop.permute.xlu0 %4378
  %4380 = vrot.lane.b32.xlu0 %v1702, 117
  %v4381 = vpop.permute.xlu0 %4380
  %4382 = vrot.lane.b32.xlu0 %v1703, 117
  %v4383 = vpop.permute.xlu0 %4382
  %4384 = vrot.lane.b32.xlu0 %v1704, 117
  %v4385 = vpop.permute.xlu0 %4384
  %4386 = vrot.lane.b32.xlu0 %v1705, 117
  %v4387 = vpop.permute.xlu0 %4386
  %4388 = vrot.lane.b32.xlu0 %v1706, 117
  %v4389 = vpop.permute.xlu0 %4388
  %4390 = vrot.lane.b32.xlu0 %v1707, 117
  %v4391 = vpop.permute.xlu0 %4390
  %4392 = vrot.lane.b32.xlu0 %v1708, 117
  %v4393 = vpop.permute.xlu0 %4392
  %4394 = vrot.lane.b32.xlu0 %v1709, 117
  %v4395 = vpop.permute.xlu0 %4394
  %4396 = vrot.lane.b32.xlu0 %v1710, 117
  %v4397 = vpop.permute.xlu0 %4396
  %vm4398 = vcmask 957440
  %v4399 = vsel %vm4398, %v4339, %v4341
  %v4400 = vsel %vm4398, %v4341, %v4343
  %v4401 = vsel %vm4398, %v4343, %v4345
  %v4402 = vsel %vm4398, %v4345, %v4347
  %v4403 = vsel %vm4398, %v4349, %v4351
  %v4404 = vsel %vm4398, %v4351, %v4353
  %v4405 = vsel %vm4398, %v4353, %v4355
  %v4406 = vsel %vm4398, %v4355, %v4357
  %v4407 = vsel %vm4398, %v4359, %v4361
  %v4408 = vsel %vm4398, %v4361, %v4363
  %v4409 = vsel %vm4398, %v4363, %v4365
  %v4410 = vsel %vm4398, %v4365, %v4367
  %v4411 = vsel %vm4398, %v4369, %v4371
  %v4412 = vsel %vm4398, %v4371, %v4373
  %v4413 = vsel %vm4398, %v4373, %v4375
  %v4414 = vsel %vm4398, %v4375, %v4377
  %v4415 = vsel %vm4398, %v4379, %v4381
  %v4416 = vsel %vm4398, %v4381, %v4383
  %v4417 = vsel %vm4398, %v4383, %v4385
  %v4418 = vsel %vm4398, %v4385, %v4387
  %v4419 = vsel %vm4398, %v4389, %v4391
  %v4420 = vsel %vm4398, %v4391, %v4393
  %v4421 = vsel %vm4398, %v4393, %v4395
  %v4422 = vsel %vm4398, %v4395, %v4397
  %v4448 = vsel %vm796, %v4337, 0
  %4450 = vmatprep.subr.mxu0 %v4400
  %4451 = vmatpush1.msra.mxu0 %v4399
  %4452 = vmatprep.subr.mxu0 %v4404
  %4453 = vmatpush1.msra.mxu0 %v4403
  %4454 = vmatprep.subr.mxu0 %v4408
  %4455 = vmatpush1.msra.mxu0 %v4407
  %4456 = vmatprep.subr.mxu0 %v4412
  %4457 = vmatpush1.msra.mxu0 %v4411
  %4458 = vmatprep.subr.mxu0 %v4416
  %4459 = vmatpush1.msra.mxu0 %v4415
  %4460 = vmatprep.subr.mxu0 %v4420
  %4461 = vmatpush1.msra.mxu0 %v4419
  %4462 = vmatprep.subr.mxu0 0.0
  %4463 = vmatpush1.msra.mxu0 0.0
  %4464 = vmatprep.subr.mxu0 0.0
  %4465 = vmatpush1.msra.mxu0 0.0
  %4466 = vmatprep.subr.mxu0 0.0
  %4467 = vmatpush1.msra.mxu0 0.0
  %4468 = vmatprep.subr.mxu0 0.0
  %4469 = vmatpush1.msra.mxu0 0.0
  %4470 = vmatprep.subr.mxu0 0.0
  %4471 = vmatpush1.msra.mxu0 0.0
  %4472 = vmatprep.subr.mxu0 0.0
  %4473 = vmatpush1.msra.mxu0 0.0
  %4474 = vmatprep.subr.mxu0 0.0
  %4475 = vmatpush1.msra.mxu0 0.0
  %4476 = vmatprep.subr.mxu0 0.0
  %4477 = vmatpush1.msra.mxu0 0.0
  %4478 = vmatprep.subr.mxu0 0.0
  %4479 = vmatpush1.msra.mxu0 0.0
  %4480 = vmatprep.subr.mxu0 0.0
  %4481 = vmatpush1.msra.mxu0 0.0
  %4482 = vmatprep.subr.mxu0 0.0
  %4483 = vmatpush1.msra.mxu0 0.0
  %4484 = vmatprep.subr.mxu0 0.0
  %4485 = vmatpush1.msra.mxu0 0.0
  %4486 = vmatprep.subr.mxu0 0.0
  %4487 = vmatpush1.msra.mxu0 0.0
  %4488 = vmatprep.subr.mxu0 0.0
  %4489 = vmatpush1.msra.mxu0 0.0
  %4490 = vmatprep.subr.mxu0 0.0
  %4491 = vmatpush1.msra.mxu0 0.0
  %4492 = vmatprep.subr.mxu0 0.0
  %4493 = vmatpush1.msra.mxu0 0.0
  %4494 = vmatprep.subr.mxu0 0.0
  %4495 = vmatpush1.msra.mxu0 0.0
  %4496 = vmatprep.subr.mxu0 0.0
  %4497 = vmatpush1.msra.mxu0 0.0
  %4498 = vmatprep.subr.mxu0 0.0
  %4499 = vmatpush1.msra.mxu0 0.0
  %4500 = vmatprep.subr.mxu0 0.0
  %4501 = vmatpush1.msra.mxu0 0.0
  %4502 = vmatprep.subr.mxu0 0.0
  %4503 = vmatpush1.msra.mxu0 0.0
  %4504 = vmatprep.subr.mxu0 0.0
  %4505 = vmatpush1.msra.mxu0 0.0
  %4506 = vmatprep.subr.mxu0 0.0
  %4507 = vmatpush1.msra.mxu0 0.0
  %4508 = vmatprep.subr.mxu0 0.0
  %4509 = vmatpush1.msra.mxu0 0.0
  %4510 = vmatprep.subr.mxu0 0.0
  %4511 = vmatpush1.msra.mxu0 0.0
  %4512 = vmatprep.subr.mxu0 0.0
  %4513 = vmatpush1.msra.mxu0 0.0
  %4514 = vmatprep.mubr.f32.mxu0 0.0
  %4515 = vmatmul.mubr.f32.gmra.mrb[0].mxu0 %v4448
  %v4516 = vpop.f32.mrb[0].mxu0
  %v4517 = vadd.f32 0.0, %v4516
  %v4518 = vpop.f32.mrb[0].mxu0
  %v4519 = vadd.f32 0.0, %v4518
  %4520 = vdwg.mxu0
  %4521 = vmatprep.subr.mxu0 %v4402
  %4522 = vmatpush1.msra.mxu0 %v4401
  %4523 = vmatprep.subr.mxu0 %v4406
  %4524 = vmatpush1.msra.mxu0 %v4405
  %4525 = vmatprep.subr.mxu0 %v4410
  %4526 = vmatpush1.msra.mxu0 %v4409
  %4527 = vmatprep.subr.mxu0 %v4414
  %4528 = vmatpush1.msra.mxu0 %v4413
  %4529 = vmatprep.subr.mxu0 %v4418
  %4530 = vmatpush1.msra.mxu0 %v4417
  %4531 = vmatprep.subr.mxu0 %v4422
  %4532 = vmatpush1.msra.mxu0 %v4421
  %4533 = vmatprep.subr.mxu0 0.0
  %4534 = vmatpush1.msra.mxu0 0.0
  %4535 = vmatprep.subr.mxu0 0.0
  %4536 = vmatpush1.msra.mxu0 0.0
  %4537 = vmatprep.subr.mxu0 0.0
  %4538 = vmatpush1.msra.mxu0 0.0
  %4539 = vmatprep.subr.mxu0 0.0
  %4540 = vmatpush1.msra.mxu0 0.0
  %4541 = vmatprep.subr.mxu0 0.0
  %4542 = vmatpush1.msra.mxu0 0.0
  %4543 = vmatprep.subr.mxu0 0.0
  %4544 = vmatpush1.msra.mxu0 0.0
  %4545 = vmatprep.subr.mxu0 0.0
  %4546 = vmatpush1.msra.mxu0 0.0
  %4547 = vmatprep.subr.mxu0 0.0
  %4548 = vmatpush1.msra.mxu0 0.0
  %4549 = vmatprep.subr.mxu0 0.0
  %4550 = vmatpush1.msra.mxu0 0.0
  %4551 = vmatprep.subr.mxu0 0.0
  %4552 = vmatpush1.msra.mxu0 0.0
  %4553 = vmatprep.subr.mxu0 0.0
  %4554 = vmatpush1.msra.mxu0 0.0
  %4555 = vmatprep.subr.mxu0 0.0
  %4556 = vmatpush1.msra.mxu0 0.0
  %4557 = vmatprep.subr.mxu0 0.0
  %4558 = vmatpush1.msra.mxu0 0.0
  %4559 = vmatprep.subr.mxu0 0.0
  %4560 = vmatpush1.msra.mxu0 0.0
  %4561 = vmatprep.subr.mxu0 0.0
  %4562 = vmatpush1.msra.mxu0 0.0
  %4563 = vmatprep.subr.mxu0 0.0
  %4564 = vmatpush1.msra.mxu0 0.0
  %4565 = vmatprep.subr.mxu0 0.0
  %4566 = vmatpush1.msra.mxu0 0.0
  %4567 = vmatprep.subr.mxu0 0.0
  %4568 = vmatpush1.msra.mxu0 0.0
  %4569 = vmatprep.subr.mxu0 0.0
  %4570 = vmatpush1.msra.mxu0 0.0
  %4571 = vmatprep.subr.mxu0 0.0
  %4572 = vmatpush1.msra.mxu0 0.0
  %4573 = vmatprep.subr.mxu0 0.0
  %4574 = vmatpush1.msra.mxu0 0.0
  %4575 = vmatprep.subr.mxu0 0.0
  %4576 = vmatpush1.msra.mxu0 0.0
  %4577 = vmatprep.subr.mxu0 0.0
  %4578 = vmatpush1.msra.mxu0 0.0
  %4579 = vmatprep.subr.mxu0 0.0
  %4580 = vmatpush1.msra.mxu0 0.0
  %4581 = vmatprep.subr.mxu0 0.0
  %4582 = vmatpush1.msra.mxu0 0.0
  %4583 = vmatprep.subr.mxu0 0.0
  %4584 = vmatpush1.msra.mxu0 0.0
  %4585 = vmatprep.mubr.f32.mxu0 0.0
  %4586 = vmatmul.mubr.f32.gmra.mrb[0].mxu0 %v4448
  %v4587 = vpop.f32.mrb[0].mxu0
  %v4588 = vadd.f32 0.0, %v4587
  %v4589 = vpop.f32.mrb[0].mxu0
  %v4590 = vadd.f32 0.0, %v4589
  %4591 = vdwg.mxu0
  %v4592 = vadd.f32 %v4332, %v4517
  %v4593 = vadd.f32 %v4333, %v4519
  %v4594 = vadd.f32 %v4334, %v4588
  %v4595 = vadd.f32 %v4335, %v4590
  %v4596 = vmax.f32 %v4592, 0.0
  %v4597 = vmax.f32 %v4593, 0.0
  %v4598 = vmax.f32 %v4594, 0.0
  %v4599 = vmax.f32 %v4595, 0.0
  %4600 = vst [vmem:[#allocation3] sm:$0xff] %v4596
  %4601 = vst [vmem:[#allocation3 + $0x8] sm:$0xff] %v4597
  %4602 = vst [vmem:[#allocation3 + $0x10] sm:$0xff] %v4598
  %4603 = vst [vmem:[#allocation3 + $0x18] sm:$0xff] %v4599
  %v4604 = vld [vmem:[#allocation3] sm:$0xff]
  %v4605 = vld [vmem:[#allocation3 + $0x8] sm:$0xff]
  %v4606 = vld [vmem:[#allocation3 + $0x10] sm:$0xff]
  %v4607 = vld [vmem:[#allocation3 + $0x18] sm:$0xff]
  %v4608 = vld [vmem:[#allocation3] sm:$0xff]
  %v4609 = vld [vmem:[#allocation3 + $0x8] sm:$0xff]
  %v4610 = vld [vmem:[#allocation3 + $0x10] sm:$0xff]
  %v4611 = vld [vmem:[#allocation3 + $0x18] sm:$0xff]
  %v4612 = vld [vmem:[#allocation3 + $0x20] sm:$0xff]
  %4618 = vrot.lane.b32.xlu0 %v4608, 127
  %v4619 = vpop.permute.xlu0 %4618
  %4620 = vrot.lane.b32.xlu0 %v4609, 127
  %v4621 = vpop.permute.xlu0 %4620
  %4622 = vrot.lane.b32.xlu0 %v4610, 127
  %v4623 = vpop.permute.xlu0 %4622
  %4624 = vrot.lane.b32.xlu0 %v4611, 127
  %v4625 = vpop.permute.xlu0 %4624
  %4626 = vrot.lane.b32.xlu0 %v4612, 127
  %v4627 = vpop.permute.xlu0 %4626
  %v4628 = vsel %vm664, %v4619, %v4621
  %v4629 = vsel %vm664, %v4621, %v4623
  %v4630 = vsel %vm664, %v4623, %v4625
  %v4631 = vsel %vm664, %v4625, %v4627
  %v4636 = vmax.f32 %v4604, %v4628
  %v4637 = vmax.f32 %v4605, %v4629
  %v4638 = vmax.f32 %v4606, %v4630
  %v4639 = vmax.f32 %v4607, %v4631
  %4640 = vrot.lane.b32.xlu0 %v4608, 126
  %v4641 = vpop.permute.xlu0 %4640
  %4642 = vrot.lane.b32.xlu0 %v4609, 126
  %v4643 = vpop.permute.xlu0 %4642
  %4644 = vrot.lane.b32.xlu0 %v4610, 126
  %v4645 = vpop.permute.xlu0 %4644
  %4646 = vrot.lane.b32.xlu0 %v4611, 126
  %v4647 = vpop.permute.xlu0 %4646
  %4648 = vrot.lane.b32.xlu0 %v4612, 126
  %v4649 = vpop.permute.xlu0 %4648
  %v4650 = vsel %vm687, %v4641, %v4643
  %v4651 = vsel %vm687, %v4643, %v4645
  %v4652 = vsel %vm687, %v4645, %v4647
  %v4653 = vsel %vm687, %v4647, %v4649
  %v4658 = vmax.f32 %v4636, %v4650
  %v4659 = vmax.f32 %v4637, %v4651
  %v4660 = vmax.f32 %v4638, %v4652
  %v4661 = vmax.f32 %v4639, %v4653
  %4662 = vrot.lane.b32.xlu0 %v4608, 125
  %v4663 = vpop.permute.xlu0 %4662
  %4664 = vrot.lane.b32.xlu0 %v4609, 125
  %v4665 = vpop.permute.xlu0 %4664
  %4666 = vrot.lane.b32.xlu0 %v4610, 125
  %v4667 = vpop.permute.xlu0 %4666
  %4668 = vrot.lane.b32.xlu0 %v4611, 125
  %v4669 = vpop.permute.xlu0 %4668
  %4670 = vrot.lane.b32.xlu0 %v4612, 125
  %v4671 = vpop.permute.xlu0 %4670
  %v4672 = vsel %vm2319, %v4663, %v4665
  %v4673 = vsel %vm2319, %v4665, %v4667
  %v4674 = vsel %vm2319, %v4667, %v4669
  %v4675 = vsel %vm2319, %v4669, %v4671
  %v4680 = vmax.f32 %v4658, %v4672
  %v4681 = vmax.f32 %v4659, %v4673
  %v4682 = vmax.f32 %v4660, %v4674
  %v4683 = vmax.f32 %v4661, %v4675
  %4684 = vrot.lane.b32.xlu0 %v4608, 124
  %v4685 = vpop.permute.xlu0 %4684
  %4686 = vrot.lane.b32.xlu0 %v4609, 124
  %v4687 = vpop.permute.xlu0 %4686
  %4688 = vrot.lane.b32.xlu0 %v4610, 124
  %v4689 = vpop.permute.xlu0 %4688
  %4690 = vrot.lane.b32.xlu0 %v4611, 124
  %v4691 = vpop.permute.xlu0 %4690
  %4692 = vrot.lane.b32.xlu0 %v4612, 124
  %v4693 = vpop.permute.xlu0 %4692
  %v4694 = vsel %vm2579, %v4685, %v4687
  %v4695 = vsel %vm2579, %v4687, %v4689
  %v4696 = vsel %vm2579, %v4689, %v4691
  %v4697 = vsel %vm2579, %v4691, %v4693
  %v4702 = vmax.f32 %v4680, %v4694
  %v4703 = vmax.f32 %v4681, %v4695
  %v4704 = vmax.f32 %v4682, %v4696
  %v4705 = vmax.f32 %v4683, %v4697
  %4706 = vrot.lane.b32.xlu0 %v4608, 123
  %v4707 = vpop.permute.xlu0 %4706
  %4708 = vrot.lane.b32.xlu0 %v4609, 123
  %v4709 = vpop.permute.xlu0 %4708
  %4710 = vrot.lane.b32.xlu0 %v4610, 123
  %v4711 = vpop.permute.xlu0 %4710
  %4712 = vrot.lane.b32.xlu0 %v4611, 123
  %v4713 = vpop.permute.xlu0 %4712
  %4714 = vrot.lane.b32.xlu0 %v4612, 123
  %v4715 = vpop.permute.xlu0 %4714
  %v4716 = vsel %vm732, %v4707, %v4709
  %v4717 = vsel %vm732, %v4709, %v4711
  %v4718 = vsel %vm732, %v4711, %v4713
  %v4719 = vsel %vm732, %v4713, %v4715
  %v4724 = vmax.f32 %v4702, %v4716
  %v4725 = vmax.f32 %v4703, %v4717
  %v4726 = vmax.f32 %v4704, %v4718
  %v4727 = vmax.f32 %v4705, %v4719
  %4728 = vrot.lane.b32.xlu0 %v4608, 122
  %v4729 = vpop.permute.xlu0 %4728
  %4730 = vrot.lane.b32.xlu0 %v4609, 122
  %v4731 = vpop.permute.xlu0 %4730
  %4732 = vrot.lane.b32.xlu0 %v4610, 122
  %v4733 = vpop.permute.xlu0 %4732
  %4734 = vrot.lane.b32.xlu0 %v4611, 122
  %v4735 = vpop.permute.xlu0 %4734
  %4736 = vrot.lane.b32.xlu0 %v4612, 122
  %v4737 = vpop.permute.xlu0 %4736
  %v4738 = vsel %vm3098, %v4729, %v4731
  %v4739 = vsel %vm3098, %v4731, %v4733
  %v4740 = vsel %vm3098, %v4733, %v4735
  %v4741 = vsel %vm3098, %v4735, %v4737
  %v4746 = vmax.f32 %v4724, %v4738
  %v4747 = vmax.f32 %v4725, %v4739
  %v4748 = vmax.f32 %v4726, %v4740
  %v4749 = vmax.f32 %v4727, %v4741
  %4750 = vrot.lane.b32.xlu0 %v4608, 121
  %v4751 = vpop.permute.xlu0 %4750
  %4752 = vrot.lane.b32.xlu0 %v4609, 121
  %v4753 = vpop.permute.xlu0 %4752
  %4754 = vrot.lane.b32.xlu0 %v4610, 121
  %v4755 = vpop.permute.xlu0 %4754
  %4756 = vrot.lane.b32.xlu0 %v4611, 121
  %v4757 = vpop.permute.xlu0 %4756
  %4758 = vrot.lane.b32.xlu0 %v4612, 121
  %v4759 = vpop.permute.xlu0 %4758
  %v4760 = vsel %vm3358, %v4751, %v4753
  %v4761 = vsel %vm3358, %v4753, %v4755
  %v4762 = vsel %vm3358, %v4755, %v4757
  %v4763 = vsel %vm3358, %v4757, %v4759
  %v4768 = vmax.f32 %v4746, %v4760
  %v4769 = vmax.f32 %v4747, %v4761
  %v4770 = vmax.f32 %v4748, %v4762
  %v4771 = vmax.f32 %v4749, %v4763
  %4772 = vrot.lane.b32.xlu0 %v4608, 120
  %v4773 = vpop.permute.xlu0 %4772
  %4774 = vrot.lane.b32.xlu0 %v4609, 120
  %v4775 = vpop.permute.xlu0 %4774
  %4776 = vrot.lane.b32.xlu0 %v4610, 120
  %v4777 = vpop.permute.xlu0 %4776
  %4778 = vrot.lane.b32.xlu0 %v4611, 120
  %v4779 = vpop.permute.xlu0 %4778
  %4780 = vrot.lane.b32.xlu0 %v4612, 120
  %v4781 = vpop.permute.xlu0 %4780
  %v4782 = vsel %vm3618, %v4773, %v4775
  %v4783 = vsel %vm3618, %v4775, %v4777
  %v4784 = vsel %vm3618, %v4777, %v4779
  %v4785 = vsel %vm3618, %v4779, %v4781
  %v4790 = vmax.f32 %v4768, %v4782
  %v4791 = vmax.f32 %v4769, %v4783
  %v4792 = vmax.f32 %v4770, %v4784
  %v4793 = vmax.f32 %v4771, %v4785
  %4794 = vrot.lane.b32.xlu0 %v4608, 119
  %v4795 = vpop.permute.xlu0 %4794
  %4796 = vrot.lane.b32.xlu0 %v4609, 119
  %v4797 = vpop.permute.xlu0 %4796
  %4798 = vrot.lane.b32.xlu0 %v4610, 119
  %v4799 = vpop.permute.xlu0 %4798
  %4800 = vrot.lane.b32.xlu0 %v4611, 119
  %v4801 = vpop.permute.xlu0 %4800
  %4802 = vrot.lane.b32.xlu0 %v4612, 119
  %v4803 = vpop.permute.xlu0 %4802
  %v4804 = vsel %vm3878, %v4795, %v4797
  %v4805 = vsel %vm3878, %v4797, %v4799
  %v4806 = vsel %vm3878, %v4799, %v4801
  %v4807 = vsel %vm3878, %v4801, %v4803
  %v4812 = vmax.f32 %v4790, %v4804
  %v4813 = vmax.f32 %v4791, %v4805
  %v4814 = vmax.f32 %v4792, %v4806
  %v4815 = vmax.f32 %v4793, %v4807
  %4816 = vrot.lane.b32.xlu0 %v4608, 118
  %v4817 = vpop.permute.xlu0 %4816
  %4818 = vrot.lane.b32.xlu0 %v4609, 118
  %v4819 = vpop.permute.xlu0 %4818
  %4820 = vrot.lane.b32.xlu0 %v4610, 118
  %v4821 = vpop.permute.xlu0 %4820
  %4822 = vrot.lane.b32.xlu0 %v4611, 118
  %v4823 = vpop.permute.xlu0 %4822
  %4824 = vrot.lane.b32.xlu0 %v4612, 118
  %v4825 = vpop.permute.xlu0 %4824
  %v4826 = vsel %vm4138, %v4817, %v4819
  %v4827 = vsel %vm4138, %v4819, %v4821
  %v4828 = vsel %vm4138, %v4821, %v4823
  %v4829 = vsel %vm4138, %v4823, %v4825
  %v4834 = vmax.f32 %v4812, %v4826
  %v4835 = vmax.f32 %v4813, %v4827
  %v4836 = vmax.f32 %v4814, %v4828
  %v4837 = vmax.f32 %v4815, %v4829
  %4838 = vrot.lane.b32.xlu0 %v4608, 117
  %v4839 = vpop.permute.xlu0 %4838
  %4840 = vrot.lane.b32.xlu0 %v4609, 117
  %v4841 = vpop.permute.xlu0 %4840
  %4842 = vrot.lane.b32.xlu0 %v4610, 117
  %v4843 = vpop.permute.xlu0 %4842
  %4844 = vrot.lane.b32.xlu0 %v4611, 117
  %v4845 = vpop.permute.xlu0 %4844
  %4846 = vrot.lane.b32.xlu0 %v4612, 117
  %v4847 = vpop.permute.xlu0 %4846
  %v4848 = vsel %vm4398, %v4839, %v4841
  %v4849 = vsel %vm4398, %v4841, %v4843
  %v4850 = vsel %vm4398, %v4843, %v4845
  %v4851 = vsel %vm4398, %v4845, %v4847
  %v4856 = vmax.f32 %v4834, %v4848
  %v4857 = vmax.f32 %v4835, %v4849
  %v4858 = vmax.f32 %v4836, %v4850
  %v4859 = vmax.f32 %v4837, %v4851
  %4860 = vrot.lane.b32.xlu0 %v4608, 116
  %v4861 = vpop.permute.xlu0 %4860
  %4862 = vrot.lane.b32.xlu0 %v4609, 116
  %v4863 = vpop.permute.xlu0 %4862
  %4864 = vrot.lane.b32.xlu0 %v4610, 116
  %v4865 = vpop.permute.xlu0 %4864
  %4866 = vrot.lane.b32.xlu0 %v4611, 116
  %v4867 = vpop.permute.xlu0 %4866
  %4868 = vrot.lane.b32.xlu0 %v4612, 116
  %v4869 = vpop.permute.xlu0 %4868
  %vm4870 = vcmask 949248
  %v4871 = vsel %vm4870, %v4861, %v4863
  %v4872 = vsel %vm4870, %v4863, %v4865
  %v4873 = vsel %vm4870, %v4865, %v4867
  %v4874 = vsel %vm4870, %v4867, %v4869
  %v4879 = vmax.f32 %v4856, %v4871
  %v4880 = vmax.f32 %v4857, %v4872
  %v4881 = vmax.f32 %v4858, %v4873
  %v4882 = vmax.f32 %v4859, %v4874
  %4883 = vrot.lane.b32.xlu0 %v4608, 115
  %v4884 = vpop.permute.xlu0 %4883
  %4885 = vrot.lane.b32.xlu0 %v4609, 115
  %v4886 = vpop.permute.xlu0 %4885
  %4887 = vrot.lane.b32.xlu0 %v4610, 115
  %v4888 = vpop.permute.xlu0 %4887
  %4889 = vrot.lane.b32.xlu0 %v4611, 115
  %v4890 = vpop.permute.xlu0 %4889
  %4891 = vrot.lane.b32.xlu0 %v4612, 115
  %v4892 = vpop.permute.xlu0 %4891
  %vm4893 = vcmask 941056
  %v4894 = vsel %vm4893, %v4884, %v4886
  %v4895 = vsel %vm4893, %v4886, %v4888
  %v4896 = vsel %vm4893, %v4888, %v4890
  %v4897 = vsel %vm4893, %v4890, %v4892
  %v4902 = vmax.f32 %v4879, %v4894
  %v4903 = vmax.f32 %v4880, %v4895
  %v4904 = vmax.f32 %v4881, %v4896
  %v4905 = vmax.f32 %v4882, %v4897
  %4906 = vrot.lane.b32.xlu0 %v4608, 114
  %v4907 = vpop.permute.xlu0 %4906
  %4908 = vrot.lane.b32.xlu0 %v4609, 114
  %v4909 = vpop.permute.xlu0 %4908
  %4910 = vrot.lane.b32.xlu0 %v4610, 114
  %v4911 = vpop.permute.xlu0 %4910
  %4912 = vrot.lane.b32.xlu0 %v4611, 114
  %v4913 = vpop.permute.xlu0 %4912
  %4914 = vrot.lane.b32.xlu0 %v4612, 114
  %v4915 = vpop.permute.xlu0 %4914
  %vm4916 = vcmask 932864
  %v4917 = vsel %vm4916, %v4907, %v4909
  %v4918 = vsel %vm4916, %v4909, %v4911
  %v4919 = vsel %vm4916, %v4911, %v4913
  %v4920 = vsel %vm4916, %v4913, %v4915
  %v4925 = vmax.f32 %v4902, %v4917
  %v4926 = vmax.f32 %v4903, %v4918
  %v4927 = vmax.f32 %v4904, %v4919
  %v4928 = vmax.f32 %v4905, %v4920
  %4929 = vrot.lane.b32.xlu0 %v4608, 113
  %v4930 = vpop.permute.xlu0 %4929
  %4931 = vrot.lane.b32.xlu0 %v4609, 113
  %v4932 = vpop.permute.xlu0 %4931
  %4933 = vrot.lane.b32.xlu0 %v4610, 113
  %v4934 = vpop.permute.xlu0 %4933
  %4935 = vrot.lane.b32.xlu0 %v4611, 113
  %v4936 = vpop.permute.xlu0 %4935
  %4937 = vrot.lane.b32.xlu0 %v4612, 113
  %v4938 = vpop.permute.xlu0 %4937
  %vm4939 = vcmask 924672
  %v4940 = vsel %vm4939, %v4930, %v4932
  %v4941 = vsel %vm4939, %v4932, %v4934
  %v4942 = vsel %vm4939, %v4934, %v4936
  %v4943 = vsel %vm4939, %v4936, %v4938
  %v4948 = vmax.f32 %v4925, %v4940
  %v4949 = vmax.f32 %v4926, %v4941
  %v4950 = vmax.f32 %v4927, %v4942
  %v4951 = vmax.f32 %v4928, %v4943
  %4952 = vrot.lane.b32.xlu0 %v4608, 112
  %v4953 = vpop.permute.xlu0 %4952
  %4954 = vrot.lane.b32.xlu0 %v4609, 112
  %v4955 = vpop.permute.xlu0 %4954
  %4956 = vrot.lane.b32.xlu0 %v4610, 112
  %v4957 = vpop.permute.xlu0 %4956
  %4958 = vrot.lane.b32.xlu0 %v4611, 112
  %v4959 = vpop.permute.xlu0 %4958
  %4960 = vrot.lane.b32.xlu0 %v4612, 112
  %v4961 = vpop.permute.xlu0 %4960
  %vm4962 = vcmask 916480
  %v4963 = vsel %vm4962, %v4953, %v4955
  %v4964 = vsel %vm4962, %v4955, %v4957
  %v4965 = vsel %vm4962, %v4957, %v4959
  %v4966 = vsel %vm4962, %v4959, %v4961
  %v4971 = vmax.f32 %v4948, %v4963
  %v4972 = vmax.f32 %v4949, %v4964
  %v4973 = vmax.f32 %v4950, %v4965
  %v4974 = vmax.f32 %v4951, %v4966
  %4975 = vrot.lane.b32.xlu0 %v4608, 111
  %v4976 = vpop.permute.xlu0 %4975
  %4977 = vrot.lane.b32.xlu0 %v4609, 111
  %v4978 = vpop.permute.xlu0 %4977
  %4979 = vrot.lane.b32.xlu0 %v4610, 111
  %v4980 = vpop.permute.xlu0 %4979
  %4981 = vrot.lane.b32.xlu0 %v4611, 111
  %v4982 = vpop.permute.xlu0 %4981
  %4983 = vrot.lane.b32.xlu0 %v4612, 111
  %v4984 = vpop.permute.xlu0 %4983
  %vm4985 = vcmask 908288
  %v4986 = vsel %vm4985, %v4976, %v4978
  %v4987 = vsel %vm4985, %v4978, %v4980
  %v4988 = vsel %vm4985, %v4980, %v4982
  %v4989 = vsel %vm4985, %v4982, %v4984
  %v4994 = vmax.f32 %v4971, %v4986
  %v4995 = vmax.f32 %v4972, %v4987
  %v4996 = vmax.f32 %v4973, %v4988
  %v4997 = vmax.f32 %v4974, %v4989
  %4998 = vrot.lane.b32.xlu0 %v4608, 110
  %v4999 = vpop.permute.xlu0 %4998
  %5000 = vrot.lane.b32.xlu0 %v4609, 110
  %v5001 = vpop.permute.xlu0 %5000
  %5002 = vrot.lane.b32.xlu0 %v4610, 110
  %v5003 = vpop.permute.xlu0 %5002
  %5004 = vrot.lane.b32.xlu0 %v4611, 110
  %v5005 = vpop.permute.xlu0 %5004
  %5006 = vrot.lane.b32.xlu0 %v4612, 110
  %v5007 = vpop.permute.xlu0 %5006
  %vm5008 = vcmask 900096
  %v5009 = vsel %vm5008, %v4999, %v5001
  %v5010 = vsel %vm5008, %v5001, %v5003
  %v5011 = vsel %vm5008, %v5003, %v5005
  %v5012 = vsel %vm5008, %v5005, %v5007
  %v5017 = vmax.f32 %v4994, %v5009
  %v5018 = vmax.f32 %v4995, %v5010
  %v5019 = vmax.f32 %v4996, %v5011
  %v5020 = vmax.f32 %v4997, %v5012
  %5021 = vrot.lane.b32.xlu0 %v4608, 109
  %v5022 = vpop.permute.xlu0 %5021
  %5023 = vrot.lane.b32.xlu0 %v4609, 109
  %v5024 = vpop.permute.xlu0 %5023
  %5025 = vrot.lane.b32.xlu0 %v4610, 109
  %v5026 = vpop.permute.xlu0 %5025
  %5027 = vrot.lane.b32.xlu0 %v4611, 109
  %v5028 = vpop.permute.xlu0 %5027
  %5029 = vrot.lane.b32.xlu0 %v4612, 109
  %v5030 = vpop.permute.xlu0 %5029
  %vm5031 = vcmask 891904
  %v5032 = vsel %vm5031, %v5022, %v5024
  %v5033 = vsel %vm5031, %v5024, %v5026
  %v5034 = vsel %vm5031, %v5026, %v5028
  %v5035 = vsel %vm5031, %v5028, %v5030
  %v5040 = vmax.f32 %v5017, %v5032
  %v5041 = vmax.f32 %v5018, %v5033
  %v5042 = vmax.f32 %v5019, %v5034
  %v5043 = vmax.f32 %v5020, %v5035
  %5044 = vrot.lane.b32.xlu0 %v4608, 108
  %v5045 = vpop.permute.xlu0 %5044
  %5046 = vrot.lane.b32.xlu0 %v4609, 108
  %v5047 = vpop.permute.xlu0 %5046
  %5048 = vrot.lane.b32.xlu0 %v4610, 108
  %v5049 = vpop.permute.xlu0 %5048
  %5050 = vrot.lane.b32.xlu0 %v4611, 108
  %v5051 = vpop.permute.xlu0 %5050
  %5052 = vrot.lane.b32.xlu0 %v4612, 108
  %v5053 = vpop.permute.xlu0 %5052
  %vm5054 = vcmask 883712
  %v5055 = vsel %vm5054, %v5045, %v5047
  %v5056 = vsel %vm5054, %v5047, %v5049
  %v5057 = vsel %vm5054, %v5049, %v5051
  %v5058 = vsel %vm5054, %v5051, %v5053
  %v5063 = vmax.f32 %v5040, %v5055
  %v5064 = vmax.f32 %v5041, %v5056
  %v5065 = vmax.f32 %v5042, %v5057
  %v5066 = vmax.f32 %v5043, %v5058
  %5067 = vrot.lane.b32.xlu0 %v4608, 107
  %v5068 = vpop.permute.xlu0 %5067
  %5069 = vrot.lane.b32.xlu0 %v4609, 107
  %v5070 = vpop.permute.xlu0 %5069
  %5071 = vrot.lane.b32.xlu0 %v4610, 107
  %v5072 = vpop.permute.xlu0 %5071
  %5073 = vrot.lane.b32.xlu0 %v4611, 107
  %v5074 = vpop.permute.xlu0 %5073
  %5075 = vrot.lane.b32.xlu0 %v4612, 107
  %v5076 = vpop.permute.xlu0 %5075
  %vm5077 = vcmask 875520
  %v5078 = vsel %vm5077, %v5068, %v5070
  %v5079 = vsel %vm5077, %v5070, %v5072
  %v5080 = vsel %vm5077, %v5072, %v5074
  %v5081 = vsel %vm5077, %v5074, %v5076
  %v5086 = vmax.f32 %v5063, %v5078
  %v5087 = vmax.f32 %v5064, %v5079
  %v5088 = vmax.f32 %v5065, %v5080
  %v5089 = vmax.f32 %v5066, %v5081
  %5090 = vrot.lane.b32.xlu0 %v4608, 106
  %v5091 = vpop.permute.xlu0 %5090
  %5092 = vrot.lane.b32.xlu0 %v4609, 106
  %v5093 = vpop.permute.xlu0 %5092
  %5094 = vrot.lane.b32.xlu0 %v4610, 106
  %v5095 = vpop.permute.xlu0 %5094
  %5096 = vrot.lane.b32.xlu0 %v4611, 106
  %v5097 = vpop.permute.xlu0 %5096
  %5098 = vrot.lane.b32.xlu0 %v4612, 106
  %v5099 = vpop.permute.xlu0 %5098
  %vm5100 = vcmask 867328
  %v5101 = vsel %vm5100, %v5091, %v5093
  %v5102 = vsel %vm5100, %v5093, %v5095
  %v5103 = vsel %vm5100, %v5095, %v5097
  %v5104 = vsel %vm5100, %v5097, %v5099
  %v5109 = vmax.f32 %v5086, %v5101
  %v5110 = vmax.f32 %v5087, %v5102
  %v5111 = vmax.f32 %v5088, %v5103
  %v5112 = vmax.f32 %v5089, %v5104
  %5113 = vrot.lane.b32.xlu0 %v4608, 105
  %v5114 = vpop.permute.xlu0 %5113
  %5115 = vrot.lane.b32.xlu0 %v4609, 105
  %v5116 = vpop.permute.xlu0 %5115
  %5117 = vrot.lane.b32.xlu0 %v4610, 105
  %v5118 = vpop.permute.xlu0 %5117
  %5119 = vrot.lane.b32.xlu0 %v4611, 105
  %v5120 = vpop.permute.xlu0 %5119
  %5121 = vrot.lane.b32.xlu0 %v4612, 105
  %v5122 = vpop.permute.xlu0 %5121
  %vm5123 = vcmask 859136
  %v5124 = vsel %vm5123, %v5114, %v5116
  %v5125 = vsel %vm5123, %v5116, %v5118
  %v5126 = vsel %vm5123, %v5118, %v5120
  %v5127 = vsel %vm5123, %v5120, %v5122
  %v5132 = vmax.f32 %v5109, %v5124
  %v5133 = vmax.f32 %v5110, %v5125
  %v5134 = vmax.f32 %v5111, %v5126
  %v5135 = vmax.f32 %v5112, %v5127
  %5136 = vst [vmem:[#allocation4] sm:$0xff] %v5132
  %5137 = vst [vmem:[#allocation4 + $0x8] sm:$0xff] %v5133
  %5138 = vst [vmem:[#allocation4 + $0x10] sm:$0xff] %v5134
  %5139 = vst [vmem:[#allocation4 + $0x18] sm:$0xff] %v5135
  %v5140 = vld [vmem:[#allocation4] ss:$8 sm:$0x3]
  %v5141 = vlaneseq
  %vm5142 = vcmp.ge.s32.totalorder %v5141, 0
  %vm5143 = vcmp.lt.s32.totalorder %v5141, 256
  %vm5144 = vmand %vm5142, %vm5143
  %5145 = vst.msk [vmem:[#allocation5] ss:$2 sm:$0x3] %vm5144, %v5140
  %s5146 = scalar_lea.vmem [#allocation4], 1
  %v5147 = vld [vmem:[%s5146] ss:$8 sm:$0x3]
  %s5148 = scalar_lea.vmem [#allocation5], 4
  %5149 = vst.msk [vmem:[%s5148] ss:$2 sm:$0x3] %vm5144, %v5147
  %s5150 = scalar_lea.vmem [#allocation4], 2
  %v5151 = vld [vmem:[%s5150] ss:$8 sm:$0x3]
  %s5152 = scalar_lea.vmem [#allocation5], 8
  %5153 = vst.msk [vmem:[%s5152] ss:$2 sm:$0x3] %vm5144, %v5151
  %s5154 = scalar_lea.vmem [#allocation4], 3
  %v5155 = vld [vmem:[%s5154] ss:$8 sm:$0x3]
  %s5156 = scalar_lea.vmem [#allocation5], 12
  %5157 = vst.msk [vmem:[%s5156] ss:$2 sm:$0x3] %vm5144, %v5155
  %s5158 = scalar_lea.vmem [#allocation4], 4
  %v5159 = vld [vmem:[%s5158] ss:$8 sm:$0x3]
  %s5160 = scalar_lea.vmem [#allocation5], 16
  %5161 = vst.msk [vmem:[%s5160] ss:$2 sm:$0x3] %vm5144, %v5159
  %s5162 = scalar_lea.vmem [#allocation4], 16
  %v5163 = vld [vmem:[%s5162] ss:$8 sm:$0x3]
  %s5164 = scalar_lea.vmem [#allocation5], 1
  %5165 = vst.msk [vmem:[%s5164] ss:$2 sm:$0x3] %vm5144, %v5163
  %s5166 = scalar_lea.vmem [#allocation4], 17
  %v5167 = vld [vmem:[%s5166] ss:$8 sm:$0x3]
  %s5168 = scalar_lea.vmem [#allocation5], 5
  %5169 = vst.msk [vmem:[%s5168] ss:$2 sm:$0x3] %vm5144, %v5167
  %s5170 = scalar_lea.vmem [#allocation4], 18
  %v5171 = vld [vmem:[%s5170] ss:$8 sm:$0x3]
  %s5172 = scalar_lea.vmem [#allocation5], 9
  %5173 = vst.msk [vmem:[%s5172] ss:$2 sm:$0x3] %vm5144, %v5171
  %s5174 = scalar_lea.vmem [#allocation4], 19
  %v5175 = vld [vmem:[%s5174] ss:$8 sm:$0x3]
  %s5176 = scalar_lea.vmem [#allocation5], 13
  %5177 = vst.msk [vmem:[%s5176] ss:$2 sm:$0x3] %vm5144, %v5175
  %s5178 = scalar_lea.vmem [#allocation4], 20
  %v5179 = vld [vmem:[%s5178] ss:$8 sm:$0x3]
  %s5180 = scalar_lea.vmem [#allocation5], 17
  %5181 = vst.msk [vmem:[%s5180] ss:$2 sm:$0x3] %vm5144, %v5179
  %v5182 = vld [vmem:[#allocation5] sm:$0xff]
  %v5183 = vld [vmem:[#allocation5 + $0x8] sm:$0xff]
  %v5184 = vld [vmem:[#allocation5 + $0x10] sm:$0xf]
  %v5185 = vld [vmem:[%s5] sm:$0xff]
  %v5186 = vld [vmem:[%s5 + $0x8] sm:$0xff]
  %v5187 = vld [vmem:[%s5 + $0x10] sm:$0xff]
  %v5188 = vld [vmem:[%s5 + $0x18] sm:$0xff]
  %v5189 = vld [vmem:[%s5 + $0x20] sm:$0xff]
  %v5190 = vld [vmem:[%s5 + $0x28] sm:$0xff]
  %v5191 = vld [vmem:[%s5 + $0x30] sm:$0xff]
  %v5192 = vld [vmem:[%s5 + $0x38] sm:$0xff]
  %v5193 = vld [vmem:[%s5 + $0x40] sm:$0xff]
  %v5194 = vld [vmem:[%s5 + $0x48] sm:$0xff]
  %v5195 = vld [vmem:[%s5 + $0x50] sm:$0xff]
  %v5196 = vld [vmem:[%s5 + $0x58] sm:$0xff]
  %v5197 = vld [vmem:[%s5 + $0x60] sm:$0xff]
  %v5198 = vld [vmem:[%s5 + $0x68] sm:$0xff]
  %v5199 = vld [vmem:[%s5 + $0x70] sm:$0xff]
  %v5200 = vld [vmem:[%s5 + $0x78] sm:$0xff]
  %v5201 = vld [vmem:[%s5 + $0x80] sm:$0xff]
  %v5202 = vld [vmem:[%s5 + $0x88] sm:$0xff]
  %v5203 = vld [vmem:[%s5 + $0x90] sm:$0xff]
  %v5204 = vld [vmem:[%s5 + $0x98] sm:$0xff]
  %v5205 = vld [vmem:[%s5 + $0xa0] sm:$0xff]
  %v5206 = vld [vmem:[%s5 + $0xa8] sm:$0xff]
  %v5207 = vld [vmem:[%s5 + $0xb0] sm:$0xff]
  %v5208 = vld [vmem:[%s5 + $0xb8] sm:$0xff]
  %v5209 = vld [vmem:[%s5 + $0xc0] sm:$0xff]
  %v5210 = vld [vmem:[%s5 + $0xc8] sm:$0xff]
  %v5211 = vld [vmem:[%s5 + $0xd0] sm:$0xff]
  %v5212 = vld [vmem:[%s5 + $0xd8] sm:$0xff]
  %v5213 = vld [vmem:[%s5 + $0xe0] sm:$0xff]
  %v5214 = vld [vmem:[%s5 + $0xe8] sm:$0xff]
  %v5215 = vld [vmem:[%s5 + $0xf0] sm:$0xff]
  %v5216 = vld [vmem:[%s5 + $0xf8] sm:$0xff]
  %v5217 = vld [vmem:[%s5 + $0x100] sm:$0xff]
  %v5218 = vld [vmem:[%s5 + $0x108] sm:$0xff]
  %v5219 = vld [vmem:[%s5 + $0x110] sm:$0xff]
  %v5220 = vld [vmem:[%s5 + $0x118] sm:$0xff]
  %v5221 = vld [vmem:[%s5 + $0x120] sm:$0xff]
  %v5222 = vld [vmem:[%s5 + $0x128] sm:$0xff]
  %v5223 = vld [vmem:[%s5 + $0x130] sm:$0xff]
  %v5224 = vld [vmem:[%s5 + $0x138] sm:$0xff]
  %v5225 = vld [vmem:[%s5 + $0x140] sm:$0xff]
  %v5226 = vld [vmem:[%s5 + $0x148] sm:$0xff]
  %v5227 = vld [vmem:[%s5 + $0x150] sm:$0xff]
  %v5228 = vld [vmem:[%s5 + $0x158] sm:$0xff]
  %v5229 = vld [vmem:[%s5 + $0x160] sm:$0xff]
  %v5230 = vld [vmem:[%s5 + $0x168] sm:$0xff]
  %v5231 = vld [vmem:[%s5 + $0x170] sm:$0xff]
  %v5232 = vld [vmem:[%s5 + $0x178] sm:$0xff]
  %v5233 = vld [vmem:[%s5 + $0x180] sm:$0xff]
  %v5234 = vld [vmem:[%s5 + $0x188] sm:$0xff]
  %v5235 = vld [vmem:[%s5 + $0x190] sm:$0xff]
  %v5236 = vld [vmem:[%s5 + $0x198] sm:$0xff]
  %v5237 = vld [vmem:[%s5 + $0x1a0] sm:$0xff]
  %v5238 = vld [vmem:[%s5 + $0x1a8] sm:$0xff]
  %v5239 = vld [vmem:[%s5 + $0x1b0] sm:$0xff]
  %v5240 = vld [vmem:[%s5 + $0x1b8] sm:$0xff]
  %v5241 = vld [vmem:[%s5 + $0x1c0] sm:$0xff]
  %v5242 = vld [vmem:[%s5 + $0x1c8] sm:$0xff]
  %v5243 = vld [vmem:[%s5 + $0x1d0] sm:$0xff]
  %v5244 = vld [vmem:[%s5 + $0x1d8] sm:$0xff]
  %v5245 = vld [vmem:[%s5 + $0x1e0] sm:$0xff]
  %v5246 = vld [vmem:[%s5 + $0x1e8] sm:$0xff]
  %v5247 = vld [vmem:[%s5 + $0x1f0] sm:$0xff]
  %v5248 = vld [vmem:[%s5 + $0x1f8] sm:$0xff]
  %v5249 = vld [vmem:[%s5 + $0x200] sm:$0xff]
  %v5250 = vld [vmem:[%s5 + $0x208] sm:$0xff]
  %v5251 = vld [vmem:[%s5 + $0x210] sm:$0xff]
  %v5252 = vld [vmem:[%s5 + $0x218] sm:$0xff]
  %v5253 = vld [vmem:[%s5 + $0x220] sm:$0xff]
  %v5254 = vld [vmem:[%s5 + $0x228] sm:$0xff]
  %v5255 = vld [vmem:[%s5 + $0x230] sm:$0xff]
  %v5256 = vld [vmem:[%s5 + $0x238] sm:$0xff]
  %v5257 = vld [vmem:[%s5 + $0x240] sm:$0xff]
  %v5258 = vld [vmem:[%s5 + $0x248] sm:$0xff]
  %v5259 = vld [vmem:[%s5 + $0x250] sm:$0xff]
  %v5260 = vld [vmem:[%s5 + $0x258] sm:$0xff]
  %v5261 = vld [vmem:[%s5 + $0x260] sm:$0xff]
  %v5262 = vld [vmem:[%s5 + $0x268] sm:$0xff]
  %v5263 = vld [vmem:[%s5 + $0x270] sm:$0xff]
  %v5264 = vld [vmem:[%s5 + $0x278] sm:$0xff]
  %v5265 = vld [vmem:[%s5 + $0x280] sm:$0xff]
  %v5266 = vld [vmem:[%s5 + $0x288] sm:$0xff]
  %v5267 = vld [vmem:[%s5 + $0x290] sm:$0xff]
  %v5268 = vld [vmem:[%s5 + $0x298] sm:$0xff]
  %v5269 = vld [vmem:[%s5 + $0x2a0] sm:$0xff]
  %v5270 = vld [vmem:[%s5 + $0x2a8] sm:$0xff]
  %v5271 = vld [vmem:[%s5 + $0x2b0] sm:$0xff]
  %v5272 = vld [vmem:[%s5 + $0x2b8] sm:$0xff]
  %v5273 = vld [vmem:[%s5 + $0x2c0] sm:$0xff]
  %v5274 = vld [vmem:[%s5 + $0x2c8] sm:$0xff]
  %v5275 = vld [vmem:[%s5 + $0x2d0] sm:$0xff]
  %v5276 = vld [vmem:[%s5 + $0x2d8] sm:$0xff]
  %v5277 = vld [vmem:[%s5 + $0x2e0] sm:$0xff]
  %v5278 = vld [vmem:[%s5 + $0x2e8] sm:$0xff]
  %v5279 = vld [vmem:[%s5 + $0x2f0] sm:$0xff]
  %v5280 = vld [vmem:[%s5 + $0x2f8] sm:$0xff]
  %v5281 = vld [vmem:[%s5 + $0x300] sm:$0xff]
  %v5282 = vld [vmem:[%s5 + $0x308] sm:$0xff]
  %v5283 = vld [vmem:[%s5 + $0x310] sm:$0xff]
  %v5284 = vld [vmem:[%s5 + $0x318] sm:$0xff]
  %v5285 = vld [vmem:[%s5 + $0x320] sm:$0xff]
  %v5286 = vld [vmem:[%s5 + $0x328] sm:$0xff]
  %v5287 = vld [vmem:[%s5 + $0x330] sm:$0xff]
  %v5288 = vld [vmem:[%s5 + $0x338] sm:$0xff]
  %v5289 = vld [vmem:[%s5 + $0x340] sm:$0xff]
  %v5290 = vld [vmem:[%s5 + $0x348] sm:$0xff]
  %v5291 = vld [vmem:[%s5 + $0x350] sm:$0xff]
  %v5292 = vld [vmem:[%s5 + $0x358] sm:$0xff]
  %v5293 = vld [vmem:[%s5 + $0x360] sm:$0xff]
  %v5294 = vld [vmem:[%s5 + $0x368] sm:$0xff]
  %v5295 = vld [vmem:[%s5 + $0x370] sm:$0xff]
  %v5296 = vld [vmem:[%s5 + $0x378] sm:$0xff]
  %v5297 = vld [vmem:[%s5 + $0x380] sm:$0xff]
  %v5298 = vld [vmem:[%s5 + $0x388] sm:$0xff]
  %v5299 = vld [vmem:[%s5 + $0x390] sm:$0xff]
  %v5300 = vld [vmem:[%s5 + $0x398] sm:$0xff]
  %v5301 = vld [vmem:[%s5 + $0x3a0] sm:$0xff]
  %v5302 = vld [vmem:[%s5 + $0x3a8] sm:$0xff]
  %v5303 = vld [vmem:[%s5 + $0x3b0] sm:$0xff]
  %v5304 = vld [vmem:[%s5 + $0x3b8] sm:$0xff]
  %v5305 = vld [vmem:[%s5 + $0x3c0] sm:$0xff]
  %v5306 = vld [vmem:[%s5 + $0x3c8] sm:$0xff]
  %v5307 = vld [vmem:[%s5 + $0x3d0] sm:$0xff]
  %v5308 = vld [vmem:[%s5 + $0x3d8] sm:$0xff]
  %v5309 = vld [vmem:[%s5 + $0x3e0] sm:$0xff]
  %v5310 = vld [vmem:[%s5 + $0x3e8] sm:$0xff]
  %v5311 = vld [vmem:[%s5 + $0x3f0] sm:$0xff]
  %v5312 = vld [vmem:[%s5 + $0x3f8] sm:$0xff]
  %v5313 = vld [vmem:[%s5 + $0x400] sm:$0xff]
  %v5314 = vld [vmem:[%s5 + $0x408] sm:$0xff]
  %v5315 = vld [vmem:[%s5 + $0x410] sm:$0xff]
  %v5316 = vld [vmem:[%s5 + $0x418] sm:$0xff]
  %v5317 = vld [vmem:[%s5 + $0x420] sm:$0xff]
  %v5318 = vld [vmem:[%s5 + $0x428] sm:$0xff]
  %v5319 = vld [vmem:[%s5 + $0x430] sm:$0xff]
  %v5320 = vld [vmem:[%s5 + $0x438] sm:$0xff]
  %v5321 = vld [vmem:[%s5 + $0x440] sm:$0xff]
  %v5322 = vld [vmem:[%s5 + $0x448] sm:$0xff]
  %v5323 = vld [vmem:[%s5 + $0x450] sm:$0xff]
  %v5324 = vld [vmem:[%s5 + $0x458] sm:$0xff]
  %v5325 = vld [vmem:[%s5 + $0x460] sm:$0xff]
  %v5326 = vld [vmem:[%s5 + $0x468] sm:$0xff]
  %v5327 = vld [vmem:[%s5 + $0x470] sm:$0xff]
  %v5328 = vld [vmem:[%s5 + $0x478] sm:$0xff]
  %v5329 = vld [vmem:[%s5 + $0x480] sm:$0xff]
  %v5330 = vld [vmem:[%s5 + $0x488] sm:$0xff]
  %v5331 = vld [vmem:[%s5 + $0x490] sm:$0xff]
  %v5332 = vld [vmem:[%s5 + $0x498] sm:$0xff]
  %v5333 = vld [vmem:[%s5 + $0x4a0] sm:$0xff]
  %v5334 = vld [vmem:[%s5 + $0x4a8] sm:$0xff]
  %v5335 = vld [vmem:[%s5 + $0x4b0] sm:$0xff]
  %v5336 = vld [vmem:[%s5 + $0x4b8] sm:$0xff]
  %v5337 = vld [vmem:[%s5 + $0x4c0] sm:$0xff]
  %v5338 = vld [vmem:[%s5 + $0x4c8] sm:$0xff]
  %v5339 = vld [vmem:[%s5 + $0x4d0] sm:$0xff]
  %v5340 = vld [vmem:[%s5 + $0x4d8] sm:$0xff]
  %v5341 = vld [vmem:[%s5 + $0x4e0] sm:$0xff]
  %v5342 = vld [vmem:[%s5 + $0x4e8] sm:$0xff]
  %v5343 = vld [vmem:[%s5 + $0x4f0] sm:$0xff]
  %v5344 = vld [vmem:[%s5 + $0x4f8] sm:$0xff]
  %v5345 = vld [vmem:[%s6] sm:$0x1]
  %v5347 = vlaneseq
  %v5348 = vshrl.u32 %v5347, 7
  %v5349 = vsub.s32 0, %v5348
  %v5350 = vrot.slane %v5345, %v5349
  %v5355 = vcombine.high %v5182, %v5182
  %v5357 = vunpack.c.l.s4 1983009808
  %v5358 = vunpack.c.0.s8 %v5357
  %v5359 = vlaneseq
  %v5360 = vshrl.u32 %v5359, 7
  %v5361 = vsub.s32 %v5358, %v5360
  %v5362 = vrot.slane %v5182, %v5361
  %v5364 = vunpack.c.l.s4 1983009808
  %v5365 = vunpack.c.0.s8 %v5364
  %v5366 = vlaneseq
  %v5367 = vshrl.u32 %v5366, 7
  %v5368 = vsub.s32 %v5365, %v5367
  %v5369 = vrot.slane %v5355, %v5368
  %v5370 = vcombine.high %v5362, %v5362
  %v5371 = vcombine.high %v5369, %v5369
  %v5372 = vcombine.high %v5183, %v5183
  %v5374 = vunpack.c.l.s4 1983009808
  %v5375 = vunpack.c.0.s8 %v5374
  %v5376 = vlaneseq
  %v5377 = vshrl.u32 %v5376, 7
  %v5378 = vsub.s32 %v5375, %v5377
  %v5379 = vrot.slane %v5183, %v5378
  %v5381 = vunpack.c.l.s4 1983009808
  %v5382 = vunpack.c.0.s8 %v5381
  %v5383 = vlaneseq
  %v5384 = vshrl.u32 %v5383, 7
  %v5385 = vsub.s32 %v5382, %v5384
  %v5386 = vrot.slane %v5372, %v5385
  %v5387 = vcombine.high %v5379, %v5379
  %v5388 = vcombine.high %v5386, %v5386
  %v5390 = vunpack.c.l.s4 1983009808
  %v5391 = vunpack.c.0.s8 %v5390
  %v5392 = vlaneseq
  %v5393 = vshrl.u32 %v5392, 7
  %v5394 = vsub.s32 %v5391, %v5393
  %v5395 = vrot.slane %v5184, %v5394
  %v5396 = vcombine.high %v5395, %v5395
  %5407 = vmatprep.subr.mxu0 0.0
  %5408 = vmatpush1.msra.mxu0 %v5185
  %5409 = vmatprep.subr.mxu0 0.0
  %5410 = vmatpush1.msra.mxu0 %v5186
  %5411 = vmatprep.subr.mxu0 0.0
  %5412 = vmatpush1.msra.mxu0 %v5187
  %5413 = vmatprep.subr.mxu0 0.0
  %5414 = vmatpush1.msra.mxu0 %v5188
  %5415 = vmatprep.subr.mxu0 0.0
  %5416 = vmatpush1.msra.mxu0 %v5189
  %5417 = vmatprep.subr.mxu0 0.0
  %5418 = vmatpush1.msra.mxu0 %v5190
  %5419 = vmatprep.subr.mxu0 0.0
  %5420 = vmatpush1.msra.mxu0 %v5191
  %5421 = vmatprep.subr.mxu0 0.0
  %5422 = vmatpush1.msra.mxu0 %v5192
  %5423 = vmatprep.subr.mxu0 0.0
  %5424 = vmatpush1.msra.mxu0 %v5193
  %5425 = vmatprep.subr.mxu0 0.0
  %5426 = vmatpush1.msra.mxu0 %v5194
  %5427 = vmatprep.subr.mxu0 0.0
  %5428 = vmatpush1.msra.mxu0 %v5195
  %5429 = vmatprep.subr.mxu0 0.0
  %5430 = vmatpush1.msra.mxu0 %v5196
  %5431 = vmatprep.subr.mxu0 0.0
  %5432 = vmatpush1.msra.mxu0 %v5197
  %5433 = vmatprep.subr.mxu0 0.0
  %5434 = vmatpush1.msra.mxu0 %v5198
  %5435 = vmatprep.subr.mxu0 0.0
  %5436 = vmatpush1.msra.mxu0 %v5199
  %5437 = vmatprep.subr.mxu0 0.0
  %5438 = vmatpush1.msra.mxu0 %v5200
  %5439 = vmatprep.subr.mxu0 0.0
  %5440 = vmatpush1.msra.mxu0 %v5201
  %5441 = vmatprep.subr.mxu0 0.0
  %5442 = vmatpush1.msra.mxu0 %v5202
  %5443 = vmatprep.subr.mxu0 0.0
  %5444 = vmatpush1.msra.mxu0 %v5203
  %5445 = vmatprep.subr.mxu0 0.0
  %5446 = vmatpush1.msra.mxu0 %v5204
  %5447 = vmatprep.subr.mxu0 0.0
  %5448 = vmatpush1.msra.mxu0 %v5205
  %5449 = vmatprep.subr.mxu0 0.0
  %5450 = vmatpush1.msra.mxu0 %v5206
  %5451 = vmatprep.subr.mxu0 0.0
  %5452 = vmatpush1.msra.mxu0 %v5207
  %5453 = vmatprep.subr.mxu0 0.0
  %5454 = vmatpush1.msra.mxu0 %v5208
  %5455 = vmatprep.subr.mxu0 0.0
  %5456 = vmatpush1.msra.mxu0 %v5209
  %5457 = vmatprep.subr.mxu0 0.0
  %5458 = vmatpush1.msra.mxu0 %v5210
  %5459 = vmatprep.subr.mxu0 0.0
  %5460 = vmatpush1.msra.mxu0 %v5211
  %5461 = vmatprep.subr.mxu0 0.0
  %5462 = vmatpush1.msra.mxu0 %v5212
  %5463 = vmatprep.subr.mxu0 0.0
  %5464 = vmatpush1.msra.mxu0 %v5213
  %5465 = vmatprep.subr.mxu0 0.0
  %5466 = vmatpush1.msra.mxu0 %v5214
  %5467 = vmatprep.subr.mxu0 0.0
  %5468 = vmatpush1.msra.mxu0 %v5215
  %5469 = vmatprep.subr.mxu0 0.0
  %5470 = vmatpush1.msra.mxu0 %v5216
  %5471 = vmatprep.mubr.f32.mxu0 %v5370
  %5472 = vmatmul.mubr.f32.gmra.mrb[0].mxu0 %v5362
  %v5473 = vpop.f32.mrb[0].mxu0
  %v5474 = vadd.f32 %v5350, %v5473
  %v5475 = vpop.f32.mrb[0].mxu0
  %5476 = vdwg.mxu0
  %5477 = vmatprep.subr.mxu0 0.0
  %5478 = vmatpush1.msra.mxu0 %v5217
  %5479 = vmatprep.subr.mxu0 0.0
  %5480 = vmatpush1.msra.mxu0 %v5218
  %5481 = vmatprep.subr.mxu0 0.0
  %5482 = vmatpush1.msra.mxu0 %v5219
  %5483 = vmatprep.subr.mxu0 0.0
  %5484 = vmatpush1.msra.mxu0 %v5220
  %5485 = vmatprep.subr.mxu0 0.0
  %5486 = vmatpush1.msra.mxu0 %v5221
  %5487 = vmatprep.subr.mxu0 0.0
  %5488 = vmatpush1.msra.mxu0 %v5222
  %5489 = vmatprep.subr.mxu0 0.0
  %5490 = vmatpush1.msra.mxu0 %v5223
  %5491 = vmatprep.subr.mxu0 0.0
  %5492 = vmatpush1.msra.mxu0 %v5224
  %5493 = vmatprep.subr.mxu0 0.0
  %5494 = vmatpush1.msra.mxu0 %v5225
  %5495 = vmatprep.subr.mxu0 0.0
  %5496 = vmatpush1.msra.mxu0 %v5226
  %5497 = vmatprep.subr.mxu0 0.0
  %5498 = vmatpush1.msra.mxu0 %v5227
  %5499 = vmatprep.subr.mxu0 0.0
  %5500 = vmatpush1.msra.mxu0 %v5228
  %5501 = vmatprep.subr.mxu0 0.0
  %5502 = vmatpush1.msra.mxu0 %v5229
  %5503 = vmatprep.subr.mxu0 0.0
  %5504 = vmatpush1.msra.mxu0 %v5230
  %5505 = vmatprep.subr.mxu0 0.0
  %5506 = vmatpush1.msra.mxu0 %v5231
  %5507 = vmatprep.subr.mxu0 0.0
  %5508 = vmatpush1.msra.mxu0 %v5232
  %5509 = vmatprep.subr.mxu0 0.0
  %5510 = vmatpush1.msra.mxu0 %v5233
  %5511 = vmatprep.subr.mxu0 0.0
  %5512 = vmatpush1.msra.mxu0 %v5234
  %5513 = vmatprep.subr.mxu0 0.0
  %5514 = vmatpush1.msra.mxu0 %v5235
  %5515 = vmatprep.subr.mxu0 0.0
  %5516 = vmatpush1.msra.mxu0 %v5236
  %5517 = vmatprep.subr.mxu0 0.0
  %5518 = vmatpush1.msra.mxu0 %v5237
  %5519 = vmatprep.subr.mxu0 0.0
  %5520 = vmatpush1.msra.mxu0 %v5238
  %5521 = vmatprep.subr.mxu0 0.0
  %5522 = vmatpush1.msra.mxu0 %v5239
  %5523 = vmatprep.subr.mxu0 0.0
  %5524 = vmatpush1.msra.mxu0 %v5240
  %5525 = vmatprep.subr.mxu0 0.0
  %5526 = vmatpush1.msra.mxu0 %v5241
  %5527 = vmatprep.subr.mxu0 0.0
  %5528 = vmatpush1.msra.mxu0 %v5242
  %5529 = vmatprep.subr.mxu0 0.0
  %5530 = vmatpush1.msra.mxu0 %v5243
  %5531 = vmatprep.subr.mxu0 0.0
  %5532 = vmatpush1.msra.mxu0 %v5244
  %5533 = vmatprep.subr.mxu0 0.0
  %5534 = vmatpush1.msra.mxu0 %v5245
  %5535 = vmatprep.subr.mxu0 0.0
  %5536 = vmatpush1.msra.mxu0 %v5246
  %5537 = vmatprep.subr.mxu0 0.0
  %5538 = vmatpush1.msra.mxu0 %v5247
  %5539 = vmatprep.subr.mxu0 0.0
  %5540 = vmatpush1.msra.mxu0 %v5248
  %5541 = vmatprep.mubr.f32.mxu0 %v5371
  %5542 = vmatmul.mubr.f32.gmra.mrb[0].mxu0 %v5369
  %v5543 = vpop.f32.mrb[0].mxu0
  %v5544 = vadd.f32 %v5474, %v5543
  %v5545 = vpop.f32.mrb[0].mxu0
  %5546 = vdwg.mxu0
  %5547 = vmatprep.subr.mxu0 0.0
  %5548 = vmatpush1.msra.mxu0 %v5249
  %5549 = vmatprep.subr.mxu0 0.0
  %5550 = vmatpush1.msra.mxu0 %v5250
  %5551 = vmatprep.subr.mxu0 0.0
  %5552 = vmatpush1.msra.mxu0 %v5251
  %5553 = vmatprep.subr.mxu0 0.0
  %5554 = vmatpush1.msra.mxu0 %v5252
  %5555 = vmatprep.subr.mxu0 0.0
  %5556 = vmatpush1.msra.mxu0 %v5253
  %5557 = vmatprep.subr.mxu0 0.0
  %5558 = vmatpush1.msra.mxu0 %v5254
  %5559 = vmatprep.subr.mxu0 0.0
  %5560 = vmatpush1.msra.mxu0 %v5255
  %5561 = vmatprep.subr.mxu0 0.0
  %5562 = vmatpush1.msra.mxu0 %v5256
  %5563 = vmatprep.subr.mxu0 0.0
  %5564 = vmatpush1.msra.mxu0 %v5257
  %5565 = vmatprep.subr.mxu0 0.0
  %5566 = vmatpush1.msra.mxu0 %v5258
  %5567 = vmatprep.subr.mxu0 0.0
  %5568 = vmatpush1.msra.mxu0 %v5259
  %5569 = vmatprep.subr.mxu0 0.0
  %5570 = vmatpush1.msra.mxu0 %v5260
  %5571 = vmatprep.subr.mxu0 0.0
  %5572 = vmatpush1.msra.mxu0 %v5261
  %5573 = vmatprep.subr.mxu0 0.0
  %5574 = vmatpush1.msra.mxu0 %v5262
  %5575 = vmatprep.subr.mxu0 0.0
  %5576 = vmatpush1.msra.mxu0 %v5263
  %5577 = vmatprep.subr.mxu0 0.0
  %5578 = vmatpush1.msra.mxu0 %v5264
  %5579 = vmatprep.subr.mxu0 0.0
  %5580 = vmatpush1.msra.mxu0 %v5265
  %5581 = vmatprep.subr.mxu0 0.0
  %5582 = vmatpush1.msra.mxu0 %v5266
  %5583 = vmatprep.subr.mxu0 0.0
  %5584 = vmatpush1.msra.mxu0 %v5267
  %5585 = vmatprep.subr.mxu0 0.0
  %5586 = vmatpush1.msra.mxu0 %v5268
  %5587 = vmatprep.subr.mxu0 0.0
  %5588 = vmatpush1.msra.mxu0 %v5269
  %5589 = vmatprep.subr.mxu0 0.0
  %5590 = vmatpush1.msra.mxu0 %v5270
  %5591 = vmatprep.subr.mxu0 0.0
  %5592 = vmatpush1.msra.mxu0 %v5271
  %5593 = vmatprep.subr.mxu0 0.0
  %5594 = vmatpush1.msra.mxu0 %v5272
  %5595 = vmatprep.subr.mxu0 0.0
  %5596 = vmatpush1.msra.mxu0 %v5273
  %5597 = vmatprep.subr.mxu0 0.0
  %5598 = vmatpush1.msra.mxu0 %v5274
  %5599 = vmatprep.subr.mxu0 0.0
  %5600 = vmatpush1.msra.mxu0 %v5275
  %5601 = vmatprep.subr.mxu0 0.0
  %5602 = vmatpush1.msra.mxu0 %v5276
  %5603 = vmatprep.subr.mxu0 0.0
  %5604 = vmatpush1.msra.mxu0 %v5277
  %5605 = vmatprep.subr.mxu0 0.0
  %5606 = vmatpush1.msra.mxu0 %v5278
  %5607 = vmatprep.subr.mxu0 0.0
  %5608 = vmatpush1.msra.mxu0 %v5279
  %5609 = vmatprep.subr.mxu0 0.0
  %5610 = vmatpush1.msra.mxu0 %v5280
  %5611 = vmatprep.mubr.f32.mxu0 %v5387
  %5612 = vmatmul.mubr.f32.gmra.mrb[0].mxu0 %v5379
  %v5613 = vpop.f32.mrb[0].mxu0
  %v5614 = vadd.f32 %v5544, %v5613
  %v5615 = vpop.f32.mrb[0].mxu0
  %5616 = vdwg.mxu0
  %5617 = vmatprep.subr.mxu0 0.0
  %5618 = vmatpush1.msra.mxu0 %v5281
  %5619 = vmatprep.subr.mxu0 0.0
  %5620 = vmatpush1.msra.mxu0 %v5282
  %5621 = vmatprep.subr.mxu0 0.0
  %5622 = vmatpush1.msra.mxu0 %v5283
  %5623 = vmatprep.subr.mxu0 0.0
  %5624 = vmatpush1.msra.mxu0 %v5284
  %5625 = vmatprep.subr.mxu0 0.0
  %5626 = vmatpush1.msra.mxu0 %v5285
  %5627 = vmatprep.subr.mxu0 0.0
  %5628 = vmatpush1.msra.mxu0 %v5286
  %5629 = vmatprep.subr.mxu0 0.0
  %5630 = vmatpush1.msra.mxu0 %v5287
  %5631 = vmatprep.subr.mxu0 0.0
  %5632 = vmatpush1.msra.mxu0 %v5288
  %5633 = vmatprep.subr.mxu0 0.0
  %5634 = vmatpush1.msra.mxu0 %v5289
  %5635 = vmatprep.subr.mxu0 0.0
  %5636 = vmatpush1.msra.mxu0 %v5290
  %5637 = vmatprep.subr.mxu0 0.0
  %5638 = vmatpush1.msra.mxu0 %v5291
  %5639 = vmatprep.subr.mxu0 0.0
  %5640 = vmatpush1.msra.mxu0 %v5292
  %5641 = vmatprep.subr.mxu0 0.0
  %5642 = vmatpush1.msra.mxu0 %v5293
  %5643 = vmatprep.subr.mxu0 0.0
  %5644 = vmatpush1.msra.mxu0 %v5294
  %5645 = vmatprep.subr.mxu0 0.0
  %5646 = vmatpush1.msra.mxu0 %v5295
  %5647 = vmatprep.subr.mxu0 0.0
  %5648 = vmatpush1.msra.mxu0 %v5296
  %5649 = vmatprep.subr.mxu0 0.0
  %5650 = vmatpush1.msra.mxu0 %v5297
  %5651 = vmatprep.subr.mxu0 0.0
  %5652 = vmatpush1.msra.mxu0 %v5298
  %5653 = vmatprep.subr.mxu0 0.0
  %5654 = vmatpush1.msra.mxu0 %v5299
  %5655 = vmatprep.subr.mxu0 0.0
  %5656 = vmatpush1.msra.mxu0 %v5300
  %5657 = vmatprep.subr.mxu0 0.0
  %5658 = vmatpush1.msra.mxu0 %v5301
  %5659 = vmatprep.subr.mxu0 0.0
  %5660 = vmatpush1.msra.mxu0 %v5302
  %5661 = vmatprep.subr.mxu0 0.0
  %5662 = vmatpush1.msra.mxu0 %v5303
  %5663 = vmatprep.subr.mxu0 0.0
  %5664 = vmatpush1.msra.mxu0 %v5304
  %5665 = vmatprep.subr.mxu0 0.0
  %5666 = vmatpush1.msra.mxu0 %v5305
  %5667 = vmatprep.subr.mxu0 0.0
  %5668 = vmatpush1.msra.mxu0 %v5306
  %5669 = vmatprep.subr.mxu0 0.0
  %5670 = vmatpush1.msra.mxu0 %v5307
  %5671 = vmatprep.subr.mxu0 0.0
  %5672 = vmatpush1.msra.mxu0 %v5308
  %5673 = vmatprep.subr.mxu0 0.0
  %5674 = vmatpush1.msra.mxu0 %v5309
  %5675 = vmatprep.subr.mxu0 0.0
  %5676 = vmatpush1.msra.mxu0 %v5310
  %5677 = vmatprep.subr.mxu0 0.0
  %5678 = vmatpush1.msra.mxu0 %v5311
  %5679 = vmatprep.subr.mxu0 0.0
  %5680 = vmatpush1.msra.mxu0 %v5312
  %5681 = vmatprep.mubr.f32.mxu0 %v5388
  %5682 = vmatmul.mubr.f32.gmra.mrb[0].mxu0 %v5386
  %v5683 = vpop.f32.mrb[0].mxu0
  %v5684 = vadd.f32 %v5614, %v5683
  %v5685 = vpop.f32.mrb[0].mxu0
  %5686 = vdwg.mxu0
  %5687 = vmatprep.subr.mxu0 0.0
  %5688 = vmatpush1.msra.mxu0 %v5313
  %5689 = vmatprep.subr.mxu0 0.0
  %5690 = vmatpush1.msra.mxu0 %v5314
  %5691 = vmatprep.subr.mxu0 0.0
  %5692 = vmatpush1.msra.mxu0 %v5315
  %5693 = vmatprep.subr.mxu0 0.0
  %5694 = vmatpush1.msra.mxu0 %v5316
  %5695 = vmatprep.subr.mxu0 0.0
  %5696 = vmatpush1.msra.mxu0 %v5317
  %5697 = vmatprep.subr.mxu0 0.0
  %5698 = vmatpush1.msra.mxu0 %v5318
  %5699 = vmatprep.subr.mxu0 0.0
  %5700 = vmatpush1.msra.mxu0 %v5319
  %5701 = vmatprep.subr.mxu0 0.0
  %5702 = vmatpush1.msra.mxu0 %v5320
  %5703 = vmatprep.subr.mxu0 0.0
  %5704 = vmatpush1.msra.mxu0 %v5321
  %5705 = vmatprep.subr.mxu0 0.0
  %5706 = vmatpush1.msra.mxu0 %v5322
  %5707 = vmatprep.subr.mxu0 0.0
  %5708 = vmatpush1.msra.mxu0 %v5323
  %5709 = vmatprep.subr.mxu0 0.0
  %5710 = vmatpush1.msra.mxu0 %v5324
  %5711 = vmatprep.subr.mxu0 0.0
  %5712 = vmatpush1.msra.mxu0 %v5325
  %5713 = vmatprep.subr.mxu0 0.0
  %5714 = vmatpush1.msra.mxu0 %v5326
  %5715 = vmatprep.subr.mxu0 0.0
  %5716 = vmatpush1.msra.mxu0 %v5327
  %5717 = vmatprep.subr.mxu0 0.0
  %5718 = vmatpush1.msra.mxu0 %v5328
  %5719 = vmatprep.subr.mxu0 0.0
  %5720 = vmatpush1.msra.mxu0 %v5329
  %5721 = vmatprep.subr.mxu0 0.0
  %5722 = vmatpush1.msra.mxu0 %v5330
  %5723 = vmatprep.subr.mxu0 0.0
  %5724 = vmatpush1.msra.mxu0 %v5331
  %5725 = vmatprep.subr.mxu0 0.0
  %5726 = vmatpush1.msra.mxu0 %v5332
  %5727 = vmatprep.subr.mxu0 0.0
  %5728 = vmatpush1.msra.mxu0 %v5333
  %5729 = vmatprep.subr.mxu0 0.0
  %5730 = vmatpush1.msra.mxu0 %v5334
  %5731 = vmatprep.subr.mxu0 0.0
  %5732 = vmatpush1.msra.mxu0 %v5335
  %5733 = vmatprep.subr.mxu0 0.0
  %5734 = vmatpush1.msra.mxu0 %v5336
  %5735 = vmatprep.subr.mxu0 0.0
  %5736 = vmatpush1.msra.mxu0 %v5337
  %5737 = vmatprep.subr.mxu0 0.0
  %5738 = vmatpush1.msra.mxu0 %v5338
  %5739 = vmatprep.subr.mxu0 0.0
  %5740 = vmatpush1.msra.mxu0 %v5339
  %5741 = vmatprep.subr.mxu0 0.0
  %5742 = vmatpush1.msra.mxu0 %v5340
  %5743 = vmatprep.subr.mxu0 0.0
  %5744 = vmatpush1.msra.mxu0 %v5341
  %5745 = vmatprep.subr.mxu0 0.0
  %5746 = vmatpush1.msra.mxu0 %v5342
  %5747 = vmatprep.subr.mxu0 0.0
  %5748 = vmatpush1.msra.mxu0 %v5343
  %5749 = vmatprep.subr.mxu0 0.0
  %5750 = vmatpush1.msra.mxu0 %v5344
  %5751 = vmatprep.mubr.f32.mxu0 %v5396
  %5752 = vmatmul.mubr.f32.gmra.mrb[0].mxu0 %v5395
  %v5753 = vpop.f32.mrb[0].mxu0
  %v5754 = vadd.f32 %v5684, %v5753
  %v5755 = vpop.f32.mrb[0].mxu0
  %5756 = vdwg.mxu0
  %v5757 = vlaneseq
  %v5758 = vand.u32 %v5757, 127
  %vm5759 = vcmp.lt.s32.totalorder %v5758, 25
  %v5760 = vsel %vm5759, %v5754, -1e+30
  %vm5761 = vcmask 254976
  %v5762 = vsel %vm5761, %v5760, -inf
  %5763 = vmax.xlane.f32.xlu0 %v5762
  %v5764 = vpop.xlane.xlu0 %5763
  %v5765 = vsub.f32 %v5760, %v5764
  %v5766 = vmul.f32 %v5765, 1.442695
  %v5767 = vpow.pop %v5766
  %v5768 = vsel %vm5761, %v5767, 0.0
  %5769 = vadd.xlane.f32.xlu0 %v5768
  %v5770 = vpop.xlane.xlu0 %5769
  %v5771 = vrcp.pop %v5770
  %v5772 = vmul.f32 %v5767, %v5771
  %v5773 = vld [vmem:[%s7] sm:$0x1]
  %v5775 = vlaneseq
  %v5776 = vshrl.u32 %v5775, 7
  %v5777 = vsub.s32 0, %v5776
  %v5778 = vrot.slane %v5773, %v5777
  %v5780 = vmul.f32 %v5772, %v5778
  %v5781 = vsel %vm5761, %v5780, 0.0
  %5782 = vadd.xlane.f32.xlu0 %v5781
  %v5783 = vpop.xlane.xlu0 %5782
  %v5784 = vld [vmem:[#allocation6] sm:$0x1]
  %v5786 = vlaneseq
  %v5787 = vshrl.u32 %v5786, 7
  %v5788 = vsub.s32 0, %v5787
  %v5789 = vrot.slane %v5784, %v5788
  %v5791 = vadd.f32 %v5783, %v5789
  %5793 = vset.pattern.permute.xlu0 0
  %5794 = vperm.xlu0 %5793, %v5791
  %v5795 = vpop.permute.xlu0 %5794
  %5797 = vst [vmem:[%s9] sm:$0x3] %v5795
  // Predicated region
  $region38: #{discriminator_cnn_forward.1} parent=0 // pred_check
    _
  $region39: #{discriminator_cnn_forward.1} parent=0 // pred_check_branch
    %5799 = sbr.rel (0) target = $region41
  $region40: #{discriminator_cnn_forward.1} parent=0 // pred_region
    _
  $region41: #{discriminator_cnn_forward.1} parent=0 // pred_fallthru
    _
  // Predicated region
  $region42: #{discriminator_cnn_forward.1} parent=0 // pred_check
    _
  $region43: #{discriminator_cnn_forward.1} parent=0 // pred_check_branch
    %5801 = sbr.rel (0) target = $region45
  $region44: #{discriminator_cnn_forward.1} parent=0 // pred_region
    _
  $region45: #{discriminator_cnn_forward.1} parent=0 // pred_fallthru
    _

</llo_original>
